<compile_context>
chip_gen: v6e
topology: v6e:2x2x1
jax: 0.10.0
libtpu: 0.0.40
codegen_flags: <defaults>
</compile_context>

<pallas_src>
import jax
import jax.numpy as jnp
from jax.experimental import pallas as pl


def _round_up(n, m):
    return ((n + m - 1) // m) * m


# ----------------------------------------------------------------------------
# Fused kernel: per-step input projection + serial tanh recurrence + decode.
# Single invocation, no grid: everything (~50 KiB) is VMEM-resident.
# ----------------------------------------------------------------------------
def rnn_fused_kernel(x_ref, wx_ref, b_ref, wh_ref, wo_ref, bo_ref,
                     h_hist_ref, y_ref):
    """x_ref:      (B, S, D)   raw input (batch-major, as given by the module)
    wx_ref:     (D, Lp)     input->hidden weight (zero padded to lane width)
    b_ref:      (1, Lp)     in_layer bias (zero padded)
    wh_ref:     (Lp, Lp)    hidden->hidden weight (zero padded)
    wo_ref:     (Lp, Op)    decode weight (zero padded)
    bo_ref:     (1, Op)     decode bias (zero padded)
    h_hist_ref: (S, B, Lp)  out: h_1..h_S (time-major)
    y_ref:      (B, Op)     out: decode(h_S)
    """
    B, S, D = x_ref.shape
    hp = jax.lax.Precision.HIGHEST

    # Load the small weights once; they stay in vregs across the whole loop.
    wx = wx_ref[...]
    b = b_ref[...]
    wh = wh_ref[...]

    # S is small and static: full unroll exposes the whole dependence chain to
    # the scheduler.  Only the Lp x Lp recurrence dot is on the critical path;
    # the x_t @ Wx projections are h-independent and overlap with it.
    h = None
    for t in range(S):
        x_t = x_ref[:, t, :]                                   # (B, D)
        p_t = jnp.dot(x_t, wx, precision=hp,
                      preferred_element_type=jnp.float32) + b  # (B, Lp)
        if t == 0:
            # h_0 == 0  =>  the recurrence matmul is dead at the first step.
            h = jnp.tanh(p_t)
        else:
            h = jnp.tanh(p_t + jnp.dot(h, wh, precision=hp,
                                       preferred_element_type=jnp.float32))
        h_hist_ref[t] = h.astype(h_hist_ref.dtype)

    # Fused decode of the last hidden state.
    y_ref[...] = (
        jnp.dot(h, wo_ref[...], precision=hp,
                preferred_element_type=jnp.float32) + bo_ref[...]
    ).astype(y_ref.dtype)


# ----------------------------------------------------------------------------
# Wrapper: pad weights to lane-dense shapes and launch the fused kernel.
# ----------------------------------------------------------------------------
def rnn_forward_decode(x, wx, wh, b, wo, bo, *, lane=128, unpad=True):
    """x: (B, S, D), wx: (D, L), wh: (L, L), b: (L,), wo: (L, O), bo: (O,).

    Returns (h_hist, y):
      h_hist: (S, B, L)   == torch.stack(module.forward(x))  (h_1..h_S)
      y:      (B, O)      == module.decode(h_S)
    With unpad=False the lane-padded (S, B, Lp) / (B, Op) buffers are returned
    directly (real values in [..., :L] / [..., :O], zeros beyond), saving two
    slice ops for callers that can consume padded layouts.
    """
    B, S, D = x.shape
    L = wh.shape[0]
    O = wo.shape[1]
    Lp = _round_up(L, lane)
    Op = _round_up(O, lane)

    f32 = jnp.float32
    # Weight padding is exact-zero (see header); in a real model these would
    # be padded once, outside the step function.
    wx_p = jnp.pad(wx.astype(f32), ((0, 0), (0, Lp - L)))
    wh_p = jnp.pad(wh.astype(f32), ((0, Lp - L), (0, Lp - L)))
    b_p = jnp.pad(b.astype(f32), (0, Lp - L)).reshape(1, Lp)
    wo_p = jnp.pad(wo.astype(f32), ((0, Lp - L), (0, Op - O)))
    bo_p = jnp.pad(bo.astype(f32), (0, Op - O)).reshape(1, Op)

    h_hist_p, y_p = pl.pallas_call(
        rnn_fused_kernel,
        out_shape=(
            jax.ShapeDtypeStruct((S, B, Lp), f32),
            jax.ShapeDtypeStruct((B, Op), f32),
        ),
        in_specs=[
            pl.BlockSpec((B, S, D), lambda: (0, 0, 0)),   # x (fully resident)
            pl.BlockSpec((D, Lp), lambda: (0, 0)),        # Wx
            pl.BlockSpec((1, Lp), lambda: (0, 0)),        # b
            pl.BlockSpec((Lp, Lp), lambda: (0, 0)),       # Wh
            pl.BlockSpec((Lp, Op), lambda: (0, 0)),       # Wo
            pl.BlockSpec((1, Op), lambda: (0, 0)),        # bo
        ],
        out_specs=(
            pl.BlockSpec((S, B, Lp), lambda: (0, 0, 0)),  # h history
            pl.BlockSpec((B, Op), lambda: (0, 0)),        # decode(h_S)
        ),
    )(x.astype(f32), wx_p, b_p, wh_p, wo_p, bo_p)

    if unpad:
        return h_hist_p[:, :, :L], y_p[:, :O]
    return h_hist_p, y_p


# ----------------------------------------------------------------------------
# Pure-JAX reference (mirrors the PyTorch forward + decode).
# ----------------------------------------------------------------------------
def rnn_forward_ref(x, wx, wh, b, wo, bo):
    hp = jax.lax.Precision.HIGHEST
    B, S, D = x.shape
    L = wh.shape[0]
    h = jnp.zeros((B, L), jnp.float32)
    hs = []
    for t in range(S):
        pre = (
            jnp.matmul(x[:, t, :], wx, precision=hp)
            + jnp.matmul(h, wh, precision=hp)
            + b
        )
        h = jnp.tanh(pre)
        hs.append(h)
    h_hist = jnp.stack(hs, axis=0)                       # (S, B, L) time-major
    y = jnp.matmul(h, wo, precision=hp) + bo             # decode(h_S)
    return h_hist, y


if __name__ == "__main__":
    # Small shapes consistent with the module.
    batch, seq, dim, latent, output = 8, 8, 16, 32, 10

    key = jax.random.PRNGKey(0)
    k_x, k_wx, k_wh, k_b, k_wo, k_bo = jax.random.split(key, 6)

    x = jax.random.normal(k_x, (batch, seq, dim), dtype=jnp.float32)

    # in_layer: Linear(dim + latent, latent) -> split into Wx, Wh + bias.
    scale_in = 1.0 / jnp.sqrt(dim + latent)
    wx = jax.random.uniform(k_wx, (dim, latent), jnp.float32, -scale_in, scale_in)
    wh = jax.random.uniform(k_wh, (latent, latent), jnp.float32, -scale_in, scale_in)
    b = jax.random.uniform(k_b, (latent,), jnp.float32, -scale_in, scale_in)

    # out_layer: Linear(latent, output).
    scale_out = 1.0 / jnp.sqrt(latent)
    wo = jax.random.uniform(k_wo, (latent, output), jnp.float32, -scale_out, scale_out)
    bo = jax.random.uniform(k_bo, (output,), jnp.float32, -scale_out, scale_out)

    # Padded-output path inside jit (skips the two slice ops); slicing for the
    # correctness check happens outside the hot path.
    fwd = jax.jit(rnn_forward_decode, static_argnames=("lane", "unpad"))
    h_hist_p, y_p = jax.block_until_ready(fwd(x, wx, wh, b, wo, bo, unpad=False))
    h_hist = h_hist_p[:, :, :latent]
    y = y_p[:, :output]

    # Sanity check against the pure-JAX reference.
    h_ref, y_ref = rnn_forward_ref(x, wx, wh, b, wo, bo)
    assert h_hist.shape == (seq, batch, latent)
    assert y.shape == (batch, output)
    assert jnp.allclose(h_hist, h_ref, atol=1e-5, rtol=1e-5)
    assert jnp.allclose(y, y_ref, atol=1e-5, rtol=1e-5)

    print("KERNEL_OK")
</pallas_src>

<mosaic_0001>
module attributes {stable_mosaic.version = 11 : i64} {
  func.func @rnn_fused_kernel(%arg0: memref<8x8x16xf32, #tpu.memory_space<vmem>>, %arg1: memref<16x128xf32, #tpu.memory_space<vmem>>, %arg2: memref<1x128xf32, #tpu.memory_space<vmem>>, %arg3: memref<128x128xf32, #tpu.memory_space<vmem>>, %arg4: memref<128x128xf32, #tpu.memory_space<vmem>>, %arg5: memref<1x128xf32, #tpu.memory_space<vmem>>, %arg6: memref<8x8x128xf32, #tpu.memory_space<vmem>>, %arg7: memref<8x128xf32, #tpu.memory_space<vmem>>) attributes {dimension_semantics = [], scalar_prefetch = 0 : i64, scratch_operands = 0 : i64, tpu.core_type = #tpu.core_type<tc>} {
    %c0 = arith.constant 0 : index
    %c0_0 = arith.constant 0 : index
    %0 = vector.load %arg1[%c0, %c0_0] : memref<16x128xf32, #tpu.memory_space<vmem>>, vector<16x128xf32>
    %c0_1 = arith.constant 0 : index
    %c0_2 = arith.constant 0 : index
    %1 = vector.load %arg2[%c0_1, %c0_2] : memref<1x128xf32, #tpu.memory_space<vmem>>, vector<1x128xf32>
    %c0_3 = arith.constant 0 : index
    %c0_4 = arith.constant 0 : index
    %2 = vector.load %arg3[%c0_3, %c0_4] : memref<128x128xf32, #tpu.memory_space<vmem>>, vector<128x128xf32>
    %c0_5 = arith.constant 0 : index
    %c0_6 = arith.constant 0 : index
    %c0_7 = arith.constant 0 : index
    %3 = vector.load %arg0[%c0_5, %c0_6, %c0_7] : memref<8x8x16xf32, #tpu.memory_space<vmem>>, vector<8x1x16xf32>
    %4 = vector.shape_cast %3 : vector<8x1x16xf32> to vector<8x16xf32>
    %cst = arith.constant dense<0.000000e+00> : vector<8x128xf32>
    %5 = tpu.matmul %4, %0, %cst {dimension_numbers = #tpu.dot_dimension_numbers<[1], [0], [0], [1], [0, 0, 1, 1], [], []>, precision = #tpu.contract_precision<fp32>} : vector<8x16xf32>, vector<16x128xf32>, vector<8x128xf32> -> vector<8x128xf32>
    %6 = vector.broadcast %1 : vector<1x128xf32> to vector<8x128xf32>
    %7 = arith.addf %5, %6 : vector<8x128xf32>
    %8 = math.tanh %7 : vector<8x128xf32>
    %c0_8 = arith.constant 0 : index
    %c0_9 = arith.constant 0 : index
    %c0_10 = arith.constant 0 : index
    %9 = vector.load %arg6[%c0_8, %c0_9, %c0_10] : memref<8x8x128xf32, #tpu.memory_space<vmem>>, vector<1x8x128xf32>
    %10 = vector.shape_cast %9 : vector<1x8x128xf32> to vector<8x128xf32>
    %11 = vector.shape_cast %8 : vector<8x128xf32> to vector<1x8x128xf32>
    tpu.vector_store %arg6[%c0_8, %c0_9, %c0_10], %11 {strides = array<i32>} : memref<8x8x128xf32, #tpu.memory_space<vmem>>, vector<1x8x128xf32>,
    %c0_11 = arith.constant 0 : index
    %c1 = arith.constant 1 : index
    %c0_12 = arith.constant 0 : index
    %12 = vector.load %arg0[%c0_11, %c1, %c0_12] : memref<8x8x16xf32, #tpu.memory_space<vmem>>, vector<8x1x16xf32>
    %13 = vector.shape_cast %12 : vector<8x1x16xf32> to vector<8x16xf32>
    %cst_13 = arith.constant dense<0.000000e+00> : vector<8x128xf32>
    %14 = tpu.matmul %13, %0, %cst_13 {dimension_numbers = #tpu.dot_dimension_numbers<[1], [0], [0], [1], [0, 0, 1, 1], [], []>, precision = #tpu.contract_precision<fp32>} : vector<8x16xf32>, vector<16x128xf32>, vector<8x128xf32> -> vector<8x128xf32>
    %15 = vector.broadcast %1 : vector<1x128xf32> to vector<8x128xf32>
    %16 = arith.addf %14, %15 : vector<8x128xf32>
    %cst_14 = arith.constant dense<0.000000e+00> : vector<8x128xf32>
    %17 = tpu.matmul %8, %2, %cst_14 {dimension_numbers = #tpu.dot_dimension_numbers<[1], [0], [0], [1], [0, 0, 1, 1], [], []>, precision = #tpu.contract_precision<fp32>} : vector<8x128xf32>, vector<128x128xf32>, vector<8x128xf32> -> vector<8x128xf32>
    %18 = arith.addf %16, %17 : vector<8x128xf32>
    %19 = math.tanh %18 : vector<8x128xf32>
    %c1_15 = arith.constant 1 : index
    %c0_16 = arith.constant 0 : index
    %c0_17 = arith.constant 0 : index
    %20 = vector.load %arg6[%c1_15, %c0_16, %c0_17] : memref<8x8x128xf32, #tpu.memory_space<vmem>>, vector<1x8x128xf32>
    %21 = vector.shape_cast %20 : vector<1x8x128xf32> to vector<8x128xf32>
    %22 = vector.shape_cast %19 : vector<8x128xf32> to vector<1x8x128xf32>
    tpu.vector_store %arg6[%c1_15, %c0_16, %c0_17], %22 {strides = array<i32>} : memref<8x8x128xf32, #tpu.memory_space<vmem>>, vector<1x8x128xf32>,
    %c0_18 = arith.constant 0 : index
    %c2 = arith.constant 2 : index
    %c0_19 = arith.constant 0 : index
    %23 = vector.load %arg0[%c0_18, %c2, %c0_19] : memref<8x8x16xf32, #tpu.memory_space<vmem>>, vector<8x1x16xf32>
    %24 = vector.shape_cast %23 : vector<8x1x16xf32> to vector<8x16xf32>
    %cst_20 = arith.constant dense<0.000000e+00> : vector<8x128xf32>
    %25 = tpu.matmul %24, %0, %cst_20 {dimension_numbers = #tpu.dot_dimension_numbers<[1], [0], [0], [1], [0, 0, 1, 1], [], []>, precision = #tpu.contract_precision<fp32>} : vector<8x16xf32>, vector<16x128xf32>, vector<8x128xf32> -> vector<8x128xf32>
    %26 = vector.broadcast %1 : vector<1x128xf32> to vector<8x128xf32>
    %27 = arith.addf %25, %26 : vector<8x128xf32>
    %cst_21 = arith.constant dense<0.000000e+00> : vector<8x128xf32>
    %28 = tpu.matmul %19, %2, %cst_21 {dimension_numbers = #tpu.dot_dimension_numbers<[1], [0], [0], [1], [0, 0, 1, 1], [], []>, precision = #tpu.contract_precision<fp32>} : vector<8x128xf32>, vector<128x128xf32>, vector<8x128xf32> -> vector<8x128xf32>
    %29 = arith.addf %27, %28 : vector<8x128xf32>
    %30 = math.tanh %29 : vector<8x128xf32>
    %c2_22 = arith.constant 2 : index
    %c0_23 = arith.constant 0 : index
    %c0_24 = arith.constant 0 : index
    %31 = vector.load %arg6[%c2_22, %c0_23, %c0_24] : memref<8x8x128xf32, #tpu.memory_space<vmem>>, vector<1x8x128xf32>
    %32 = vector.shape_cast %31 : vector<1x8x128xf32> to vector<8x128xf32>
    %33 = vector.shape_cast %30 : vector<8x128xf32> to vector<1x8x128xf32>
    tpu.vector_store %arg6[%c2_22, %c0_23, %c0_24], %33 {strides = array<i32>} : memref<8x8x128xf32, #tpu.memory_space<vmem>>, vector<1x8x128xf32>,
    %c0_25 = arith.constant 0 : index
    %c3 = arith.constant 3 : index
    %c0_26 = arith.constant 0 : index
    %34 = vector.load %arg0[%c0_25, %c3, %c0_26] : memref<8x8x16xf32, #tpu.memory_space<vmem>>, vector<8x1x16xf32>
    %35 = vector.shape_cast %34 : vector<8x1x16xf32> to vector<8x16xf32>
    %cst_27 = arith.constant dense<0.000000e+00> : vector<8x128xf32>
    %36 = tpu.matmul %35, %0, %cst_27 {dimension_numbers = #tpu.dot_dimension_numbers<[1], [0], [0], [1], [0, 0, 1, 1], [], []>, precision = #tpu.contract_precision<fp32>} : vector<8x16xf32>, vector<16x128xf32>, vector<8x128xf32> -> vector<8x128xf32>
    %37 = vector.broadcast %1 : vector<1x128xf32> to vector<8x128xf32>
    %38 = arith.addf %36, %37 : vector<8x128xf32>
    %cst_28 = arith.constant dense<0.000000e+00> : vector<8x128xf32>
    %39 = tpu.matmul %30, %2, %cst_28 {dimension_numbers = #tpu.dot_dimension_numbers<[1], [0], [0], [1], [0, 0, 1, 1], [], []>, precision = #tpu.contract_precision<fp32>} : vector<8x128xf32>, vector<128x128xf32>, vector<8x128xf32> -> vector<8x128xf32>
    %40 = arith.addf %38, %39 : vector<8x128xf32>
    %41 = math.tanh %40 : vector<8x128xf32>
    %c3_29 = arith.constant 3 : index
    %c0_30 = arith.constant 0 : index
    %c0_31 = arith.constant 0 : index
    %42 = vector.load %arg6[%c3_29, %c0_30, %c0_31] : memref<8x8x128xf32, #tpu.memory_space<vmem>>, vector<1x8x128xf32>
    %43 = vector.shape_cast %42 : vector<1x8x128xf32> to vector<8x128xf32>
    %44 = vector.shape_cast %41 : vector<8x128xf32> to vector<1x8x128xf32>
    tpu.vector_store %arg6[%c3_29, %c0_30, %c0_31], %44 {strides = array<i32>} : memref<8x8x128xf32, #tpu.memory_space<vmem>>, vector<1x8x128xf32>,
    %c0_32 = arith.constant 0 : index
    %c4 = arith.constant 4 : index
    %c0_33 = arith.constant 0 : index
    %45 = vector.load %arg0[%c0_32, %c4, %c0_33] : memref<8x8x16xf32, #tpu.memory_space<vmem>>, vector<8x1x16xf32>
    %46 = vector.shape_cast %45 : vector<8x1x16xf32> to vector<8x16xf32>
    %cst_34 = arith.constant dense<0.000000e+00> : vector<8x128xf32>
    %47 = tpu.matmul %46, %0, %cst_34 {dimension_numbers = #tpu.dot_dimension_numbers<[1], [0], [0], [1], [0, 0, 1, 1], [], []>, precision = #tpu.contract_precision<fp32>} : vector<8x16xf32>, vector<16x128xf32>, vector<8x128xf32> -> vector<8x128xf32>
    %48 = vector.broadcast %1 : vector<1x128xf32> to vector<8x128xf32>
    %49 = arith.addf %47, %48 : vector<8x128xf32>
    %cst_35 = arith.constant dense<0.000000e+00> : vector<8x128xf32>
    %50 = tpu.matmul %41, %2, %cst_35 {dimension_numbers = #tpu.dot_dimension_numbers<[1], [0], [0], [1], [0, 0, 1, 1], [], []>, precision = #tpu.contract_precision<fp32>} : vector<8x128xf32>, vector<128x128xf32>, vector<8x128xf32> -> vector<8x128xf32>
    %51 = arith.addf %49, %50 : vector<8x128xf32>
    %52 = math.tanh %51 : vector<8x128xf32>
    %c4_36 = arith.constant 4 : index
    %c0_37 = arith.constant 0 : index
    %c0_38 = arith.constant 0 : index
    %53 = vector.load %arg6[%c4_36, %c0_37, %c0_38] : memref<8x8x128xf32, #tpu.memory_space<vmem>>, vector<1x8x128xf32>
    %54 = vector.shape_cast %53 : vector<1x8x128xf32> to vector<8x128xf32>
    %55 = vector.shape_cast %52 : vector<8x128xf32> to vector<1x8x128xf32>
    tpu.vector_store %arg6[%c4_36, %c0_37, %c0_38], %55 {strides = array<i32>} : memref<8x8x128xf32, #tpu.memory_space<vmem>>, vector<1x8x128xf32>,
    %c0_39 = arith.constant 0 : index
    %c5 = arith.constant 5 : index
    %c0_40 = arith.constant 0 : index
    %56 = vector.load %arg0[%c0_39, %c5, %c0_40] : memref<8x8x16xf32, #tpu.memory_space<vmem>>, vector<8x1x16xf32>
    %57 = vector.shape_cast %56 : vector<8x1x16xf32> to vector<8x16xf32>
    %cst_41 = arith.constant dense<0.000000e+00> : vector<8x128xf32>
    %58 = tpu.matmul %57, %0, %cst_41 {dimension_numbers = #tpu.dot_dimension_numbers<[1], [0], [0], [1], [0, 0, 1, 1], [], []>, precision = #tpu.contract_precision<fp32>} : vector<8x16xf32>, vector<16x128xf32>, vector<8x128xf32> -> vector<8x128xf32>
    %59 = vector.broadcast %1 : vector<1x128xf32> to vector<8x128xf32>
    %60 = arith.addf %58, %59 : vector<8x128xf32>
    %cst_42 = arith.constant dense<0.000000e+00> : vector<8x128xf32>
    %61 = tpu.matmul %52, %2, %cst_42 {dimension_numbers = #tpu.dot_dimension_numbers<[1], [0], [0], [1], [0, 0, 1, 1], [], []>, precision = #tpu.contract_precision<fp32>} : vector<8x128xf32>, vector<128x128xf32>, vector<8x128xf32> -> vector<8x128xf32>
    %62 = arith.addf %60, %61 : vector<8x128xf32>
    %63 = math.tanh %62 : vector<8x128xf32>
    %c5_43 = arith.constant 5 : index
    %c0_44 = arith.constant 0 : index
    %c0_45 = arith.constant 0 : index
    %64 = vector.load %arg6[%c5_43, %c0_44, %c0_45] : memref<8x8x128xf32, #tpu.memory_space<vmem>>, vector<1x8x128xf32>
    %65 = vector.shape_cast %64 : vector<1x8x128xf32> to vector<8x128xf32>
    %66 = vector.shape_cast %63 : vector<8x128xf32> to vector<1x8x128xf32>
    tpu.vector_store %arg6[%c5_43, %c0_44, %c0_45], %66 {strides = array<i32>} : memref<8x8x128xf32, #tpu.memory_space<vmem>>, vector<1x8x128xf32>,
    %c0_46 = arith.constant 0 : index
    %c6 = arith.constant 6 : index
    %c0_47 = arith.constant 0 : index
    %67 = vector.load %arg0[%c0_46, %c6, %c0_47] : memref<8x8x16xf32, #tpu.memory_space<vmem>>, vector<8x1x16xf32>
    %68 = vector.shape_cast %67 : vector<8x1x16xf32> to vector<8x16xf32>
    %cst_48 = arith.constant dense<0.000000e+00> : vector<8x128xf32>
    %69 = tpu.matmul %68, %0, %cst_48 {dimension_numbers = #tpu.dot_dimension_numbers<[1], [0], [0], [1], [0, 0, 1, 1], [], []>, precision = #tpu.contract_precision<fp32>} : vector<8x16xf32>, vector<16x128xf32>, vector<8x128xf32> -> vector<8x128xf32>
    %70 = vector.broadcast %1 : vector<1x128xf32> to vector<8x128xf32>
    %71 = arith.addf %69, %70 : vector<8x128xf32>
    %cst_49 = arith.constant dense<0.000000e+00> : vector<8x128xf32>
    %72 = tpu.matmul %63, %2, %cst_49 {dimension_numbers = #tpu.dot_dimension_numbers<[1], [0], [0], [1], [0, 0, 1, 1], [], []>, precision = #tpu.contract_precision<fp32>} : vector<8x128xf32>, vector<128x128xf32>, vector<8x128xf32> -> vector<8x128xf32>
    %73 = arith.addf %71, %72 : vector<8x128xf32>
    %74 = math.tanh %73 : vector<8x128xf32>
    %c6_50 = arith.constant 6 : index
    %c0_51 = arith.constant 0 : index
    %c0_52 = arith.constant 0 : index
    %75 = vector.load %arg6[%c6_50, %c0_51, %c0_52] : memref<8x8x128xf32, #tpu.memory_space<vmem>>, vector<1x8x128xf32>
    %76 = vector.shape_cast %75 : vector<1x8x128xf32> to vector<8x128xf32>
    %77 = vector.shape_cast %74 : vector<8x128xf32> to vector<1x8x128xf32>
    tpu.vector_store %arg6[%c6_50, %c0_51, %c0_52], %77 {strides = array<i32>} : memref<8x8x128xf32, #tpu.memory_space<vmem>>, vector<1x8x128xf32>,
    %c0_53 = arith.constant 0 : index
    %c7 = arith.constant 7 : index
    %c0_54 = arith.constant 0 : index
    %78 = vector.load %arg0[%c0_53, %c7, %c0_54] : memref<8x8x16xf32, #tpu.memory_space<vmem>>, vector<8x1x16xf32>
    %79 = vector.shape_cast %78 : vector<8x1x16xf32> to vector<8x16xf32>
    %cst_55 = arith.constant dense<0.000000e+00> : vector<8x128xf32>
    %80 = tpu.matmul %79, %0, %cst_55 {dimension_numbers = #tpu.dot_dimension_numbers<[1], [0], [0], [1], [0, 0, 1, 1], [], []>, precision = #tpu.contract_precision<fp32>} : vector<8x16xf32>, vector<16x128xf32>, vector<8x128xf32> -> vector<8x128xf32>
    %81 = vector.broadcast %1 : vector<1x128xf32> to vector<8x128xf32>
    %82 = arith.addf %80, %81 : vector<8x128xf32>
    %cst_56 = arith.constant dense<0.000000e+00> : vector<8x128xf32>
    %83 = tpu.matmul %74, %2, %cst_56 {dimension_numbers = #tpu.dot_dimension_numbers<[1], [0], [0], [1], [0, 0, 1, 1], [], []>, precision = #tpu.contract_precision<fp32>} : vector<8x128xf32>, vector<128x128xf32>, vector<8x128xf32> -> vector<8x128xf32>
    %84 = arith.addf %82, %83 : vector<8x128xf32>
    %85 = math.tanh %84 : vector<8x128xf32>
    %c7_57 = arith.constant 7 : index
    %c0_58 = arith.constant 0 : index
    %c0_59 = arith.constant 0 : index
    %86 = vector.load %arg6[%c7_57, %c0_58, %c0_59] : memref<8x8x128xf32, #tpu.memory_space<vmem>>, vector<1x8x128xf32>
    %87 = vector.shape_cast %86 : vector<1x8x128xf32> to vector<8x128xf32>
    %88 = vector.shape_cast %85 : vector<8x128xf32> to vector<1x8x128xf32>
    tpu.vector_store %arg6[%c7_57, %c0_58, %c0_59], %88 {strides = array<i32>} : memref<8x8x128xf32, #tpu.memory_space<vmem>>, vector<1x8x128xf32>,
    %c0_60 = arith.constant 0 : index
    %c0_61 = arith.constant 0 : index
    %89 = vector.load %arg4[%c0_60, %c0_61] : memref<128x128xf32, #tpu.memory_space<vmem>>, vector<128x128xf32>
    %cst_62 = arith.constant dense<0.000000e+00> : vector<8x128xf32>
    %90 = tpu.matmul %85, %89, %cst_62 {dimension_numbers = #tpu.dot_dimension_numbers<[1], [0], [0], [1], [0, 0, 1, 1], [], []>, precision = #tpu.contract_precision<fp32>} : vector<8x128xf32>, vector<128x128xf32>, vector<8x128xf32> -> vector<8x128xf32>
    %c0_63 = arith.constant 0 : index
    %c0_64 = arith.constant 0 : index
    %91 = vector.load %arg5[%c0_63, %c0_64] : memref<1x128xf32, #tpu.memory_space<vmem>>, vector<1x128xf32>
    %92 = vector.broadcast %91 : vector<1x128xf32> to vector<8x128xf32>
    %93 = arith.addf %90, %92 : vector<8x128xf32>
    %c0_65 = arith.constant 0 : index
    %c0_66 = arith.constant 0 : index
    %94 = vector.load %arg7[%c0_65, %c0_66] : memref<8x128xf32, #tpu.memory_space<vmem>>, vector<8x128xf32>
    tpu.vector_store %arg7[%c0_65, %c0_66], %93 {strides = array<i32>} : memref<8x128xf32, #tpu.memory_space<vmem>>, vector<8x128xf32>,
    return
  }
}

</mosaic_0001>

<llo_original>
// kernel: rnn_forward_decode.1
$region0: #{rnn_forward_decode.1}
  #allocation0 [shape = 'u32[]', space=smem, size = 0x4, offset = 0x4, fixed_abs, tag = 'smem constant byte address 0x4 - core index']
  #allocation1 [shape = 'u32[144,128]{1,0:T(1,128)}', space=vmem, size = 0x12000, scoped, tag = 'internal scratch']
  %s0 = inlined_call_operand.vmem [shape: f32[8,8,16], index: 0, kind: input, shape index: {}]
  %s1 = inlined_call_operand.vmem [shape: f32[16,128], index: 1, kind: input, shape index: {}]
  %s2 = inlined_call_operand.vmem [shape: f32[1,128], index: 2, kind: input, shape index: {}]
  %s3 = inlined_call_operand.vmem [shape: f32[128,128], index: 3, kind: input, shape index: {}]
  %s4 = inlined_call_operand.vmem [shape: f32[128,128], index: 4, kind: input, shape index: {}]
  %s5 = inlined_call_operand.vmem [shape: f32[1,128], index: 5, kind: input, shape index: {}]
  %s6 = inlined_call_operand.hbm [shape: f32[8,8,128], index: 6, kind: output, shape index: {0}]
  %s7 = inlined_call_operand.hbm [shape: f32[8,128], index: 7, kind: output, shape index: {1}]
  %8 = xla_tuple %s6, %s7
  %s9 = sld [smem:[#allocation0]]
  $region42: #{rnn_forward_decode.1} parent=0
    _
  %s11 = ssub.s32 1, %s9
  %s12 = scalar_select 0, %s11, %s9
  $region1: #{rnn_forward_decode.1} parent=0
    #allocation2 [shape = 'u8[32768]{0}', space=vmem, size = 0x8000, scoped, tag = 'output window, operand 0, single buffered']
    #allocation3 [shape = 's32[1]{0}', space=sflag, size = 0x4, scoped, tag = 'scoped memory for rnn_forward_decode.1']
    #allocation4 [shape = 'u8[4096]{0}', space=vmem, size = 0x1000, scoped, tag = 'output window, operand 1, single buffered']
    #allocation5 [shape = 's32[1]{0}', space=sflag, size = 0x4, scoped, tag = 'scoped memory for rnn_forward_decode.1']
    %13 = vsyncpa [#allocation3], 0
    %14 = vsyncpa [#allocation5], 0
    // Predicated region
    $region2: #{rnn_forward_decode.1} parent=1 // pred_check
      _
    $region3: #{rnn_forward_decode.1} parent=1 // pred_check_branch
      %16 = sbr.rel (0) target = $region5
    $region4: #{rnn_forward_decode.1} parent=1 // pred_region
      _
    $region5: #{rnn_forward_decode.1} parent=1 // pred_fallthru
      _
    // Predicated region
    $region6: #{rnn_forward_decode.1} parent=1 // pred_check
      _
    $region7: #{rnn_forward_decode.1} parent=1 // pred_check_branch
      %18 = sbr.rel (0) target = $region9
    $region8: #{rnn_forward_decode.1} parent=1 // pred_region
      _
    $region9: #{rnn_forward_decode.1} parent=1 // pred_fallthru
      _
    // Predicated region
    $region10: #{rnn_forward_decode.1} parent=1 // pred_check
      _
    $region11: #{rnn_forward_decode.1} parent=1 // pred_check_branch
      %20 = sbr.rel (0) target = $region13
    $region12: #{rnn_forward_decode.1} parent=1 // pred_region
      _
    $region13: #{rnn_forward_decode.1} parent=1 // pred_fallthru
      _
    // Predicated region
    $region14: #{rnn_forward_decode.1} parent=1 // pred_check
      _
    $region15: #{rnn_forward_decode.1} parent=1 // pred_check_branch
      %22 = sbr.rel (0) target = $region17
    $region16: #{rnn_forward_decode.1} parent=1 // pred_region
      _
    $region17: #{rnn_forward_decode.1} parent=1 // pred_fallthru
      _
    // Predicated region
    $region18: #{rnn_forward_decode.1} parent=1 // pred_check
      _
    $region19: #{rnn_forward_decode.1} parent=1 // pred_check_branch
      %24 = sbr.rel (0) target = $region21
    $region20: #{rnn_forward_decode.1} parent=1 // pred_region
      _
    $region21: #{rnn_forward_decode.1} parent=1 // pred_fallthru
      _
    // Predicated region
    $region22: #{rnn_forward_decode.1} parent=1 // pred_check
      _
    $region23: #{rnn_forward_decode.1} parent=1 // pred_check_branch
      %26 = sbr.rel (0) target = $region25
    $region24: #{rnn_forward_decode.1} parent=1 // pred_region
      _
    $region25: #{rnn_forward_decode.1} parent=1 // pred_fallthru
      _
    %v27 = vld [vmem:[%s1] sm:$0xff]
    %v28 = vld [vmem:[%s1 + $0x8] sm:$0xff]
    %v29 = vld [vmem:[%s2] sm:$0x1]
    %v30 = vld [vmem:[%s3] sm:$0xff]
    %v31 = vld [vmem:[%s3 + $0x8] sm:$0xff]
    %v32 = vld [vmem:[%s3 + $0x10] sm:$0xff]
    %v33 = vld [vmem:[%s3 + $0x18] sm:$0xff]
    %v34 = vld [vmem:[%s3 + $0x20] sm:$0xff]
    %v35 = vld [vmem:[%s3 + $0x28] sm:$0xff]
    %v36 = vld [vmem:[%s3 + $0x30] sm:$0xff]
    %v37 = vld [vmem:[%s3 + $0x38] sm:$0xff]
    %v38 = vld [vmem:[%s3 + $0x40] sm:$0xff]
    %v39 = vld [vmem:[%s3 + $0x48] sm:$0xff]
    %v40 = vld [vmem:[%s3 + $0x50] sm:$0xff]
    %v41 = vld [vmem:[%s3 + $0x58] sm:$0xff]
    %v42 = vld [vmem:[%s3 + $0x60] sm:$0xff]
    %v43 = vld [vmem:[%s3 + $0x68] sm:$0xff]
    %v44 = vld [vmem:[%s3 + $0x70] sm:$0xff]
    %v45 = vld [vmem:[%s3 + $0x78] sm:$0xff]
    %v46 = vld [vmem:[%s0] sm:$0x1]
    %v47 = vld [vmem:[%s0 + $0x8] sm:$0x1]
    %v48 = vld [vmem:[%s0 + $0x10] sm:$0x1]
    %v49 = vld [vmem:[%s0 + $0x18] sm:$0x1]
    %v50 = vld [vmem:[%s0 + $0x20] sm:$0x1]
    %v51 = vld [vmem:[%s0 + $0x28] sm:$0x1]
    %v52 = vld [vmem:[%s0 + $0x30] sm:$0x1]
    %v53 = vld [vmem:[%s0 + $0x38] sm:$0x1]
    %v55 = vlaneseq
    %v56 = vshrl.u32 %v55, 7
    %v57 = vsub.s32 0, %v56
    %v58 = vrot.slane %v29, %v57
    %v68 = vrot.slane %v47, 7
    %vm69 = vcmask 1041409
    %v70 = vsel %vm69, %v68, %v46
    %v71 = vrot.slane %v48, 6
    %vm72 = vcmask 1042434
    %v73 = vsel %vm72, %v71, %v70
    %v74 = vrot.slane %v49, 5
    %vm75 = vcmask 1043459
    %v76 = vsel %vm75, %v74, %v73
    %v77 = vrot.slane %v50, 4
    %vm78 = vcmask 1044484
    %v79 = vsel %vm78, %v77, %v76
    %v80 = vrot.slane %v51, 3
    %vm81 = vcmask 1045509
    %v82 = vsel %vm81, %v80, %v79
    %v83 = vrot.slane %v52, 2
    %vm84 = vcmask 1046534
    %v85 = vsel %vm84, %v83, %v82
    %v86 = vrot.slane %v53, 1
    %vm87 = vcmask 1047559
    %v88 = vsel %vm87, %v86, %v85
    %vm89 = vcmask 130048
    %v90 = vsel %vm89, %v88, 0
    %92 = vmatprep.subr.mxu0 0.0
    %93 = vmatpush1.msra.mxu0 0.0
    %94 = vmatprep.subr.mxu0 0.0
    %95 = vmatpush1.msra.mxu0 0.0
    %96 = vmatprep.subr.mxu0 0.0
    %97 = vmatpush1.msra.mxu0 0.0
    %98 = vmatprep.subr.mxu0 0.0
    %99 = vmatpush1.msra.mxu0 0.0
    %100 = vmatprep.subr.mxu0 0.0
    %101 = vmatpush1.msra.mxu0 0.0
    %102 = vmatprep.subr.mxu0 0.0
    %103 = vmatpush1.msra.mxu0 0.0
    %104 = vmatprep.subr.mxu0 0.0
    %105 = vmatpush1.msra.mxu0 0.0
    %106 = vmatprep.subr.mxu0 0.0
    %107 = vmatpush1.msra.mxu0 0.0
    %108 = vmatprep.subr.mxu0 0.0
    %109 = vmatpush1.msra.mxu0 0.0
    %110 = vmatprep.subr.mxu0 0.0
    %111 = vmatpush1.msra.mxu0 0.0
    %112 = vmatprep.subr.mxu0 0.0
    %113 = vmatpush1.msra.mxu0 0.0
    %114 = vmatprep.subr.mxu0 0.0
    %115 = vmatpush1.msra.mxu0 0.0
    %116 = vmatprep.subr.mxu0 0.0
    %117 = vmatpush1.msra.mxu0 0.0
    %118 = vmatprep.subr.mxu0 0.0
    %119 = vmatpush1.msra.mxu0 0.0
    %120 = vmatprep.subr.mxu0 0.0
    %v121 = vand.u32 %v28, 4294901760
    %122 = vmatpush1.msra.mxu0 %v121
    %123 = vmatprep.subr.mxu0 0.0
    %v124 = vand.u32 %v27, 4294901760
    %125 = vmatpush1.msra.mxu0 %v124
    %126 = vmatprep.subr.mxu0 0.0
    %127 = vmatpush2.msra.mxu0 0.0
    %128 = vmatprep.subr.mxu0 0.0
    %129 = vmatpush2.msra.mxu0 0.0
    %130 = vmatprep.subr.mxu0 0.0
    %131 = vmatpush2.msra.mxu0 0.0
    %132 = vmatprep.subr.mxu0 0.0
    %133 = vmatpush2.msra.mxu0 0.0
    %134 = vmatprep.subr.mxu0 0.0
    %135 = vmatpush2.msra.mxu0 0.0
    %136 = vmatprep.subr.mxu0 0.0
    %137 = vmatpush2.msra.mxu0 0.0
    %138 = vmatprep.subr.mxu0 0.0
    %139 = vmatpush2.msra.mxu0 0.0
    %140 = vmatprep.subr.mxu0 0.0
    %141 = vmatpush2.msra.mxu0 0.0
    %142 = vmatprep.subr.mxu0 0.0
    %143 = vmatpush2.msra.mxu0 0.0
    %144 = vmatprep.subr.mxu0 0.0
    %145 = vmatpush2.msra.mxu0 0.0
    %146 = vmatprep.subr.mxu0 0.0
    %147 = vmatpush2.msra.mxu0 0.0
    %148 = vmatprep.subr.mxu0 0.0
    %149 = vmatpush2.msra.mxu0 0.0
    %150 = vmatprep.subr.mxu0 0.0
    %151 = vmatpush2.msra.mxu0 0.0
    %152 = vmatprep.subr.mxu0 0.0
    %153 = vmatpush2.msra.mxu0 0.0
    %154 = vmatprep.subr.mxu0 0.0
    %155 = vmatpush2.msra.mxu0 0.0
    %156 = vmatprep.subr.mxu0 0.0
    %157 = vmatpush2.msra.mxu0 0.0
    %158 = vmatprep.mubr.f32.mxu0 0.0
    %v159 = vand.u32 %v90, 4294901760
    %v160 = vsub.f32 %v90, %v159
    %v161 = vand.u32 %v160, 4294901760
    %v162 = vsub.f32 %v160, %v161
    %v163 = vand.u32 %v162, 4294901760
    %164 = vmatmul.mubr.f32.gmra.mxu0 %v163
    %v165 = vpop.f32.mrf.mxu0
    %v166 = vadd.f32 %v58, %v165
    %v167 = vpop.f32.mrf.mxu0
    %168 = vdwg.mxu0
    %169 = vmatprep.subr.mxu0 0.0
    %170 = vmatpush1.msra.mxu0 0.0
    %171 = vmatprep.subr.mxu0 0.0
    %172 = vmatpush1.msra.mxu0 0.0
    %173 = vmatprep.subr.mxu0 0.0
    %174 = vmatpush1.msra.mxu0 0.0
    %175 = vmatprep.subr.mxu0 0.0
    %176 = vmatpush1.msra.mxu0 0.0
    %177 = vmatprep.subr.mxu0 0.0
    %178 = vmatpush1.msra.mxu0 0.0
    %179 = vmatprep.subr.mxu0 0.0
    %180 = vmatpush1.msra.mxu0 0.0
    %181 = vmatprep.subr.mxu0 0.0
    %182 = vmatpush1.msra.mxu0 0.0
    %183 = vmatprep.subr.mxu0 0.0
    %184 = vmatpush1.msra.mxu0 0.0
    %185 = vmatprep.subr.mxu0 0.0
    %186 = vmatpush1.msra.mxu0 0.0
    %187 = vmatprep.subr.mxu0 0.0
    %188 = vmatpush1.msra.mxu0 0.0
    %189 = vmatprep.subr.mxu0 0.0
    %190 = vmatpush1.msra.mxu0 0.0
    %191 = vmatprep.subr.mxu0 0.0
    %192 = vmatpush1.msra.mxu0 0.0
    %193 = vmatprep.subr.mxu0 0.0
    %194 = vmatpush1.msra.mxu0 0.0
    %195 = vmatprep.subr.mxu0 0.0
    %196 = vmatpush1.msra.mxu0 0.0
    %197 = vmatprep.subr.mxu0 0.0
    %v198 = vand.u32 %v28, 4294901760
    %v199 = vsub.f32 %v28, %v198
    %v200 = vand.u32 %v199, 4294901760
    %v201 = vsub.f32 %v199, %v200
    %v202 = vand.u32 %v201, 4294901760
    %203 = vmatpush1.msra.mxu0 %v202
    %204 = vmatprep.subr.mxu0 0.0
    %v205 = vand.u32 %v27, 4294901760
    %v206 = vsub.f32 %v27, %v205
    %v207 = vand.u32 %v206, 4294901760
    %v208 = vsub.f32 %v206, %v207
    %v209 = vand.u32 %v208, 4294901760
    %210 = vmatpush1.msra.mxu0 %v209
    %211 = vmatprep.subr.mxu0 0.0
    %212 = vmatpush2.msra.mxu0 0.0
    %213 = vmatprep.subr.mxu0 0.0
    %214 = vmatpush2.msra.mxu0 0.0
    %215 = vmatprep.subr.mxu0 0.0
    %216 = vmatpush2.msra.mxu0 0.0
    %217 = vmatprep.subr.mxu0 0.0
    %218 = vmatpush2.msra.mxu0 0.0
    %219 = vmatprep.subr.mxu0 0.0
    %220 = vmatpush2.msra.mxu0 0.0
    %221 = vmatprep.subr.mxu0 0.0
    %222 = vmatpush2.msra.mxu0 0.0
    %223 = vmatprep.subr.mxu0 0.0
    %224 = vmatpush2.msra.mxu0 0.0
    %225 = vmatprep.subr.mxu0 0.0
    %226 = vmatpush2.msra.mxu0 0.0
    %227 = vmatprep.subr.mxu0 0.0
    %228 = vmatpush2.msra.mxu0 0.0
    %229 = vmatprep.subr.mxu0 0.0
    %230 = vmatpush2.msra.mxu0 0.0
    %231 = vmatprep.subr.mxu0 0.0
    %232 = vmatpush2.msra.mxu0 0.0
    %233 = vmatprep.subr.mxu0 0.0
    %234 = vmatpush2.msra.mxu0 0.0
    %235 = vmatprep.subr.mxu0 0.0
    %236 = vmatpush2.msra.mxu0 0.0
    %237 = vmatprep.subr.mxu0 0.0
    %238 = vmatpush2.msra.mxu0 0.0
    %239 = vmatprep.subr.mxu0 0.0
    %240 = vmatpush2.msra.mxu0 0.0
    %241 = vmatprep.subr.mxu0 0.0
    %242 = vmatpush2.msra.mxu0 0.0
    %243 = vmatprep.mubr.f32.mxu0 0.0
    %v244 = vand.u32 %v90, 4294901760
    %245 = vmatmul.mubr.f32.gmra.mxu0 %v244
    %v246 = vpop.f32.mrf.mxu0
    %v247 = vadd.f32 %v166, %v246
    %v248 = vpop.f32.mrf.mxu0
    %249 = vdwg.mxu0
    %250 = vmatprep.subr.mxu0 0.0
    %251 = vmatpush1.msra.mxu0 0.0
    %252 = vmatprep.subr.mxu0 0.0
    %253 = vmatpush1.msra.mxu0 0.0
    %254 = vmatprep.subr.mxu0 0.0
    %255 = vmatpush1.msra.mxu0 0.0
    %256 = vmatprep.subr.mxu0 0.0
    %257 = vmatpush1.msra.mxu0 0.0
    %258 = vmatprep.subr.mxu0 0.0
    %259 = vmatpush1.msra.mxu0 0.0
    %260 = vmatprep.subr.mxu0 0.0
    %261 = vmatpush1.msra.mxu0 0.0
    %262 = vmatprep.subr.mxu0 0.0
    %263 = vmatpush1.msra.mxu0 0.0
    %264 = vmatprep.subr.mxu0 0.0
    %265 = vmatpush1.msra.mxu0 0.0
    %266 = vmatprep.subr.mxu0 0.0
    %267 = vmatpush1.msra.mxu0 0.0
    %268 = vmatprep.subr.mxu0 0.0
    %269 = vmatpush1.msra.mxu0 0.0
    %270 = vmatprep.subr.mxu0 0.0
    %271 = vmatpush1.msra.mxu0 0.0
    %272 = vmatprep.subr.mxu0 0.0
    %273 = vmatpush1.msra.mxu0 0.0
    %274 = vmatprep.subr.mxu0 0.0
    %275 = vmatpush1.msra.mxu0 0.0
    %276 = vmatprep.subr.mxu0 0.0
    %277 = vmatpush1.msra.mxu0 0.0
    %278 = vmatprep.subr.mxu0 0.0
    %v279 = vand.u32 %v28, 4294901760
    %v280 = vsub.f32 %v28, %v279
    %281 = vmatpush1.msra.mxu0 %v280
    %282 = vmatprep.subr.mxu0 0.0
    %v283 = vand.u32 %v27, 4294901760
    %v284 = vsub.f32 %v27, %v283
    %285 = vmatpush1.msra.mxu0 %v284
    %286 = vmatprep.subr.mxu0 0.0
    %287 = vmatpush2.msra.mxu0 0.0
    %288 = vmatprep.subr.mxu0 0.0
    %289 = vmatpush2.msra.mxu0 0.0
    %290 = vmatprep.subr.mxu0 0.0
    %291 = vmatpush2.msra.mxu0 0.0
    %292 = vmatprep.subr.mxu0 0.0
    %293 = vmatpush2.msra.mxu0 0.0
    %294 = vmatprep.subr.mxu0 0.0
    %295 = vmatpush2.msra.mxu0 0.0
    %296 = vmatprep.subr.mxu0 0.0
    %297 = vmatpush2.msra.mxu0 0.0
    %298 = vmatprep.subr.mxu0 0.0
    %299 = vmatpush2.msra.mxu0 0.0
    %300 = vmatprep.subr.mxu0 0.0
    %301 = vmatpush2.msra.mxu0 0.0
    %302 = vmatprep.subr.mxu0 0.0
    %303 = vmatpush2.msra.mxu0 0.0
    %304 = vmatprep.subr.mxu0 0.0
    %305 = vmatpush2.msra.mxu0 0.0
    %306 = vmatprep.subr.mxu0 0.0
    %307 = vmatpush2.msra.mxu0 0.0
    %308 = vmatprep.subr.mxu0 0.0
    %309 = vmatpush2.msra.mxu0 0.0
    %310 = vmatprep.subr.mxu0 0.0
    %311 = vmatpush2.msra.mxu0 0.0
    %312 = vmatprep.subr.mxu0 0.0
    %313 = vmatpush2.msra.mxu0 0.0
    %314 = vmatprep.subr.mxu0 0.0
    %315 = vmatpush2.msra.mxu0 0.0
    %316 = vmatprep.subr.mxu0 0.0
    %317 = vmatpush2.msra.mxu0 0.0
    %318 = vmatprep.mubr.f32.mxu0 0.0
    %v319 = vand.u32 %v90, 4294901760
    %v320 = vsub.f32 %v90, %v319
    %321 = vmatmul.mubr.f32.gmra.mxu0 %v320
    %v322 = vpop.f32.mrf.mxu0
    %v323 = vadd.f32 %v247, %v322
    %v324 = vpop.f32.mrf.mxu0
    %325 = vdwg.mxu0
    %326 = vmatprep.subr.mxu0 0.0
    %327 = vmatpush1.msra.mxu0 0.0
    %328 = vmatprep.subr.mxu0 0.0
    %329 = vmatpush1.msra.mxu0 0.0
    %330 = vmatprep.subr.mxu0 0.0
    %331 = vmatpush1.msra.mxu0 0.0
    %332 = vmatprep.subr.mxu0 0.0
    %333 = vmatpush1.msra.mxu0 0.0
    %334 = vmatprep.subr.mxu0 0.0
    %335 = vmatpush1.msra.mxu0 0.0
    %336 = vmatprep.subr.mxu0 0.0
    %337 = vmatpush1.msra.mxu0 0.0
    %338 = vmatprep.subr.mxu0 0.0
    %339 = vmatpush1.msra.mxu0 0.0
    %340 = vmatprep.subr.mxu0 0.0
    %341 = vmatpush1.msra.mxu0 0.0
    %342 = vmatprep.subr.mxu0 0.0
    %343 = vmatpush1.msra.mxu0 0.0
    %344 = vmatprep.subr.mxu0 0.0
    %345 = vmatpush1.msra.mxu0 0.0
    %346 = vmatprep.subr.mxu0 0.0
    %347 = vmatpush1.msra.mxu0 0.0
    %348 = vmatprep.subr.mxu0 0.0
    %349 = vmatpush1.msra.mxu0 0.0
    %350 = vmatprep.subr.mxu0 0.0
    %351 = vmatpush1.msra.mxu0 0.0
    %352 = vmatprep.subr.mxu0 0.0
    %353 = vmatpush1.msra.mxu0 0.0
    %354 = vmatprep.subr.mxu0 0.0
    %v355 = vand.u32 %v28, 4294901760
    %356 = vmatpush1.msra.mxu0 %v355
    %357 = vmatprep.subr.mxu0 0.0
    %v358 = vand.u32 %v27, 4294901760
    %359 = vmatpush1.msra.mxu0 %v358
    %360 = vmatprep.subr.mxu0 0.0
    %361 = vmatpush2.msra.mxu0 0.0
    %362 = vmatprep.subr.mxu0 0.0
    %363 = vmatpush2.msra.mxu0 0.0
    %364 = vmatprep.subr.mxu0 0.0
    %365 = vmatpush2.msra.mxu0 0.0
    %366 = vmatprep.subr.mxu0 0.0
    %367 = vmatpush2.msra.mxu0 0.0
    %368 = vmatprep.subr.mxu0 0.0
    %369 = vmatpush2.msra.mxu0 0.0
    %370 = vmatprep.subr.mxu0 0.0
    %371 = vmatpush2.msra.mxu0 0.0
    %372 = vmatprep.subr.mxu0 0.0
    %373 = vmatpush2.msra.mxu0 0.0
    %374 = vmatprep.subr.mxu0 0.0
    %375 = vmatpush2.msra.mxu0 0.0
    %376 = vmatprep.subr.mxu0 0.0
    %377 = vmatpush2.msra.mxu0 0.0
    %378 = vmatprep.subr.mxu0 0.0
    %379 = vmatpush2.msra.mxu0 0.0
    %380 = vmatprep.subr.mxu0 0.0
    %381 = vmatpush2.msra.mxu0 0.0
    %382 = vmatprep.subr.mxu0 0.0
    %383 = vmatpush2.msra.mxu0 0.0
    %384 = vmatprep.subr.mxu0 0.0
    %385 = vmatpush2.msra.mxu0 0.0
    %386 = vmatprep.subr.mxu0 0.0
    %387 = vmatpush2.msra.mxu0 0.0
    %388 = vmatprep.subr.mxu0 0.0
    %389 = vmatpush2.msra.mxu0 0.0
    %390 = vmatprep.subr.mxu0 0.0
    %391 = vmatpush2.msra.mxu0 0.0
    %392 = vmatprep.mubr.f32.mxu0 0.0
    %v393 = vand.u32 %v90, 4294901760
    %v394 = vsub.f32 %v90, %v393
    %v395 = vand.u32 %v394, 4294901760
    %396 = vmatmul.mubr.f32.gmra.mxu0 %v395
    %v397 = vpop.f32.mrf.mxu0
    %v398 = vadd.f32 %v323, %v397
    %v399 = vpop.f32.mrf.mxu0
    %400 = vdwg.mxu0
    %401 = vmatprep.subr.mxu0 0.0
    %402 = vmatpush1.msra.mxu0 0.0
    %403 = vmatprep.subr.mxu0 0.0
    %404 = vmatpush1.msra.mxu0 0.0
    %405 = vmatprep.subr.mxu0 0.0
    %406 = vmatpush1.msra.mxu0 0.0
    %407 = vmatprep.subr.mxu0 0.0
    %408 = vmatpush1.msra.mxu0 0.0
    %409 = vmatprep.subr.mxu0 0.0
    %410 = vmatpush1.msra.mxu0 0.0
    %411 = vmatprep.subr.mxu0 0.0
    %412 = vmatpush1.msra.mxu0 0.0
    %413 = vmatprep.subr.mxu0 0.0
    %414 = vmatpush1.msra.mxu0 0.0
    %415 = vmatprep.subr.mxu0 0.0
    %416 = vmatpush1.msra.mxu0 0.0
    %417 = vmatprep.subr.mxu0 0.0
    %418 = vmatpush1.msra.mxu0 0.0
    %419 = vmatprep.subr.mxu0 0.0
    %420 = vmatpush1.msra.mxu0 0.0
    %421 = vmatprep.subr.mxu0 0.0
    %422 = vmatpush1.msra.mxu0 0.0
    %423 = vmatprep.subr.mxu0 0.0
    %424 = vmatpush1.msra.mxu0 0.0
    %425 = vmatprep.subr.mxu0 0.0
    %426 = vmatpush1.msra.mxu0 0.0
    %427 = vmatprep.subr.mxu0 0.0
    %428 = vmatpush1.msra.mxu0 0.0
    %429 = vmatprep.subr.mxu0 0.0
    %v430 = vand.u32 %v28, 4294901760
    %v431 = vsub.f32 %v28, %v430
    %v432 = vand.u32 %v431, 4294901760
    %433 = vmatpush1.msra.mxu0 %v432
    %434 = vmatprep.subr.mxu0 0.0
    %v435 = vand.u32 %v27, 4294901760
    %v436 = vsub.f32 %v27, %v435
    %v437 = vand.u32 %v436, 4294901760
    %438 = vmatpush1.msra.mxu0 %v437
    %439 = vmatprep.subr.mxu0 0.0
    %440 = vmatpush2.msra.mxu0 0.0
    %441 = vmatprep.subr.mxu0 0.0
    %442 = vmatpush2.msra.mxu0 0.0
    %443 = vmatprep.subr.mxu0 0.0
    %444 = vmatpush2.msra.mxu0 0.0
    %445 = vmatprep.subr.mxu0 0.0
    %446 = vmatpush2.msra.mxu0 0.0
    %447 = vmatprep.subr.mxu0 0.0
    %448 = vmatpush2.msra.mxu0 0.0
    %449 = vmatprep.subr.mxu0 0.0
    %450 = vmatpush2.msra.mxu0 0.0
    %451 = vmatprep.subr.mxu0 0.0
    %452 = vmatpush2.msra.mxu0 0.0
    %453 = vmatprep.subr.mxu0 0.0
    %454 = vmatpush2.msra.mxu0 0.0
    %455 = vmatprep.subr.mxu0 0.0
    %456 = vmatpush2.msra.mxu0 0.0
    %457 = vmatprep.subr.mxu0 0.0
    %458 = vmatpush2.msra.mxu0 0.0
    %459 = vmatprep.subr.mxu0 0.0
    %460 = vmatpush2.msra.mxu0 0.0
    %461 = vmatprep.subr.mxu0 0.0
    %462 = vmatpush2.msra.mxu0 0.0
    %463 = vmatprep.subr.mxu0 0.0
    %464 = vmatpush2.msra.mxu0 0.0
    %465 = vmatprep.subr.mxu0 0.0
    %466 = vmatpush2.msra.mxu0 0.0
    %467 = vmatprep.subr.mxu0 0.0
    %468 = vmatpush2.msra.mxu0 0.0
    %469 = vmatprep.subr.mxu0 0.0
    %470 = vmatpush2.msra.mxu0 0.0
    %471 = vmatprep.mubr.f32.mxu0 0.0
    %v472 = vand.u32 %v90, 4294901760
    %473 = vmatmul.mubr.f32.gmra.mxu0 %v472
    %v474 = vpop.f32.mrf.mxu0
    %v475 = vadd.f32 %v398, %v474
    %v476 = vpop.f32.mrf.mxu0
    %477 = vdwg.mxu0
    %478 = vmatprep.subr.mxu0 0.0
    %479 = vmatpush1.msra.mxu0 0.0
    %480 = vmatprep.subr.mxu0 0.0
    %481 = vmatpush1.msra.mxu0 0.0
    %482 = vmatprep.subr.mxu0 0.0
    %483 = vmatpush1.msra.mxu0 0.0
    %484 = vmatprep.subr.mxu0 0.0
    %485 = vmatpush1.msra.mxu0 0.0
    %486 = vmatprep.subr.mxu0 0.0
    %487 = vmatpush1.msra.mxu0 0.0
    %488 = vmatprep.subr.mxu0 0.0
    %489 = vmatpush1.msra.mxu0 0.0
    %490 = vmatprep.subr.mxu0 0.0
    %491 = vmatpush1.msra.mxu0 0.0
    %492 = vmatprep.subr.mxu0 0.0
    %493 = vmatpush1.msra.mxu0 0.0
    %494 = vmatprep.subr.mxu0 0.0
    %495 = vmatpush1.msra.mxu0 0.0
    %496 = vmatprep.subr.mxu0 0.0
    %497 = vmatpush1.msra.mxu0 0.0
    %498 = vmatprep.subr.mxu0 0.0
    %499 = vmatpush1.msra.mxu0 0.0
    %500 = vmatprep.subr.mxu0 0.0
    %501 = vmatpush1.msra.mxu0 0.0
    %502 = vmatprep.subr.mxu0 0.0
    %503 = vmatpush1.msra.mxu0 0.0
    %504 = vmatprep.subr.mxu0 0.0
    %505 = vmatpush1.msra.mxu0 0.0
    %506 = vmatprep.subr.mxu0 0.0
    %v507 = vand.u32 %v28, 4294901760
    %508 = vmatpush1.msra.mxu0 %v507
    %509 = vmatprep.subr.mxu0 0.0
    %v510 = vand.u32 %v27, 4294901760
    %511 = vmatpush1.msra.mxu0 %v510
    %512 = vmatprep.subr.mxu0 0.0
    %513 = vmatpush2.msra.mxu0 0.0
    %514 = vmatprep.subr.mxu0 0.0
    %515 = vmatpush2.msra.mxu0 0.0
    %516 = vmatprep.subr.mxu0 0.0
    %517 = vmatpush2.msra.mxu0 0.0
    %518 = vmatprep.subr.mxu0 0.0
    %519 = vmatpush2.msra.mxu0 0.0
    %520 = vmatprep.subr.mxu0 0.0
    %521 = vmatpush2.msra.mxu0 0.0
    %522 = vmatprep.subr.mxu0 0.0
    %523 = vmatpush2.msra.mxu0 0.0
    %524 = vmatprep.subr.mxu0 0.0
    %525 = vmatpush2.msra.mxu0 0.0
    %526 = vmatprep.subr.mxu0 0.0
    %527 = vmatpush2.msra.mxu0 0.0
    %528 = vmatprep.subr.mxu0 0.0
    %529 = vmatpush2.msra.mxu0 0.0
    %530 = vmatprep.subr.mxu0 0.0
    %531 = vmatpush2.msra.mxu0 0.0
    %532 = vmatprep.subr.mxu0 0.0
    %533 = vmatpush2.msra.mxu0 0.0
    %534 = vmatprep.subr.mxu0 0.0
    %535 = vmatpush2.msra.mxu0 0.0
    %536 = vmatprep.subr.mxu0 0.0
    %537 = vmatpush2.msra.mxu0 0.0
    %538 = vmatprep.subr.mxu0 0.0
    %539 = vmatpush2.msra.mxu0 0.0
    %540 = vmatprep.subr.mxu0 0.0
    %541 = vmatpush2.msra.mxu0 0.0
    %542 = vmatprep.subr.mxu0 0.0
    %543 = vmatpush2.msra.mxu0 0.0
    %544 = vmatprep.mubr.f32.mxu0 0.0
    %v545 = vand.u32 %v90, 4294901760
    %546 = vmatmul.mubr.f32.gmra.mxu0 %v545
    %v547 = vpop.f32.mrf.mxu0
    %v548 = vadd.f32 %v475, %v547
    %v549 = vpop.f32.mrf.mxu0
    %550 = vdwg.mxu0
    %v551 = vtanh.pop %v548
    %552 = vst [vmem:[#allocation2] sm:$0xff] %v551
    %v553 = vld [vmem:[%s0 + $0x1] sm:$0x1]
    %v554 = vld [vmem:[%s0 + $0x9] sm:$0x1]
    %v555 = vld [vmem:[%s0 + $0x11] sm:$0x1]
    %v556 = vld [vmem:[%s0 + $0x19] sm:$0x1]
    %v557 = vld [vmem:[%s0 + $0x21] sm:$0x1]
    %v558 = vld [vmem:[%s0 + $0x29] sm:$0x1]
    %v559 = vld [vmem:[%s0 + $0x31] sm:$0x1]
    %v560 = vld [vmem:[%s0 + $0x39] sm:$0x1]
    %v569 = vrot.slane %v554, 7
    %v570 = vsel %vm69, %v569, %v553
    %v571 = vrot.slane %v555, 6
    %v572 = vsel %vm72, %v571, %v570
    %v573 = vrot.slane %v556, 5
    %v574 = vsel %vm75, %v573, %v572
    %v575 = vrot.slane %v557, 4
    %v576 = vsel %vm78, %v575, %v574
    %v577 = vrot.slane %v558, 3
    %v578 = vsel %vm81, %v577, %v576
    %v579 = vrot.slane %v559, 2
    %v580 = vsel %vm84, %v579, %v578
    %v581 = vrot.slane %v560, 1
    %v582 = vsel %vm87, %v581, %v580
    %v583 = vsel %vm89, %v582, 0
    %585 = vmatprep.subr.mxu0 0.0
    %586 = vmatpush1.msra.mxu0 0.0
    %587 = vmatprep.subr.mxu0 0.0
    %588 = vmatpush1.msra.mxu0 0.0
    %589 = vmatprep.subr.mxu0 0.0
    %590 = vmatpush1.msra.mxu0 0.0
    %591 = vmatprep.subr.mxu0 0.0
    %592 = vmatpush1.msra.mxu0 0.0
    %593 = vmatprep.subr.mxu0 0.0
    %594 = vmatpush1.msra.mxu0 0.0
    %595 = vmatprep.subr.mxu0 0.0
    %596 = vmatpush1.msra.mxu0 0.0
    %597 = vmatprep.subr.mxu0 0.0
    %598 = vmatpush1.msra.mxu0 0.0
    %599 = vmatprep.subr.mxu0 0.0
    %600 = vmatpush1.msra.mxu0 0.0
    %601 = vmatprep.subr.mxu0 0.0
    %602 = vmatpush1.msra.mxu0 0.0
    %603 = vmatprep.subr.mxu0 0.0
    %604 = vmatpush1.msra.mxu0 0.0
    %605 = vmatprep.subr.mxu0 0.0
    %606 = vmatpush1.msra.mxu0 0.0
    %607 = vmatprep.subr.mxu0 0.0
    %608 = vmatpush1.msra.mxu0 0.0
    %609 = vmatprep.subr.mxu0 0.0
    %610 = vmatpush1.msra.mxu0 0.0
    %611 = vmatprep.subr.mxu0 0.0
    %612 = vmatpush1.msra.mxu0 0.0
    %613 = vmatprep.subr.mxu0 0.0
    %v614 = vand.u32 %v28, 4294901760
    %615 = vmatpush1.msra.mxu0 %v614
    %616 = vmatprep.subr.mxu0 0.0
    %v617 = vand.u32 %v27, 4294901760
    %618 = vmatpush1.msra.mxu0 %v617
    %619 = vmatprep.subr.mxu0 0.0
    %620 = vmatpush2.msra.mxu0 0.0
    %621 = vmatprep.subr.mxu0 0.0
    %622 = vmatpush2.msra.mxu0 0.0
    %623 = vmatprep.subr.mxu0 0.0
    %624 = vmatpush2.msra.mxu0 0.0
    %625 = vmatprep.subr.mxu0 0.0
    %626 = vmatpush2.msra.mxu0 0.0
    %627 = vmatprep.subr.mxu0 0.0
    %628 = vmatpush2.msra.mxu0 0.0
    %629 = vmatprep.subr.mxu0 0.0
    %630 = vmatpush2.msra.mxu0 0.0
    %631 = vmatprep.subr.mxu0 0.0
    %632 = vmatpush2.msra.mxu0 0.0
    %633 = vmatprep.subr.mxu0 0.0
    %634 = vmatpush2.msra.mxu0 0.0
    %635 = vmatprep.subr.mxu0 0.0
    %636 = vmatpush2.msra.mxu0 0.0
    %637 = vmatprep.subr.mxu0 0.0
    %638 = vmatpush2.msra.mxu0 0.0
    %639 = vmatprep.subr.mxu0 0.0
    %640 = vmatpush2.msra.mxu0 0.0
    %641 = vmatprep.subr.mxu0 0.0
    %642 = vmatpush2.msra.mxu0 0.0
    %643 = vmatprep.subr.mxu0 0.0
    %644 = vmatpush2.msra.mxu0 0.0
    %645 = vmatprep.subr.mxu0 0.0
    %646 = vmatpush2.msra.mxu0 0.0
    %647 = vmatprep.subr.mxu0 0.0
    %648 = vmatpush2.msra.mxu0 0.0
    %649 = vmatprep.subr.mxu0 0.0
    %650 = vmatpush2.msra.mxu0 0.0
    %651 = vmatprep.mubr.f32.mxu0 0.0
    %v652 = vand.u32 %v583, 4294901760
    %v653 = vsub.f32 %v583, %v652
    %v654 = vand.u32 %v653, 4294901760
    %v655 = vsub.f32 %v653, %v654
    %v656 = vand.u32 %v655, 4294901760
    %657 = vmatmul.mubr.f32.gmra.mxu0 %v656
    %v658 = vpop.f32.mrf.mxu0
    %v659 = vadd.f32 %v58, %v658
    %v660 = vpop.f32.mrf.mxu0
    %661 = vdwg.mxu0
    %662 = vmatprep.subr.mxu0 0.0
    %663 = vmatpush1.msra.mxu0 0.0
    %664 = vmatprep.subr.mxu0 0.0
    %665 = vmatpush1.msra.mxu0 0.0
    %666 = vmatprep.subr.mxu0 0.0
    %667 = vmatpush1.msra.mxu0 0.0
    %668 = vmatprep.subr.mxu0 0.0
    %669 = vmatpush1.msra.mxu0 0.0
    %670 = vmatprep.subr.mxu0 0.0
    %671 = vmatpush1.msra.mxu0 0.0
    %672 = vmatprep.subr.mxu0 0.0
    %673 = vmatpush1.msra.mxu0 0.0
    %674 = vmatprep.subr.mxu0 0.0
    %675 = vmatpush1.msra.mxu0 0.0
    %676 = vmatprep.subr.mxu0 0.0
    %677 = vmatpush1.msra.mxu0 0.0
    %678 = vmatprep.subr.mxu0 0.0
    %679 = vmatpush1.msra.mxu0 0.0
    %680 = vmatprep.subr.mxu0 0.0
    %681 = vmatpush1.msra.mxu0 0.0
    %682 = vmatprep.subr.mxu0 0.0
    %683 = vmatpush1.msra.mxu0 0.0
    %684 = vmatprep.subr.mxu0 0.0
    %685 = vmatpush1.msra.mxu0 0.0
    %686 = vmatprep.subr.mxu0 0.0
    %687 = vmatpush1.msra.mxu0 0.0
    %688 = vmatprep.subr.mxu0 0.0
    %689 = vmatpush1.msra.mxu0 0.0
    %690 = vmatprep.subr.mxu0 0.0
    %v691 = vand.u32 %v28, 4294901760
    %v692 = vsub.f32 %v28, %v691
    %v693 = vand.u32 %v692, 4294901760
    %v694 = vsub.f32 %v692, %v693
    %v695 = vand.u32 %v694, 4294901760
    %696 = vmatpush1.msra.mxu0 %v695
    %697 = vmatprep.subr.mxu0 0.0
    %v698 = vand.u32 %v27, 4294901760
    %v699 = vsub.f32 %v27, %v698
    %v700 = vand.u32 %v699, 4294901760
    %v701 = vsub.f32 %v699, %v700
    %v702 = vand.u32 %v701, 4294901760
    %703 = vmatpush1.msra.mxu0 %v702
    %704 = vmatprep.subr.mxu0 0.0
    %705 = vmatpush2.msra.mxu0 0.0
    %706 = vmatprep.subr.mxu0 0.0
    %707 = vmatpush2.msra.mxu0 0.0
    %708 = vmatprep.subr.mxu0 0.0
    %709 = vmatpush2.msra.mxu0 0.0
    %710 = vmatprep.subr.mxu0 0.0
    %711 = vmatpush2.msra.mxu0 0.0
    %712 = vmatprep.subr.mxu0 0.0
    %713 = vmatpush2.msra.mxu0 0.0
    %714 = vmatprep.subr.mxu0 0.0
    %715 = vmatpush2.msra.mxu0 0.0
    %716 = vmatprep.subr.mxu0 0.0
    %717 = vmatpush2.msra.mxu0 0.0
    %718 = vmatprep.subr.mxu0 0.0
    %719 = vmatpush2.msra.mxu0 0.0
    %720 = vmatprep.subr.mxu0 0.0
    %721 = vmatpush2.msra.mxu0 0.0
    %722 = vmatprep.subr.mxu0 0.0
    %723 = vmatpush2.msra.mxu0 0.0
    %724 = vmatprep.subr.mxu0 0.0
    %725 = vmatpush2.msra.mxu0 0.0
    %726 = vmatprep.subr.mxu0 0.0
    %727 = vmatpush2.msra.mxu0 0.0
    %728 = vmatprep.subr.mxu0 0.0
    %729 = vmatpush2.msra.mxu0 0.0
    %730 = vmatprep.subr.mxu0 0.0
    %731 = vmatpush2.msra.mxu0 0.0
    %732 = vmatprep.subr.mxu0 0.0
    %733 = vmatpush2.msra.mxu0 0.0
    %734 = vmatprep.subr.mxu0 0.0
    %735 = vmatpush2.msra.mxu0 0.0
    %736 = vmatprep.mubr.f32.mxu0 0.0
    %v737 = vand.u32 %v583, 4294901760
    %738 = vmatmul.mubr.f32.gmra.mxu0 %v737
    %v739 = vpop.f32.mrf.mxu0
    %v740 = vadd.f32 %v659, %v739
    %v741 = vpop.f32.mrf.mxu0
    %742 = vdwg.mxu0
    %743 = vmatprep.subr.mxu0 0.0
    %744 = vmatpush1.msra.mxu0 0.0
    %745 = vmatprep.subr.mxu0 0.0
    %746 = vmatpush1.msra.mxu0 0.0
    %747 = vmatprep.subr.mxu0 0.0
    %748 = vmatpush1.msra.mxu0 0.0
    %749 = vmatprep.subr.mxu0 0.0
    %750 = vmatpush1.msra.mxu0 0.0
    %751 = vmatprep.subr.mxu0 0.0
    %752 = vmatpush1.msra.mxu0 0.0
    %753 = vmatprep.subr.mxu0 0.0
    %754 = vmatpush1.msra.mxu0 0.0
    %755 = vmatprep.subr.mxu0 0.0
    %756 = vmatpush1.msra.mxu0 0.0
    %757 = vmatprep.subr.mxu0 0.0
    %758 = vmatpush1.msra.mxu0 0.0
    %759 = vmatprep.subr.mxu0 0.0
    %760 = vmatpush1.msra.mxu0 0.0
    %761 = vmatprep.subr.mxu0 0.0
    %762 = vmatpush1.msra.mxu0 0.0
    %763 = vmatprep.subr.mxu0 0.0
    %764 = vmatpush1.msra.mxu0 0.0
    %765 = vmatprep.subr.mxu0 0.0
    %766 = vmatpush1.msra.mxu0 0.0
    %767 = vmatprep.subr.mxu0 0.0
    %768 = vmatpush1.msra.mxu0 0.0
    %769 = vmatprep.subr.mxu0 0.0
    %770 = vmatpush1.msra.mxu0 0.0
    %771 = vmatprep.subr.mxu0 0.0
    %v772 = vand.u32 %v28, 4294901760
    %v773 = vsub.f32 %v28, %v772
    %774 = vmatpush1.msra.mxu0 %v773
    %775 = vmatprep.subr.mxu0 0.0
    %v776 = vand.u32 %v27, 4294901760
    %v777 = vsub.f32 %v27, %v776
    %778 = vmatpush1.msra.mxu0 %v777
    %779 = vmatprep.subr.mxu0 0.0
    %780 = vmatpush2.msra.mxu0 0.0
    %781 = vmatprep.subr.mxu0 0.0
    %782 = vmatpush2.msra.mxu0 0.0
    %783 = vmatprep.subr.mxu0 0.0
    %784 = vmatpush2.msra.mxu0 0.0
    %785 = vmatprep.subr.mxu0 0.0
    %786 = vmatpush2.msra.mxu0 0.0
    %787 = vmatprep.subr.mxu0 0.0
    %788 = vmatpush2.msra.mxu0 0.0
    %789 = vmatprep.subr.mxu0 0.0
    %790 = vmatpush2.msra.mxu0 0.0
    %791 = vmatprep.subr.mxu0 0.0
    %792 = vmatpush2.msra.mxu0 0.0
    %793 = vmatprep.subr.mxu0 0.0
    %794 = vmatpush2.msra.mxu0 0.0
    %795 = vmatprep.subr.mxu0 0.0
    %796 = vmatpush2.msra.mxu0 0.0
    %797 = vmatprep.subr.mxu0 0.0
    %798 = vmatpush2.msra.mxu0 0.0
    %799 = vmatprep.subr.mxu0 0.0
    %800 = vmatpush2.msra.mxu0 0.0
    %801 = vmatprep.subr.mxu0 0.0
    %802 = vmatpush2.msra.mxu0 0.0
    %803 = vmatprep.subr.mxu0 0.0
    %804 = vmatpush2.msra.mxu0 0.0
    %805 = vmatprep.subr.mxu0 0.0
    %806 = vmatpush2.msra.mxu0 0.0
    %807 = vmatprep.subr.mxu0 0.0
    %808 = vmatpush2.msra.mxu0 0.0
    %809 = vmatprep.subr.mxu0 0.0
    %810 = vmatpush2.msra.mxu0 0.0
    %811 = vmatprep.mubr.f32.mxu0 0.0
    %v812 = vand.u32 %v583, 4294901760
    %v813 = vsub.f32 %v583, %v812
    %814 = vmatmul.mubr.f32.gmra.mxu0 %v813
    %v815 = vpop.f32.mrf.mxu0
    %v816 = vadd.f32 %v740, %v815
    %v817 = vpop.f32.mrf.mxu0
    %818 = vdwg.mxu0
    %819 = vmatprep.subr.mxu0 0.0
    %820 = vmatpush1.msra.mxu0 0.0
    %821 = vmatprep.subr.mxu0 0.0
    %822 = vmatpush1.msra.mxu0 0.0
    %823 = vmatprep.subr.mxu0 0.0
    %824 = vmatpush1.msra.mxu0 0.0
    %825 = vmatprep.subr.mxu0 0.0
    %826 = vmatpush1.msra.mxu0 0.0
    %827 = vmatprep.subr.mxu0 0.0
    %828 = vmatpush1.msra.mxu0 0.0
    %829 = vmatprep.subr.mxu0 0.0
    %830 = vmatpush1.msra.mxu0 0.0
    %831 = vmatprep.subr.mxu0 0.0
    %832 = vmatpush1.msra.mxu0 0.0
    %833 = vmatprep.subr.mxu0 0.0
    %834 = vmatpush1.msra.mxu0 0.0
    %835 = vmatprep.subr.mxu0 0.0
    %836 = vmatpush1.msra.mxu0 0.0
    %837 = vmatprep.subr.mxu0 0.0
    %838 = vmatpush1.msra.mxu0 0.0
    %839 = vmatprep.subr.mxu0 0.0
    %840 = vmatpush1.msra.mxu0 0.0
    %841 = vmatprep.subr.mxu0 0.0
    %842 = vmatpush1.msra.mxu0 0.0
    %843 = vmatprep.subr.mxu0 0.0
    %844 = vmatpush1.msra.mxu0 0.0
    %845 = vmatprep.subr.mxu0 0.0
    %846 = vmatpush1.msra.mxu0 0.0
    %847 = vmatprep.subr.mxu0 0.0
    %v848 = vand.u32 %v28, 4294901760
    %849 = vmatpush1.msra.mxu0 %v848
    %850 = vmatprep.subr.mxu0 0.0
    %v851 = vand.u32 %v27, 4294901760
    %852 = vmatpush1.msra.mxu0 %v851
    %853 = vmatprep.subr.mxu0 0.0
    %854 = vmatpush2.msra.mxu0 0.0
    %855 = vmatprep.subr.mxu0 0.0
    %856 = vmatpush2.msra.mxu0 0.0
    %857 = vmatprep.subr.mxu0 0.0
    %858 = vmatpush2.msra.mxu0 0.0
    %859 = vmatprep.subr.mxu0 0.0
    %860 = vmatpush2.msra.mxu0 0.0
    %861 = vmatprep.subr.mxu0 0.0
    %862 = vmatpush2.msra.mxu0 0.0
    %863 = vmatprep.subr.mxu0 0.0
    %864 = vmatpush2.msra.mxu0 0.0
    %865 = vmatprep.subr.mxu0 0.0
    %866 = vmatpush2.msra.mxu0 0.0
    %867 = vmatprep.subr.mxu0 0.0
    %868 = vmatpush2.msra.mxu0 0.0
    %869 = vmatprep.subr.mxu0 0.0
    %870 = vmatpush2.msra.mxu0 0.0
    %871 = vmatprep.subr.mxu0 0.0
    %872 = vmatpush2.msra.mxu0 0.0
    %873 = vmatprep.subr.mxu0 0.0
    %874 = vmatpush2.msra.mxu0 0.0
    %875 = vmatprep.subr.mxu0 0.0
    %876 = vmatpush2.msra.mxu0 0.0
    %877 = vmatprep.subr.mxu0 0.0
    %878 = vmatpush2.msra.mxu0 0.0
    %879 = vmatprep.subr.mxu0 0.0
    %880 = vmatpush2.msra.mxu0 0.0
    %881 = vmatprep.subr.mxu0 0.0
    %882 = vmatpush2.msra.mxu0 0.0
    %883 = vmatprep.subr.mxu0 0.0
    %884 = vmatpush2.msra.mxu0 0.0
    %885 = vmatprep.mubr.f32.mxu0 0.0
    %v886 = vand.u32 %v583, 4294901760
    %v887 = vsub.f32 %v583, %v886
    %v888 = vand.u32 %v887, 4294901760
    %889 = vmatmul.mubr.f32.gmra.mxu0 %v888
    %v890 = vpop.f32.mrf.mxu0
    %v891 = vadd.f32 %v816, %v890
    %v892 = vpop.f32.mrf.mxu0
    %893 = vdwg.mxu0
    %894 = vmatprep.subr.mxu0 0.0
    %895 = vmatpush1.msra.mxu0 0.0
    %896 = vmatprep.subr.mxu0 0.0
    %897 = vmatpush1.msra.mxu0 0.0
    %898 = vmatprep.subr.mxu0 0.0
    %899 = vmatpush1.msra.mxu0 0.0
    %900 = vmatprep.subr.mxu0 0.0
    %901 = vmatpush1.msra.mxu0 0.0
    %902 = vmatprep.subr.mxu0 0.0
    %903 = vmatpush1.msra.mxu0 0.0
    %904 = vmatprep.subr.mxu0 0.0
    %905 = vmatpush1.msra.mxu0 0.0
    %906 = vmatprep.subr.mxu0 0.0
    %907 = vmatpush1.msra.mxu0 0.0
    %908 = vmatprep.subr.mxu0 0.0
    %909 = vmatpush1.msra.mxu0 0.0
    %910 = vmatprep.subr.mxu0 0.0
    %911 = vmatpush1.msra.mxu0 0.0
    %912 = vmatprep.subr.mxu0 0.0
    %913 = vmatpush1.msra.mxu0 0.0
    %914 = vmatprep.subr.mxu0 0.0
    %915 = vmatpush1.msra.mxu0 0.0
    %916 = vmatprep.subr.mxu0 0.0
    %917 = vmatpush1.msra.mxu0 0.0
    %918 = vmatprep.subr.mxu0 0.0
    %919 = vmatpush1.msra.mxu0 0.0
    %920 = vmatprep.subr.mxu0 0.0
    %921 = vmatpush1.msra.mxu0 0.0
    %922 = vmatprep.subr.mxu0 0.0
    %v923 = vand.u32 %v28, 4294901760
    %v924 = vsub.f32 %v28, %v923
    %v925 = vand.u32 %v924, 4294901760
    %926 = vmatpush1.msra.mxu0 %v925
    %927 = vmatprep.subr.mxu0 0.0
    %v928 = vand.u32 %v27, 4294901760
    %v929 = vsub.f32 %v27, %v928
    %v930 = vand.u32 %v929, 4294901760
    %931 = vmatpush1.msra.mxu0 %v930
    %932 = vmatprep.subr.mxu0 0.0
    %933 = vmatpush2.msra.mxu0 0.0
    %934 = vmatprep.subr.mxu0 0.0
    %935 = vmatpush2.msra.mxu0 0.0
    %936 = vmatprep.subr.mxu0 0.0
    %937 = vmatpush2.msra.mxu0 0.0
    %938 = vmatprep.subr.mxu0 0.0
    %939 = vmatpush2.msra.mxu0 0.0
    %940 = vmatprep.subr.mxu0 0.0
    %941 = vmatpush2.msra.mxu0 0.0
    %942 = vmatprep.subr.mxu0 0.0
    %943 = vmatpush2.msra.mxu0 0.0
    %944 = vmatprep.subr.mxu0 0.0
    %945 = vmatpush2.msra.mxu0 0.0
    %946 = vmatprep.subr.mxu0 0.0
    %947 = vmatpush2.msra.mxu0 0.0
    %948 = vmatprep.subr.mxu0 0.0
    %949 = vmatpush2.msra.mxu0 0.0
    %950 = vmatprep.subr.mxu0 0.0
    %951 = vmatpush2.msra.mxu0 0.0
    %952 = vmatprep.subr.mxu0 0.0
    %953 = vmatpush2.msra.mxu0 0.0
    %954 = vmatprep.subr.mxu0 0.0
    %955 = vmatpush2.msra.mxu0 0.0
    %956 = vmatprep.subr.mxu0 0.0
    %957 = vmatpush2.msra.mxu0 0.0
    %958 = vmatprep.subr.mxu0 0.0
    %959 = vmatpush2.msra.mxu0 0.0
    %960 = vmatprep.subr.mxu0 0.0
    %961 = vmatpush2.msra.mxu0 0.0
    %962 = vmatprep.subr.mxu0 0.0
    %963 = vmatpush2.msra.mxu0 0.0
    %964 = vmatprep.mubr.f32.mxu0 0.0
    %v965 = vand.u32 %v583, 4294901760
    %966 = vmatmul.mubr.f32.gmra.mxu0 %v965
    %v967 = vpop.f32.mrf.mxu0
    %v968 = vadd.f32 %v891, %v967
    %v969 = vpop.f32.mrf.mxu0
    %970 = vdwg.mxu0
    %971 = vmatprep.subr.mxu0 0.0
    %972 = vmatpush1.msra.mxu0 0.0
    %973 = vmatprep.subr.mxu0 0.0
    %974 = vmatpush1.msra.mxu0 0.0
    %975 = vmatprep.subr.mxu0 0.0
    %976 = vmatpush1.msra.mxu0 0.0
    %977 = vmatprep.subr.mxu0 0.0
    %978 = vmatpush1.msra.mxu0 0.0
    %979 = vmatprep.subr.mxu0 0.0
    %980 = vmatpush1.msra.mxu0 0.0
    %981 = vmatprep.subr.mxu0 0.0
    %982 = vmatpush1.msra.mxu0 0.0
    %983 = vmatprep.subr.mxu0 0.0
    %984 = vmatpush1.msra.mxu0 0.0
    %985 = vmatprep.subr.mxu0 0.0
    %986 = vmatpush1.msra.mxu0 0.0
    %987 = vmatprep.subr.mxu0 0.0
    %988 = vmatpush1.msra.mxu0 0.0
    %989 = vmatprep.subr.mxu0 0.0
    %990 = vmatpush1.msra.mxu0 0.0
    %991 = vmatprep.subr.mxu0 0.0
    %992 = vmatpush1.msra.mxu0 0.0
    %993 = vmatprep.subr.mxu0 0.0
    %994 = vmatpush1.msra.mxu0 0.0
    %995 = vmatprep.subr.mxu0 0.0
    %996 = vmatpush1.msra.mxu0 0.0
    %997 = vmatprep.subr.mxu0 0.0
    %998 = vmatpush1.msra.mxu0 0.0
    %999 = vmatprep.subr.mxu0 0.0
    %v1000 = vand.u32 %v28, 4294901760
    %1001 = vmatpush1.msra.mxu0 %v1000
    %1002 = vmatprep.subr.mxu0 0.0
    %v1003 = vand.u32 %v27, 4294901760
    %1004 = vmatpush1.msra.mxu0 %v1003
    %1005 = vmatprep.subr.mxu0 0.0
    %1006 = vmatpush2.msra.mxu0 0.0
    %1007 = vmatprep.subr.mxu0 0.0
    %1008 = vmatpush2.msra.mxu0 0.0
    %1009 = vmatprep.subr.mxu0 0.0
    %1010 = vmatpush2.msra.mxu0 0.0
    %1011 = vmatprep.subr.mxu0 0.0
    %1012 = vmatpush2.msra.mxu0 0.0
    %1013 = vmatprep.subr.mxu0 0.0
    %1014 = vmatpush2.msra.mxu0 0.0
    %1015 = vmatprep.subr.mxu0 0.0
    %1016 = vmatpush2.msra.mxu0 0.0
    %1017 = vmatprep.subr.mxu0 0.0
    %1018 = vmatpush2.msra.mxu0 0.0
    %1019 = vmatprep.subr.mxu0 0.0
    %1020 = vmatpush2.msra.mxu0 0.0
    %1021 = vmatprep.subr.mxu0 0.0
    %1022 = vmatpush2.msra.mxu0 0.0
    %1023 = vmatprep.subr.mxu0 0.0
    %1024 = vmatpush2.msra.mxu0 0.0
    %1025 = vmatprep.subr.mxu0 0.0
    %1026 = vmatpush2.msra.mxu0 0.0
    %1027 = vmatprep.subr.mxu0 0.0
    %1028 = vmatpush2.msra.mxu0 0.0
    %1029 = vmatprep.subr.mxu0 0.0
    %1030 = vmatpush2.msra.mxu0 0.0
    %1031 = vmatprep.subr.mxu0 0.0
    %1032 = vmatpush2.msra.mxu0 0.0
    %1033 = vmatprep.subr.mxu0 0.0
    %1034 = vmatpush2.msra.mxu0 0.0
    %1035 = vmatprep.subr.mxu0 0.0
    %1036 = vmatpush2.msra.mxu0 0.0
    %1037 = vmatprep.mubr.f32.mxu0 0.0
    %v1038 = vand.u32 %v583, 4294901760
    %1039 = vmatmul.mubr.f32.gmra.mxu0 %v1038
    %v1040 = vpop.f32.mrf.mxu0
    %v1041 = vadd.f32 %v968, %v1040
    %v1042 = vpop.f32.mrf.mxu0
    %1043 = vdwg.mxu0
    %1044 = vmatprep.subr.mxu0 0.0
    %v1045 = vand.u32 %v45, 4294901760
    %1046 = vmatpush1.msra.mxu0 %v1045
    %1047 = vmatprep.subr.mxu0 0.0
    %v1048 = vand.u32 %v44, 4294901760
    %1049 = vmatpush1.msra.mxu0 %v1048
    %1050 = vmatprep.subr.mxu0 0.0
    %v1051 = vand.u32 %v43, 4294901760
    %1052 = vmatpush1.msra.mxu0 %v1051
    %1053 = vmatprep.subr.mxu0 0.0
    %v1054 = vand.u32 %v42, 4294901760
    %1055 = vmatpush1.msra.mxu0 %v1054
    %1056 = vmatprep.subr.mxu0 0.0
    %v1057 = vand.u32 %v41, 4294901760
    %1058 = vmatpush1.msra.mxu0 %v1057
    %1059 = vmatprep.subr.mxu0 0.0
    %v1060 = vand.u32 %v40, 4294901760
    %1061 = vmatpush1.msra.mxu0 %v1060
    %1062 = vmatprep.subr.mxu0 0.0
    %v1063 = vand.u32 %v39, 4294901760
    %1064 = vmatpush1.msra.mxu0 %v1063
    %1065 = vmatprep.subr.mxu0 0.0
    %v1066 = vand.u32 %v38, 4294901760
    %1067 = vmatpush1.msra.mxu0 %v1066
    %1068 = vmatprep.subr.mxu0 0.0
    %v1069 = vand.u32 %v37, 4294901760
    %1070 = vmatpush1.msra.mxu0 %v1069
    %1071 = vmatprep.subr.mxu0 0.0
    %v1072 = vand.u32 %v36, 4294901760
    %1073 = vmatpush1.msra.mxu0 %v1072
    %1074 = vmatprep.subr.mxu0 0.0
    %v1075 = vand.u32 %v35, 4294901760
    %1076 = vmatpush1.msra.mxu0 %v1075
    %1077 = vmatprep.subr.mxu0 0.0
    %v1078 = vand.u32 %v34, 4294901760
    %1079 = vmatpush1.msra.mxu0 %v1078
    %1080 = vmatprep.subr.mxu0 0.0
    %v1081 = vand.u32 %v33, 4294901760
    %1082 = vmatpush1.msra.mxu0 %v1081
    %1083 = vmatprep.subr.mxu0 0.0
    %v1084 = vand.u32 %v32, 4294901760
    %1085 = vmatpush1.msra.mxu0 %v1084
    %1086 = vmatprep.subr.mxu0 0.0
    %v1087 = vand.u32 %v31, 4294901760
    %1088 = vmatpush1.msra.mxu0 %v1087
    %1089 = vmatprep.subr.mxu0 0.0
    %v1090 = vand.u32 %v30, 4294901760
    %1091 = vmatpush1.msra.mxu0 %v1090
    %1092 = vmatprep.subr.mxu0 0.0
    %1093 = vmatpush2.msra.mxu0 0.0
    %1094 = vmatprep.subr.mxu0 0.0
    %1095 = vmatpush2.msra.mxu0 0.0
    %1096 = vmatprep.subr.mxu0 0.0
    %1097 = vmatpush2.msra.mxu0 0.0
    %1098 = vmatprep.subr.mxu0 0.0
    %1099 = vmatpush2.msra.mxu0 0.0
    %1100 = vmatprep.subr.mxu0 0.0
    %1101 = vmatpush2.msra.mxu0 0.0
    %1102 = vmatprep.subr.mxu0 0.0
    %1103 = vmatpush2.msra.mxu0 0.0
    %1104 = vmatprep.subr.mxu0 0.0
    %1105 = vmatpush2.msra.mxu0 0.0
    %1106 = vmatprep.subr.mxu0 0.0
    %1107 = vmatpush2.msra.mxu0 0.0
    %1108 = vmatprep.subr.mxu0 0.0
    %1109 = vmatpush2.msra.mxu0 0.0
    %1110 = vmatprep.subr.mxu0 0.0
    %1111 = vmatpush2.msra.mxu0 0.0
    %1112 = vmatprep.subr.mxu0 0.0
    %1113 = vmatpush2.msra.mxu0 0.0
    %1114 = vmatprep.subr.mxu0 0.0
    %1115 = vmatpush2.msra.mxu0 0.0
    %1116 = vmatprep.subr.mxu0 0.0
    %1117 = vmatpush2.msra.mxu0 0.0
    %1118 = vmatprep.subr.mxu0 0.0
    %1119 = vmatpush2.msra.mxu0 0.0
    %1120 = vmatprep.subr.mxu0 0.0
    %1121 = vmatpush2.msra.mxu0 0.0
    %1122 = vmatprep.subr.mxu0 0.0
    %1123 = vmatpush2.msra.mxu0 0.0
    %1124 = vmatprep.mubr.f32.mxu0 0.0
    %v1125 = vand.u32 %v551, 4294901760
    %v1126 = vsub.f32 %v551, %v1125
    %v1127 = vand.u32 %v1126, 4294901760
    %v1128 = vsub.f32 %v1126, %v1127
    %v1129 = vand.u32 %v1128, 4294901760
    %1130 = vmatmul.mubr.f32.gmra.mxu0 %v1129
    %v1131 = vpop.f32.mrf.mxu0
    %v1132 = vadd.f32 0.0, %v1131
    %v1133 = vpop.f32.mrf.mxu0
    %1134 = vdwg.mxu0
    %1135 = vmatprep.subr.mxu0 0.0
    %v1136 = vand.u32 %v45, 4294901760
    %v1137 = vsub.f32 %v45, %v1136
    %v1138 = vand.u32 %v1137, 4294901760
    %v1139 = vsub.f32 %v1137, %v1138
    %v1140 = vand.u32 %v1139, 4294901760
    %1141 = vmatpush1.msra.mxu0 %v1140
    %1142 = vmatprep.subr.mxu0 0.0
    %v1143 = vand.u32 %v44, 4294901760
    %v1144 = vsub.f32 %v44, %v1143
    %v1145 = vand.u32 %v1144, 4294901760
    %v1146 = vsub.f32 %v1144, %v1145
    %v1147 = vand.u32 %v1146, 4294901760
    %1148 = vmatpush1.msra.mxu0 %v1147
    %1149 = vmatprep.subr.mxu0 0.0
    %v1150 = vand.u32 %v43, 4294901760
    %v1151 = vsub.f32 %v43, %v1150
    %v1152 = vand.u32 %v1151, 4294901760
    %v1153 = vsub.f32 %v1151, %v1152
    %v1154 = vand.u32 %v1153, 4294901760
    %1155 = vmatpush1.msra.mxu0 %v1154
    %1156 = vmatprep.subr.mxu0 0.0
    %v1157 = vand.u32 %v42, 4294901760
    %v1158 = vsub.f32 %v42, %v1157
    %v1159 = vand.u32 %v1158, 4294901760
    %v1160 = vsub.f32 %v1158, %v1159
    %v1161 = vand.u32 %v1160, 4294901760
    %1162 = vmatpush1.msra.mxu0 %v1161
    %1163 = vmatprep.subr.mxu0 0.0
    %v1164 = vand.u32 %v41, 4294901760
    %v1165 = vsub.f32 %v41, %v1164
    %v1166 = vand.u32 %v1165, 4294901760
    %v1167 = vsub.f32 %v1165, %v1166
    %v1168 = vand.u32 %v1167, 4294901760
    %1169 = vmatpush1.msra.mxu0 %v1168
    %1170 = vmatprep.subr.mxu0 0.0
    %v1171 = vand.u32 %v40, 4294901760
    %v1172 = vsub.f32 %v40, %v1171
    %v1173 = vand.u32 %v1172, 4294901760
    %v1174 = vsub.f32 %v1172, %v1173
    %v1175 = vand.u32 %v1174, 4294901760
    %1176 = vmatpush1.msra.mxu0 %v1175
    %1177 = vmatprep.subr.mxu0 0.0
    %v1178 = vand.u32 %v39, 4294901760
    %v1179 = vsub.f32 %v39, %v1178
    %v1180 = vand.u32 %v1179, 4294901760
    %v1181 = vsub.f32 %v1179, %v1180
    %v1182 = vand.u32 %v1181, 4294901760
    %1183 = vmatpush1.msra.mxu0 %v1182
    %1184 = vmatprep.subr.mxu0 0.0
    %v1185 = vand.u32 %v38, 4294901760
    %v1186 = vsub.f32 %v38, %v1185
    %v1187 = vand.u32 %v1186, 4294901760
    %v1188 = vsub.f32 %v1186, %v1187
    %v1189 = vand.u32 %v1188, 4294901760
    %1190 = vmatpush1.msra.mxu0 %v1189
    %1191 = vmatprep.subr.mxu0 0.0
    %v1192 = vand.u32 %v37, 4294901760
    %v1193 = vsub.f32 %v37, %v1192
    %v1194 = vand.u32 %v1193, 4294901760
    %v1195 = vsub.f32 %v1193, %v1194
    %v1196 = vand.u32 %v1195, 4294901760
    %1197 = vmatpush1.msra.mxu0 %v1196
    %1198 = vmatprep.subr.mxu0 0.0
    %v1199 = vand.u32 %v36, 4294901760
    %v1200 = vsub.f32 %v36, %v1199
    %v1201 = vand.u32 %v1200, 4294901760
    %v1202 = vsub.f32 %v1200, %v1201
    %v1203 = vand.u32 %v1202, 4294901760
    %1204 = vmatpush1.msra.mxu0 %v1203
    %1205 = vmatprep.subr.mxu0 0.0
    %v1206 = vand.u32 %v35, 4294901760
    %v1207 = vsub.f32 %v35, %v1206
    %v1208 = vand.u32 %v1207, 4294901760
    %v1209 = vsub.f32 %v1207, %v1208
    %v1210 = vand.u32 %v1209, 4294901760
    %1211 = vmatpush1.msra.mxu0 %v1210
    %1212 = vmatprep.subr.mxu0 0.0
    %v1213 = vand.u32 %v34, 4294901760
    %v1214 = vsub.f32 %v34, %v1213
    %v1215 = vand.u32 %v1214, 4294901760
    %v1216 = vsub.f32 %v1214, %v1215
    %v1217 = vand.u32 %v1216, 4294901760
    %1218 = vmatpush1.msra.mxu0 %v1217
    %1219 = vmatprep.subr.mxu0 0.0
    %v1220 = vand.u32 %v33, 4294901760
    %v1221 = vsub.f32 %v33, %v1220
    %v1222 = vand.u32 %v1221, 4294901760
    %v1223 = vsub.f32 %v1221, %v1222
    %v1224 = vand.u32 %v1223, 4294901760
    %1225 = vmatpush1.msra.mxu0 %v1224
    %1226 = vmatprep.subr.mxu0 0.0
    %v1227 = vand.u32 %v32, 4294901760
    %v1228 = vsub.f32 %v32, %v1227
    %v1229 = vand.u32 %v1228, 4294901760
    %v1230 = vsub.f32 %v1228, %v1229
    %v1231 = vand.u32 %v1230, 4294901760
    %1232 = vmatpush1.msra.mxu0 %v1231
    %1233 = vmatprep.subr.mxu0 0.0
    %v1234 = vand.u32 %v31, 4294901760
    %v1235 = vsub.f32 %v31, %v1234
    %v1236 = vand.u32 %v1235, 4294901760
    %v1237 = vsub.f32 %v1235, %v1236
    %v1238 = vand.u32 %v1237, 4294901760
    %1239 = vmatpush1.msra.mxu0 %v1238
    %1240 = vmatprep.subr.mxu0 0.0
    %v1241 = vand.u32 %v30, 4294901760
    %v1242 = vsub.f32 %v30, %v1241
    %v1243 = vand.u32 %v1242, 4294901760
    %v1244 = vsub.f32 %v1242, %v1243
    %v1245 = vand.u32 %v1244, 4294901760
    %1246 = vmatpush1.msra.mxu0 %v1245
    %1247 = vmatprep.subr.mxu0 0.0
    %1248 = vmatpush2.msra.mxu0 0.0
    %1249 = vmatprep.subr.mxu0 0.0
    %1250 = vmatpush2.msra.mxu0 0.0
    %1251 = vmatprep.subr.mxu0 0.0
    %1252 = vmatpush2.msra.mxu0 0.0
    %1253 = vmatprep.subr.mxu0 0.0
    %1254 = vmatpush2.msra.mxu0 0.0
    %1255 = vmatprep.subr.mxu0 0.0
    %1256 = vmatpush2.msra.mxu0 0.0
    %1257 = vmatprep.subr.mxu0 0.0
    %1258 = vmatpush2.msra.mxu0 0.0
    %1259 = vmatprep.subr.mxu0 0.0
    %1260 = vmatpush2.msra.mxu0 0.0
    %1261 = vmatprep.subr.mxu0 0.0
    %1262 = vmatpush2.msra.mxu0 0.0
    %1263 = vmatprep.subr.mxu0 0.0
    %1264 = vmatpush2.msra.mxu0 0.0
    %1265 = vmatprep.subr.mxu0 0.0
    %1266 = vmatpush2.msra.mxu0 0.0
    %1267 = vmatprep.subr.mxu0 0.0
    %1268 = vmatpush2.msra.mxu0 0.0
    %1269 = vmatprep.subr.mxu0 0.0
    %1270 = vmatpush2.msra.mxu0 0.0
    %1271 = vmatprep.subr.mxu0 0.0
    %1272 = vmatpush2.msra.mxu0 0.0
    %1273 = vmatprep.subr.mxu0 0.0
    %1274 = vmatpush2.msra.mxu0 0.0
    %1275 = vmatprep.subr.mxu0 0.0
    %1276 = vmatpush2.msra.mxu0 0.0
    %1277 = vmatprep.subr.mxu0 0.0
    %1278 = vmatpush2.msra.mxu0 0.0
    %1279 = vmatprep.mubr.f32.mxu0 0.0
    %v1280 = vand.u32 %v551, 4294901760
    %1281 = vmatmul.mubr.f32.gmra.mxu0 %v1280
    %v1282 = vpop.f32.mrf.mxu0
    %v1283 = vadd.f32 %v1132, %v1282
    %v1284 = vpop.f32.mrf.mxu0
    %1285 = vdwg.mxu0
    %1286 = vmatprep.subr.mxu0 0.0
    %v1287 = vand.u32 %v45, 4294901760
    %v1288 = vsub.f32 %v45, %v1287
    %1289 = vmatpush1.msra.mxu0 %v1288
    %1290 = vmatprep.subr.mxu0 0.0
    %v1291 = vand.u32 %v44, 4294901760
    %v1292 = vsub.f32 %v44, %v1291
    %1293 = vmatpush1.msra.mxu0 %v1292
    %1294 = vmatprep.subr.mxu0 0.0
    %v1295 = vand.u32 %v43, 4294901760
    %v1296 = vsub.f32 %v43, %v1295
    %1297 = vmatpush1.msra.mxu0 %v1296
    %1298 = vmatprep.subr.mxu0 0.0
    %v1299 = vand.u32 %v42, 4294901760
    %v1300 = vsub.f32 %v42, %v1299
    %1301 = vmatpush1.msra.mxu0 %v1300
    %1302 = vmatprep.subr.mxu0 0.0
    %v1303 = vand.u32 %v41, 4294901760
    %v1304 = vsub.f32 %v41, %v1303
    %1305 = vmatpush1.msra.mxu0 %v1304
    %1306 = vmatprep.subr.mxu0 0.0
    %v1307 = vand.u32 %v40, 4294901760
    %v1308 = vsub.f32 %v40, %v1307
    %1309 = vmatpush1.msra.mxu0 %v1308
    %1310 = vmatprep.subr.mxu0 0.0
    %v1311 = vand.u32 %v39, 4294901760
    %v1312 = vsub.f32 %v39, %v1311
    %1313 = vmatpush1.msra.mxu0 %v1312
    %1314 = vmatprep.subr.mxu0 0.0
    %v1315 = vand.u32 %v38, 4294901760
    %v1316 = vsub.f32 %v38, %v1315
    %1317 = vmatpush1.msra.mxu0 %v1316
    %1318 = vmatprep.subr.mxu0 0.0
    %v1319 = vand.u32 %v37, 4294901760
    %v1320 = vsub.f32 %v37, %v1319
    %1321 = vmatpush1.msra.mxu0 %v1320
    %1322 = vmatprep.subr.mxu0 0.0
    %v1323 = vand.u32 %v36, 4294901760
    %v1324 = vsub.f32 %v36, %v1323
    %1325 = vmatpush1.msra.mxu0 %v1324
    %1326 = vmatprep.subr.mxu0 0.0
    %v1327 = vand.u32 %v35, 4294901760
    %v1328 = vsub.f32 %v35, %v1327
    %1329 = vmatpush1.msra.mxu0 %v1328
    %1330 = vmatprep.subr.mxu0 0.0
    %v1331 = vand.u32 %v34, 4294901760
    %v1332 = vsub.f32 %v34, %v1331
    %1333 = vmatpush1.msra.mxu0 %v1332
    %1334 = vmatprep.subr.mxu0 0.0
    %v1335 = vand.u32 %v33, 4294901760
    %v1336 = vsub.f32 %v33, %v1335
    %1337 = vmatpush1.msra.mxu0 %v1336
    %1338 = vmatprep.subr.mxu0 0.0
    %v1339 = vand.u32 %v32, 4294901760
    %v1340 = vsub.f32 %v32, %v1339
    %1341 = vmatpush1.msra.mxu0 %v1340
    %1342 = vmatprep.subr.mxu0 0.0
    %v1343 = vand.u32 %v31, 4294901760
    %v1344 = vsub.f32 %v31, %v1343
    %1345 = vmatpush1.msra.mxu0 %v1344
    %1346 = vmatprep.subr.mxu0 0.0
    %v1347 = vand.u32 %v30, 4294901760
    %v1348 = vsub.f32 %v30, %v1347
    %1349 = vmatpush1.msra.mxu0 %v1348
    %1350 = vmatprep.subr.mxu0 0.0
    %1351 = vmatpush2.msra.mxu0 0.0
    %1352 = vmatprep.subr.mxu0 0.0
    %1353 = vmatpush2.msra.mxu0 0.0
    %1354 = vmatprep.subr.mxu0 0.0
    %1355 = vmatpush2.msra.mxu0 0.0
    %1356 = vmatprep.subr.mxu0 0.0
    %1357 = vmatpush2.msra.mxu0 0.0
    %1358 = vmatprep.subr.mxu0 0.0
    %1359 = vmatpush2.msra.mxu0 0.0
    %1360 = vmatprep.subr.mxu0 0.0
    %1361 = vmatpush2.msra.mxu0 0.0
    %1362 = vmatprep.subr.mxu0 0.0
    %1363 = vmatpush2.msra.mxu0 0.0
    %1364 = vmatprep.subr.mxu0 0.0
    %1365 = vmatpush2.msra.mxu0 0.0
    %1366 = vmatprep.subr.mxu0 0.0
    %1367 = vmatpush2.msra.mxu0 0.0
    %1368 = vmatprep.subr.mxu0 0.0
    %1369 = vmatpush2.msra.mxu0 0.0
    %1370 = vmatprep.subr.mxu0 0.0
    %1371 = vmatpush2.msra.mxu0 0.0
    %1372 = vmatprep.subr.mxu0 0.0
    %1373 = vmatpush2.msra.mxu0 0.0
    %1374 = vmatprep.subr.mxu0 0.0
    %1375 = vmatpush2.msra.mxu0 0.0
    %1376 = vmatprep.subr.mxu0 0.0
    %1377 = vmatpush2.msra.mxu0 0.0
    %1378 = vmatprep.subr.mxu0 0.0
    %1379 = vmatpush2.msra.mxu0 0.0
    %1380 = vmatprep.subr.mxu0 0.0
    %1381 = vmatpush2.msra.mxu0 0.0
    %1382 = vmatprep.mubr.f32.mxu0 0.0
    %v1383 = vand.u32 %v551, 4294901760
    %v1384 = vsub.f32 %v551, %v1383
    %1385 = vmatmul.mubr.f32.gmra.mxu0 %v1384
    %v1386 = vpop.f32.mrf.mxu0
    %v1387 = vadd.f32 %v1283, %v1386
    %v1388 = vpop.f32.mrf.mxu0
    %1389 = vdwg.mxu0
    %1390 = vmatprep.subr.mxu0 0.0
    %v1391 = vand.u32 %v45, 4294901760
    %1392 = vmatpush1.msra.mxu0 %v1391
    %1393 = vmatprep.subr.mxu0 0.0
    %v1394 = vand.u32 %v44, 4294901760
    %1395 = vmatpush1.msra.mxu0 %v1394
    %1396 = vmatprep.subr.mxu0 0.0
    %v1397 = vand.u32 %v43, 4294901760
    %1398 = vmatpush1.msra.mxu0 %v1397
    %1399 = vmatprep.subr.mxu0 0.0
    %v1400 = vand.u32 %v42, 4294901760
    %1401 = vmatpush1.msra.mxu0 %v1400
    %1402 = vmatprep.subr.mxu0 0.0
    %v1403 = vand.u32 %v41, 4294901760
    %1404 = vmatpush1.msra.mxu0 %v1403
    %1405 = vmatprep.subr.mxu0 0.0
    %v1406 = vand.u32 %v40, 4294901760
    %1407 = vmatpush1.msra.mxu0 %v1406
    %1408 = vmatprep.subr.mxu0 0.0
    %v1409 = vand.u32 %v39, 4294901760
    %1410 = vmatpush1.msra.mxu0 %v1409
    %1411 = vmatprep.subr.mxu0 0.0
    %v1412 = vand.u32 %v38, 4294901760
    %1413 = vmatpush1.msra.mxu0 %v1412
    %1414 = vmatprep.subr.mxu0 0.0
    %v1415 = vand.u32 %v37, 4294901760
    %1416 = vmatpush1.msra.mxu0 %v1415
    %1417 = vmatprep.subr.mxu0 0.0
    %v1418 = vand.u32 %v36, 4294901760
    %1419 = vmatpush1.msra.mxu0 %v1418
    %1420 = vmatprep.subr.mxu0 0.0
    %v1421 = vand.u32 %v35, 4294901760
    %1422 = vmatpush1.msra.mxu0 %v1421
    %1423 = vmatprep.subr.mxu0 0.0
    %v1424 = vand.u32 %v34, 4294901760
    %1425 = vmatpush1.msra.mxu0 %v1424
    %1426 = vmatprep.subr.mxu0 0.0
    %v1427 = vand.u32 %v33, 4294901760
    %1428 = vmatpush1.msra.mxu0 %v1427
    %1429 = vmatprep.subr.mxu0 0.0
    %v1430 = vand.u32 %v32, 4294901760
    %1431 = vmatpush1.msra.mxu0 %v1430
    %1432 = vmatprep.subr.mxu0 0.0
    %v1433 = vand.u32 %v31, 4294901760
    %1434 = vmatpush1.msra.mxu0 %v1433
    %1435 = vmatprep.subr.mxu0 0.0
    %v1436 = vand.u32 %v30, 4294901760
    %1437 = vmatpush1.msra.mxu0 %v1436
    %1438 = vmatprep.subr.mxu0 0.0
    %1439 = vmatpush2.msra.mxu0 0.0
    %1440 = vmatprep.subr.mxu0 0.0
    %1441 = vmatpush2.msra.mxu0 0.0
    %1442 = vmatprep.subr.mxu0 0.0
    %1443 = vmatpush2.msra.mxu0 0.0
    %1444 = vmatprep.subr.mxu0 0.0
    %1445 = vmatpush2.msra.mxu0 0.0
    %1446 = vmatprep.subr.mxu0 0.0
    %1447 = vmatpush2.msra.mxu0 0.0
    %1448 = vmatprep.subr.mxu0 0.0
    %1449 = vmatpush2.msra.mxu0 0.0
    %1450 = vmatprep.subr.mxu0 0.0
    %1451 = vmatpush2.msra.mxu0 0.0
    %1452 = vmatprep.subr.mxu0 0.0
    %1453 = vmatpush2.msra.mxu0 0.0
    %1454 = vmatprep.subr.mxu0 0.0
    %1455 = vmatpush2.msra.mxu0 0.0
    %1456 = vmatprep.subr.mxu0 0.0
    %1457 = vmatpush2.msra.mxu0 0.0
    %1458 = vmatprep.subr.mxu0 0.0
    %1459 = vmatpush2.msra.mxu0 0.0
    %1460 = vmatprep.subr.mxu0 0.0
    %1461 = vmatpush2.msra.mxu0 0.0
    %1462 = vmatprep.subr.mxu0 0.0
    %1463 = vmatpush2.msra.mxu0 0.0
    %1464 = vmatprep.subr.mxu0 0.0
    %1465 = vmatpush2.msra.mxu0 0.0
    %1466 = vmatprep.subr.mxu0 0.0
    %1467 = vmatpush2.msra.mxu0 0.0
    %1468 = vmatprep.subr.mxu0 0.0
    %1469 = vmatpush2.msra.mxu0 0.0
    %1470 = vmatprep.mubr.f32.mxu0 0.0
    %v1471 = vand.u32 %v551, 4294901760
    %v1472 = vsub.f32 %v551, %v1471
    %v1473 = vand.u32 %v1472, 4294901760
    %1474 = vmatmul.mubr.f32.gmra.mxu0 %v1473
    %v1475 = vpop.f32.mrf.mxu0
    %v1476 = vadd.f32 %v1387, %v1475
    %v1477 = vpop.f32.mrf.mxu0
    %1478 = vdwg.mxu0
    %1479 = vmatprep.subr.mxu0 0.0
    %v1480 = vand.u32 %v45, 4294901760
    %v1481 = vsub.f32 %v45, %v1480
    %v1482 = vand.u32 %v1481, 4294901760
    %1483 = vmatpush1.msra.mxu0 %v1482
    %1484 = vmatprep.subr.mxu0 0.0
    %v1485 = vand.u32 %v44, 4294901760
    %v1486 = vsub.f32 %v44, %v1485
    %v1487 = vand.u32 %v1486, 4294901760
    %1488 = vmatpush1.msra.mxu0 %v1487
    %1489 = vmatprep.subr.mxu0 0.0
    %v1490 = vand.u32 %v43, 4294901760
    %v1491 = vsub.f32 %v43, %v1490
    %v1492 = vand.u32 %v1491, 4294901760
    %1493 = vmatpush1.msra.mxu0 %v1492
    %1494 = vmatprep.subr.mxu0 0.0
    %v1495 = vand.u32 %v42, 4294901760
    %v1496 = vsub.f32 %v42, %v1495
    %v1497 = vand.u32 %v1496, 4294901760
    %1498 = vmatpush1.msra.mxu0 %v1497
    %1499 = vmatprep.subr.mxu0 0.0
    %v1500 = vand.u32 %v41, 4294901760
    %v1501 = vsub.f32 %v41, %v1500
    %v1502 = vand.u32 %v1501, 4294901760
    %1503 = vmatpush1.msra.mxu0 %v1502
    %1504 = vmatprep.subr.mxu0 0.0
    %v1505 = vand.u32 %v40, 4294901760
    %v1506 = vsub.f32 %v40, %v1505
    %v1507 = vand.u32 %v1506, 4294901760
    %1508 = vmatpush1.msra.mxu0 %v1507
    %1509 = vmatprep.subr.mxu0 0.0
    %v1510 = vand.u32 %v39, 4294901760
    %v1511 = vsub.f32 %v39, %v1510
    %v1512 = vand.u32 %v1511, 4294901760
    %1513 = vmatpush1.msra.mxu0 %v1512
    %1514 = vmatprep.subr.mxu0 0.0
    %v1515 = vand.u32 %v38, 4294901760
    %v1516 = vsub.f32 %v38, %v1515
    %v1517 = vand.u32 %v1516, 4294901760
    %1518 = vmatpush1.msra.mxu0 %v1517
    %1519 = vmatprep.subr.mxu0 0.0
    %v1520 = vand.u32 %v37, 4294901760
    %v1521 = vsub.f32 %v37, %v1520
    %v1522 = vand.u32 %v1521, 4294901760
    %1523 = vmatpush1.msra.mxu0 %v1522
    %1524 = vmatprep.subr.mxu0 0.0
    %v1525 = vand.u32 %v36, 4294901760
    %v1526 = vsub.f32 %v36, %v1525
    %v1527 = vand.u32 %v1526, 4294901760
    %1528 = vmatpush1.msra.mxu0 %v1527
    %1529 = vmatprep.subr.mxu0 0.0
    %v1530 = vand.u32 %v35, 4294901760
    %v1531 = vsub.f32 %v35, %v1530
    %v1532 = vand.u32 %v1531, 4294901760
    %1533 = vmatpush1.msra.mxu0 %v1532
    %1534 = vmatprep.subr.mxu0 0.0
    %v1535 = vand.u32 %v34, 4294901760
    %v1536 = vsub.f32 %v34, %v1535
    %v1537 = vand.u32 %v1536, 4294901760
    %1538 = vmatpush1.msra.mxu0 %v1537
    %1539 = vmatprep.subr.mxu0 0.0
    %v1540 = vand.u32 %v33, 4294901760
    %v1541 = vsub.f32 %v33, %v1540
    %v1542 = vand.u32 %v1541, 4294901760
    %1543 = vmatpush1.msra.mxu0 %v1542
    %1544 = vmatprep.subr.mxu0 0.0
    %v1545 = vand.u32 %v32, 4294901760
    %v1546 = vsub.f32 %v32, %v1545
    %v1547 = vand.u32 %v1546, 4294901760
    %1548 = vmatpush1.msra.mxu0 %v1547
    %1549 = vmatprep.subr.mxu0 0.0
    %v1550 = vand.u32 %v31, 4294901760
    %v1551 = vsub.f32 %v31, %v1550
    %v1552 = vand.u32 %v1551, 4294901760
    %1553 = vmatpush1.msra.mxu0 %v1552
    %1554 = vmatprep.subr.mxu0 0.0
    %v1555 = vand.u32 %v30, 4294901760
    %v1556 = vsub.f32 %v30, %v1555
    %v1557 = vand.u32 %v1556, 4294901760
    %1558 = vmatpush1.msra.mxu0 %v1557
    %1559 = vmatprep.subr.mxu0 0.0
    %1560 = vmatpush2.msra.mxu0 0.0
    %1561 = vmatprep.subr.mxu0 0.0
    %1562 = vmatpush2.msra.mxu0 0.0
    %1563 = vmatprep.subr.mxu0 0.0
    %1564 = vmatpush2.msra.mxu0 0.0
    %1565 = vmatprep.subr.mxu0 0.0
    %1566 = vmatpush2.msra.mxu0 0.0
    %1567 = vmatprep.subr.mxu0 0.0
    %1568 = vmatpush2.msra.mxu0 0.0
    %1569 = vmatprep.subr.mxu0 0.0
    %1570 = vmatpush2.msra.mxu0 0.0
    %1571 = vmatprep.subr.mxu0 0.0
    %1572 = vmatpush2.msra.mxu0 0.0
    %1573 = vmatprep.subr.mxu0 0.0
    %1574 = vmatpush2.msra.mxu0 0.0
    %1575 = vmatprep.subr.mxu0 0.0
    %1576 = vmatpush2.msra.mxu0 0.0
    %1577 = vmatprep.subr.mxu0 0.0
    %1578 = vmatpush2.msra.mxu0 0.0
    %1579 = vmatprep.subr.mxu0 0.0
    %1580 = vmatpush2.msra.mxu0 0.0
    %1581 = vmatprep.subr.mxu0 0.0
    %1582 = vmatpush2.msra.mxu0 0.0
    %1583 = vmatprep.subr.mxu0 0.0
    %1584 = vmatpush2.msra.mxu0 0.0
    %1585 = vmatprep.subr.mxu0 0.0
    %1586 = vmatpush2.msra.mxu0 0.0
    %1587 = vmatprep.subr.mxu0 0.0
    %1588 = vmatpush2.msra.mxu0 0.0
    %1589 = vmatprep.subr.mxu0 0.0
    %1590 = vmatpush2.msra.mxu0 0.0
    %1591 = vmatprep.mubr.f32.mxu0 0.0
    %v1592 = vand.u32 %v551, 4294901760
    %1593 = vmatmul.mubr.f32.gmra.mxu0 %v1592
    %v1594 = vpop.f32.mrf.mxu0
    %v1595 = vadd.f32 %v1476, %v1594
    %v1596 = vpop.f32.mrf.mxu0
    %1597 = vdwg.mxu0
    %1598 = vmatprep.subr.mxu0 0.0
    %v1599 = vand.u32 %v45, 4294901760
    %1600 = vmatpush1.msra.mxu0 %v1599
    %1601 = vmatprep.subr.mxu0 0.0
    %v1602 = vand.u32 %v44, 4294901760
    %1603 = vmatpush1.msra.mxu0 %v1602
    %1604 = vmatprep.subr.mxu0 0.0
    %v1605 = vand.u32 %v43, 4294901760
    %1606 = vmatpush1.msra.mxu0 %v1605
    %1607 = vmatprep.subr.mxu0 0.0
    %v1608 = vand.u32 %v42, 4294901760
    %1609 = vmatpush1.msra.mxu0 %v1608
    %1610 = vmatprep.subr.mxu0 0.0
    %v1611 = vand.u32 %v41, 4294901760
    %1612 = vmatpush1.msra.mxu0 %v1611
    %1613 = vmatprep.subr.mxu0 0.0
    %v1614 = vand.u32 %v40, 4294901760
    %1615 = vmatpush1.msra.mxu0 %v1614
    %1616 = vmatprep.subr.mxu0 0.0
    %v1617 = vand.u32 %v39, 4294901760
    %1618 = vmatpush1.msra.mxu0 %v1617
    %1619 = vmatprep.subr.mxu0 0.0
    %v1620 = vand.u32 %v38, 4294901760
    %1621 = vmatpush1.msra.mxu0 %v1620
    %1622 = vmatprep.subr.mxu0 0.0
    %v1623 = vand.u32 %v37, 4294901760
    %1624 = vmatpush1.msra.mxu0 %v1623
    %1625 = vmatprep.subr.mxu0 0.0
    %v1626 = vand.u32 %v36, 4294901760
    %1627 = vmatpush1.msra.mxu0 %v1626
    %1628 = vmatprep.subr.mxu0 0.0
    %v1629 = vand.u32 %v35, 4294901760
    %1630 = vmatpush1.msra.mxu0 %v1629
    %1631 = vmatprep.subr.mxu0 0.0
    %v1632 = vand.u32 %v34, 4294901760
    %1633 = vmatpush1.msra.mxu0 %v1632
    %1634 = vmatprep.subr.mxu0 0.0
    %v1635 = vand.u32 %v33, 4294901760
    %1636 = vmatpush1.msra.mxu0 %v1635
    %1637 = vmatprep.subr.mxu0 0.0
    %v1638 = vand.u32 %v32, 4294901760
    %1639 = vmatpush1.msra.mxu0 %v1638
    %1640 = vmatprep.subr.mxu0 0.0
    %v1641 = vand.u32 %v31, 4294901760
    %1642 = vmatpush1.msra.mxu0 %v1641
    %1643 = vmatprep.subr.mxu0 0.0
    %v1644 = vand.u32 %v30, 4294901760
    %1645 = vmatpush1.msra.mxu0 %v1644
    %1646 = vmatprep.subr.mxu0 0.0
    %1647 = vmatpush2.msra.mxu0 0.0
    %1648 = vmatprep.subr.mxu0 0.0
    %1649 = vmatpush2.msra.mxu0 0.0
    %1650 = vmatprep.subr.mxu0 0.0
    %1651 = vmatpush2.msra.mxu0 0.0
    %1652 = vmatprep.subr.mxu0 0.0
    %1653 = vmatpush2.msra.mxu0 0.0
    %1654 = vmatprep.subr.mxu0 0.0
    %1655 = vmatpush2.msra.mxu0 0.0
    %1656 = vmatprep.subr.mxu0 0.0
    %1657 = vmatpush2.msra.mxu0 0.0
    %1658 = vmatprep.subr.mxu0 0.0
    %1659 = vmatpush2.msra.mxu0 0.0
    %1660 = vmatprep.subr.mxu0 0.0
    %1661 = vmatpush2.msra.mxu0 0.0
    %1662 = vmatprep.subr.mxu0 0.0
    %1663 = vmatpush2.msra.mxu0 0.0
    %1664 = vmatprep.subr.mxu0 0.0
    %1665 = vmatpush2.msra.mxu0 0.0
    %1666 = vmatprep.subr.mxu0 0.0
    %1667 = vmatpush2.msra.mxu0 0.0
    %1668 = vmatprep.subr.mxu0 0.0
    %1669 = vmatpush2.msra.mxu0 0.0
    %1670 = vmatprep.subr.mxu0 0.0
    %1671 = vmatpush2.msra.mxu0 0.0
    %1672 = vmatprep.subr.mxu0 0.0
    %1673 = vmatpush2.msra.mxu0 0.0
    %1674 = vmatprep.subr.mxu0 0.0
    %1675 = vmatpush2.msra.mxu0 0.0
    %1676 = vmatprep.subr.mxu0 0.0
    %1677 = vmatpush2.msra.mxu0 0.0
    %1678 = vmatprep.mubr.f32.mxu0 0.0
    %v1679 = vand.u32 %v551, 4294901760
    %1680 = vmatmul.mubr.f32.gmra.mxu0 %v1679
    %v1681 = vpop.f32.mrf.mxu0
    %v1682 = vadd.f32 %v1595, %v1681
    %v1683 = vpop.f32.mrf.mxu0
    %1684 = vdwg.mxu0
    %v1685 = vadd.f32 %v1041, %v1682
    %v1686 = vtanh.pop %v1685
    %s1687 = scalar_lea.vmem [#allocation2], 8
    %1688 = vst [vmem:[%s1687] sm:$0xff] %v1686
    %v1689 = vld [vmem:[%s0 + $0x2] sm:$0x1]
    %v1690 = vld [vmem:[%s0 + $0xa] sm:$0x1]
    %v1691 = vld [vmem:[%s0 + $0x12] sm:$0x1]
    %v1692 = vld [vmem:[%s0 + $0x1a] sm:$0x1]
    %v1693 = vld [vmem:[%s0 + $0x22] sm:$0x1]
    %v1694 = vld [vmem:[%s0 + $0x2a] sm:$0x1]
    %v1695 = vld [vmem:[%s0 + $0x32] sm:$0x1]
    %v1696 = vld [vmem:[%s0 + $0x3a] sm:$0x1]
    %v1705 = vrot.slane %v1690, 7
    %v1706 = vsel %vm69, %v1705, %v1689
    %v1707 = vrot.slane %v1691, 6
    %v1708 = vsel %vm72, %v1707, %v1706
    %v1709 = vrot.slane %v1692, 5
    %v1710 = vsel %vm75, %v1709, %v1708
    %v1711 = vrot.slane %v1693, 4
    %v1712 = vsel %vm78, %v1711, %v1710
    %v1713 = vrot.slane %v1694, 3
    %v1714 = vsel %vm81, %v1713, %v1712
    %v1715 = vrot.slane %v1695, 2
    %v1716 = vsel %vm84, %v1715, %v1714
    %v1717 = vrot.slane %v1696, 1
    %v1718 = vsel %vm87, %v1717, %v1716
    %v1719 = vsel %vm89, %v1718, 0
    %1721 = vmatprep.subr.mxu0 0.0
    %1722 = vmatpush1.msra.mxu0 0.0
    %1723 = vmatprep.subr.mxu0 0.0
    %1724 = vmatpush1.msra.mxu0 0.0
    %1725 = vmatprep.subr.mxu0 0.0
    %1726 = vmatpush1.msra.mxu0 0.0
    %1727 = vmatprep.subr.mxu0 0.0
    %1728 = vmatpush1.msra.mxu0 0.0
    %1729 = vmatprep.subr.mxu0 0.0
    %1730 = vmatpush1.msra.mxu0 0.0
    %1731 = vmatprep.subr.mxu0 0.0
    %1732 = vmatpush1.msra.mxu0 0.0
    %1733 = vmatprep.subr.mxu0 0.0
    %1734 = vmatpush1.msra.mxu0 0.0
    %1735 = vmatprep.subr.mxu0 0.0
    %1736 = vmatpush1.msra.mxu0 0.0
    %1737 = vmatprep.subr.mxu0 0.0
    %1738 = vmatpush1.msra.mxu0 0.0
    %1739 = vmatprep.subr.mxu0 0.0
    %1740 = vmatpush1.msra.mxu0 0.0
    %1741 = vmatprep.subr.mxu0 0.0
    %1742 = vmatpush1.msra.mxu0 0.0
    %1743 = vmatprep.subr.mxu0 0.0
    %1744 = vmatpush1.msra.mxu0 0.0
    %1745 = vmatprep.subr.mxu0 0.0
    %1746 = vmatpush1.msra.mxu0 0.0
    %1747 = vmatprep.subr.mxu0 0.0
    %1748 = vmatpush1.msra.mxu0 0.0
    %1749 = vmatprep.subr.mxu0 0.0
    %v1750 = vand.u32 %v28, 4294901760
    %1751 = vmatpush1.msra.mxu0 %v1750
    %1752 = vmatprep.subr.mxu0 0.0
    %v1753 = vand.u32 %v27, 4294901760
    %1754 = vmatpush1.msra.mxu0 %v1753
    %1755 = vmatprep.subr.mxu0 0.0
    %1756 = vmatpush2.msra.mxu0 0.0
    %1757 = vmatprep.subr.mxu0 0.0
    %1758 = vmatpush2.msra.mxu0 0.0
    %1759 = vmatprep.subr.mxu0 0.0
    %1760 = vmatpush2.msra.mxu0 0.0
    %1761 = vmatprep.subr.mxu0 0.0
    %1762 = vmatpush2.msra.mxu0 0.0
    %1763 = vmatprep.subr.mxu0 0.0
    %1764 = vmatpush2.msra.mxu0 0.0
    %1765 = vmatprep.subr.mxu0 0.0
    %1766 = vmatpush2.msra.mxu0 0.0
    %1767 = vmatprep.subr.mxu0 0.0
    %1768 = vmatpush2.msra.mxu0 0.0
    %1769 = vmatprep.subr.mxu0 0.0
    %1770 = vmatpush2.msra.mxu0 0.0
    %1771 = vmatprep.subr.mxu0 0.0
    %1772 = vmatpush2.msra.mxu0 0.0
    %1773 = vmatprep.subr.mxu0 0.0
    %1774 = vmatpush2.msra.mxu0 0.0
    %1775 = vmatprep.subr.mxu0 0.0
    %1776 = vmatpush2.msra.mxu0 0.0
    %1777 = vmatprep.subr.mxu0 0.0
    %1778 = vmatpush2.msra.mxu0 0.0
    %1779 = vmatprep.subr.mxu0 0.0
    %1780 = vmatpush2.msra.mxu0 0.0
    %1781 = vmatprep.subr.mxu0 0.0
    %1782 = vmatpush2.msra.mxu0 0.0
    %1783 = vmatprep.subr.mxu0 0.0
    %1784 = vmatpush2.msra.mxu0 0.0
    %1785 = vmatprep.subr.mxu0 0.0
    %1786 = vmatpush2.msra.mxu0 0.0
    %1787 = vmatprep.mubr.f32.mxu0 0.0
    %v1788 = vand.u32 %v1719, 4294901760
    %v1789 = vsub.f32 %v1719, %v1788
    %v1790 = vand.u32 %v1789, 4294901760
    %v1791 = vsub.f32 %v1789, %v1790
    %v1792 = vand.u32 %v1791, 4294901760
    %1793 = vmatmul.mubr.f32.gmra.mxu0 %v1792
    %v1794 = vpop.f32.mrf.mxu0
    %v1795 = vadd.f32 %v58, %v1794
    %v1796 = vpop.f32.mrf.mxu0
    %1797 = vdwg.mxu0
    %1798 = vmatprep.subr.mxu0 0.0
    %1799 = vmatpush1.msra.mxu0 0.0
    %1800 = vmatprep.subr.mxu0 0.0
    %1801 = vmatpush1.msra.mxu0 0.0
    %1802 = vmatprep.subr.mxu0 0.0
    %1803 = vmatpush1.msra.mxu0 0.0
    %1804 = vmatprep.subr.mxu0 0.0
    %1805 = vmatpush1.msra.mxu0 0.0
    %1806 = vmatprep.subr.mxu0 0.0
    %1807 = vmatpush1.msra.mxu0 0.0
    %1808 = vmatprep.subr.mxu0 0.0
    %1809 = vmatpush1.msra.mxu0 0.0
    %1810 = vmatprep.subr.mxu0 0.0
    %1811 = vmatpush1.msra.mxu0 0.0
    %1812 = vmatprep.subr.mxu0 0.0
    %1813 = vmatpush1.msra.mxu0 0.0
    %1814 = vmatprep.subr.mxu0 0.0
    %1815 = vmatpush1.msra.mxu0 0.0
    %1816 = vmatprep.subr.mxu0 0.0
    %1817 = vmatpush1.msra.mxu0 0.0
    %1818 = vmatprep.subr.mxu0 0.0
    %1819 = vmatpush1.msra.mxu0 0.0
    %1820 = vmatprep.subr.mxu0 0.0
    %1821 = vmatpush1.msra.mxu0 0.0
    %1822 = vmatprep.subr.mxu0 0.0
    %1823 = vmatpush1.msra.mxu0 0.0
    %1824 = vmatprep.subr.mxu0 0.0
    %1825 = vmatpush1.msra.mxu0 0.0
    %1826 = vmatprep.subr.mxu0 0.0
    %v1827 = vand.u32 %v28, 4294901760
    %v1828 = vsub.f32 %v28, %v1827
    %v1829 = vand.u32 %v1828, 4294901760
    %v1830 = vsub.f32 %v1828, %v1829
    %v1831 = vand.u32 %v1830, 4294901760
    %1832 = vmatpush1.msra.mxu0 %v1831
    %1833 = vmatprep.subr.mxu0 0.0
    %v1834 = vand.u32 %v27, 4294901760
    %v1835 = vsub.f32 %v27, %v1834
    %v1836 = vand.u32 %v1835, 4294901760
    %v1837 = vsub.f32 %v1835, %v1836
    %v1838 = vand.u32 %v1837, 4294901760
    %1839 = vmatpush1.msra.mxu0 %v1838
    %1840 = vmatprep.subr.mxu0 0.0
    %1841 = vmatpush2.msra.mxu0 0.0
    %1842 = vmatprep.subr.mxu0 0.0
    %1843 = vmatpush2.msra.mxu0 0.0
    %1844 = vmatprep.subr.mxu0 0.0
    %1845 = vmatpush2.msra.mxu0 0.0
    %1846 = vmatprep.subr.mxu0 0.0
    %1847 = vmatpush2.msra.mxu0 0.0
    %1848 = vmatprep.subr.mxu0 0.0
    %1849 = vmatpush2.msra.mxu0 0.0
    %1850 = vmatprep.subr.mxu0 0.0
    %1851 = vmatpush2.msra.mxu0 0.0
    %1852 = vmatprep.subr.mxu0 0.0
    %1853 = vmatpush2.msra.mxu0 0.0
    %1854 = vmatprep.subr.mxu0 0.0
    %1855 = vmatpush2.msra.mxu0 0.0
    %1856 = vmatprep.subr.mxu0 0.0
    %1857 = vmatpush2.msra.mxu0 0.0
    %1858 = vmatprep.subr.mxu0 0.0
    %1859 = vmatpush2.msra.mxu0 0.0
    %1860 = vmatprep.subr.mxu0 0.0
    %1861 = vmatpush2.msra.mxu0 0.0
    %1862 = vmatprep.subr.mxu0 0.0
    %1863 = vmatpush2.msra.mxu0 0.0
    %1864 = vmatprep.subr.mxu0 0.0
    %1865 = vmatpush2.msra.mxu0 0.0
    %1866 = vmatprep.subr.mxu0 0.0
    %1867 = vmatpush2.msra.mxu0 0.0
    %1868 = vmatprep.subr.mxu0 0.0
    %1869 = vmatpush2.msra.mxu0 0.0
    %1870 = vmatprep.subr.mxu0 0.0
    %1871 = vmatpush2.msra.mxu0 0.0
    %1872 = vmatprep.mubr.f32.mxu0 0.0
    %v1873 = vand.u32 %v1719, 4294901760
    %1874 = vmatmul.mubr.f32.gmra.mxu0 %v1873
    %v1875 = vpop.f32.mrf.mxu0
    %v1876 = vadd.f32 %v1795, %v1875
    %v1877 = vpop.f32.mrf.mxu0
    %1878 = vdwg.mxu0
    %1879 = vmatprep.subr.mxu0 0.0
    %1880 = vmatpush1.msra.mxu0 0.0
    %1881 = vmatprep.subr.mxu0 0.0
    %1882 = vmatpush1.msra.mxu0 0.0
    %1883 = vmatprep.subr.mxu0 0.0
    %1884 = vmatpush1.msra.mxu0 0.0
    %1885 = vmatprep.subr.mxu0 0.0
    %1886 = vmatpush1.msra.mxu0 0.0
    %1887 = vmatprep.subr.mxu0 0.0
    %1888 = vmatpush1.msra.mxu0 0.0
    %1889 = vmatprep.subr.mxu0 0.0
    %1890 = vmatpush1.msra.mxu0 0.0
    %1891 = vmatprep.subr.mxu0 0.0
    %1892 = vmatpush1.msra.mxu0 0.0
    %1893 = vmatprep.subr.mxu0 0.0
    %1894 = vmatpush1.msra.mxu0 0.0
    %1895 = vmatprep.subr.mxu0 0.0
    %1896 = vmatpush1.msra.mxu0 0.0
    %1897 = vmatprep.subr.mxu0 0.0
    %1898 = vmatpush1.msra.mxu0 0.0
    %1899 = vmatprep.subr.mxu0 0.0
    %1900 = vmatpush1.msra.mxu0 0.0
    %1901 = vmatprep.subr.mxu0 0.0
    %1902 = vmatpush1.msra.mxu0 0.0
    %1903 = vmatprep.subr.mxu0 0.0
    %1904 = vmatpush1.msra.mxu0 0.0
    %1905 = vmatprep.subr.mxu0 0.0
    %1906 = vmatpush1.msra.mxu0 0.0
    %1907 = vmatprep.subr.mxu0 0.0
    %v1908 = vand.u32 %v28, 4294901760
    %v1909 = vsub.f32 %v28, %v1908
    %1910 = vmatpush1.msra.mxu0 %v1909
    %1911 = vmatprep.subr.mxu0 0.0
    %v1912 = vand.u32 %v27, 4294901760
    %v1913 = vsub.f32 %v27, %v1912
    %1914 = vmatpush1.msra.mxu0 %v1913
    %1915 = vmatprep.subr.mxu0 0.0
    %1916 = vmatpush2.msra.mxu0 0.0
    %1917 = vmatprep.subr.mxu0 0.0
    %1918 = vmatpush2.msra.mxu0 0.0
    %1919 = vmatprep.subr.mxu0 0.0
    %1920 = vmatpush2.msra.mxu0 0.0
    %1921 = vmatprep.subr.mxu0 0.0
    %1922 = vmatpush2.msra.mxu0 0.0
    %1923 = vmatprep.subr.mxu0 0.0
    %1924 = vmatpush2.msra.mxu0 0.0
    %1925 = vmatprep.subr.mxu0 0.0
    %1926 = vmatpush2.msra.mxu0 0.0
    %1927 = vmatprep.subr.mxu0 0.0
    %1928 = vmatpush2.msra.mxu0 0.0
    %1929 = vmatprep.subr.mxu0 0.0
    %1930 = vmatpush2.msra.mxu0 0.0
    %1931 = vmatprep.subr.mxu0 0.0
    %1932 = vmatpush2.msra.mxu0 0.0
    %1933 = vmatprep.subr.mxu0 0.0
    %1934 = vmatpush2.msra.mxu0 0.0
    %1935 = vmatprep.subr.mxu0 0.0
    %1936 = vmatpush2.msra.mxu0 0.0
    %1937 = vmatprep.subr.mxu0 0.0
    %1938 = vmatpush2.msra.mxu0 0.0
    %1939 = vmatprep.subr.mxu0 0.0
    %1940 = vmatpush2.msra.mxu0 0.0
    %1941 = vmatprep.subr.mxu0 0.0
    %1942 = vmatpush2.msra.mxu0 0.0
    %1943 = vmatprep.subr.mxu0 0.0
    %1944 = vmatpush2.msra.mxu0 0.0
    %1945 = vmatprep.subr.mxu0 0.0
    %1946 = vmatpush2.msra.mxu0 0.0
    %1947 = vmatprep.mubr.f32.mxu0 0.0
    %v1948 = vand.u32 %v1719, 4294901760
    %v1949 = vsub.f32 %v1719, %v1948
    %1950 = vmatmul.mubr.f32.gmra.mxu0 %v1949
    %v1951 = vpop.f32.mrf.mxu0
    %v1952 = vadd.f32 %v1876, %v1951
    %v1953 = vpop.f32.mrf.mxu0
    %1954 = vdwg.mxu0
    %1955 = vmatprep.subr.mxu0 0.0
    %1956 = vmatpush1.msra.mxu0 0.0
    %1957 = vmatprep.subr.mxu0 0.0
    %1958 = vmatpush1.msra.mxu0 0.0
    %1959 = vmatprep.subr.mxu0 0.0
    %1960 = vmatpush1.msra.mxu0 0.0
    %1961 = vmatprep.subr.mxu0 0.0
    %1962 = vmatpush1.msra.mxu0 0.0
    %1963 = vmatprep.subr.mxu0 0.0
    %1964 = vmatpush1.msra.mxu0 0.0
    %1965 = vmatprep.subr.mxu0 0.0
    %1966 = vmatpush1.msra.mxu0 0.0
    %1967 = vmatprep.subr.mxu0 0.0
    %1968 = vmatpush1.msra.mxu0 0.0
    %1969 = vmatprep.subr.mxu0 0.0
    %1970 = vmatpush1.msra.mxu0 0.0
    %1971 = vmatprep.subr.mxu0 0.0
    %1972 = vmatpush1.msra.mxu0 0.0
    %1973 = vmatprep.subr.mxu0 0.0
    %1974 = vmatpush1.msra.mxu0 0.0
    %1975 = vmatprep.subr.mxu0 0.0
    %1976 = vmatpush1.msra.mxu0 0.0
    %1977 = vmatprep.subr.mxu0 0.0
    %1978 = vmatpush1.msra.mxu0 0.0
    %1979 = vmatprep.subr.mxu0 0.0
    %1980 = vmatpush1.msra.mxu0 0.0
    %1981 = vmatprep.subr.mxu0 0.0
    %1982 = vmatpush1.msra.mxu0 0.0
    %1983 = vmatprep.subr.mxu0 0.0
    %v1984 = vand.u32 %v28, 4294901760
    %1985 = vmatpush1.msra.mxu0 %v1984
    %1986 = vmatprep.subr.mxu0 0.0
    %v1987 = vand.u32 %v27, 4294901760
    %1988 = vmatpush1.msra.mxu0 %v1987
    %1989 = vmatprep.subr.mxu0 0.0
    %1990 = vmatpush2.msra.mxu0 0.0
    %1991 = vmatprep.subr.mxu0 0.0
    %1992 = vmatpush2.msra.mxu0 0.0
    %1993 = vmatprep.subr.mxu0 0.0
    %1994 = vmatpush2.msra.mxu0 0.0
    %1995 = vmatprep.subr.mxu0 0.0
    %1996 = vmatpush2.msra.mxu0 0.0
    %1997 = vmatprep.subr.mxu0 0.0
    %1998 = vmatpush2.msra.mxu0 0.0
    %1999 = vmatprep.subr.mxu0 0.0
    %2000 = vmatpush2.msra.mxu0 0.0
    %2001 = vmatprep.subr.mxu0 0.0
    %2002 = vmatpush2.msra.mxu0 0.0
    %2003 = vmatprep.subr.mxu0 0.0
    %2004 = vmatpush2.msra.mxu0 0.0
    %2005 = vmatprep.subr.mxu0 0.0
    %2006 = vmatpush2.msra.mxu0 0.0
    %2007 = vmatprep.subr.mxu0 0.0
    %2008 = vmatpush2.msra.mxu0 0.0
    %2009 = vmatprep.subr.mxu0 0.0
    %2010 = vmatpush2.msra.mxu0 0.0
    %2011 = vmatprep.subr.mxu0 0.0
    %2012 = vmatpush2.msra.mxu0 0.0
    %2013 = vmatprep.subr.mxu0 0.0
    %2014 = vmatpush2.msra.mxu0 0.0
    %2015 = vmatprep.subr.mxu0 0.0
    %2016 = vmatpush2.msra.mxu0 0.0
    %2017 = vmatprep.subr.mxu0 0.0
    %2018 = vmatpush2.msra.mxu0 0.0
    %2019 = vmatprep.subr.mxu0 0.0
    %2020 = vmatpush2.msra.mxu0 0.0
    %2021 = vmatprep.mubr.f32.mxu0 0.0
    %v2022 = vand.u32 %v1719, 4294901760
    %v2023 = vsub.f32 %v1719, %v2022
    %v2024 = vand.u32 %v2023, 4294901760
    %2025 = vmatmul.mubr.f32.gmra.mxu0 %v2024
    %v2026 = vpop.f32.mrf.mxu0
    %v2027 = vadd.f32 %v1952, %v2026
    %v2028 = vpop.f32.mrf.mxu0
    %2029 = vdwg.mxu0
    %2030 = vmatprep.subr.mxu0 0.0
    %2031 = vmatpush1.msra.mxu0 0.0
    %2032 = vmatprep.subr.mxu0 0.0
    %2033 = vmatpush1.msra.mxu0 0.0
    %2034 = vmatprep.subr.mxu0 0.0
    %2035 = vmatpush1.msra.mxu0 0.0
    %2036 = vmatprep.subr.mxu0 0.0
    %2037 = vmatpush1.msra.mxu0 0.0
    %2038 = vmatprep.subr.mxu0 0.0
    %2039 = vmatpush1.msra.mxu0 0.0
    %2040 = vmatprep.subr.mxu0 0.0
    %2041 = vmatpush1.msra.mxu0 0.0
    %2042 = vmatprep.subr.mxu0 0.0
    %2043 = vmatpush1.msra.mxu0 0.0
    %2044 = vmatprep.subr.mxu0 0.0
    %2045 = vmatpush1.msra.mxu0 0.0
    %2046 = vmatprep.subr.mxu0 0.0
    %2047 = vmatpush1.msra.mxu0 0.0
    %2048 = vmatprep.subr.mxu0 0.0
    %2049 = vmatpush1.msra.mxu0 0.0
    %2050 = vmatprep.subr.mxu0 0.0
    %2051 = vmatpush1.msra.mxu0 0.0
    %2052 = vmatprep.subr.mxu0 0.0
    %2053 = vmatpush1.msra.mxu0 0.0
    %2054 = vmatprep.subr.mxu0 0.0
    %2055 = vmatpush1.msra.mxu0 0.0
    %2056 = vmatprep.subr.mxu0 0.0
    %2057 = vmatpush1.msra.mxu0 0.0
    %2058 = vmatprep.subr.mxu0 0.0
    %v2059 = vand.u32 %v28, 4294901760
    %v2060 = vsub.f32 %v28, %v2059
    %v2061 = vand.u32 %v2060, 4294901760
    %2062 = vmatpush1.msra.mxu0 %v2061
    %2063 = vmatprep.subr.mxu0 0.0
    %v2064 = vand.u32 %v27, 4294901760
    %v2065 = vsub.f32 %v27, %v2064
    %v2066 = vand.u32 %v2065, 4294901760
    %2067 = vmatpush1.msra.mxu0 %v2066
    %2068 = vmatprep.subr.mxu0 0.0
    %2069 = vmatpush2.msra.mxu0 0.0
    %2070 = vmatprep.subr.mxu0 0.0
    %2071 = vmatpush2.msra.mxu0 0.0
    %2072 = vmatprep.subr.mxu0 0.0
    %2073 = vmatpush2.msra.mxu0 0.0
    %2074 = vmatprep.subr.mxu0 0.0
    %2075 = vmatpush2.msra.mxu0 0.0
    %2076 = vmatprep.subr.mxu0 0.0
    %2077 = vmatpush2.msra.mxu0 0.0
    %2078 = vmatprep.subr.mxu0 0.0
    %2079 = vmatpush2.msra.mxu0 0.0
    %2080 = vmatprep.subr.mxu0 0.0
    %2081 = vmatpush2.msra.mxu0 0.0
    %2082 = vmatprep.subr.mxu0 0.0
    %2083 = vmatpush2.msra.mxu0 0.0
    %2084 = vmatprep.subr.mxu0 0.0
    %2085 = vmatpush2.msra.mxu0 0.0
    %2086 = vmatprep.subr.mxu0 0.0
    %2087 = vmatpush2.msra.mxu0 0.0
    %2088 = vmatprep.subr.mxu0 0.0
    %2089 = vmatpush2.msra.mxu0 0.0
    %2090 = vmatprep.subr.mxu0 0.0
    %2091 = vmatpush2.msra.mxu0 0.0
    %2092 = vmatprep.subr.mxu0 0.0
    %2093 = vmatpush2.msra.mxu0 0.0
    %2094 = vmatprep.subr.mxu0 0.0
    %2095 = vmatpush2.msra.mxu0 0.0
    %2096 = vmatprep.subr.mxu0 0.0
    %2097 = vmatpush2.msra.mxu0 0.0
    %2098 = vmatprep.subr.mxu0 0.0
    %2099 = vmatpush2.msra.mxu0 0.0
    %2100 = vmatprep.mubr.f32.mxu0 0.0
    %v2101 = vand.u32 %v1719, 4294901760
    %2102 = vmatmul.mubr.f32.gmra.mxu0 %v2101
    %v2103 = vpop.f32.mrf.mxu0
    %v2104 = vadd.f32 %v2027, %v2103
    %v2105 = vpop.f32.mrf.mxu0
    %2106 = vdwg.mxu0
    %2107 = vmatprep.subr.mxu0 0.0
    %2108 = vmatpush1.msra.mxu0 0.0
    %2109 = vmatprep.subr.mxu0 0.0
    %2110 = vmatpush1.msra.mxu0 0.0
    %2111 = vmatprep.subr.mxu0 0.0
    %2112 = vmatpush1.msra.mxu0 0.0
    %2113 = vmatprep.subr.mxu0 0.0
    %2114 = vmatpush1.msra.mxu0 0.0
    %2115 = vmatprep.subr.mxu0 0.0
    %2116 = vmatpush1.msra.mxu0 0.0
    %2117 = vmatprep.subr.mxu0 0.0
    %2118 = vmatpush1.msra.mxu0 0.0
    %2119 = vmatprep.subr.mxu0 0.0
    %2120 = vmatpush1.msra.mxu0 0.0
    %2121 = vmatprep.subr.mxu0 0.0
    %2122 = vmatpush1.msra.mxu0 0.0
    %2123 = vmatprep.subr.mxu0 0.0
    %2124 = vmatpush1.msra.mxu0 0.0
    %2125 = vmatprep.subr.mxu0 0.0
    %2126 = vmatpush1.msra.mxu0 0.0
    %2127 = vmatprep.subr.mxu0 0.0
    %2128 = vmatpush1.msra.mxu0 0.0
    %2129 = vmatprep.subr.mxu0 0.0
    %2130 = vmatpush1.msra.mxu0 0.0
    %2131 = vmatprep.subr.mxu0 0.0
    %2132 = vmatpush1.msra.mxu0 0.0
    %2133 = vmatprep.subr.mxu0 0.0
    %2134 = vmatpush1.msra.mxu0 0.0
    %2135 = vmatprep.subr.mxu0 0.0
    %v2136 = vand.u32 %v28, 4294901760
    %2137 = vmatpush1.msra.mxu0 %v2136
    %2138 = vmatprep.subr.mxu0 0.0
    %v2139 = vand.u32 %v27, 4294901760
    %2140 = vmatpush1.msra.mxu0 %v2139
    %2141 = vmatprep.subr.mxu0 0.0
    %2142 = vmatpush2.msra.mxu0 0.0
    %2143 = vmatprep.subr.mxu0 0.0
    %2144 = vmatpush2.msra.mxu0 0.0
    %2145 = vmatprep.subr.mxu0 0.0
    %2146 = vmatpush2.msra.mxu0 0.0
    %2147 = vmatprep.subr.mxu0 0.0
    %2148 = vmatpush2.msra.mxu0 0.0
    %2149 = vmatprep.subr.mxu0 0.0
    %2150 = vmatpush2.msra.mxu0 0.0
    %2151 = vmatprep.subr.mxu0 0.0
    %2152 = vmatpush2.msra.mxu0 0.0
    %2153 = vmatprep.subr.mxu0 0.0
    %2154 = vmatpush2.msra.mxu0 0.0
    %2155 = vmatprep.subr.mxu0 0.0
    %2156 = vmatpush2.msra.mxu0 0.0
    %2157 = vmatprep.subr.mxu0 0.0
    %2158 = vmatpush2.msra.mxu0 0.0
    %2159 = vmatprep.subr.mxu0 0.0
    %2160 = vmatpush2.msra.mxu0 0.0
    %2161 = vmatprep.subr.mxu0 0.0
    %2162 = vmatpush2.msra.mxu0 0.0
    %2163 = vmatprep.subr.mxu0 0.0
    %2164 = vmatpush2.msra.mxu0 0.0
    %2165 = vmatprep.subr.mxu0 0.0
    %2166 = vmatpush2.msra.mxu0 0.0
    %2167 = vmatprep.subr.mxu0 0.0
    %2168 = vmatpush2.msra.mxu0 0.0
    %2169 = vmatprep.subr.mxu0 0.0
    %2170 = vmatpush2.msra.mxu0 0.0
    %2171 = vmatprep.subr.mxu0 0.0
    %2172 = vmatpush2.msra.mxu0 0.0
    %2173 = vmatprep.mubr.f32.mxu0 0.0
    %v2174 = vand.u32 %v1719, 4294901760
    %2175 = vmatmul.mubr.f32.gmra.mxu0 %v2174
    %v2176 = vpop.f32.mrf.mxu0
    %v2177 = vadd.f32 %v2104, %v2176
    %v2178 = vpop.f32.mrf.mxu0
    %2179 = vdwg.mxu0
    %2180 = vmatprep.subr.mxu0 0.0
    %v2181 = vand.u32 %v45, 4294901760
    %2182 = vmatpush1.msra.mxu0 %v2181
    %2183 = vmatprep.subr.mxu0 0.0
    %v2184 = vand.u32 %v44, 4294901760
    %2185 = vmatpush1.msra.mxu0 %v2184
    %2186 = vmatprep.subr.mxu0 0.0
    %v2187 = vand.u32 %v43, 4294901760
    %2188 = vmatpush1.msra.mxu0 %v2187
    %2189 = vmatprep.subr.mxu0 0.0
    %v2190 = vand.u32 %v42, 4294901760
    %2191 = vmatpush1.msra.mxu0 %v2190
    %2192 = vmatprep.subr.mxu0 0.0
    %v2193 = vand.u32 %v41, 4294901760
    %2194 = vmatpush1.msra.mxu0 %v2193
    %2195 = vmatprep.subr.mxu0 0.0
    %v2196 = vand.u32 %v40, 4294901760
    %2197 = vmatpush1.msra.mxu0 %v2196
    %2198 = vmatprep.subr.mxu0 0.0
    %v2199 = vand.u32 %v39, 4294901760
    %2200 = vmatpush1.msra.mxu0 %v2199
    %2201 = vmatprep.subr.mxu0 0.0
    %v2202 = vand.u32 %v38, 4294901760
    %2203 = vmatpush1.msra.mxu0 %v2202
    %2204 = vmatprep.subr.mxu0 0.0
    %v2205 = vand.u32 %v37, 4294901760
    %2206 = vmatpush1.msra.mxu0 %v2205
    %2207 = vmatprep.subr.mxu0 0.0
    %v2208 = vand.u32 %v36, 4294901760
    %2209 = vmatpush1.msra.mxu0 %v2208
    %2210 = vmatprep.subr.mxu0 0.0
    %v2211 = vand.u32 %v35, 4294901760
    %2212 = vmatpush1.msra.mxu0 %v2211
    %2213 = vmatprep.subr.mxu0 0.0
    %v2214 = vand.u32 %v34, 4294901760
    %2215 = vmatpush1.msra.mxu0 %v2214
    %2216 = vmatprep.subr.mxu0 0.0
    %v2217 = vand.u32 %v33, 4294901760
    %2218 = vmatpush1.msra.mxu0 %v2217
    %2219 = vmatprep.subr.mxu0 0.0
    %v2220 = vand.u32 %v32, 4294901760
    %2221 = vmatpush1.msra.mxu0 %v2220
    %2222 = vmatprep.subr.mxu0 0.0
    %v2223 = vand.u32 %v31, 4294901760
    %2224 = vmatpush1.msra.mxu0 %v2223
    %2225 = vmatprep.subr.mxu0 0.0
    %v2226 = vand.u32 %v30, 4294901760
    %2227 = vmatpush1.msra.mxu0 %v2226
    %2228 = vmatprep.subr.mxu0 0.0
    %2229 = vmatpush2.msra.mxu0 0.0
    %2230 = vmatprep.subr.mxu0 0.0
    %2231 = vmatpush2.msra.mxu0 0.0
    %2232 = vmatprep.subr.mxu0 0.0
    %2233 = vmatpush2.msra.mxu0 0.0
    %2234 = vmatprep.subr.mxu0 0.0
    %2235 = vmatpush2.msra.mxu0 0.0
    %2236 = vmatprep.subr.mxu0 0.0
    %2237 = vmatpush2.msra.mxu0 0.0
    %2238 = vmatprep.subr.mxu0 0.0
    %2239 = vmatpush2.msra.mxu0 0.0
    %2240 = vmatprep.subr.mxu0 0.0
    %2241 = vmatpush2.msra.mxu0 0.0
    %2242 = vmatprep.subr.mxu0 0.0
    %2243 = vmatpush2.msra.mxu0 0.0
    %2244 = vmatprep.subr.mxu0 0.0
    %2245 = vmatpush2.msra.mxu0 0.0
    %2246 = vmatprep.subr.mxu0 0.0
    %2247 = vmatpush2.msra.mxu0 0.0
    %2248 = vmatprep.subr.mxu0 0.0
    %2249 = vmatpush2.msra.mxu0 0.0
    %2250 = vmatprep.subr.mxu0 0.0
    %2251 = vmatpush2.msra.mxu0 0.0
    %2252 = vmatprep.subr.mxu0 0.0
    %2253 = vmatpush2.msra.mxu0 0.0
    %2254 = vmatprep.subr.mxu0 0.0
    %2255 = vmatpush2.msra.mxu0 0.0
    %2256 = vmatprep.subr.mxu0 0.0
    %2257 = vmatpush2.msra.mxu0 0.0
    %2258 = vmatprep.subr.mxu0 0.0
    %2259 = vmatpush2.msra.mxu0 0.0
    %2260 = vmatprep.mubr.f32.mxu0 0.0
    %v2261 = vand.u32 %v1686, 4294901760
    %v2262 = vsub.f32 %v1686, %v2261
    %v2263 = vand.u32 %v2262, 4294901760
    %v2264 = vsub.f32 %v2262, %v2263
    %v2265 = vand.u32 %v2264, 4294901760
    %2266 = vmatmul.mubr.f32.gmra.mxu0 %v2265
    %v2267 = vpop.f32.mrf.mxu0
    %v2268 = vadd.f32 0.0, %v2267
    %v2269 = vpop.f32.mrf.mxu0
    %2270 = vdwg.mxu0
    %2271 = vmatprep.subr.mxu0 0.0
    %v2272 = vand.u32 %v45, 4294901760
    %v2273 = vsub.f32 %v45, %v2272
    %v2274 = vand.u32 %v2273, 4294901760
    %v2275 = vsub.f32 %v2273, %v2274
    %v2276 = vand.u32 %v2275, 4294901760
    %2277 = vmatpush1.msra.mxu0 %v2276
    %2278 = vmatprep.subr.mxu0 0.0
    %v2279 = vand.u32 %v44, 4294901760
    %v2280 = vsub.f32 %v44, %v2279
    %v2281 = vand.u32 %v2280, 4294901760
    %v2282 = vsub.f32 %v2280, %v2281
    %v2283 = vand.u32 %v2282, 4294901760
    %2284 = vmatpush1.msra.mxu0 %v2283
    %2285 = vmatprep.subr.mxu0 0.0
    %v2286 = vand.u32 %v43, 4294901760
    %v2287 = vsub.f32 %v43, %v2286
    %v2288 = vand.u32 %v2287, 4294901760
    %v2289 = vsub.f32 %v2287, %v2288
    %v2290 = vand.u32 %v2289, 4294901760
    %2291 = vmatpush1.msra.mxu0 %v2290
    %2292 = vmatprep.subr.mxu0 0.0
    %v2293 = vand.u32 %v42, 4294901760
    %v2294 = vsub.f32 %v42, %v2293
    %v2295 = vand.u32 %v2294, 4294901760
    %v2296 = vsub.f32 %v2294, %v2295
    %v2297 = vand.u32 %v2296, 4294901760
    %2298 = vmatpush1.msra.mxu0 %v2297
    %2299 = vmatprep.subr.mxu0 0.0
    %v2300 = vand.u32 %v41, 4294901760
    %v2301 = vsub.f32 %v41, %v2300
    %v2302 = vand.u32 %v2301, 4294901760
    %v2303 = vsub.f32 %v2301, %v2302
    %v2304 = vand.u32 %v2303, 4294901760
    %2305 = vmatpush1.msra.mxu0 %v2304
    %2306 = vmatprep.subr.mxu0 0.0
    %v2307 = vand.u32 %v40, 4294901760
    %v2308 = vsub.f32 %v40, %v2307
    %v2309 = vand.u32 %v2308, 4294901760
    %v2310 = vsub.f32 %v2308, %v2309
    %v2311 = vand.u32 %v2310, 4294901760
    %2312 = vmatpush1.msra.mxu0 %v2311
    %2313 = vmatprep.subr.mxu0 0.0
    %v2314 = vand.u32 %v39, 4294901760
    %v2315 = vsub.f32 %v39, %v2314
    %v2316 = vand.u32 %v2315, 4294901760
    %v2317 = vsub.f32 %v2315, %v2316
    %v2318 = vand.u32 %v2317, 4294901760
    %2319 = vmatpush1.msra.mxu0 %v2318
    %2320 = vmatprep.subr.mxu0 0.0
    %v2321 = vand.u32 %v38, 4294901760
    %v2322 = vsub.f32 %v38, %v2321
    %v2323 = vand.u32 %v2322, 4294901760
    %v2324 = vsub.f32 %v2322, %v2323
    %v2325 = vand.u32 %v2324, 4294901760
    %2326 = vmatpush1.msra.mxu0 %v2325
    %2327 = vmatprep.subr.mxu0 0.0
    %v2328 = vand.u32 %v37, 4294901760
    %v2329 = vsub.f32 %v37, %v2328
    %v2330 = vand.u32 %v2329, 4294901760
    %v2331 = vsub.f32 %v2329, %v2330
    %v2332 = vand.u32 %v2331, 4294901760
    %2333 = vmatpush1.msra.mxu0 %v2332
    %2334 = vmatprep.subr.mxu0 0.0
    %v2335 = vand.u32 %v36, 4294901760
    %v2336 = vsub.f32 %v36, %v2335
    %v2337 = vand.u32 %v2336, 4294901760
    %v2338 = vsub.f32 %v2336, %v2337
    %v2339 = vand.u32 %v2338, 4294901760
    %2340 = vmatpush1.msra.mxu0 %v2339
    %2341 = vmatprep.subr.mxu0 0.0
    %v2342 = vand.u32 %v35, 4294901760
    %v2343 = vsub.f32 %v35, %v2342
    %v2344 = vand.u32 %v2343, 4294901760
    %v2345 = vsub.f32 %v2343, %v2344
    %v2346 = vand.u32 %v2345, 4294901760
    %2347 = vmatpush1.msra.mxu0 %v2346
    %2348 = vmatprep.subr.mxu0 0.0
    %v2349 = vand.u32 %v34, 4294901760
    %v2350 = vsub.f32 %v34, %v2349
    %v2351 = vand.u32 %v2350, 4294901760
    %v2352 = vsub.f32 %v2350, %v2351
    %v2353 = vand.u32 %v2352, 4294901760
    %2354 = vmatpush1.msra.mxu0 %v2353
    %2355 = vmatprep.subr.mxu0 0.0
    %v2356 = vand.u32 %v33, 4294901760
    %v2357 = vsub.f32 %v33, %v2356
    %v2358 = vand.u32 %v2357, 4294901760
    %v2359 = vsub.f32 %v2357, %v2358
    %v2360 = vand.u32 %v2359, 4294901760
    %2361 = vmatpush1.msra.mxu0 %v2360
    %2362 = vmatprep.subr.mxu0 0.0
    %v2363 = vand.u32 %v32, 4294901760
    %v2364 = vsub.f32 %v32, %v2363
    %v2365 = vand.u32 %v2364, 4294901760
    %v2366 = vsub.f32 %v2364, %v2365
    %v2367 = vand.u32 %v2366, 4294901760
    %2368 = vmatpush1.msra.mxu0 %v2367
    %2369 = vmatprep.subr.mxu0 0.0
    %v2370 = vand.u32 %v31, 4294901760
    %v2371 = vsub.f32 %v31, %v2370
    %v2372 = vand.u32 %v2371, 4294901760
    %v2373 = vsub.f32 %v2371, %v2372
    %v2374 = vand.u32 %v2373, 4294901760
    %2375 = vmatpush1.msra.mxu0 %v2374
    %2376 = vmatprep.subr.mxu0 0.0
    %v2377 = vand.u32 %v30, 4294901760
    %v2378 = vsub.f32 %v30, %v2377
    %v2379 = vand.u32 %v2378, 4294901760
    %v2380 = vsub.f32 %v2378, %v2379
    %v2381 = vand.u32 %v2380, 4294901760
    %2382 = vmatpush1.msra.mxu0 %v2381
    %2383 = vmatprep.subr.mxu0 0.0
    %2384 = vmatpush2.msra.mxu0 0.0
    %2385 = vmatprep.subr.mxu0 0.0
    %2386 = vmatpush2.msra.mxu0 0.0
    %2387 = vmatprep.subr.mxu0 0.0
    %2388 = vmatpush2.msra.mxu0 0.0
    %2389 = vmatprep.subr.mxu0 0.0
    %2390 = vmatpush2.msra.mxu0 0.0
    %2391 = vmatprep.subr.mxu0 0.0
    %2392 = vmatpush2.msra.mxu0 0.0
    %2393 = vmatprep.subr.mxu0 0.0
    %2394 = vmatpush2.msra.mxu0 0.0
    %2395 = vmatprep.subr.mxu0 0.0
    %2396 = vmatpush2.msra.mxu0 0.0
    %2397 = vmatprep.subr.mxu0 0.0
    %2398 = vmatpush2.msra.mxu0 0.0
    %2399 = vmatprep.subr.mxu0 0.0
    %2400 = vmatpush2.msra.mxu0 0.0
    %2401 = vmatprep.subr.mxu0 0.0
    %2402 = vmatpush2.msra.mxu0 0.0
    %2403 = vmatprep.subr.mxu0 0.0
    %2404 = vmatpush2.msra.mxu0 0.0
    %2405 = vmatprep.subr.mxu0 0.0
    %2406 = vmatpush2.msra.mxu0 0.0
    %2407 = vmatprep.subr.mxu0 0.0
    %2408 = vmatpush2.msra.mxu0 0.0
    %2409 = vmatprep.subr.mxu0 0.0
    %2410 = vmatpush2.msra.mxu0 0.0
    %2411 = vmatprep.subr.mxu0 0.0
    %2412 = vmatpush2.msra.mxu0 0.0
    %2413 = vmatprep.subr.mxu0 0.0
    %2414 = vmatpush2.msra.mxu0 0.0
    %2415 = vmatprep.mubr.f32.mxu0 0.0
    %v2416 = vand.u32 %v1686, 4294901760
    %2417 = vmatmul.mubr.f32.gmra.mxu0 %v2416
    %v2418 = vpop.f32.mrf.mxu0
    %v2419 = vadd.f32 %v2268, %v2418
    %v2420 = vpop.f32.mrf.mxu0
    %2421 = vdwg.mxu0
    %2422 = vmatprep.subr.mxu0 0.0
    %v2423 = vand.u32 %v45, 4294901760
    %v2424 = vsub.f32 %v45, %v2423
    %2425 = vmatpush1.msra.mxu0 %v2424
    %2426 = vmatprep.subr.mxu0 0.0
    %v2427 = vand.u32 %v44, 4294901760
    %v2428 = vsub.f32 %v44, %v2427
    %2429 = vmatpush1.msra.mxu0 %v2428
    %2430 = vmatprep.subr.mxu0 0.0
    %v2431 = vand.u32 %v43, 4294901760
    %v2432 = vsub.f32 %v43, %v2431
    %2433 = vmatpush1.msra.mxu0 %v2432
    %2434 = vmatprep.subr.mxu0 0.0
    %v2435 = vand.u32 %v42, 4294901760
    %v2436 = vsub.f32 %v42, %v2435
    %2437 = vmatpush1.msra.mxu0 %v2436
    %2438 = vmatprep.subr.mxu0 0.0
    %v2439 = vand.u32 %v41, 4294901760
    %v2440 = vsub.f32 %v41, %v2439
    %2441 = vmatpush1.msra.mxu0 %v2440
    %2442 = vmatprep.subr.mxu0 0.0
    %v2443 = vand.u32 %v40, 4294901760
    %v2444 = vsub.f32 %v40, %v2443
    %2445 = vmatpush1.msra.mxu0 %v2444
    %2446 = vmatprep.subr.mxu0 0.0
    %v2447 = vand.u32 %v39, 4294901760
    %v2448 = vsub.f32 %v39, %v2447
    %2449 = vmatpush1.msra.mxu0 %v2448
    %2450 = vmatprep.subr.mxu0 0.0
    %v2451 = vand.u32 %v38, 4294901760
    %v2452 = vsub.f32 %v38, %v2451
    %2453 = vmatpush1.msra.mxu0 %v2452
    %2454 = vmatprep.subr.mxu0 0.0
    %v2455 = vand.u32 %v37, 4294901760
    %v2456 = vsub.f32 %v37, %v2455
    %2457 = vmatpush1.msra.mxu0 %v2456
    %2458 = vmatprep.subr.mxu0 0.0
    %v2459 = vand.u32 %v36, 4294901760
    %v2460 = vsub.f32 %v36, %v2459
    %2461 = vmatpush1.msra.mxu0 %v2460
    %2462 = vmatprep.subr.mxu0 0.0
    %v2463 = vand.u32 %v35, 4294901760
    %v2464 = vsub.f32 %v35, %v2463
    %2465 = vmatpush1.msra.mxu0 %v2464
    %2466 = vmatprep.subr.mxu0 0.0
    %v2467 = vand.u32 %v34, 4294901760
    %v2468 = vsub.f32 %v34, %v2467
    %2469 = vmatpush1.msra.mxu0 %v2468
    %2470 = vmatprep.subr.mxu0 0.0
    %v2471 = vand.u32 %v33, 4294901760
    %v2472 = vsub.f32 %v33, %v2471
    %2473 = vmatpush1.msra.mxu0 %v2472
    %2474 = vmatprep.subr.mxu0 0.0
    %v2475 = vand.u32 %v32, 4294901760
    %v2476 = vsub.f32 %v32, %v2475
    %2477 = vmatpush1.msra.mxu0 %v2476
    %2478 = vmatprep.subr.mxu0 0.0
    %v2479 = vand.u32 %v31, 4294901760
    %v2480 = vsub.f32 %v31, %v2479
    %2481 = vmatpush1.msra.mxu0 %v2480
    %2482 = vmatprep.subr.mxu0 0.0
    %v2483 = vand.u32 %v30, 4294901760
    %v2484 = vsub.f32 %v30, %v2483
    %2485 = vmatpush1.msra.mxu0 %v2484
    %2486 = vmatprep.subr.mxu0 0.0
    %2487 = vmatpush2.msra.mxu0 0.0
    %2488 = vmatprep.subr.mxu0 0.0
    %2489 = vmatpush2.msra.mxu0 0.0
    %2490 = vmatprep.subr.mxu0 0.0
    %2491 = vmatpush2.msra.mxu0 0.0
    %2492 = vmatprep.subr.mxu0 0.0
    %2493 = vmatpush2.msra.mxu0 0.0
    %2494 = vmatprep.subr.mxu0 0.0
    %2495 = vmatpush2.msra.mxu0 0.0
    %2496 = vmatprep.subr.mxu0 0.0
    %2497 = vmatpush2.msra.mxu0 0.0
    %2498 = vmatprep.subr.mxu0 0.0
    %2499 = vmatpush2.msra.mxu0 0.0
    %2500 = vmatprep.subr.mxu0 0.0
    %2501 = vmatpush2.msra.mxu0 0.0
    %2502 = vmatprep.subr.mxu0 0.0
    %2503 = vmatpush2.msra.mxu0 0.0
    %2504 = vmatprep.subr.mxu0 0.0
    %2505 = vmatpush2.msra.mxu0 0.0
    %2506 = vmatprep.subr.mxu0 0.0
    %2507 = vmatpush2.msra.mxu0 0.0
    %2508 = vmatprep.subr.mxu0 0.0
    %2509 = vmatpush2.msra.mxu0 0.0
    %2510 = vmatprep.subr.mxu0 0.0
    %2511 = vmatpush2.msra.mxu0 0.0
    %2512 = vmatprep.subr.mxu0 0.0
    %2513 = vmatpush2.msra.mxu0 0.0
    %2514 = vmatprep.subr.mxu0 0.0
    %2515 = vmatpush2.msra.mxu0 0.0
    %2516 = vmatprep.subr.mxu0 0.0
    %2517 = vmatpush2.msra.mxu0 0.0
    %2518 = vmatprep.mubr.f32.mxu0 0.0
    %v2519 = vand.u32 %v1686, 4294901760
    %v2520 = vsub.f32 %v1686, %v2519
    %2521 = vmatmul.mubr.f32.gmra.mxu0 %v2520
    %v2522 = vpop.f32.mrf.mxu0
    %v2523 = vadd.f32 %v2419, %v2522
    %v2524 = vpop.f32.mrf.mxu0
    %2525 = vdwg.mxu0
    %2526 = vmatprep.subr.mxu0 0.0
    %v2527 = vand.u32 %v45, 4294901760
    %2528 = vmatpush1.msra.mxu0 %v2527
    %2529 = vmatprep.subr.mxu0 0.0
    %v2530 = vand.u32 %v44, 4294901760
    %2531 = vmatpush1.msra.mxu0 %v2530
    %2532 = vmatprep.subr.mxu0 0.0
    %v2533 = vand.u32 %v43, 4294901760
    %2534 = vmatpush1.msra.mxu0 %v2533
    %2535 = vmatprep.subr.mxu0 0.0
    %v2536 = vand.u32 %v42, 4294901760
    %2537 = vmatpush1.msra.mxu0 %v2536
    %2538 = vmatprep.subr.mxu0 0.0
    %v2539 = vand.u32 %v41, 4294901760
    %2540 = vmatpush1.msra.mxu0 %v2539
    %2541 = vmatprep.subr.mxu0 0.0
    %v2542 = vand.u32 %v40, 4294901760
    %2543 = vmatpush1.msra.mxu0 %v2542
    %2544 = vmatprep.subr.mxu0 0.0
    %v2545 = vand.u32 %v39, 4294901760
    %2546 = vmatpush1.msra.mxu0 %v2545
    %2547 = vmatprep.subr.mxu0 0.0
    %v2548 = vand.u32 %v38, 4294901760
    %2549 = vmatpush1.msra.mxu0 %v2548
    %2550 = vmatprep.subr.mxu0 0.0
    %v2551 = vand.u32 %v37, 4294901760
    %2552 = vmatpush1.msra.mxu0 %v2551
    %2553 = vmatprep.subr.mxu0 0.0
    %v2554 = vand.u32 %v36, 4294901760
    %2555 = vmatpush1.msra.mxu0 %v2554
    %2556 = vmatprep.subr.mxu0 0.0
    %v2557 = vand.u32 %v35, 4294901760
    %2558 = vmatpush1.msra.mxu0 %v2557
    %2559 = vmatprep.subr.mxu0 0.0
    %v2560 = vand.u32 %v34, 4294901760
    %2561 = vmatpush1.msra.mxu0 %v2560
    %2562 = vmatprep.subr.mxu0 0.0
    %v2563 = vand.u32 %v33, 4294901760
    %2564 = vmatpush1.msra.mxu0 %v2563
    %2565 = vmatprep.subr.mxu0 0.0
    %v2566 = vand.u32 %v32, 4294901760
    %2567 = vmatpush1.msra.mxu0 %v2566
    %2568 = vmatprep.subr.mxu0 0.0
    %v2569 = vand.u32 %v31, 4294901760
    %2570 = vmatpush1.msra.mxu0 %v2569
    %2571 = vmatprep.subr.mxu0 0.0
    %v2572 = vand.u32 %v30, 4294901760
    %2573 = vmatpush1.msra.mxu0 %v2572
    %2574 = vmatprep.subr.mxu0 0.0
    %2575 = vmatpush2.msra.mxu0 0.0
    %2576 = vmatprep.subr.mxu0 0.0
    %2577 = vmatpush2.msra.mxu0 0.0
    %2578 = vmatprep.subr.mxu0 0.0
    %2579 = vmatpush2.msra.mxu0 0.0
    %2580 = vmatprep.subr.mxu0 0.0
    %2581 = vmatpush2.msra.mxu0 0.0
    %2582 = vmatprep.subr.mxu0 0.0
    %2583 = vmatpush2.msra.mxu0 0.0
    %2584 = vmatprep.subr.mxu0 0.0
    %2585 = vmatpush2.msra.mxu0 0.0
    %2586 = vmatprep.subr.mxu0 0.0
    %2587 = vmatpush2.msra.mxu0 0.0
    %2588 = vmatprep.subr.mxu0 0.0
    %2589 = vmatpush2.msra.mxu0 0.0
    %2590 = vmatprep.subr.mxu0 0.0
    %2591 = vmatpush2.msra.mxu0 0.0
    %2592 = vmatprep.subr.mxu0 0.0
    %2593 = vmatpush2.msra.mxu0 0.0
    %2594 = vmatprep.subr.mxu0 0.0
    %2595 = vmatpush2.msra.mxu0 0.0
    %2596 = vmatprep.subr.mxu0 0.0
    %2597 = vmatpush2.msra.mxu0 0.0
    %2598 = vmatprep.subr.mxu0 0.0
    %2599 = vmatpush2.msra.mxu0 0.0
    %2600 = vmatprep.subr.mxu0 0.0
    %2601 = vmatpush2.msra.mxu0 0.0
    %2602 = vmatprep.subr.mxu0 0.0
    %2603 = vmatpush2.msra.mxu0 0.0
    %2604 = vmatprep.subr.mxu0 0.0
    %2605 = vmatpush2.msra.mxu0 0.0
    %2606 = vmatprep.mubr.f32.mxu0 0.0
    %v2607 = vand.u32 %v1686, 4294901760
    %v2608 = vsub.f32 %v1686, %v2607
    %v2609 = vand.u32 %v2608, 4294901760
    %2610 = vmatmul.mubr.f32.gmra.mxu0 %v2609
    %v2611 = vpop.f32.mrf.mxu0
    %v2612 = vadd.f32 %v2523, %v2611
    %v2613 = vpop.f32.mrf.mxu0
    %2614 = vdwg.mxu0
    %2615 = vmatprep.subr.mxu0 0.0
    %v2616 = vand.u32 %v45, 4294901760
    %v2617 = vsub.f32 %v45, %v2616
    %v2618 = vand.u32 %v2617, 4294901760
    %2619 = vmatpush1.msra.mxu0 %v2618
    %2620 = vmatprep.subr.mxu0 0.0
    %v2621 = vand.u32 %v44, 4294901760
    %v2622 = vsub.f32 %v44, %v2621
    %v2623 = vand.u32 %v2622, 4294901760
    %2624 = vmatpush1.msra.mxu0 %v2623
    %2625 = vmatprep.subr.mxu0 0.0
    %v2626 = vand.u32 %v43, 4294901760
    %v2627 = vsub.f32 %v43, %v2626
    %v2628 = vand.u32 %v2627, 4294901760
    %2629 = vmatpush1.msra.mxu0 %v2628
    %2630 = vmatprep.subr.mxu0 0.0
    %v2631 = vand.u32 %v42, 4294901760
    %v2632 = vsub.f32 %v42, %v2631
    %v2633 = vand.u32 %v2632, 4294901760
    %2634 = vmatpush1.msra.mxu0 %v2633
    %2635 = vmatprep.subr.mxu0 0.0
    %v2636 = vand.u32 %v41, 4294901760
    %v2637 = vsub.f32 %v41, %v2636
    %v2638 = vand.u32 %v2637, 4294901760
    %2639 = vmatpush1.msra.mxu0 %v2638
    %2640 = vmatprep.subr.mxu0 0.0
    %v2641 = vand.u32 %v40, 4294901760
    %v2642 = vsub.f32 %v40, %v2641
    %v2643 = vand.u32 %v2642, 4294901760
    %2644 = vmatpush1.msra.mxu0 %v2643
    %2645 = vmatprep.subr.mxu0 0.0
    %v2646 = vand.u32 %v39, 4294901760
    %v2647 = vsub.f32 %v39, %v2646
    %v2648 = vand.u32 %v2647, 4294901760
    %2649 = vmatpush1.msra.mxu0 %v2648
    %2650 = vmatprep.subr.mxu0 0.0
    %v2651 = vand.u32 %v38, 4294901760
    %v2652 = vsub.f32 %v38, %v2651
    %v2653 = vand.u32 %v2652, 4294901760
    %2654 = vmatpush1.msra.mxu0 %v2653
    %2655 = vmatprep.subr.mxu0 0.0
    %v2656 = vand.u32 %v37, 4294901760
    %v2657 = vsub.f32 %v37, %v2656
    %v2658 = vand.u32 %v2657, 4294901760
    %2659 = vmatpush1.msra.mxu0 %v2658
    %2660 = vmatprep.subr.mxu0 0.0
    %v2661 = vand.u32 %v36, 4294901760
    %v2662 = vsub.f32 %v36, %v2661
    %v2663 = vand.u32 %v2662, 4294901760
    %2664 = vmatpush1.msra.mxu0 %v2663
    %2665 = vmatprep.subr.mxu0 0.0
    %v2666 = vand.u32 %v35, 4294901760
    %v2667 = vsub.f32 %v35, %v2666
    %v2668 = vand.u32 %v2667, 4294901760
    %2669 = vmatpush1.msra.mxu0 %v2668
    %2670 = vmatprep.subr.mxu0 0.0
    %v2671 = vand.u32 %v34, 4294901760
    %v2672 = vsub.f32 %v34, %v2671
    %v2673 = vand.u32 %v2672, 4294901760
    %2674 = vmatpush1.msra.mxu0 %v2673
    %2675 = vmatprep.subr.mxu0 0.0
    %v2676 = vand.u32 %v33, 4294901760
    %v2677 = vsub.f32 %v33, %v2676
    %v2678 = vand.u32 %v2677, 4294901760
    %2679 = vmatpush1.msra.mxu0 %v2678
    %2680 = vmatprep.subr.mxu0 0.0
    %v2681 = vand.u32 %v32, 4294901760
    %v2682 = vsub.f32 %v32, %v2681
    %v2683 = vand.u32 %v2682, 4294901760
    %2684 = vmatpush1.msra.mxu0 %v2683
    %2685 = vmatprep.subr.mxu0 0.0
    %v2686 = vand.u32 %v31, 4294901760
    %v2687 = vsub.f32 %v31, %v2686
    %v2688 = vand.u32 %v2687, 4294901760
    %2689 = vmatpush1.msra.mxu0 %v2688
    %2690 = vmatprep.subr.mxu0 0.0
    %v2691 = vand.u32 %v30, 4294901760
    %v2692 = vsub.f32 %v30, %v2691
    %v2693 = vand.u32 %v2692, 4294901760
    %2694 = vmatpush1.msra.mxu0 %v2693
    %2695 = vmatprep.subr.mxu0 0.0
    %2696 = vmatpush2.msra.mxu0 0.0
    %2697 = vmatprep.subr.mxu0 0.0
    %2698 = vmatpush2.msra.mxu0 0.0
    %2699 = vmatprep.subr.mxu0 0.0
    %2700 = vmatpush2.msra.mxu0 0.0
    %2701 = vmatprep.subr.mxu0 0.0
    %2702 = vmatpush2.msra.mxu0 0.0
    %2703 = vmatprep.subr.mxu0 0.0
    %2704 = vmatpush2.msra.mxu0 0.0
    %2705 = vmatprep.subr.mxu0 0.0
    %2706 = vmatpush2.msra.mxu0 0.0
    %2707 = vmatprep.subr.mxu0 0.0
    %2708 = vmatpush2.msra.mxu0 0.0
    %2709 = vmatprep.subr.mxu0 0.0
    %2710 = vmatpush2.msra.mxu0 0.0
    %2711 = vmatprep.subr.mxu0 0.0
    %2712 = vmatpush2.msra.mxu0 0.0
    %2713 = vmatprep.subr.mxu0 0.0
    %2714 = vmatpush2.msra.mxu0 0.0
    %2715 = vmatprep.subr.mxu0 0.0
    %2716 = vmatpush2.msra.mxu0 0.0
    %2717 = vmatprep.subr.mxu0 0.0
    %2718 = vmatpush2.msra.mxu0 0.0
    %2719 = vmatprep.subr.mxu0 0.0
    %2720 = vmatpush2.msra.mxu0 0.0
    %2721 = vmatprep.subr.mxu0 0.0
    %2722 = vmatpush2.msra.mxu0 0.0
    %2723 = vmatprep.subr.mxu0 0.0
    %2724 = vmatpush2.msra.mxu0 0.0
    %2725 = vmatprep.subr.mxu0 0.0
    %2726 = vmatpush2.msra.mxu0 0.0
    %2727 = vmatprep.mubr.f32.mxu0 0.0
    %v2728 = vand.u32 %v1686, 4294901760
    %2729 = vmatmul.mubr.f32.gmra.mxu0 %v2728
    %v2730 = vpop.f32.mrf.mxu0
    %v2731 = vadd.f32 %v2612, %v2730
    %v2732 = vpop.f32.mrf.mxu0
    %2733 = vdwg.mxu0
    %2734 = vmatprep.subr.mxu0 0.0
    %v2735 = vand.u32 %v45, 4294901760
    %2736 = vmatpush1.msra.mxu0 %v2735
    %2737 = vmatprep.subr.mxu0 0.0
    %v2738 = vand.u32 %v44, 4294901760
    %2739 = vmatpush1.msra.mxu0 %v2738
    %2740 = vmatprep.subr.mxu0 0.0
    %v2741 = vand.u32 %v43, 4294901760
    %2742 = vmatpush1.msra.mxu0 %v2741
    %2743 = vmatprep.subr.mxu0 0.0
    %v2744 = vand.u32 %v42, 4294901760
    %2745 = vmatpush1.msra.mxu0 %v2744
    %2746 = vmatprep.subr.mxu0 0.0
    %v2747 = vand.u32 %v41, 4294901760
    %2748 = vmatpush1.msra.mxu0 %v2747
    %2749 = vmatprep.subr.mxu0 0.0
    %v2750 = vand.u32 %v40, 4294901760
    %2751 = vmatpush1.msra.mxu0 %v2750
    %2752 = vmatprep.subr.mxu0 0.0
    %v2753 = vand.u32 %v39, 4294901760
    %2754 = vmatpush1.msra.mxu0 %v2753
    %2755 = vmatprep.subr.mxu0 0.0
    %v2756 = vand.u32 %v38, 4294901760
    %2757 = vmatpush1.msra.mxu0 %v2756
    %2758 = vmatprep.subr.mxu0 0.0
    %v2759 = vand.u32 %v37, 4294901760
    %2760 = vmatpush1.msra.mxu0 %v2759
    %2761 = vmatprep.subr.mxu0 0.0
    %v2762 = vand.u32 %v36, 4294901760
    %2763 = vmatpush1.msra.mxu0 %v2762
    %2764 = vmatprep.subr.mxu0 0.0
    %v2765 = vand.u32 %v35, 4294901760
    %2766 = vmatpush1.msra.mxu0 %v2765
    %2767 = vmatprep.subr.mxu0 0.0
    %v2768 = vand.u32 %v34, 4294901760
    %2769 = vmatpush1.msra.mxu0 %v2768
    %2770 = vmatprep.subr.mxu0 0.0
    %v2771 = vand.u32 %v33, 4294901760
    %2772 = vmatpush1.msra.mxu0 %v2771
    %2773 = vmatprep.subr.mxu0 0.0
    %v2774 = vand.u32 %v32, 4294901760
    %2775 = vmatpush1.msra.mxu0 %v2774
    %2776 = vmatprep.subr.mxu0 0.0
    %v2777 = vand.u32 %v31, 4294901760
    %2778 = vmatpush1.msra.mxu0 %v2777
    %2779 = vmatprep.subr.mxu0 0.0
    %v2780 = vand.u32 %v30, 4294901760
    %2781 = vmatpush1.msra.mxu0 %v2780
    %2782 = vmatprep.subr.mxu0 0.0
    %2783 = vmatpush2.msra.mxu0 0.0
    %2784 = vmatprep.subr.mxu0 0.0
    %2785 = vmatpush2.msra.mxu0 0.0
    %2786 = vmatprep.subr.mxu0 0.0
    %2787 = vmatpush2.msra.mxu0 0.0
    %2788 = vmatprep.subr.mxu0 0.0
    %2789 = vmatpush2.msra.mxu0 0.0
    %2790 = vmatprep.subr.mxu0 0.0
    %2791 = vmatpush2.msra.mxu0 0.0
    %2792 = vmatprep.subr.mxu0 0.0
    %2793 = vmatpush2.msra.mxu0 0.0
    %2794 = vmatprep.subr.mxu0 0.0
    %2795 = vmatpush2.msra.mxu0 0.0
    %2796 = vmatprep.subr.mxu0 0.0
    %2797 = vmatpush2.msra.mxu0 0.0
    %2798 = vmatprep.subr.mxu0 0.0
    %2799 = vmatpush2.msra.mxu0 0.0
    %2800 = vmatprep.subr.mxu0 0.0
    %2801 = vmatpush2.msra.mxu0 0.0
    %2802 = vmatprep.subr.mxu0 0.0
    %2803 = vmatpush2.msra.mxu0 0.0
    %2804 = vmatprep.subr.mxu0 0.0
    %2805 = vmatpush2.msra.mxu0 0.0
    %2806 = vmatprep.subr.mxu0 0.0
    %2807 = vmatpush2.msra.mxu0 0.0
    %2808 = vmatprep.subr.mxu0 0.0
    %2809 = vmatpush2.msra.mxu0 0.0
    %2810 = vmatprep.subr.mxu0 0.0
    %2811 = vmatpush2.msra.mxu0 0.0
    %2812 = vmatprep.subr.mxu0 0.0
    %2813 = vmatpush2.msra.mxu0 0.0
    %2814 = vmatprep.mubr.f32.mxu0 0.0
    %v2815 = vand.u32 %v1686, 4294901760
    %2816 = vmatmul.mubr.f32.gmra.mxu0 %v2815
    %v2817 = vpop.f32.mrf.mxu0
    %v2818 = vadd.f32 %v2731, %v2817
    %v2819 = vpop.f32.mrf.mxu0
    %2820 = vdwg.mxu0
    %v2821 = vadd.f32 %v2177, %v2818
    %v2822 = vtanh.pop %v2821
    %s2823 = scalar_lea.vmem [#allocation2], 16
    %2824 = vst [vmem:[%s2823] sm:$0xff] %v2822
    %v2825 = vld [vmem:[%s0 + $0x3] sm:$0x1]
    %v2826 = vld [vmem:[%s0 + $0xb] sm:$0x1]
    %v2827 = vld [vmem:[%s0 + $0x13] sm:$0x1]
    %v2828 = vld [vmem:[%s0 + $0x1b] sm:$0x1]
    %v2829 = vld [vmem:[%s0 + $0x23] sm:$0x1]
    %v2830 = vld [vmem:[%s0 + $0x2b] sm:$0x1]
    %v2831 = vld [vmem:[%s0 + $0x33] sm:$0x1]
    %v2832 = vld [vmem:[%s0 + $0x3b] sm:$0x1]
    %v2841 = vrot.slane %v2826, 7
    %v2842 = vsel %vm69, %v2841, %v2825
    %v2843 = vrot.slane %v2827, 6
    %v2844 = vsel %vm72, %v2843, %v2842
    %v2845 = vrot.slane %v2828, 5
    %v2846 = vsel %vm75, %v2845, %v2844
    %v2847 = vrot.slane %v2829, 4
    %v2848 = vsel %vm78, %v2847, %v2846
    %v2849 = vrot.slane %v2830, 3
    %v2850 = vsel %vm81, %v2849, %v2848
    %v2851 = vrot.slane %v2831, 2
    %v2852 = vsel %vm84, %v2851, %v2850
    %v2853 = vrot.slane %v2832, 1
    %v2854 = vsel %vm87, %v2853, %v2852
    %v2855 = vsel %vm89, %v2854, 0
    %2857 = vmatprep.subr.mxu0 0.0
    %2858 = vmatpush1.msra.mxu0 0.0
    %2859 = vmatprep.subr.mxu0 0.0
    %2860 = vmatpush1.msra.mxu0 0.0
    %2861 = vmatprep.subr.mxu0 0.0
    %2862 = vmatpush1.msra.mxu0 0.0
    %2863 = vmatprep.subr.mxu0 0.0
    %2864 = vmatpush1.msra.mxu0 0.0
    %2865 = vmatprep.subr.mxu0 0.0
    %2866 = vmatpush1.msra.mxu0 0.0
    %2867 = vmatprep.subr.mxu0 0.0
    %2868 = vmatpush1.msra.mxu0 0.0
    %2869 = vmatprep.subr.mxu0 0.0
    %2870 = vmatpush1.msra.mxu0 0.0
    %2871 = vmatprep.subr.mxu0 0.0
    %2872 = vmatpush1.msra.mxu0 0.0
    %2873 = vmatprep.subr.mxu0 0.0
    %2874 = vmatpush1.msra.mxu0 0.0
    %2875 = vmatprep.subr.mxu0 0.0
    %2876 = vmatpush1.msra.mxu0 0.0
    %2877 = vmatprep.subr.mxu0 0.0
    %2878 = vmatpush1.msra.mxu0 0.0
    %2879 = vmatprep.subr.mxu0 0.0
    %2880 = vmatpush1.msra.mxu0 0.0
    %2881 = vmatprep.subr.mxu0 0.0
    %2882 = vmatpush1.msra.mxu0 0.0
    %2883 = vmatprep.subr.mxu0 0.0
    %2884 = vmatpush1.msra.mxu0 0.0
    %2885 = vmatprep.subr.mxu0 0.0
    %v2886 = vand.u32 %v28, 4294901760
    %2887 = vmatpush1.msra.mxu0 %v2886
    %2888 = vmatprep.subr.mxu0 0.0
    %v2889 = vand.u32 %v27, 4294901760
    %2890 = vmatpush1.msra.mxu0 %v2889
    %2891 = vmatprep.subr.mxu0 0.0
    %2892 = vmatpush2.msra.mxu0 0.0
    %2893 = vmatprep.subr.mxu0 0.0
    %2894 = vmatpush2.msra.mxu0 0.0
    %2895 = vmatprep.subr.mxu0 0.0
    %2896 = vmatpush2.msra.mxu0 0.0
    %2897 = vmatprep.subr.mxu0 0.0
    %2898 = vmatpush2.msra.mxu0 0.0
    %2899 = vmatprep.subr.mxu0 0.0
    %2900 = vmatpush2.msra.mxu0 0.0
    %2901 = vmatprep.subr.mxu0 0.0
    %2902 = vmatpush2.msra.mxu0 0.0
    %2903 = vmatprep.subr.mxu0 0.0
    %2904 = vmatpush2.msra.mxu0 0.0
    %2905 = vmatprep.subr.mxu0 0.0
    %2906 = vmatpush2.msra.mxu0 0.0
    %2907 = vmatprep.subr.mxu0 0.0
    %2908 = vmatpush2.msra.mxu0 0.0
    %2909 = vmatprep.subr.mxu0 0.0
    %2910 = vmatpush2.msra.mxu0 0.0
    %2911 = vmatprep.subr.mxu0 0.0
    %2912 = vmatpush2.msra.mxu0 0.0
    %2913 = vmatprep.subr.mxu0 0.0
    %2914 = vmatpush2.msra.mxu0 0.0
    %2915 = vmatprep.subr.mxu0 0.0
    %2916 = vmatpush2.msra.mxu0 0.0
    %2917 = vmatprep.subr.mxu0 0.0
    %2918 = vmatpush2.msra.mxu0 0.0
    %2919 = vmatprep.subr.mxu0 0.0
    %2920 = vmatpush2.msra.mxu0 0.0
    %2921 = vmatprep.subr.mxu0 0.0
    %2922 = vmatpush2.msra.mxu0 0.0
    %2923 = vmatprep.mubr.f32.mxu0 0.0
    %v2924 = vand.u32 %v2855, 4294901760
    %v2925 = vsub.f32 %v2855, %v2924
    %v2926 = vand.u32 %v2925, 4294901760
    %v2927 = vsub.f32 %v2925, %v2926
    %v2928 = vand.u32 %v2927, 4294901760
    %2929 = vmatmul.mubr.f32.gmra.mxu0 %v2928
    %v2930 = vpop.f32.mrf.mxu0
    %v2931 = vadd.f32 %v58, %v2930
    %v2932 = vpop.f32.mrf.mxu0
    %2933 = vdwg.mxu0
    %2934 = vmatprep.subr.mxu0 0.0
    %2935 = vmatpush1.msra.mxu0 0.0
    %2936 = vmatprep.subr.mxu0 0.0
    %2937 = vmatpush1.msra.mxu0 0.0
    %2938 = vmatprep.subr.mxu0 0.0
    %2939 = vmatpush1.msra.mxu0 0.0
    %2940 = vmatprep.subr.mxu0 0.0
    %2941 = vmatpush1.msra.mxu0 0.0
    %2942 = vmatprep.subr.mxu0 0.0
    %2943 = vmatpush1.msra.mxu0 0.0
    %2944 = vmatprep.subr.mxu0 0.0
    %2945 = vmatpush1.msra.mxu0 0.0
    %2946 = vmatprep.subr.mxu0 0.0
    %2947 = vmatpush1.msra.mxu0 0.0
    %2948 = vmatprep.subr.mxu0 0.0
    %2949 = vmatpush1.msra.mxu0 0.0
    %2950 = vmatprep.subr.mxu0 0.0
    %2951 = vmatpush1.msra.mxu0 0.0
    %2952 = vmatprep.subr.mxu0 0.0
    %2953 = vmatpush1.msra.mxu0 0.0
    %2954 = vmatprep.subr.mxu0 0.0
    %2955 = vmatpush1.msra.mxu0 0.0
    %2956 = vmatprep.subr.mxu0 0.0
    %2957 = vmatpush1.msra.mxu0 0.0
    %2958 = vmatprep.subr.mxu0 0.0
    %2959 = vmatpush1.msra.mxu0 0.0
    %2960 = vmatprep.subr.mxu0 0.0
    %2961 = vmatpush1.msra.mxu0 0.0
    %2962 = vmatprep.subr.mxu0 0.0
    %v2963 = vand.u32 %v28, 4294901760
    %v2964 = vsub.f32 %v28, %v2963
    %v2965 = vand.u32 %v2964, 4294901760
    %v2966 = vsub.f32 %v2964, %v2965
    %v2967 = vand.u32 %v2966, 4294901760
    %2968 = vmatpush1.msra.mxu0 %v2967
    %2969 = vmatprep.subr.mxu0 0.0
    %v2970 = vand.u32 %v27, 4294901760
    %v2971 = vsub.f32 %v27, %v2970
    %v2972 = vand.u32 %v2971, 4294901760
    %v2973 = vsub.f32 %v2971, %v2972
    %v2974 = vand.u32 %v2973, 4294901760
    %2975 = vmatpush1.msra.mxu0 %v2974
    %2976 = vmatprep.subr.mxu0 0.0
    %2977 = vmatpush2.msra.mxu0 0.0
    %2978 = vmatprep.subr.mxu0 0.0
    %2979 = vmatpush2.msra.mxu0 0.0
    %2980 = vmatprep.subr.mxu0 0.0
    %2981 = vmatpush2.msra.mxu0 0.0
    %2982 = vmatprep.subr.mxu0 0.0
    %2983 = vmatpush2.msra.mxu0 0.0
    %2984 = vmatprep.subr.mxu0 0.0
    %2985 = vmatpush2.msra.mxu0 0.0
    %2986 = vmatprep.subr.mxu0 0.0
    %2987 = vmatpush2.msra.mxu0 0.0
    %2988 = vmatprep.subr.mxu0 0.0
    %2989 = vmatpush2.msra.mxu0 0.0
    %2990 = vmatprep.subr.mxu0 0.0
    %2991 = vmatpush2.msra.mxu0 0.0
    %2992 = vmatprep.subr.mxu0 0.0
    %2993 = vmatpush2.msra.mxu0 0.0
    %2994 = vmatprep.subr.mxu0 0.0
    %2995 = vmatpush2.msra.mxu0 0.0
    %2996 = vmatprep.subr.mxu0 0.0
    %2997 = vmatpush2.msra.mxu0 0.0
    %2998 = vmatprep.subr.mxu0 0.0
    %2999 = vmatpush2.msra.mxu0 0.0
    %3000 = vmatprep.subr.mxu0 0.0
    %3001 = vmatpush2.msra.mxu0 0.0
    %3002 = vmatprep.subr.mxu0 0.0
    %3003 = vmatpush2.msra.mxu0 0.0
    %3004 = vmatprep.subr.mxu0 0.0
    %3005 = vmatpush2.msra.mxu0 0.0
    %3006 = vmatprep.subr.mxu0 0.0
    %3007 = vmatpush2.msra.mxu0 0.0
    %3008 = vmatprep.mubr.f32.mxu0 0.0
    %v3009 = vand.u32 %v2855, 4294901760
    %3010 = vmatmul.mubr.f32.gmra.mxu0 %v3009
    %v3011 = vpop.f32.mrf.mxu0
    %v3012 = vadd.f32 %v2931, %v3011
    %v3013 = vpop.f32.mrf.mxu0
    %3014 = vdwg.mxu0
    %3015 = vmatprep.subr.mxu0 0.0
    %3016 = vmatpush1.msra.mxu0 0.0
    %3017 = vmatprep.subr.mxu0 0.0
    %3018 = vmatpush1.msra.mxu0 0.0
    %3019 = vmatprep.subr.mxu0 0.0
    %3020 = vmatpush1.msra.mxu0 0.0
    %3021 = vmatprep.subr.mxu0 0.0
    %3022 = vmatpush1.msra.mxu0 0.0
    %3023 = vmatprep.subr.mxu0 0.0
    %3024 = vmatpush1.msra.mxu0 0.0
    %3025 = vmatprep.subr.mxu0 0.0
    %3026 = vmatpush1.msra.mxu0 0.0
    %3027 = vmatprep.subr.mxu0 0.0
    %3028 = vmatpush1.msra.mxu0 0.0
    %3029 = vmatprep.subr.mxu0 0.0
    %3030 = vmatpush1.msra.mxu0 0.0
    %3031 = vmatprep.subr.mxu0 0.0
    %3032 = vmatpush1.msra.mxu0 0.0
    %3033 = vmatprep.subr.mxu0 0.0
    %3034 = vmatpush1.msra.mxu0 0.0
    %3035 = vmatprep.subr.mxu0 0.0
    %3036 = vmatpush1.msra.mxu0 0.0
    %3037 = vmatprep.subr.mxu0 0.0
    %3038 = vmatpush1.msra.mxu0 0.0
    %3039 = vmatprep.subr.mxu0 0.0
    %3040 = vmatpush1.msra.mxu0 0.0
    %3041 = vmatprep.subr.mxu0 0.0
    %3042 = vmatpush1.msra.mxu0 0.0
    %3043 = vmatprep.subr.mxu0 0.0
    %v3044 = vand.u32 %v28, 4294901760
    %v3045 = vsub.f32 %v28, %v3044
    %3046 = vmatpush1.msra.mxu0 %v3045
    %3047 = vmatprep.subr.mxu0 0.0
    %v3048 = vand.u32 %v27, 4294901760
    %v3049 = vsub.f32 %v27, %v3048
    %3050 = vmatpush1.msra.mxu0 %v3049
    %3051 = vmatprep.subr.mxu0 0.0
    %3052 = vmatpush2.msra.mxu0 0.0
    %3053 = vmatprep.subr.mxu0 0.0
    %3054 = vmatpush2.msra.mxu0 0.0
    %3055 = vmatprep.subr.mxu0 0.0
    %3056 = vmatpush2.msra.mxu0 0.0
    %3057 = vmatprep.subr.mxu0 0.0
    %3058 = vmatpush2.msra.mxu0 0.0
    %3059 = vmatprep.subr.mxu0 0.0
    %3060 = vmatpush2.msra.mxu0 0.0
    %3061 = vmatprep.subr.mxu0 0.0
    %3062 = vmatpush2.msra.mxu0 0.0
    %3063 = vmatprep.subr.mxu0 0.0
    %3064 = vmatpush2.msra.mxu0 0.0
    %3065 = vmatprep.subr.mxu0 0.0
    %3066 = vmatpush2.msra.mxu0 0.0
    %3067 = vmatprep.subr.mxu0 0.0
    %3068 = vmatpush2.msra.mxu0 0.0
    %3069 = vmatprep.subr.mxu0 0.0
    %3070 = vmatpush2.msra.mxu0 0.0
    %3071 = vmatprep.subr.mxu0 0.0
    %3072 = vmatpush2.msra.mxu0 0.0
    %3073 = vmatprep.subr.mxu0 0.0
    %3074 = vmatpush2.msra.mxu0 0.0
    %3075 = vmatprep.subr.mxu0 0.0
    %3076 = vmatpush2.msra.mxu0 0.0
    %3077 = vmatprep.subr.mxu0 0.0
    %3078 = vmatpush2.msra.mxu0 0.0
    %3079 = vmatprep.subr.mxu0 0.0
    %3080 = vmatpush2.msra.mxu0 0.0
    %3081 = vmatprep.subr.mxu0 0.0
    %3082 = vmatpush2.msra.mxu0 0.0
    %3083 = vmatprep.mubr.f32.mxu0 0.0
    %v3084 = vand.u32 %v2855, 4294901760
    %v3085 = vsub.f32 %v2855, %v3084
    %3086 = vmatmul.mubr.f32.gmra.mxu0 %v3085
    %v3087 = vpop.f32.mrf.mxu0
    %v3088 = vadd.f32 %v3012, %v3087
    %v3089 = vpop.f32.mrf.mxu0
    %3090 = vdwg.mxu0
    %3091 = vmatprep.subr.mxu0 0.0
    %3092 = vmatpush1.msra.mxu0 0.0
    %3093 = vmatprep.subr.mxu0 0.0
    %3094 = vmatpush1.msra.mxu0 0.0
    %3095 = vmatprep.subr.mxu0 0.0
    %3096 = vmatpush1.msra.mxu0 0.0
    %3097 = vmatprep.subr.mxu0 0.0
    %3098 = vmatpush1.msra.mxu0 0.0
    %3099 = vmatprep.subr.mxu0 0.0
    %3100 = vmatpush1.msra.mxu0 0.0
    %3101 = vmatprep.subr.mxu0 0.0
    %3102 = vmatpush1.msra.mxu0 0.0
    %3103 = vmatprep.subr.mxu0 0.0
    %3104 = vmatpush1.msra.mxu0 0.0
    %3105 = vmatprep.subr.mxu0 0.0
    %3106 = vmatpush1.msra.mxu0 0.0
    %3107 = vmatprep.subr.mxu0 0.0
    %3108 = vmatpush1.msra.mxu0 0.0
    %3109 = vmatprep.subr.mxu0 0.0
    %3110 = vmatpush1.msra.mxu0 0.0
    %3111 = vmatprep.subr.mxu0 0.0
    %3112 = vmatpush1.msra.mxu0 0.0
    %3113 = vmatprep.subr.mxu0 0.0
    %3114 = vmatpush1.msra.mxu0 0.0
    %3115 = vmatprep.subr.mxu0 0.0
    %3116 = vmatpush1.msra.mxu0 0.0
    %3117 = vmatprep.subr.mxu0 0.0
    %3118 = vmatpush1.msra.mxu0 0.0
    %3119 = vmatprep.subr.mxu0 0.0
    %v3120 = vand.u32 %v28, 4294901760
    %3121 = vmatpush1.msra.mxu0 %v3120
    %3122 = vmatprep.subr.mxu0 0.0
    %v3123 = vand.u32 %v27, 4294901760
    %3124 = vmatpush1.msra.mxu0 %v3123
    %3125 = vmatprep.subr.mxu0 0.0
    %3126 = vmatpush2.msra.mxu0 0.0
    %3127 = vmatprep.subr.mxu0 0.0
    %3128 = vmatpush2.msra.mxu0 0.0
    %3129 = vmatprep.subr.mxu0 0.0
    %3130 = vmatpush2.msra.mxu0 0.0
    %3131 = vmatprep.subr.mxu0 0.0
    %3132 = vmatpush2.msra.mxu0 0.0
    %3133 = vmatprep.subr.mxu0 0.0
    %3134 = vmatpush2.msra.mxu0 0.0
    %3135 = vmatprep.subr.mxu0 0.0
    %3136 = vmatpush2.msra.mxu0 0.0
    %3137 = vmatprep.subr.mxu0 0.0
    %3138 = vmatpush2.msra.mxu0 0.0
    %3139 = vmatprep.subr.mxu0 0.0
    %3140 = vmatpush2.msra.mxu0 0.0
    %3141 = vmatprep.subr.mxu0 0.0
    %3142 = vmatpush2.msra.mxu0 0.0
    %3143 = vmatprep.subr.mxu0 0.0
    %3144 = vmatpush2.msra.mxu0 0.0
    %3145 = vmatprep.subr.mxu0 0.0
    %3146 = vmatpush2.msra.mxu0 0.0
    %3147 = vmatprep.subr.mxu0 0.0
    %3148 = vmatpush2.msra.mxu0 0.0
    %3149 = vmatprep.subr.mxu0 0.0
    %3150 = vmatpush2.msra.mxu0 0.0
    %3151 = vmatprep.subr.mxu0 0.0
    %3152 = vmatpush2.msra.mxu0 0.0
    %3153 = vmatprep.subr.mxu0 0.0
    %3154 = vmatpush2.msra.mxu0 0.0
    %3155 = vmatprep.subr.mxu0 0.0
    %3156 = vmatpush2.msra.mxu0 0.0
    %3157 = vmatprep.mubr.f32.mxu0 0.0
    %v3158 = vand.u32 %v2855, 4294901760
    %v3159 = vsub.f32 %v2855, %v3158
    %v3160 = vand.u32 %v3159, 4294901760
    %3161 = vmatmul.mubr.f32.gmra.mxu0 %v3160
    %v3162 = vpop.f32.mrf.mxu0
    %v3163 = vadd.f32 %v3088, %v3162
    %v3164 = vpop.f32.mrf.mxu0
    %3165 = vdwg.mxu0
    %3166 = vmatprep.subr.mxu0 0.0
    %3167 = vmatpush1.msra.mxu0 0.0
    %3168 = vmatprep.subr.mxu0 0.0
    %3169 = vmatpush1.msra.mxu0 0.0
    %3170 = vmatprep.subr.mxu0 0.0
    %3171 = vmatpush1.msra.mxu0 0.0
    %3172 = vmatprep.subr.mxu0 0.0
    %3173 = vmatpush1.msra.mxu0 0.0
    %3174 = vmatprep.subr.mxu0 0.0
    %3175 = vmatpush1.msra.mxu0 0.0
    %3176 = vmatprep.subr.mxu0 0.0
    %3177 = vmatpush1.msra.mxu0 0.0
    %3178 = vmatprep.subr.mxu0 0.0
    %3179 = vmatpush1.msra.mxu0 0.0
    %3180 = vmatprep.subr.mxu0 0.0
    %3181 = vmatpush1.msra.mxu0 0.0
    %3182 = vmatprep.subr.mxu0 0.0
    %3183 = vmatpush1.msra.mxu0 0.0
    %3184 = vmatprep.subr.mxu0 0.0
    %3185 = vmatpush1.msra.mxu0 0.0
    %3186 = vmatprep.subr.mxu0 0.0
    %3187 = vmatpush1.msra.mxu0 0.0
    %3188 = vmatprep.subr.mxu0 0.0
    %3189 = vmatpush1.msra.mxu0 0.0
    %3190 = vmatprep.subr.mxu0 0.0
    %3191 = vmatpush1.msra.mxu0 0.0
    %3192 = vmatprep.subr.mxu0 0.0
    %3193 = vmatpush1.msra.mxu0 0.0
    %3194 = vmatprep.subr.mxu0 0.0
    %v3195 = vand.u32 %v28, 4294901760
    %v3196 = vsub.f32 %v28, %v3195
    %v3197 = vand.u32 %v3196, 4294901760
    %3198 = vmatpush1.msra.mxu0 %v3197
    %3199 = vmatprep.subr.mxu0 0.0
    %v3200 = vand.u32 %v27, 4294901760
    %v3201 = vsub.f32 %v27, %v3200
    %v3202 = vand.u32 %v3201, 4294901760
    %3203 = vmatpush1.msra.mxu0 %v3202
    %3204 = vmatprep.subr.mxu0 0.0
    %3205 = vmatpush2.msra.mxu0 0.0
    %3206 = vmatprep.subr.mxu0 0.0
    %3207 = vmatpush2.msra.mxu0 0.0
    %3208 = vmatprep.subr.mxu0 0.0
    %3209 = vmatpush2.msra.mxu0 0.0
    %3210 = vmatprep.subr.mxu0 0.0
    %3211 = vmatpush2.msra.mxu0 0.0
    %3212 = vmatprep.subr.mxu0 0.0
    %3213 = vmatpush2.msra.mxu0 0.0
    %3214 = vmatprep.subr.mxu0 0.0
    %3215 = vmatpush2.msra.mxu0 0.0
    %3216 = vmatprep.subr.mxu0 0.0
    %3217 = vmatpush2.msra.mxu0 0.0
    %3218 = vmatprep.subr.mxu0 0.0
    %3219 = vmatpush2.msra.mxu0 0.0
    %3220 = vmatprep.subr.mxu0 0.0
    %3221 = vmatpush2.msra.mxu0 0.0
    %3222 = vmatprep.subr.mxu0 0.0
    %3223 = vmatpush2.msra.mxu0 0.0
    %3224 = vmatprep.subr.mxu0 0.0
    %3225 = vmatpush2.msra.mxu0 0.0
    %3226 = vmatprep.subr.mxu0 0.0
    %3227 = vmatpush2.msra.mxu0 0.0
    %3228 = vmatprep.subr.mxu0 0.0
    %3229 = vmatpush2.msra.mxu0 0.0
    %3230 = vmatprep.subr.mxu0 0.0
    %3231 = vmatpush2.msra.mxu0 0.0
    %3232 = vmatprep.subr.mxu0 0.0
    %3233 = vmatpush2.msra.mxu0 0.0
    %3234 = vmatprep.subr.mxu0 0.0
    %3235 = vmatpush2.msra.mxu0 0.0
    %3236 = vmatprep.mubr.f32.mxu0 0.0
    %v3237 = vand.u32 %v2855, 4294901760
    %3238 = vmatmul.mubr.f32.gmra.mxu0 %v3237
    %v3239 = vpop.f32.mrf.mxu0
    %v3240 = vadd.f32 %v3163, %v3239
    %v3241 = vpop.f32.mrf.mxu0
    %3242 = vdwg.mxu0
    %3243 = vmatprep.subr.mxu0 0.0
    %3244 = vmatpush1.msra.mxu0 0.0
    %3245 = vmatprep.subr.mxu0 0.0
    %3246 = vmatpush1.msra.mxu0 0.0
    %3247 = vmatprep.subr.mxu0 0.0
    %3248 = vmatpush1.msra.mxu0 0.0
    %3249 = vmatprep.subr.mxu0 0.0
    %3250 = vmatpush1.msra.mxu0 0.0
    %3251 = vmatprep.subr.mxu0 0.0
    %3252 = vmatpush1.msra.mxu0 0.0
    %3253 = vmatprep.subr.mxu0 0.0
    %3254 = vmatpush1.msra.mxu0 0.0
    %3255 = vmatprep.subr.mxu0 0.0
    %3256 = vmatpush1.msra.mxu0 0.0
    %3257 = vmatprep.subr.mxu0 0.0
    %3258 = vmatpush1.msra.mxu0 0.0
    %3259 = vmatprep.subr.mxu0 0.0
    %3260 = vmatpush1.msra.mxu0 0.0
    %3261 = vmatprep.subr.mxu0 0.0
    %3262 = vmatpush1.msra.mxu0 0.0
    %3263 = vmatprep.subr.mxu0 0.0
    %3264 = vmatpush1.msra.mxu0 0.0
    %3265 = vmatprep.subr.mxu0 0.0
    %3266 = vmatpush1.msra.mxu0 0.0
    %3267 = vmatprep.subr.mxu0 0.0
    %3268 = vmatpush1.msra.mxu0 0.0
    %3269 = vmatprep.subr.mxu0 0.0
    %3270 = vmatpush1.msra.mxu0 0.0
    %3271 = vmatprep.subr.mxu0 0.0
    %v3272 = vand.u32 %v28, 4294901760
    %3273 = vmatpush1.msra.mxu0 %v3272
    %3274 = vmatprep.subr.mxu0 0.0
    %v3275 = vand.u32 %v27, 4294901760
    %3276 = vmatpush1.msra.mxu0 %v3275
    %3277 = vmatprep.subr.mxu0 0.0
    %3278 = vmatpush2.msra.mxu0 0.0
    %3279 = vmatprep.subr.mxu0 0.0
    %3280 = vmatpush2.msra.mxu0 0.0
    %3281 = vmatprep.subr.mxu0 0.0
    %3282 = vmatpush2.msra.mxu0 0.0
    %3283 = vmatprep.subr.mxu0 0.0
    %3284 = vmatpush2.msra.mxu0 0.0
    %3285 = vmatprep.subr.mxu0 0.0
    %3286 = vmatpush2.msra.mxu0 0.0
    %3287 = vmatprep.subr.mxu0 0.0
    %3288 = vmatpush2.msra.mxu0 0.0
    %3289 = vmatprep.subr.mxu0 0.0
    %3290 = vmatpush2.msra.mxu0 0.0
    %3291 = vmatprep.subr.mxu0 0.0
    %3292 = vmatpush2.msra.mxu0 0.0
    %3293 = vmatprep.subr.mxu0 0.0
    %3294 = vmatpush2.msra.mxu0 0.0
    %3295 = vmatprep.subr.mxu0 0.0
    %3296 = vmatpush2.msra.mxu0 0.0
    %3297 = vmatprep.subr.mxu0 0.0
    %3298 = vmatpush2.msra.mxu0 0.0
    %3299 = vmatprep.subr.mxu0 0.0
    %3300 = vmatpush2.msra.mxu0 0.0
    %3301 = vmatprep.subr.mxu0 0.0
    %3302 = vmatpush2.msra.mxu0 0.0
    %3303 = vmatprep.subr.mxu0 0.0
    %3304 = vmatpush2.msra.mxu0 0.0
    %3305 = vmatprep.subr.mxu0 0.0
    %3306 = vmatpush2.msra.mxu0 0.0
    %3307 = vmatprep.subr.mxu0 0.0
    %3308 = vmatpush2.msra.mxu0 0.0
    %3309 = vmatprep.mubr.f32.mxu0 0.0
    %v3310 = vand.u32 %v2855, 4294901760
    %3311 = vmatmul.mubr.f32.gmra.mxu0 %v3310
    %v3312 = vpop.f32.mrf.mxu0
    %v3313 = vadd.f32 %v3240, %v3312
    %v3314 = vpop.f32.mrf.mxu0
    %3315 = vdwg.mxu0
    %3316 = vmatprep.subr.mxu0 0.0
    %v3317 = vand.u32 %v45, 4294901760
    %3318 = vmatpush1.msra.mxu0 %v3317
    %3319 = vmatprep.subr.mxu0 0.0
    %v3320 = vand.u32 %v44, 4294901760
    %3321 = vmatpush1.msra.mxu0 %v3320
    %3322 = vmatprep.subr.mxu0 0.0
    %v3323 = vand.u32 %v43, 4294901760
    %3324 = vmatpush1.msra.mxu0 %v3323
    %3325 = vmatprep.subr.mxu0 0.0
    %v3326 = vand.u32 %v42, 4294901760
    %3327 = vmatpush1.msra.mxu0 %v3326
    %3328 = vmatprep.subr.mxu0 0.0
    %v3329 = vand.u32 %v41, 4294901760
    %3330 = vmatpush1.msra.mxu0 %v3329
    %3331 = vmatprep.subr.mxu0 0.0
    %v3332 = vand.u32 %v40, 4294901760
    %3333 = vmatpush1.msra.mxu0 %v3332
    %3334 = vmatprep.subr.mxu0 0.0
    %v3335 = vand.u32 %v39, 4294901760
    %3336 = vmatpush1.msra.mxu0 %v3335
    %3337 = vmatprep.subr.mxu0 0.0
    %v3338 = vand.u32 %v38, 4294901760
    %3339 = vmatpush1.msra.mxu0 %v3338
    %3340 = vmatprep.subr.mxu0 0.0
    %v3341 = vand.u32 %v37, 4294901760
    %3342 = vmatpush1.msra.mxu0 %v3341
    %3343 = vmatprep.subr.mxu0 0.0
    %v3344 = vand.u32 %v36, 4294901760
    %3345 = vmatpush1.msra.mxu0 %v3344
    %3346 = vmatprep.subr.mxu0 0.0
    %v3347 = vand.u32 %v35, 4294901760
    %3348 = vmatpush1.msra.mxu0 %v3347
    %3349 = vmatprep.subr.mxu0 0.0
    %v3350 = vand.u32 %v34, 4294901760
    %3351 = vmatpush1.msra.mxu0 %v3350
    %3352 = vmatprep.subr.mxu0 0.0
    %v3353 = vand.u32 %v33, 4294901760
    %3354 = vmatpush1.msra.mxu0 %v3353
    %3355 = vmatprep.subr.mxu0 0.0
    %v3356 = vand.u32 %v32, 4294901760
    %3357 = vmatpush1.msra.mxu0 %v3356
    %3358 = vmatprep.subr.mxu0 0.0
    %v3359 = vand.u32 %v31, 4294901760
    %3360 = vmatpush1.msra.mxu0 %v3359
    %3361 = vmatprep.subr.mxu0 0.0
    %v3362 = vand.u32 %v30, 4294901760
    %3363 = vmatpush1.msra.mxu0 %v3362
    %3364 = vmatprep.subr.mxu0 0.0
    %3365 = vmatpush2.msra.mxu0 0.0
    %3366 = vmatprep.subr.mxu0 0.0
    %3367 = vmatpush2.msra.mxu0 0.0
    %3368 = vmatprep.subr.mxu0 0.0
    %3369 = vmatpush2.msra.mxu0 0.0
    %3370 = vmatprep.subr.mxu0 0.0
    %3371 = vmatpush2.msra.mxu0 0.0
    %3372 = vmatprep.subr.mxu0 0.0
    %3373 = vmatpush2.msra.mxu0 0.0
    %3374 = vmatprep.subr.mxu0 0.0
    %3375 = vmatpush2.msra.mxu0 0.0
    %3376 = vmatprep.subr.mxu0 0.0
    %3377 = vmatpush2.msra.mxu0 0.0
    %3378 = vmatprep.subr.mxu0 0.0
    %3379 = vmatpush2.msra.mxu0 0.0
    %3380 = vmatprep.subr.mxu0 0.0
    %3381 = vmatpush2.msra.mxu0 0.0
    %3382 = vmatprep.subr.mxu0 0.0
    %3383 = vmatpush2.msra.mxu0 0.0
    %3384 = vmatprep.subr.mxu0 0.0
    %3385 = vmatpush2.msra.mxu0 0.0
    %3386 = vmatprep.subr.mxu0 0.0
    %3387 = vmatpush2.msra.mxu0 0.0
    %3388 = vmatprep.subr.mxu0 0.0
    %3389 = vmatpush2.msra.mxu0 0.0
    %3390 = vmatprep.subr.mxu0 0.0
    %3391 = vmatpush2.msra.mxu0 0.0
    %3392 = vmatprep.subr.mxu0 0.0
    %3393 = vmatpush2.msra.mxu0 0.0
    %3394 = vmatprep.subr.mxu0 0.0
    %3395 = vmatpush2.msra.mxu0 0.0
    %3396 = vmatprep.mubr.f32.mxu0 0.0
    %v3397 = vand.u32 %v2822, 4294901760
    %v3398 = vsub.f32 %v2822, %v3397
    %v3399 = vand.u32 %v3398, 4294901760
    %v3400 = vsub.f32 %v3398, %v3399
    %v3401 = vand.u32 %v3400, 4294901760
    %3402 = vmatmul.mubr.f32.gmra.mxu0 %v3401
    %v3403 = vpop.f32.mrf.mxu0
    %v3404 = vadd.f32 0.0, %v3403
    %v3405 = vpop.f32.mrf.mxu0
    %3406 = vdwg.mxu0
    %3407 = vmatprep.subr.mxu0 0.0
    %v3408 = vand.u32 %v45, 4294901760
    %v3409 = vsub.f32 %v45, %v3408
    %v3410 = vand.u32 %v3409, 4294901760
    %v3411 = vsub.f32 %v3409, %v3410
    %v3412 = vand.u32 %v3411, 4294901760
    %3413 = vmatpush1.msra.mxu0 %v3412
    %3414 = vmatprep.subr.mxu0 0.0
    %v3415 = vand.u32 %v44, 4294901760
    %v3416 = vsub.f32 %v44, %v3415
    %v3417 = vand.u32 %v3416, 4294901760
    %v3418 = vsub.f32 %v3416, %v3417
    %v3419 = vand.u32 %v3418, 4294901760
    %3420 = vmatpush1.msra.mxu0 %v3419
    %3421 = vmatprep.subr.mxu0 0.0
    %v3422 = vand.u32 %v43, 4294901760
    %v3423 = vsub.f32 %v43, %v3422
    %v3424 = vand.u32 %v3423, 4294901760
    %v3425 = vsub.f32 %v3423, %v3424
    %v3426 = vand.u32 %v3425, 4294901760
    %3427 = vmatpush1.msra.mxu0 %v3426
    %3428 = vmatprep.subr.mxu0 0.0
    %v3429 = vand.u32 %v42, 4294901760
    %v3430 = vsub.f32 %v42, %v3429
    %v3431 = vand.u32 %v3430, 4294901760
    %v3432 = vsub.f32 %v3430, %v3431
    %v3433 = vand.u32 %v3432, 4294901760
    %3434 = vmatpush1.msra.mxu0 %v3433
    %3435 = vmatprep.subr.mxu0 0.0
    %v3436 = vand.u32 %v41, 4294901760
    %v3437 = vsub.f32 %v41, %v3436
    %v3438 = vand.u32 %v3437, 4294901760
    %v3439 = vsub.f32 %v3437, %v3438
    %v3440 = vand.u32 %v3439, 4294901760
    %3441 = vmatpush1.msra.mxu0 %v3440
    %3442 = vmatprep.subr.mxu0 0.0
    %v3443 = vand.u32 %v40, 4294901760
    %v3444 = vsub.f32 %v40, %v3443
    %v3445 = vand.u32 %v3444, 4294901760
    %v3446 = vsub.f32 %v3444, %v3445
    %v3447 = vand.u32 %v3446, 4294901760
    %3448 = vmatpush1.msra.mxu0 %v3447
    %3449 = vmatprep.subr.mxu0 0.0
    %v3450 = vand.u32 %v39, 4294901760
    %v3451 = vsub.f32 %v39, %v3450
    %v3452 = vand.u32 %v3451, 4294901760
    %v3453 = vsub.f32 %v3451, %v3452
    %v3454 = vand.u32 %v3453, 4294901760
    %3455 = vmatpush1.msra.mxu0 %v3454
    %3456 = vmatprep.subr.mxu0 0.0
    %v3457 = vand.u32 %v38, 4294901760
    %v3458 = vsub.f32 %v38, %v3457
    %v3459 = vand.u32 %v3458, 4294901760
    %v3460 = vsub.f32 %v3458, %v3459
    %v3461 = vand.u32 %v3460, 4294901760
    %3462 = vmatpush1.msra.mxu0 %v3461
    %3463 = vmatprep.subr.mxu0 0.0
    %v3464 = vand.u32 %v37, 4294901760
    %v3465 = vsub.f32 %v37, %v3464
    %v3466 = vand.u32 %v3465, 4294901760
    %v3467 = vsub.f32 %v3465, %v3466
    %v3468 = vand.u32 %v3467, 4294901760
    %3469 = vmatpush1.msra.mxu0 %v3468
    %3470 = vmatprep.subr.mxu0 0.0
    %v3471 = vand.u32 %v36, 4294901760
    %v3472 = vsub.f32 %v36, %v3471
    %v3473 = vand.u32 %v3472, 4294901760
    %v3474 = vsub.f32 %v3472, %v3473
    %v3475 = vand.u32 %v3474, 4294901760
    %3476 = vmatpush1.msra.mxu0 %v3475
    %3477 = vmatprep.subr.mxu0 0.0
    %v3478 = vand.u32 %v35, 4294901760
    %v3479 = vsub.f32 %v35, %v3478
    %v3480 = vand.u32 %v3479, 4294901760
    %v3481 = vsub.f32 %v3479, %v3480
    %v3482 = vand.u32 %v3481, 4294901760
    %3483 = vmatpush1.msra.mxu0 %v3482
    %3484 = vmatprep.subr.mxu0 0.0
    %v3485 = vand.u32 %v34, 4294901760
    %v3486 = vsub.f32 %v34, %v3485
    %v3487 = vand.u32 %v3486, 4294901760
    %v3488 = vsub.f32 %v3486, %v3487
    %v3489 = vand.u32 %v3488, 4294901760
    %3490 = vmatpush1.msra.mxu0 %v3489
    %3491 = vmatprep.subr.mxu0 0.0
    %v3492 = vand.u32 %v33, 4294901760
    %v3493 = vsub.f32 %v33, %v3492
    %v3494 = vand.u32 %v3493, 4294901760
    %v3495 = vsub.f32 %v3493, %v3494
    %v3496 = vand.u32 %v3495, 4294901760
    %3497 = vmatpush1.msra.mxu0 %v3496
    %3498 = vmatprep.subr.mxu0 0.0
    %v3499 = vand.u32 %v32, 4294901760
    %v3500 = vsub.f32 %v32, %v3499
    %v3501 = vand.u32 %v3500, 4294901760
    %v3502 = vsub.f32 %v3500, %v3501
    %v3503 = vand.u32 %v3502, 4294901760
    %3504 = vmatpush1.msra.mxu0 %v3503
    %3505 = vmatprep.subr.mxu0 0.0
    %v3506 = vand.u32 %v31, 4294901760
    %v3507 = vsub.f32 %v31, %v3506
    %v3508 = vand.u32 %v3507, 4294901760
    %v3509 = vsub.f32 %v3507, %v3508
    %v3510 = vand.u32 %v3509, 4294901760
    %3511 = vmatpush1.msra.mxu0 %v3510
    %3512 = vmatprep.subr.mxu0 0.0
    %v3513 = vand.u32 %v30, 4294901760
    %v3514 = vsub.f32 %v30, %v3513
    %v3515 = vand.u32 %v3514, 4294901760
    %v3516 = vsub.f32 %v3514, %v3515
    %v3517 = vand.u32 %v3516, 4294901760
    %3518 = vmatpush1.msra.mxu0 %v3517
    %3519 = vmatprep.subr.mxu0 0.0
    %3520 = vmatpush2.msra.mxu0 0.0
    %3521 = vmatprep.subr.mxu0 0.0
    %3522 = vmatpush2.msra.mxu0 0.0
    %3523 = vmatprep.subr.mxu0 0.0
    %3524 = vmatpush2.msra.mxu0 0.0
    %3525 = vmatprep.subr.mxu0 0.0
    %3526 = vmatpush2.msra.mxu0 0.0
    %3527 = vmatprep.subr.mxu0 0.0
    %3528 = vmatpush2.msra.mxu0 0.0
    %3529 = vmatprep.subr.mxu0 0.0
    %3530 = vmatpush2.msra.mxu0 0.0
    %3531 = vmatprep.subr.mxu0 0.0
    %3532 = vmatpush2.msra.mxu0 0.0
    %3533 = vmatprep.subr.mxu0 0.0
    %3534 = vmatpush2.msra.mxu0 0.0
    %3535 = vmatprep.subr.mxu0 0.0
    %3536 = vmatpush2.msra.mxu0 0.0
    %3537 = vmatprep.subr.mxu0 0.0
    %3538 = vmatpush2.msra.mxu0 0.0
    %3539 = vmatprep.subr.mxu0 0.0
    %3540 = vmatpush2.msra.mxu0 0.0
    %3541 = vmatprep.subr.mxu0 0.0
    %3542 = vmatpush2.msra.mxu0 0.0
    %3543 = vmatprep.subr.mxu0 0.0
    %3544 = vmatpush2.msra.mxu0 0.0
    %3545 = vmatprep.subr.mxu0 0.0
    %3546 = vmatpush2.msra.mxu0 0.0
    %3547 = vmatprep.subr.mxu0 0.0
    %3548 = vmatpush2.msra.mxu0 0.0
    %3549 = vmatprep.subr.mxu0 0.0
    %3550 = vmatpush2.msra.mxu0 0.0
    %3551 = vmatprep.mubr.f32.mxu0 0.0
    %v3552 = vand.u32 %v2822, 4294901760
    %3553 = vmatmul.mubr.f32.gmra.mxu0 %v3552
    %v3554 = vpop.f32.mrf.mxu0
    %v3555 = vadd.f32 %v3404, %v3554
    %v3556 = vpop.f32.mrf.mxu0
    %3557 = vdwg.mxu0
    %3558 = vmatprep.subr.mxu0 0.0
    %v3559 = vand.u32 %v45, 4294901760
    %v3560 = vsub.f32 %v45, %v3559
    %3561 = vmatpush1.msra.mxu0 %v3560
    %3562 = vmatprep.subr.mxu0 0.0
    %v3563 = vand.u32 %v44, 4294901760
    %v3564 = vsub.f32 %v44, %v3563
    %3565 = vmatpush1.msra.mxu0 %v3564
    %3566 = vmatprep.subr.mxu0 0.0
    %v3567 = vand.u32 %v43, 4294901760
    %v3568 = vsub.f32 %v43, %v3567
    %3569 = vmatpush1.msra.mxu0 %v3568
    %3570 = vmatprep.subr.mxu0 0.0
    %v3571 = vand.u32 %v42, 4294901760
    %v3572 = vsub.f32 %v42, %v3571
    %3573 = vmatpush1.msra.mxu0 %v3572
    %3574 = vmatprep.subr.mxu0 0.0
    %v3575 = vand.u32 %v41, 4294901760
    %v3576 = vsub.f32 %v41, %v3575
    %3577 = vmatpush1.msra.mxu0 %v3576
    %3578 = vmatprep.subr.mxu0 0.0
    %v3579 = vand.u32 %v40, 4294901760
    %v3580 = vsub.f32 %v40, %v3579
    %3581 = vmatpush1.msra.mxu0 %v3580
    %3582 = vmatprep.subr.mxu0 0.0
    %v3583 = vand.u32 %v39, 4294901760
    %v3584 = vsub.f32 %v39, %v3583
    %3585 = vmatpush1.msra.mxu0 %v3584
    %3586 = vmatprep.subr.mxu0 0.0
    %v3587 = vand.u32 %v38, 4294901760
    %v3588 = vsub.f32 %v38, %v3587
    %3589 = vmatpush1.msra.mxu0 %v3588
    %3590 = vmatprep.subr.mxu0 0.0
    %v3591 = vand.u32 %v37, 4294901760
    %v3592 = vsub.f32 %v37, %v3591
    %3593 = vmatpush1.msra.mxu0 %v3592
    %3594 = vmatprep.subr.mxu0 0.0
    %v3595 = vand.u32 %v36, 4294901760
    %v3596 = vsub.f32 %v36, %v3595
    %3597 = vmatpush1.msra.mxu0 %v3596
    %3598 = vmatprep.subr.mxu0 0.0
    %v3599 = vand.u32 %v35, 4294901760
    %v3600 = vsub.f32 %v35, %v3599
    %3601 = vmatpush1.msra.mxu0 %v3600
    %3602 = vmatprep.subr.mxu0 0.0
    %v3603 = vand.u32 %v34, 4294901760
    %v3604 = vsub.f32 %v34, %v3603
    %3605 = vmatpush1.msra.mxu0 %v3604
    %3606 = vmatprep.subr.mxu0 0.0
    %v3607 = vand.u32 %v33, 4294901760
    %v3608 = vsub.f32 %v33, %v3607
    %3609 = vmatpush1.msra.mxu0 %v3608
    %3610 = vmatprep.subr.mxu0 0.0
    %v3611 = vand.u32 %v32, 4294901760
    %v3612 = vsub.f32 %v32, %v3611
    %3613 = vmatpush1.msra.mxu0 %v3612
    %3614 = vmatprep.subr.mxu0 0.0
    %v3615 = vand.u32 %v31, 4294901760
    %v3616 = vsub.f32 %v31, %v3615
    %3617 = vmatpush1.msra.mxu0 %v3616
    %3618 = vmatprep.subr.mxu0 0.0
    %v3619 = vand.u32 %v30, 4294901760
    %v3620 = vsub.f32 %v30, %v3619
    %3621 = vmatpush1.msra.mxu0 %v3620
    %3622 = vmatprep.subr.mxu0 0.0
    %3623 = vmatpush2.msra.mxu0 0.0
    %3624 = vmatprep.subr.mxu0 0.0
    %3625 = vmatpush2.msra.mxu0 0.0
    %3626 = vmatprep.subr.mxu0 0.0
    %3627 = vmatpush2.msra.mxu0 0.0
    %3628 = vmatprep.subr.mxu0 0.0
    %3629 = vmatpush2.msra.mxu0 0.0
    %3630 = vmatprep.subr.mxu0 0.0
    %3631 = vmatpush2.msra.mxu0 0.0
    %3632 = vmatprep.subr.mxu0 0.0
    %3633 = vmatpush2.msra.mxu0 0.0
    %3634 = vmatprep.subr.mxu0 0.0
    %3635 = vmatpush2.msra.mxu0 0.0
    %3636 = vmatprep.subr.mxu0 0.0
    %3637 = vmatpush2.msra.mxu0 0.0
    %3638 = vmatprep.subr.mxu0 0.0
    %3639 = vmatpush2.msra.mxu0 0.0
    %3640 = vmatprep.subr.mxu0 0.0
    %3641 = vmatpush2.msra.mxu0 0.0
    %3642 = vmatprep.subr.mxu0 0.0
    %3643 = vmatpush2.msra.mxu0 0.0
    %3644 = vmatprep.subr.mxu0 0.0
    %3645 = vmatpush2.msra.mxu0 0.0
    %3646 = vmatprep.subr.mxu0 0.0
    %3647 = vmatpush2.msra.mxu0 0.0
    %3648 = vmatprep.subr.mxu0 0.0
    %3649 = vmatpush2.msra.mxu0 0.0
    %3650 = vmatprep.subr.mxu0 0.0
    %3651 = vmatpush2.msra.mxu0 0.0
    %3652 = vmatprep.subr.mxu0 0.0
    %3653 = vmatpush2.msra.mxu0 0.0
    %3654 = vmatprep.mubr.f32.mxu0 0.0
    %v3655 = vand.u32 %v2822, 4294901760
    %v3656 = vsub.f32 %v2822, %v3655
    %3657 = vmatmul.mubr.f32.gmra.mxu0 %v3656
    %v3658 = vpop.f32.mrf.mxu0
    %v3659 = vadd.f32 %v3555, %v3658
    %v3660 = vpop.f32.mrf.mxu0
    %3661 = vdwg.mxu0
    %3662 = vmatprep.subr.mxu0 0.0
    %v3663 = vand.u32 %v45, 4294901760
    %3664 = vmatpush1.msra.mxu0 %v3663
    %3665 = vmatprep.subr.mxu0 0.0
    %v3666 = vand.u32 %v44, 4294901760
    %3667 = vmatpush1.msra.mxu0 %v3666
    %3668 = vmatprep.subr.mxu0 0.0
    %v3669 = vand.u32 %v43, 4294901760
    %3670 = vmatpush1.msra.mxu0 %v3669
    %3671 = vmatprep.subr.mxu0 0.0
    %v3672 = vand.u32 %v42, 4294901760
    %3673 = vmatpush1.msra.mxu0 %v3672
    %3674 = vmatprep.subr.mxu0 0.0
    %v3675 = vand.u32 %v41, 4294901760
    %3676 = vmatpush1.msra.mxu0 %v3675
    %3677 = vmatprep.subr.mxu0 0.0
    %v3678 = vand.u32 %v40, 4294901760
    %3679 = vmatpush1.msra.mxu0 %v3678
    %3680 = vmatprep.subr.mxu0 0.0
    %v3681 = vand.u32 %v39, 4294901760
    %3682 = vmatpush1.msra.mxu0 %v3681
    %3683 = vmatprep.subr.mxu0 0.0
    %v3684 = vand.u32 %v38, 4294901760
    %3685 = vmatpush1.msra.mxu0 %v3684
    %3686 = vmatprep.subr.mxu0 0.0
    %v3687 = vand.u32 %v37, 4294901760
    %3688 = vmatpush1.msra.mxu0 %v3687
    %3689 = vmatprep.subr.mxu0 0.0
    %v3690 = vand.u32 %v36, 4294901760
    %3691 = vmatpush1.msra.mxu0 %v3690
    %3692 = vmatprep.subr.mxu0 0.0
    %v3693 = vand.u32 %v35, 4294901760
    %3694 = vmatpush1.msra.mxu0 %v3693
    %3695 = vmatprep.subr.mxu0 0.0
    %v3696 = vand.u32 %v34, 4294901760
    %3697 = vmatpush1.msra.mxu0 %v3696
    %3698 = vmatprep.subr.mxu0 0.0
    %v3699 = vand.u32 %v33, 4294901760
    %3700 = vmatpush1.msra.mxu0 %v3699
    %3701 = vmatprep.subr.mxu0 0.0
    %v3702 = vand.u32 %v32, 4294901760
    %3703 = vmatpush1.msra.mxu0 %v3702
    %3704 = vmatprep.subr.mxu0 0.0
    %v3705 = vand.u32 %v31, 4294901760
    %3706 = vmatpush1.msra.mxu0 %v3705
    %3707 = vmatprep.subr.mxu0 0.0
    %v3708 = vand.u32 %v30, 4294901760
    %3709 = vmatpush1.msra.mxu0 %v3708
    %3710 = vmatprep.subr.mxu0 0.0
    %3711 = vmatpush2.msra.mxu0 0.0
    %3712 = vmatprep.subr.mxu0 0.0
    %3713 = vmatpush2.msra.mxu0 0.0
    %3714 = vmatprep.subr.mxu0 0.0
    %3715 = vmatpush2.msra.mxu0 0.0
    %3716 = vmatprep.subr.mxu0 0.0
    %3717 = vmatpush2.msra.mxu0 0.0
    %3718 = vmatprep.subr.mxu0 0.0
    %3719 = vmatpush2.msra.mxu0 0.0
    %3720 = vmatprep.subr.mxu0 0.0
    %3721 = vmatpush2.msra.mxu0 0.0
    %3722 = vmatprep.subr.mxu0 0.0
    %3723 = vmatpush2.msra.mxu0 0.0
    %3724 = vmatprep.subr.mxu0 0.0
    %3725 = vmatpush2.msra.mxu0 0.0
    %3726 = vmatprep.subr.mxu0 0.0
    %3727 = vmatpush2.msra.mxu0 0.0
    %3728 = vmatprep.subr.mxu0 0.0
    %3729 = vmatpush2.msra.mxu0 0.0
    %3730 = vmatprep.subr.mxu0 0.0
    %3731 = vmatpush2.msra.mxu0 0.0
    %3732 = vmatprep.subr.mxu0 0.0
    %3733 = vmatpush2.msra.mxu0 0.0
    %3734 = vmatprep.subr.mxu0 0.0
    %3735 = vmatpush2.msra.mxu0 0.0
    %3736 = vmatprep.subr.mxu0 0.0
    %3737 = vmatpush2.msra.mxu0 0.0
    %3738 = vmatprep.subr.mxu0 0.0
    %3739 = vmatpush2.msra.mxu0 0.0
    %3740 = vmatprep.subr.mxu0 0.0
    %3741 = vmatpush2.msra.mxu0 0.0
    %3742 = vmatprep.mubr.f32.mxu0 0.0
    %v3743 = vand.u32 %v2822, 4294901760
    %v3744 = vsub.f32 %v2822, %v3743
    %v3745 = vand.u32 %v3744, 4294901760
    %3746 = vmatmul.mubr.f32.gmra.mxu0 %v3745
    %v3747 = vpop.f32.mrf.mxu0
    %v3748 = vadd.f32 %v3659, %v3747
    %v3749 = vpop.f32.mrf.mxu0
    %3750 = vdwg.mxu0
    %3751 = vmatprep.subr.mxu0 0.0
    %v3752 = vand.u32 %v45, 4294901760
    %v3753 = vsub.f32 %v45, %v3752
    %v3754 = vand.u32 %v3753, 4294901760
    %3755 = vmatpush1.msra.mxu0 %v3754
    %3756 = vmatprep.subr.mxu0 0.0
    %v3757 = vand.u32 %v44, 4294901760
    %v3758 = vsub.f32 %v44, %v3757
    %v3759 = vand.u32 %v3758, 4294901760
    %3760 = vmatpush1.msra.mxu0 %v3759
    %3761 = vmatprep.subr.mxu0 0.0
    %v3762 = vand.u32 %v43, 4294901760
    %v3763 = vsub.f32 %v43, %v3762
    %v3764 = vand.u32 %v3763, 4294901760
    %3765 = vmatpush1.msra.mxu0 %v3764
    %3766 = vmatprep.subr.mxu0 0.0
    %v3767 = vand.u32 %v42, 4294901760
    %v3768 = vsub.f32 %v42, %v3767
    %v3769 = vand.u32 %v3768, 4294901760
    %3770 = vmatpush1.msra.mxu0 %v3769
    %3771 = vmatprep.subr.mxu0 0.0
    %v3772 = vand.u32 %v41, 4294901760
    %v3773 = vsub.f32 %v41, %v3772
    %v3774 = vand.u32 %v3773, 4294901760
    %3775 = vmatpush1.msra.mxu0 %v3774
    %3776 = vmatprep.subr.mxu0 0.0
    %v3777 = vand.u32 %v40, 4294901760
    %v3778 = vsub.f32 %v40, %v3777
    %v3779 = vand.u32 %v3778, 4294901760
    %3780 = vmatpush1.msra.mxu0 %v3779
    %3781 = vmatprep.subr.mxu0 0.0
    %v3782 = vand.u32 %v39, 4294901760
    %v3783 = vsub.f32 %v39, %v3782
    %v3784 = vand.u32 %v3783, 4294901760
    %3785 = vmatpush1.msra.mxu0 %v3784
    %3786 = vmatprep.subr.mxu0 0.0
    %v3787 = vand.u32 %v38, 4294901760
    %v3788 = vsub.f32 %v38, %v3787
    %v3789 = vand.u32 %v3788, 4294901760
    %3790 = vmatpush1.msra.mxu0 %v3789
    %3791 = vmatprep.subr.mxu0 0.0
    %v3792 = vand.u32 %v37, 4294901760
    %v3793 = vsub.f32 %v37, %v3792
    %v3794 = vand.u32 %v3793, 4294901760
    %3795 = vmatpush1.msra.mxu0 %v3794
    %3796 = vmatprep.subr.mxu0 0.0
    %v3797 = vand.u32 %v36, 4294901760
    %v3798 = vsub.f32 %v36, %v3797
    %v3799 = vand.u32 %v3798, 4294901760
    %3800 = vmatpush1.msra.mxu0 %v3799
    %3801 = vmatprep.subr.mxu0 0.0
    %v3802 = vand.u32 %v35, 4294901760
    %v3803 = vsub.f32 %v35, %v3802
    %v3804 = vand.u32 %v3803, 4294901760
    %3805 = vmatpush1.msra.mxu0 %v3804
    %3806 = vmatprep.subr.mxu0 0.0
    %v3807 = vand.u32 %v34, 4294901760
    %v3808 = vsub.f32 %v34, %v3807
    %v3809 = vand.u32 %v3808, 4294901760
    %3810 = vmatpush1.msra.mxu0 %v3809
    %3811 = vmatprep.subr.mxu0 0.0
    %v3812 = vand.u32 %v33, 4294901760
    %v3813 = vsub.f32 %v33, %v3812
    %v3814 = vand.u32 %v3813, 4294901760
    %3815 = vmatpush1.msra.mxu0 %v3814
    %3816 = vmatprep.subr.mxu0 0.0
    %v3817 = vand.u32 %v32, 4294901760
    %v3818 = vsub.f32 %v32, %v3817
    %v3819 = vand.u32 %v3818, 4294901760
    %3820 = vmatpush1.msra.mxu0 %v3819
    %3821 = vmatprep.subr.mxu0 0.0
    %v3822 = vand.u32 %v31, 4294901760
    %v3823 = vsub.f32 %v31, %v3822
    %v3824 = vand.u32 %v3823, 4294901760
    %3825 = vmatpush1.msra.mxu0 %v3824
    %3826 = vmatprep.subr.mxu0 0.0
    %v3827 = vand.u32 %v30, 4294901760
    %v3828 = vsub.f32 %v30, %v3827
    %v3829 = vand.u32 %v3828, 4294901760
    %3830 = vmatpush1.msra.mxu0 %v3829
    %3831 = vmatprep.subr.mxu0 0.0
    %3832 = vmatpush2.msra.mxu0 0.0
    %3833 = vmatprep.subr.mxu0 0.0
    %3834 = vmatpush2.msra.mxu0 0.0
    %3835 = vmatprep.subr.mxu0 0.0
    %3836 = vmatpush2.msra.mxu0 0.0
    %3837 = vmatprep.subr.mxu0 0.0
    %3838 = vmatpush2.msra.mxu0 0.0
    %3839 = vmatprep.subr.mxu0 0.0
    %3840 = vmatpush2.msra.mxu0 0.0
    %3841 = vmatprep.subr.mxu0 0.0
    %3842 = vmatpush2.msra.mxu0 0.0
    %3843 = vmatprep.subr.mxu0 0.0
    %3844 = vmatpush2.msra.mxu0 0.0
    %3845 = vmatprep.subr.mxu0 0.0
    %3846 = vmatpush2.msra.mxu0 0.0
    %3847 = vmatprep.subr.mxu0 0.0
    %3848 = vmatpush2.msra.mxu0 0.0
    %3849 = vmatprep.subr.mxu0 0.0
    %3850 = vmatpush2.msra.mxu0 0.0
    %3851 = vmatprep.subr.mxu0 0.0
    %3852 = vmatpush2.msra.mxu0 0.0
    %3853 = vmatprep.subr.mxu0 0.0
    %3854 = vmatpush2.msra.mxu0 0.0
    %3855 = vmatprep.subr.mxu0 0.0
    %3856 = vmatpush2.msra.mxu0 0.0
    %3857 = vmatprep.subr.mxu0 0.0
    %3858 = vmatpush2.msra.mxu0 0.0
    %3859 = vmatprep.subr.mxu0 0.0
    %3860 = vmatpush2.msra.mxu0 0.0
    %3861 = vmatprep.subr.mxu0 0.0
    %3862 = vmatpush2.msra.mxu0 0.0
    %3863 = vmatprep.mubr.f32.mxu0 0.0
    %v3864 = vand.u32 %v2822, 4294901760
    %3865 = vmatmul.mubr.f32.gmra.mxu0 %v3864
    %v3866 = vpop.f32.mrf.mxu0
    %v3867 = vadd.f32 %v3748, %v3866
    %v3868 = vpop.f32.mrf.mxu0
    %3869 = vdwg.mxu0
    %3870 = vmatprep.subr.mxu0 0.0
    %v3871 = vand.u32 %v45, 4294901760
    %3872 = vmatpush1.msra.mxu0 %v3871
    %3873 = vmatprep.subr.mxu0 0.0
    %v3874 = vand.u32 %v44, 4294901760
    %3875 = vmatpush1.msra.mxu0 %v3874
    %3876 = vmatprep.subr.mxu0 0.0
    %v3877 = vand.u32 %v43, 4294901760
    %3878 = vmatpush1.msra.mxu0 %v3877
    %3879 = vmatprep.subr.mxu0 0.0
    %v3880 = vand.u32 %v42, 4294901760
    %3881 = vmatpush1.msra.mxu0 %v3880
    %3882 = vmatprep.subr.mxu0 0.0
    %v3883 = vand.u32 %v41, 4294901760
    %3884 = vmatpush1.msra.mxu0 %v3883
    %3885 = vmatprep.subr.mxu0 0.0
    %v3886 = vand.u32 %v40, 4294901760
    %3887 = vmatpush1.msra.mxu0 %v3886
    %3888 = vmatprep.subr.mxu0 0.0
    %v3889 = vand.u32 %v39, 4294901760
    %3890 = vmatpush1.msra.mxu0 %v3889
    %3891 = vmatprep.subr.mxu0 0.0
    %v3892 = vand.u32 %v38, 4294901760
    %3893 = vmatpush1.msra.mxu0 %v3892
    %3894 = vmatprep.subr.mxu0 0.0
    %v3895 = vand.u32 %v37, 4294901760
    %3896 = vmatpush1.msra.mxu0 %v3895
    %3897 = vmatprep.subr.mxu0 0.0
    %v3898 = vand.u32 %v36, 4294901760
    %3899 = vmatpush1.msra.mxu0 %v3898
    %3900 = vmatprep.subr.mxu0 0.0
    %v3901 = vand.u32 %v35, 4294901760
    %3902 = vmatpush1.msra.mxu0 %v3901
    %3903 = vmatprep.subr.mxu0 0.0
    %v3904 = vand.u32 %v34, 4294901760
    %3905 = vmatpush1.msra.mxu0 %v3904
    %3906 = vmatprep.subr.mxu0 0.0
    %v3907 = vand.u32 %v33, 4294901760
    %3908 = vmatpush1.msra.mxu0 %v3907
    %3909 = vmatprep.subr.mxu0 0.0
    %v3910 = vand.u32 %v32, 4294901760
    %3911 = vmatpush1.msra.mxu0 %v3910
    %3912 = vmatprep.subr.mxu0 0.0
    %v3913 = vand.u32 %v31, 4294901760
    %3914 = vmatpush1.msra.mxu0 %v3913
    %3915 = vmatprep.subr.mxu0 0.0
    %v3916 = vand.u32 %v30, 4294901760
    %3917 = vmatpush1.msra.mxu0 %v3916
    %3918 = vmatprep.subr.mxu0 0.0
    %3919 = vmatpush2.msra.mxu0 0.0
    %3920 = vmatprep.subr.mxu0 0.0
    %3921 = vmatpush2.msra.mxu0 0.0
    %3922 = vmatprep.subr.mxu0 0.0
    %3923 = vmatpush2.msra.mxu0 0.0
    %3924 = vmatprep.subr.mxu0 0.0
    %3925 = vmatpush2.msra.mxu0 0.0
    %3926 = vmatprep.subr.mxu0 0.0
    %3927 = vmatpush2.msra.mxu0 0.0
    %3928 = vmatprep.subr.mxu0 0.0
    %3929 = vmatpush2.msra.mxu0 0.0
    %3930 = vmatprep.subr.mxu0 0.0
    %3931 = vmatpush2.msra.mxu0 0.0
    %3932 = vmatprep.subr.mxu0 0.0
    %3933 = vmatpush2.msra.mxu0 0.0
    %3934 = vmatprep.subr.mxu0 0.0
    %3935 = vmatpush2.msra.mxu0 0.0
    %3936 = vmatprep.subr.mxu0 0.0
    %3937 = vmatpush2.msra.mxu0 0.0
    %3938 = vmatprep.subr.mxu0 0.0
    %3939 = vmatpush2.msra.mxu0 0.0
    %3940 = vmatprep.subr.mxu0 0.0
    %3941 = vmatpush2.msra.mxu0 0.0
    %3942 = vmatprep.subr.mxu0 0.0
    %3943 = vmatpush2.msra.mxu0 0.0
    %3944 = vmatprep.subr.mxu0 0.0
    %3945 = vmatpush2.msra.mxu0 0.0
    %3946 = vmatprep.subr.mxu0 0.0
    %3947 = vmatpush2.msra.mxu0 0.0
    %3948 = vmatprep.subr.mxu0 0.0
    %3949 = vmatpush2.msra.mxu0 0.0
    %3950 = vmatprep.mubr.f32.mxu0 0.0
    %v3951 = vand.u32 %v2822, 4294901760
    %3952 = vmatmul.mubr.f32.gmra.mxu0 %v3951
    %v3953 = vpop.f32.mrf.mxu0
    %v3954 = vadd.f32 %v3867, %v3953
    %v3955 = vpop.f32.mrf.mxu0
    %3956 = vdwg.mxu0
    %v3957 = vadd.f32 %v3313, %v3954
    %v3958 = vtanh.pop %v3957
    %s3959 = scalar_lea.vmem [#allocation2], 24
    %3960 = vst [vmem:[%s3959] sm:$0xff] %v3958
    %v3961 = vld [vmem:[%s0 + $0x4] sm:$0x1]
    %v3962 = vld [vmem:[%s0 + $0xc] sm:$0x1]
    %v3963 = vld [vmem:[%s0 + $0x14] sm:$0x1]
    %v3964 = vld [vmem:[%s0 + $0x1c] sm:$0x1]
    %v3965 = vld [vmem:[%s0 + $0x24] sm:$0x1]
    %v3966 = vld [vmem:[%s0 + $0x2c] sm:$0x1]
    %v3967 = vld [vmem:[%s0 + $0x34] sm:$0x1]
    %v3968 = vld [vmem:[%s0 + $0x3c] sm:$0x1]
    %v3977 = vrot.slane %v3962, 7
    %v3978 = vsel %vm69, %v3977, %v3961
    %v3979 = vrot.slane %v3963, 6
    %v3980 = vsel %vm72, %v3979, %v3978
    %v3981 = vrot.slane %v3964, 5
    %v3982 = vsel %vm75, %v3981, %v3980
    %v3983 = vrot.slane %v3965, 4
    %v3984 = vsel %vm78, %v3983, %v3982
    %v3985 = vrot.slane %v3966, 3
    %v3986 = vsel %vm81, %v3985, %v3984
    %v3987 = vrot.slane %v3967, 2
    %v3988 = vsel %vm84, %v3987, %v3986
    %v3989 = vrot.slane %v3968, 1
    %v3990 = vsel %vm87, %v3989, %v3988
    %v3991 = vsel %vm89, %v3990, 0
    %3993 = vmatprep.subr.mxu0 0.0
    %3994 = vmatpush1.msra.mxu0 0.0
    %3995 = vmatprep.subr.mxu0 0.0
    %3996 = vmatpush1.msra.mxu0 0.0
    %3997 = vmatprep.subr.mxu0 0.0
    %3998 = vmatpush1.msra.mxu0 0.0
    %3999 = vmatprep.subr.mxu0 0.0
    %4000 = vmatpush1.msra.mxu0 0.0
    %4001 = vmatprep.subr.mxu0 0.0
    %4002 = vmatpush1.msra.mxu0 0.0
    %4003 = vmatprep.subr.mxu0 0.0
    %4004 = vmatpush1.msra.mxu0 0.0
    %4005 = vmatprep.subr.mxu0 0.0
    %4006 = vmatpush1.msra.mxu0 0.0
    %4007 = vmatprep.subr.mxu0 0.0
    %4008 = vmatpush1.msra.mxu0 0.0
    %4009 = vmatprep.subr.mxu0 0.0
    %4010 = vmatpush1.msra.mxu0 0.0
    %4011 = vmatprep.subr.mxu0 0.0
    %4012 = vmatpush1.msra.mxu0 0.0
    %4013 = vmatprep.subr.mxu0 0.0
    %4014 = vmatpush1.msra.mxu0 0.0
    %4015 = vmatprep.subr.mxu0 0.0
    %4016 = vmatpush1.msra.mxu0 0.0
    %4017 = vmatprep.subr.mxu0 0.0
    %4018 = vmatpush1.msra.mxu0 0.0
    %4019 = vmatprep.subr.mxu0 0.0
    %4020 = vmatpush1.msra.mxu0 0.0
    %4021 = vmatprep.subr.mxu0 0.0
    %v4022 = vand.u32 %v28, 4294901760
    %4023 = vmatpush1.msra.mxu0 %v4022
    %4024 = vmatprep.subr.mxu0 0.0
    %v4025 = vand.u32 %v27, 4294901760
    %4026 = vmatpush1.msra.mxu0 %v4025
    %4027 = vmatprep.subr.mxu0 0.0
    %4028 = vmatpush2.msra.mxu0 0.0
    %4029 = vmatprep.subr.mxu0 0.0
    %4030 = vmatpush2.msra.mxu0 0.0
    %4031 = vmatprep.subr.mxu0 0.0
    %4032 = vmatpush2.msra.mxu0 0.0
    %4033 = vmatprep.subr.mxu0 0.0
    %4034 = vmatpush2.msra.mxu0 0.0
    %4035 = vmatprep.subr.mxu0 0.0
    %4036 = vmatpush2.msra.mxu0 0.0
    %4037 = vmatprep.subr.mxu0 0.0
    %4038 = vmatpush2.msra.mxu0 0.0
    %4039 = vmatprep.subr.mxu0 0.0
    %4040 = vmatpush2.msra.mxu0 0.0
    %4041 = vmatprep.subr.mxu0 0.0
    %4042 = vmatpush2.msra.mxu0 0.0
    %4043 = vmatprep.subr.mxu0 0.0
    %4044 = vmatpush2.msra.mxu0 0.0
    %4045 = vmatprep.subr.mxu0 0.0
    %4046 = vmatpush2.msra.mxu0 0.0
    %4047 = vmatprep.subr.mxu0 0.0
    %4048 = vmatpush2.msra.mxu0 0.0
    %4049 = vmatprep.subr.mxu0 0.0
    %4050 = vmatpush2.msra.mxu0 0.0
    %4051 = vmatprep.subr.mxu0 0.0
    %4052 = vmatpush2.msra.mxu0 0.0
    %4053 = vmatprep.subr.mxu0 0.0
    %4054 = vmatpush2.msra.mxu0 0.0
    %4055 = vmatprep.subr.mxu0 0.0
    %4056 = vmatpush2.msra.mxu0 0.0
    %4057 = vmatprep.subr.mxu0 0.0
    %4058 = vmatpush2.msra.mxu0 0.0
    %4059 = vmatprep.mubr.f32.mxu0 0.0
    %v4060 = vand.u32 %v3991, 4294901760
    %v4061 = vsub.f32 %v3991, %v4060
    %v4062 = vand.u32 %v4061, 4294901760
    %v4063 = vsub.f32 %v4061, %v4062
    %v4064 = vand.u32 %v4063, 4294901760
    %4065 = vmatmul.mubr.f32.gmra.mxu0 %v4064
    %v4066 = vpop.f32.mrf.mxu0
    %v4067 = vadd.f32 %v58, %v4066
    %v4068 = vpop.f32.mrf.mxu0
    %4069 = vdwg.mxu0
    %4070 = vmatprep.subr.mxu0 0.0
    %4071 = vmatpush1.msra.mxu0 0.0
    %4072 = vmatprep.subr.mxu0 0.0
    %4073 = vmatpush1.msra.mxu0 0.0
    %4074 = vmatprep.subr.mxu0 0.0
    %4075 = vmatpush1.msra.mxu0 0.0
    %4076 = vmatprep.subr.mxu0 0.0
    %4077 = vmatpush1.msra.mxu0 0.0
    %4078 = vmatprep.subr.mxu0 0.0
    %4079 = vmatpush1.msra.mxu0 0.0
    %4080 = vmatprep.subr.mxu0 0.0
    %4081 = vmatpush1.msra.mxu0 0.0
    %4082 = vmatprep.subr.mxu0 0.0
    %4083 = vmatpush1.msra.mxu0 0.0
    %4084 = vmatprep.subr.mxu0 0.0
    %4085 = vmatpush1.msra.mxu0 0.0
    %4086 = vmatprep.subr.mxu0 0.0
    %4087 = vmatpush1.msra.mxu0 0.0
    %4088 = vmatprep.subr.mxu0 0.0
    %4089 = vmatpush1.msra.mxu0 0.0
    %4090 = vmatprep.subr.mxu0 0.0
    %4091 = vmatpush1.msra.mxu0 0.0
    %4092 = vmatprep.subr.mxu0 0.0
    %4093 = vmatpush1.msra.mxu0 0.0
    %4094 = vmatprep.subr.mxu0 0.0
    %4095 = vmatpush1.msra.mxu0 0.0
    %4096 = vmatprep.subr.mxu0 0.0
    %4097 = vmatpush1.msra.mxu0 0.0
    %4098 = vmatprep.subr.mxu0 0.0
    %v4099 = vand.u32 %v28, 4294901760
    %v4100 = vsub.f32 %v28, %v4099
    %v4101 = vand.u32 %v4100, 4294901760
    %v4102 = vsub.f32 %v4100, %v4101
    %v4103 = vand.u32 %v4102, 4294901760
    %4104 = vmatpush1.msra.mxu0 %v4103
    %4105 = vmatprep.subr.mxu0 0.0
    %v4106 = vand.u32 %v27, 4294901760
    %v4107 = vsub.f32 %v27, %v4106
    %v4108 = vand.u32 %v4107, 4294901760
    %v4109 = vsub.f32 %v4107, %v4108
    %v4110 = vand.u32 %v4109, 4294901760
    %4111 = vmatpush1.msra.mxu0 %v4110
    %4112 = vmatprep.subr.mxu0 0.0
    %4113 = vmatpush2.msra.mxu0 0.0
    %4114 = vmatprep.subr.mxu0 0.0
    %4115 = vmatpush2.msra.mxu0 0.0
    %4116 = vmatprep.subr.mxu0 0.0
    %4117 = vmatpush2.msra.mxu0 0.0
    %4118 = vmatprep.subr.mxu0 0.0
    %4119 = vmatpush2.msra.mxu0 0.0
    %4120 = vmatprep.subr.mxu0 0.0
    %4121 = vmatpush2.msra.mxu0 0.0
    %4122 = vmatprep.subr.mxu0 0.0
    %4123 = vmatpush2.msra.mxu0 0.0
    %4124 = vmatprep.subr.mxu0 0.0
    %4125 = vmatpush2.msra.mxu0 0.0
    %4126 = vmatprep.subr.mxu0 0.0
    %4127 = vmatpush2.msra.mxu0 0.0
    %4128 = vmatprep.subr.mxu0 0.0
    %4129 = vmatpush2.msra.mxu0 0.0
    %4130 = vmatprep.subr.mxu0 0.0
    %4131 = vmatpush2.msra.mxu0 0.0
    %4132 = vmatprep.subr.mxu0 0.0
    %4133 = vmatpush2.msra.mxu0 0.0
    %4134 = vmatprep.subr.mxu0 0.0
    %4135 = vmatpush2.msra.mxu0 0.0
    %4136 = vmatprep.subr.mxu0 0.0
    %4137 = vmatpush2.msra.mxu0 0.0
    %4138 = vmatprep.subr.mxu0 0.0
    %4139 = vmatpush2.msra.mxu0 0.0
    %4140 = vmatprep.subr.mxu0 0.0
    %4141 = vmatpush2.msra.mxu0 0.0
    %4142 = vmatprep.subr.mxu0 0.0
    %4143 = vmatpush2.msra.mxu0 0.0
    %4144 = vmatprep.mubr.f32.mxu0 0.0
    %v4145 = vand.u32 %v3991, 4294901760
    %4146 = vmatmul.mubr.f32.gmra.mxu0 %v4145
    %v4147 = vpop.f32.mrf.mxu0
    %v4148 = vadd.f32 %v4067, %v4147
    %v4149 = vpop.f32.mrf.mxu0
    %4150 = vdwg.mxu0
    %4151 = vmatprep.subr.mxu0 0.0
    %4152 = vmatpush1.msra.mxu0 0.0
    %4153 = vmatprep.subr.mxu0 0.0
    %4154 = vmatpush1.msra.mxu0 0.0
    %4155 = vmatprep.subr.mxu0 0.0
    %4156 = vmatpush1.msra.mxu0 0.0
    %4157 = vmatprep.subr.mxu0 0.0
    %4158 = vmatpush1.msra.mxu0 0.0
    %4159 = vmatprep.subr.mxu0 0.0
    %4160 = vmatpush1.msra.mxu0 0.0
    %4161 = vmatprep.subr.mxu0 0.0
    %4162 = vmatpush1.msra.mxu0 0.0
    %4163 = vmatprep.subr.mxu0 0.0
    %4164 = vmatpush1.msra.mxu0 0.0
    %4165 = vmatprep.subr.mxu0 0.0
    %4166 = vmatpush1.msra.mxu0 0.0
    %4167 = vmatprep.subr.mxu0 0.0
    %4168 = vmatpush1.msra.mxu0 0.0
    %4169 = vmatprep.subr.mxu0 0.0
    %4170 = vmatpush1.msra.mxu0 0.0
    %4171 = vmatprep.subr.mxu0 0.0
    %4172 = vmatpush1.msra.mxu0 0.0
    %4173 = vmatprep.subr.mxu0 0.0
    %4174 = vmatpush1.msra.mxu0 0.0
    %4175 = vmatprep.subr.mxu0 0.0
    %4176 = vmatpush1.msra.mxu0 0.0
    %4177 = vmatprep.subr.mxu0 0.0
    %4178 = vmatpush1.msra.mxu0 0.0
    %4179 = vmatprep.subr.mxu0 0.0
    %v4180 = vand.u32 %v28, 4294901760
    %v4181 = vsub.f32 %v28, %v4180
    %4182 = vmatpush1.msra.mxu0 %v4181
    %4183 = vmatprep.subr.mxu0 0.0
    %v4184 = vand.u32 %v27, 4294901760
    %v4185 = vsub.f32 %v27, %v4184
    %4186 = vmatpush1.msra.mxu0 %v4185
    %4187 = vmatprep.subr.mxu0 0.0
    %4188 = vmatpush2.msra.mxu0 0.0
    %4189 = vmatprep.subr.mxu0 0.0
    %4190 = vmatpush2.msra.mxu0 0.0
    %4191 = vmatprep.subr.mxu0 0.0
    %4192 = vmatpush2.msra.mxu0 0.0
    %4193 = vmatprep.subr.mxu0 0.0
    %4194 = vmatpush2.msra.mxu0 0.0
    %4195 = vmatprep.subr.mxu0 0.0
    %4196 = vmatpush2.msra.mxu0 0.0
    %4197 = vmatprep.subr.mxu0 0.0
    %4198 = vmatpush2.msra.mxu0 0.0
    %4199 = vmatprep.subr.mxu0 0.0
    %4200 = vmatpush2.msra.mxu0 0.0
    %4201 = vmatprep.subr.mxu0 0.0
    %4202 = vmatpush2.msra.mxu0 0.0
    %4203 = vmatprep.subr.mxu0 0.0
    %4204 = vmatpush2.msra.mxu0 0.0
    %4205 = vmatprep.subr.mxu0 0.0
    %4206 = vmatpush2.msra.mxu0 0.0
    %4207 = vmatprep.subr.mxu0 0.0
    %4208 = vmatpush2.msra.mxu0 0.0
    %4209 = vmatprep.subr.mxu0 0.0
    %4210 = vmatpush2.msra.mxu0 0.0
    %4211 = vmatprep.subr.mxu0 0.0
    %4212 = vmatpush2.msra.mxu0 0.0
    %4213 = vmatprep.subr.mxu0 0.0
    %4214 = vmatpush2.msra.mxu0 0.0
    %4215 = vmatprep.subr.mxu0 0.0
    %4216 = vmatpush2.msra.mxu0 0.0
    %4217 = vmatprep.subr.mxu0 0.0
    %4218 = vmatpush2.msra.mxu0 0.0
    %4219 = vmatprep.mubr.f32.mxu0 0.0
    %v4220 = vand.u32 %v3991, 4294901760
    %v4221 = vsub.f32 %v3991, %v4220
    %4222 = vmatmul.mubr.f32.gmra.mxu0 %v4221
    %v4223 = vpop.f32.mrf.mxu0
    %v4224 = vadd.f32 %v4148, %v4223
    %v4225 = vpop.f32.mrf.mxu0
    %4226 = vdwg.mxu0
    %4227 = vmatprep.subr.mxu0 0.0
    %4228 = vmatpush1.msra.mxu0 0.0
    %4229 = vmatprep.subr.mxu0 0.0
    %4230 = vmatpush1.msra.mxu0 0.0
    %4231 = vmatprep.subr.mxu0 0.0
    %4232 = vmatpush1.msra.mxu0 0.0
    %4233 = vmatprep.subr.mxu0 0.0
    %4234 = vmatpush1.msra.mxu0 0.0
    %4235 = vmatprep.subr.mxu0 0.0
    %4236 = vmatpush1.msra.mxu0 0.0
    %4237 = vmatprep.subr.mxu0 0.0
    %4238 = vmatpush1.msra.mxu0 0.0
    %4239 = vmatprep.subr.mxu0 0.0
    %4240 = vmatpush1.msra.mxu0 0.0
    %4241 = vmatprep.subr.mxu0 0.0
    %4242 = vmatpush1.msra.mxu0 0.0
    %4243 = vmatprep.subr.mxu0 0.0
    %4244 = vmatpush1.msra.mxu0 0.0
    %4245 = vmatprep.subr.mxu0 0.0
    %4246 = vmatpush1.msra.mxu0 0.0
    %4247 = vmatprep.subr.mxu0 0.0
    %4248 = vmatpush1.msra.mxu0 0.0
    %4249 = vmatprep.subr.mxu0 0.0
    %4250 = vmatpush1.msra.mxu0 0.0
    %4251 = vmatprep.subr.mxu0 0.0
    %4252 = vmatpush1.msra.mxu0 0.0
    %4253 = vmatprep.subr.mxu0 0.0
    %4254 = vmatpush1.msra.mxu0 0.0
    %4255 = vmatprep.subr.mxu0 0.0
    %v4256 = vand.u32 %v28, 4294901760
    %4257 = vmatpush1.msra.mxu0 %v4256
    %4258 = vmatprep.subr.mxu0 0.0
    %v4259 = vand.u32 %v27, 4294901760
    %4260 = vmatpush1.msra.mxu0 %v4259
    %4261 = vmatprep.subr.mxu0 0.0
    %4262 = vmatpush2.msra.mxu0 0.0
    %4263 = vmatprep.subr.mxu0 0.0
    %4264 = vmatpush2.msra.mxu0 0.0
    %4265 = vmatprep.subr.mxu0 0.0
    %4266 = vmatpush2.msra.mxu0 0.0
    %4267 = vmatprep.subr.mxu0 0.0
    %4268 = vmatpush2.msra.mxu0 0.0
    %4269 = vmatprep.subr.mxu0 0.0
    %4270 = vmatpush2.msra.mxu0 0.0
    %4271 = vmatprep.subr.mxu0 0.0
    %4272 = vmatpush2.msra.mxu0 0.0
    %4273 = vmatprep.subr.mxu0 0.0
    %4274 = vmatpush2.msra.mxu0 0.0
    %4275 = vmatprep.subr.mxu0 0.0
    %4276 = vmatpush2.msra.mxu0 0.0
    %4277 = vmatprep.subr.mxu0 0.0
    %4278 = vmatpush2.msra.mxu0 0.0
    %4279 = vmatprep.subr.mxu0 0.0
    %4280 = vmatpush2.msra.mxu0 0.0
    %4281 = vmatprep.subr.mxu0 0.0
    %4282 = vmatpush2.msra.mxu0 0.0
    %4283 = vmatprep.subr.mxu0 0.0
    %4284 = vmatpush2.msra.mxu0 0.0
    %4285 = vmatprep.subr.mxu0 0.0
    %4286 = vmatpush2.msra.mxu0 0.0
    %4287 = vmatprep.subr.mxu0 0.0
    %4288 = vmatpush2.msra.mxu0 0.0
    %4289 = vmatprep.subr.mxu0 0.0
    %4290 = vmatpush2.msra.mxu0 0.0
    %4291 = vmatprep.subr.mxu0 0.0
    %4292 = vmatpush2.msra.mxu0 0.0
    %4293 = vmatprep.mubr.f32.mxu0 0.0
    %v4294 = vand.u32 %v3991, 4294901760
    %v4295 = vsub.f32 %v3991, %v4294
    %v4296 = vand.u32 %v4295, 4294901760
    %4297 = vmatmul.mubr.f32.gmra.mxu0 %v4296
    %v4298 = vpop.f32.mrf.mxu0
    %v4299 = vadd.f32 %v4224, %v4298
    %v4300 = vpop.f32.mrf.mxu0
    %4301 = vdwg.mxu0
    %4302 = vmatprep.subr.mxu0 0.0
    %4303 = vmatpush1.msra.mxu0 0.0
    %4304 = vmatprep.subr.mxu0 0.0
    %4305 = vmatpush1.msra.mxu0 0.0
    %4306 = vmatprep.subr.mxu0 0.0
    %4307 = vmatpush1.msra.mxu0 0.0
    %4308 = vmatprep.subr.mxu0 0.0
    %4309 = vmatpush1.msra.mxu0 0.0
    %4310 = vmatprep.subr.mxu0 0.0
    %4311 = vmatpush1.msra.mxu0 0.0
    %4312 = vmatprep.subr.mxu0 0.0
    %4313 = vmatpush1.msra.mxu0 0.0
    %4314 = vmatprep.subr.mxu0 0.0
    %4315 = vmatpush1.msra.mxu0 0.0
    %4316 = vmatprep.subr.mxu0 0.0
    %4317 = vmatpush1.msra.mxu0 0.0
    %4318 = vmatprep.subr.mxu0 0.0
    %4319 = vmatpush1.msra.mxu0 0.0
    %4320 = vmatprep.subr.mxu0 0.0
    %4321 = vmatpush1.msra.mxu0 0.0
    %4322 = vmatprep.subr.mxu0 0.0
    %4323 = vmatpush1.msra.mxu0 0.0
    %4324 = vmatprep.subr.mxu0 0.0
    %4325 = vmatpush1.msra.mxu0 0.0
    %4326 = vmatprep.subr.mxu0 0.0
    %4327 = vmatpush1.msra.mxu0 0.0
    %4328 = vmatprep.subr.mxu0 0.0
    %4329 = vmatpush1.msra.mxu0 0.0
    %4330 = vmatprep.subr.mxu0 0.0
    %v4331 = vand.u32 %v28, 4294901760
    %v4332 = vsub.f32 %v28, %v4331
    %v4333 = vand.u32 %v4332, 4294901760
    %4334 = vmatpush1.msra.mxu0 %v4333
    %4335 = vmatprep.subr.mxu0 0.0
    %v4336 = vand.u32 %v27, 4294901760
    %v4337 = vsub.f32 %v27, %v4336
    %v4338 = vand.u32 %v4337, 4294901760
    %4339 = vmatpush1.msra.mxu0 %v4338
    %4340 = vmatprep.subr.mxu0 0.0
    %4341 = vmatpush2.msra.mxu0 0.0
    %4342 = vmatprep.subr.mxu0 0.0
    %4343 = vmatpush2.msra.mxu0 0.0
    %4344 = vmatprep.subr.mxu0 0.0
    %4345 = vmatpush2.msra.mxu0 0.0
    %4346 = vmatprep.subr.mxu0 0.0
    %4347 = vmatpush2.msra.mxu0 0.0
    %4348 = vmatprep.subr.mxu0 0.0
    %4349 = vmatpush2.msra.mxu0 0.0
    %4350 = vmatprep.subr.mxu0 0.0
    %4351 = vmatpush2.msra.mxu0 0.0
    %4352 = vmatprep.subr.mxu0 0.0
    %4353 = vmatpush2.msra.mxu0 0.0
    %4354 = vmatprep.subr.mxu0 0.0
    %4355 = vmatpush2.msra.mxu0 0.0
    %4356 = vmatprep.subr.mxu0 0.0
    %4357 = vmatpush2.msra.mxu0 0.0
    %4358 = vmatprep.subr.mxu0 0.0
    %4359 = vmatpush2.msra.mxu0 0.0
    %4360 = vmatprep.subr.mxu0 0.0
    %4361 = vmatpush2.msra.mxu0 0.0
    %4362 = vmatprep.subr.mxu0 0.0
    %4363 = vmatpush2.msra.mxu0 0.0
    %4364 = vmatprep.subr.mxu0 0.0
    %4365 = vmatpush2.msra.mxu0 0.0
    %4366 = vmatprep.subr.mxu0 0.0
    %4367 = vmatpush2.msra.mxu0 0.0
    %4368 = vmatprep.subr.mxu0 0.0
    %4369 = vmatpush2.msra.mxu0 0.0
    %4370 = vmatprep.subr.mxu0 0.0
    %4371 = vmatpush2.msra.mxu0 0.0
    %4372 = vmatprep.mubr.f32.mxu0 0.0
    %v4373 = vand.u32 %v3991, 4294901760
    %4374 = vmatmul.mubr.f32.gmra.mxu0 %v4373
    %v4375 = vpop.f32.mrf.mxu0
    %v4376 = vadd.f32 %v4299, %v4375
    %v4377 = vpop.f32.mrf.mxu0
    %4378 = vdwg.mxu0
    %4379 = vmatprep.subr.mxu0 0.0
    %4380 = vmatpush1.msra.mxu0 0.0
    %4381 = vmatprep.subr.mxu0 0.0
    %4382 = vmatpush1.msra.mxu0 0.0
    %4383 = vmatprep.subr.mxu0 0.0
    %4384 = vmatpush1.msra.mxu0 0.0
    %4385 = vmatprep.subr.mxu0 0.0
    %4386 = vmatpush1.msra.mxu0 0.0
    %4387 = vmatprep.subr.mxu0 0.0
    %4388 = vmatpush1.msra.mxu0 0.0
    %4389 = vmatprep.subr.mxu0 0.0
    %4390 = vmatpush1.msra.mxu0 0.0
    %4391 = vmatprep.subr.mxu0 0.0
    %4392 = vmatpush1.msra.mxu0 0.0
    %4393 = vmatprep.subr.mxu0 0.0
    %4394 = vmatpush1.msra.mxu0 0.0
    %4395 = vmatprep.subr.mxu0 0.0
    %4396 = vmatpush1.msra.mxu0 0.0
    %4397 = vmatprep.subr.mxu0 0.0
    %4398 = vmatpush1.msra.mxu0 0.0
    %4399 = vmatprep.subr.mxu0 0.0
    %4400 = vmatpush1.msra.mxu0 0.0
    %4401 = vmatprep.subr.mxu0 0.0
    %4402 = vmatpush1.msra.mxu0 0.0
    %4403 = vmatprep.subr.mxu0 0.0
    %4404 = vmatpush1.msra.mxu0 0.0
    %4405 = vmatprep.subr.mxu0 0.0
    %4406 = vmatpush1.msra.mxu0 0.0
    %4407 = vmatprep.subr.mxu0 0.0
    %v4408 = vand.u32 %v28, 4294901760
    %4409 = vmatpush1.msra.mxu0 %v4408
    %4410 = vmatprep.subr.mxu0 0.0
    %v4411 = vand.u32 %v27, 4294901760
    %4412 = vmatpush1.msra.mxu0 %v4411
    %4413 = vmatprep.subr.mxu0 0.0
    %4414 = vmatpush2.msra.mxu0 0.0
    %4415 = vmatprep.subr.mxu0 0.0
    %4416 = vmatpush2.msra.mxu0 0.0
    %4417 = vmatprep.subr.mxu0 0.0
    %4418 = vmatpush2.msra.mxu0 0.0
    %4419 = vmatprep.subr.mxu0 0.0
    %4420 = vmatpush2.msra.mxu0 0.0
    %4421 = vmatprep.subr.mxu0 0.0
    %4422 = vmatpush2.msra.mxu0 0.0
    %4423 = vmatprep.subr.mxu0 0.0
    %4424 = vmatpush2.msra.mxu0 0.0
    %4425 = vmatprep.subr.mxu0 0.0
    %4426 = vmatpush2.msra.mxu0 0.0
    %4427 = vmatprep.subr.mxu0 0.0
    %4428 = vmatpush2.msra.mxu0 0.0
    %4429 = vmatprep.subr.mxu0 0.0
    %4430 = vmatpush2.msra.mxu0 0.0
    %4431 = vmatprep.subr.mxu0 0.0
    %4432 = vmatpush2.msra.mxu0 0.0
    %4433 = vmatprep.subr.mxu0 0.0
    %4434 = vmatpush2.msra.mxu0 0.0
    %4435 = vmatprep.subr.mxu0 0.0
    %4436 = vmatpush2.msra.mxu0 0.0
    %4437 = vmatprep.subr.mxu0 0.0
    %4438 = vmatpush2.msra.mxu0 0.0
    %4439 = vmatprep.subr.mxu0 0.0
    %4440 = vmatpush2.msra.mxu0 0.0
    %4441 = vmatprep.subr.mxu0 0.0
    %4442 = vmatpush2.msra.mxu0 0.0
    %4443 = vmatprep.subr.mxu0 0.0
    %4444 = vmatpush2.msra.mxu0 0.0
    %4445 = vmatprep.mubr.f32.mxu0 0.0
    %v4446 = vand.u32 %v3991, 4294901760
    %4447 = vmatmul.mubr.f32.gmra.mxu0 %v4446
    %v4448 = vpop.f32.mrf.mxu0
    %v4449 = vadd.f32 %v4376, %v4448
    %v4450 = vpop.f32.mrf.mxu0
    %4451 = vdwg.mxu0
    %4452 = vmatprep.subr.mxu0 0.0
    %v4453 = vand.u32 %v45, 4294901760
    %4454 = vmatpush1.msra.mxu0 %v4453
    %4455 = vmatprep.subr.mxu0 0.0
    %v4456 = vand.u32 %v44, 4294901760
    %4457 = vmatpush1.msra.mxu0 %v4456
    %4458 = vmatprep.subr.mxu0 0.0
    %v4459 = vand.u32 %v43, 4294901760
    %4460 = vmatpush1.msra.mxu0 %v4459
    %4461 = vmatprep.subr.mxu0 0.0
    %v4462 = vand.u32 %v42, 4294901760
    %4463 = vmatpush1.msra.mxu0 %v4462
    %4464 = vmatprep.subr.mxu0 0.0
    %v4465 = vand.u32 %v41, 4294901760
    %4466 = vmatpush1.msra.mxu0 %v4465
    %4467 = vmatprep.subr.mxu0 0.0
    %v4468 = vand.u32 %v40, 4294901760
    %4469 = vmatpush1.msra.mxu0 %v4468
    %4470 = vmatprep.subr.mxu0 0.0
    %v4471 = vand.u32 %v39, 4294901760
    %4472 = vmatpush1.msra.mxu0 %v4471
    %4473 = vmatprep.subr.mxu0 0.0
    %v4474 = vand.u32 %v38, 4294901760
    %4475 = vmatpush1.msra.mxu0 %v4474
    %4476 = vmatprep.subr.mxu0 0.0
    %v4477 = vand.u32 %v37, 4294901760
    %4478 = vmatpush1.msra.mxu0 %v4477
    %4479 = vmatprep.subr.mxu0 0.0
    %v4480 = vand.u32 %v36, 4294901760
    %4481 = vmatpush1.msra.mxu0 %v4480
    %4482 = vmatprep.subr.mxu0 0.0
    %v4483 = vand.u32 %v35, 4294901760
    %4484 = vmatpush1.msra.mxu0 %v4483
    %4485 = vmatprep.subr.mxu0 0.0
    %v4486 = vand.u32 %v34, 4294901760
    %4487 = vmatpush1.msra.mxu0 %v4486
    %4488 = vmatprep.subr.mxu0 0.0
    %v4489 = vand.u32 %v33, 4294901760
    %4490 = vmatpush1.msra.mxu0 %v4489
    %4491 = vmatprep.subr.mxu0 0.0
    %v4492 = vand.u32 %v32, 4294901760
    %4493 = vmatpush1.msra.mxu0 %v4492
    %4494 = vmatprep.subr.mxu0 0.0
    %v4495 = vand.u32 %v31, 4294901760
    %4496 = vmatpush1.msra.mxu0 %v4495
    %4497 = vmatprep.subr.mxu0 0.0
    %v4498 = vand.u32 %v30, 4294901760
    %4499 = vmatpush1.msra.mxu0 %v4498
    %4500 = vmatprep.subr.mxu0 0.0
    %4501 = vmatpush2.msra.mxu0 0.0
    %4502 = vmatprep.subr.mxu0 0.0
    %4503 = vmatpush2.msra.mxu0 0.0
    %4504 = vmatprep.subr.mxu0 0.0
    %4505 = vmatpush2.msra.mxu0 0.0
    %4506 = vmatprep.subr.mxu0 0.0
    %4507 = vmatpush2.msra.mxu0 0.0
    %4508 = vmatprep.subr.mxu0 0.0
    %4509 = vmatpush2.msra.mxu0 0.0
    %4510 = vmatprep.subr.mxu0 0.0
    %4511 = vmatpush2.msra.mxu0 0.0
    %4512 = vmatprep.subr.mxu0 0.0
    %4513 = vmatpush2.msra.mxu0 0.0
    %4514 = vmatprep.subr.mxu0 0.0
    %4515 = vmatpush2.msra.mxu0 0.0
    %4516 = vmatprep.subr.mxu0 0.0
    %4517 = vmatpush2.msra.mxu0 0.0
    %4518 = vmatprep.subr.mxu0 0.0
    %4519 = vmatpush2.msra.mxu0 0.0
    %4520 = vmatprep.subr.mxu0 0.0
    %4521 = vmatpush2.msra.mxu0 0.0
    %4522 = vmatprep.subr.mxu0 0.0
    %4523 = vmatpush2.msra.mxu0 0.0
    %4524 = vmatprep.subr.mxu0 0.0
    %4525 = vmatpush2.msra.mxu0 0.0
    %4526 = vmatprep.subr.mxu0 0.0
    %4527 = vmatpush2.msra.mxu0 0.0
    %4528 = vmatprep.subr.mxu0 0.0
    %4529 = vmatpush2.msra.mxu0 0.0
    %4530 = vmatprep.subr.mxu0 0.0
    %4531 = vmatpush2.msra.mxu0 0.0
    %4532 = vmatprep.mubr.f32.mxu0 0.0
    %v4533 = vand.u32 %v3958, 4294901760
    %v4534 = vsub.f32 %v3958, %v4533
    %v4535 = vand.u32 %v4534, 4294901760
    %v4536 = vsub.f32 %v4534, %v4535
    %v4537 = vand.u32 %v4536, 4294901760
    %4538 = vmatmul.mubr.f32.gmra.mxu0 %v4537
    %v4539 = vpop.f32.mrf.mxu0
    %v4540 = vadd.f32 0.0, %v4539
    %v4541 = vpop.f32.mrf.mxu0
    %4542 = vdwg.mxu0
    %4543 = vmatprep.subr.mxu0 0.0
    %v4544 = vand.u32 %v45, 4294901760
    %v4545 = vsub.f32 %v45, %v4544
    %v4546 = vand.u32 %v4545, 4294901760
    %v4547 = vsub.f32 %v4545, %v4546
    %v4548 = vand.u32 %v4547, 4294901760
    %4549 = vmatpush1.msra.mxu0 %v4548
    %4550 = vmatprep.subr.mxu0 0.0
    %v4551 = vand.u32 %v44, 4294901760
    %v4552 = vsub.f32 %v44, %v4551
    %v4553 = vand.u32 %v4552, 4294901760
    %v4554 = vsub.f32 %v4552, %v4553
    %v4555 = vand.u32 %v4554, 4294901760
    %4556 = vmatpush1.msra.mxu0 %v4555
    %4557 = vmatprep.subr.mxu0 0.0
    %v4558 = vand.u32 %v43, 4294901760
    %v4559 = vsub.f32 %v43, %v4558
    %v4560 = vand.u32 %v4559, 4294901760
    %v4561 = vsub.f32 %v4559, %v4560
    %v4562 = vand.u32 %v4561, 4294901760
    %4563 = vmatpush1.msra.mxu0 %v4562
    %4564 = vmatprep.subr.mxu0 0.0
    %v4565 = vand.u32 %v42, 4294901760
    %v4566 = vsub.f32 %v42, %v4565
    %v4567 = vand.u32 %v4566, 4294901760
    %v4568 = vsub.f32 %v4566, %v4567
    %v4569 = vand.u32 %v4568, 4294901760
    %4570 = vmatpush1.msra.mxu0 %v4569
    %4571 = vmatprep.subr.mxu0 0.0
    %v4572 = vand.u32 %v41, 4294901760
    %v4573 = vsub.f32 %v41, %v4572
    %v4574 = vand.u32 %v4573, 4294901760
    %v4575 = vsub.f32 %v4573, %v4574
    %v4576 = vand.u32 %v4575, 4294901760
    %4577 = vmatpush1.msra.mxu0 %v4576
    %4578 = vmatprep.subr.mxu0 0.0
    %v4579 = vand.u32 %v40, 4294901760
    %v4580 = vsub.f32 %v40, %v4579
    %v4581 = vand.u32 %v4580, 4294901760
    %v4582 = vsub.f32 %v4580, %v4581
    %v4583 = vand.u32 %v4582, 4294901760
    %4584 = vmatpush1.msra.mxu0 %v4583
    %4585 = vmatprep.subr.mxu0 0.0
    %v4586 = vand.u32 %v39, 4294901760
    %v4587 = vsub.f32 %v39, %v4586
    %v4588 = vand.u32 %v4587, 4294901760
    %v4589 = vsub.f32 %v4587, %v4588
    %v4590 = vand.u32 %v4589, 4294901760
    %4591 = vmatpush1.msra.mxu0 %v4590
    %4592 = vmatprep.subr.mxu0 0.0
    %v4593 = vand.u32 %v38, 4294901760
    %v4594 = vsub.f32 %v38, %v4593
    %v4595 = vand.u32 %v4594, 4294901760
    %v4596 = vsub.f32 %v4594, %v4595
    %v4597 = vand.u32 %v4596, 4294901760
    %4598 = vmatpush1.msra.mxu0 %v4597
    %4599 = vmatprep.subr.mxu0 0.0
    %v4600 = vand.u32 %v37, 4294901760
    %v4601 = vsub.f32 %v37, %v4600
    %v4602 = vand.u32 %v4601, 4294901760
    %v4603 = vsub.f32 %v4601, %v4602
    %v4604 = vand.u32 %v4603, 4294901760
    %4605 = vmatpush1.msra.mxu0 %v4604
    %4606 = vmatprep.subr.mxu0 0.0
    %v4607 = vand.u32 %v36, 4294901760
    %v4608 = vsub.f32 %v36, %v4607
    %v4609 = vand.u32 %v4608, 4294901760
    %v4610 = vsub.f32 %v4608, %v4609
    %v4611 = vand.u32 %v4610, 4294901760
    %4612 = vmatpush1.msra.mxu0 %v4611
    %4613 = vmatprep.subr.mxu0 0.0
    %v4614 = vand.u32 %v35, 4294901760
    %v4615 = vsub.f32 %v35, %v4614
    %v4616 = vand.u32 %v4615, 4294901760
    %v4617 = vsub.f32 %v4615, %v4616
    %v4618 = vand.u32 %v4617, 4294901760
    %4619 = vmatpush1.msra.mxu0 %v4618
    %4620 = vmatprep.subr.mxu0 0.0
    %v4621 = vand.u32 %v34, 4294901760
    %v4622 = vsub.f32 %v34, %v4621
    %v4623 = vand.u32 %v4622, 4294901760
    %v4624 = vsub.f32 %v4622, %v4623
    %v4625 = vand.u32 %v4624, 4294901760
    %4626 = vmatpush1.msra.mxu0 %v4625
    %4627 = vmatprep.subr.mxu0 0.0
    %v4628 = vand.u32 %v33, 4294901760
    %v4629 = vsub.f32 %v33, %v4628
    %v4630 = vand.u32 %v4629, 4294901760
    %v4631 = vsub.f32 %v4629, %v4630
    %v4632 = vand.u32 %v4631, 4294901760
    %4633 = vmatpush1.msra.mxu0 %v4632
    %4634 = vmatprep.subr.mxu0 0.0
    %v4635 = vand.u32 %v32, 4294901760
    %v4636 = vsub.f32 %v32, %v4635
    %v4637 = vand.u32 %v4636, 4294901760
    %v4638 = vsub.f32 %v4636, %v4637
    %v4639 = vand.u32 %v4638, 4294901760
    %4640 = vmatpush1.msra.mxu0 %v4639
    %4641 = vmatprep.subr.mxu0 0.0
    %v4642 = vand.u32 %v31, 4294901760
    %v4643 = vsub.f32 %v31, %v4642
    %v4644 = vand.u32 %v4643, 4294901760
    %v4645 = vsub.f32 %v4643, %v4644
    %v4646 = vand.u32 %v4645, 4294901760
    %4647 = vmatpush1.msra.mxu0 %v4646
    %4648 = vmatprep.subr.mxu0 0.0
    %v4649 = vand.u32 %v30, 4294901760
    %v4650 = vsub.f32 %v30, %v4649
    %v4651 = vand.u32 %v4650, 4294901760
    %v4652 = vsub.f32 %v4650, %v4651
    %v4653 = vand.u32 %v4652, 4294901760
    %4654 = vmatpush1.msra.mxu0 %v4653
    %4655 = vmatprep.subr.mxu0 0.0
    %4656 = vmatpush2.msra.mxu0 0.0
    %4657 = vmatprep.subr.mxu0 0.0
    %4658 = vmatpush2.msra.mxu0 0.0
    %4659 = vmatprep.subr.mxu0 0.0
    %4660 = vmatpush2.msra.mxu0 0.0
    %4661 = vmatprep.subr.mxu0 0.0
    %4662 = vmatpush2.msra.mxu0 0.0
    %4663 = vmatprep.subr.mxu0 0.0
    %4664 = vmatpush2.msra.mxu0 0.0
    %4665 = vmatprep.subr.mxu0 0.0
    %4666 = vmatpush2.msra.mxu0 0.0
    %4667 = vmatprep.subr.mxu0 0.0
    %4668 = vmatpush2.msra.mxu0 0.0
    %4669 = vmatprep.subr.mxu0 0.0
    %4670 = vmatpush2.msra.mxu0 0.0
    %4671 = vmatprep.subr.mxu0 0.0
    %4672 = vmatpush2.msra.mxu0 0.0
    %4673 = vmatprep.subr.mxu0 0.0
    %4674 = vmatpush2.msra.mxu0 0.0
    %4675 = vmatprep.subr.mxu0 0.0
    %4676 = vmatpush2.msra.mxu0 0.0
    %4677 = vmatprep.subr.mxu0 0.0
    %4678 = vmatpush2.msra.mxu0 0.0
    %4679 = vmatprep.subr.mxu0 0.0
    %4680 = vmatpush2.msra.mxu0 0.0
    %4681 = vmatprep.subr.mxu0 0.0
    %4682 = vmatpush2.msra.mxu0 0.0
    %4683 = vmatprep.subr.mxu0 0.0
    %4684 = vmatpush2.msra.mxu0 0.0
    %4685 = vmatprep.subr.mxu0 0.0
    %4686 = vmatpush2.msra.mxu0 0.0
    %4687 = vmatprep.mubr.f32.mxu0 0.0
    %v4688 = vand.u32 %v3958, 4294901760
    %4689 = vmatmul.mubr.f32.gmra.mxu0 %v4688
    %v4690 = vpop.f32.mrf.mxu0
    %v4691 = vadd.f32 %v4540, %v4690
    %v4692 = vpop.f32.mrf.mxu0
    %4693 = vdwg.mxu0
    %4694 = vmatprep.subr.mxu0 0.0
    %v4695 = vand.u32 %v45, 4294901760
    %v4696 = vsub.f32 %v45, %v4695
    %4697 = vmatpush1.msra.mxu0 %v4696
    %4698 = vmatprep.subr.mxu0 0.0
    %v4699 = vand.u32 %v44, 4294901760
    %v4700 = vsub.f32 %v44, %v4699
    %4701 = vmatpush1.msra.mxu0 %v4700
    %4702 = vmatprep.subr.mxu0 0.0
    %v4703 = vand.u32 %v43, 4294901760
    %v4704 = vsub.f32 %v43, %v4703
    %4705 = vmatpush1.msra.mxu0 %v4704
    %4706 = vmatprep.subr.mxu0 0.0
    %v4707 = vand.u32 %v42, 4294901760
    %v4708 = vsub.f32 %v42, %v4707
    %4709 = vmatpush1.msra.mxu0 %v4708
    %4710 = vmatprep.subr.mxu0 0.0
    %v4711 = vand.u32 %v41, 4294901760
    %v4712 = vsub.f32 %v41, %v4711
    %4713 = vmatpush1.msra.mxu0 %v4712
    %4714 = vmatprep.subr.mxu0 0.0
    %v4715 = vand.u32 %v40, 4294901760
    %v4716 = vsub.f32 %v40, %v4715
    %4717 = vmatpush1.msra.mxu0 %v4716
    %4718 = vmatprep.subr.mxu0 0.0
    %v4719 = vand.u32 %v39, 4294901760
    %v4720 = vsub.f32 %v39, %v4719
    %4721 = vmatpush1.msra.mxu0 %v4720
    %4722 = vmatprep.subr.mxu0 0.0
    %v4723 = vand.u32 %v38, 4294901760
    %v4724 = vsub.f32 %v38, %v4723
    %4725 = vmatpush1.msra.mxu0 %v4724
    %4726 = vmatprep.subr.mxu0 0.0
    %v4727 = vand.u32 %v37, 4294901760
    %v4728 = vsub.f32 %v37, %v4727
    %4729 = vmatpush1.msra.mxu0 %v4728
    %4730 = vmatprep.subr.mxu0 0.0
    %v4731 = vand.u32 %v36, 4294901760
    %v4732 = vsub.f32 %v36, %v4731
    %4733 = vmatpush1.msra.mxu0 %v4732
    %4734 = vmatprep.subr.mxu0 0.0
    %v4735 = vand.u32 %v35, 4294901760
    %v4736 = vsub.f32 %v35, %v4735
    %4737 = vmatpush1.msra.mxu0 %v4736
    %4738 = vmatprep.subr.mxu0 0.0
    %v4739 = vand.u32 %v34, 4294901760
    %v4740 = vsub.f32 %v34, %v4739
    %4741 = vmatpush1.msra.mxu0 %v4740
    %4742 = vmatprep.subr.mxu0 0.0
    %v4743 = vand.u32 %v33, 4294901760
    %v4744 = vsub.f32 %v33, %v4743
    %4745 = vmatpush1.msra.mxu0 %v4744
    %4746 = vmatprep.subr.mxu0 0.0
    %v4747 = vand.u32 %v32, 4294901760
    %v4748 = vsub.f32 %v32, %v4747
    %4749 = vmatpush1.msra.mxu0 %v4748
    %4750 = vmatprep.subr.mxu0 0.0
    %v4751 = vand.u32 %v31, 4294901760
    %v4752 = vsub.f32 %v31, %v4751
    %4753 = vmatpush1.msra.mxu0 %v4752
    %4754 = vmatprep.subr.mxu0 0.0
    %v4755 = vand.u32 %v30, 4294901760
    %v4756 = vsub.f32 %v30, %v4755
    %4757 = vmatpush1.msra.mxu0 %v4756
    %4758 = vmatprep.subr.mxu0 0.0
    %4759 = vmatpush2.msra.mxu0 0.0
    %4760 = vmatprep.subr.mxu0 0.0
    %4761 = vmatpush2.msra.mxu0 0.0
    %4762 = vmatprep.subr.mxu0 0.0
    %4763 = vmatpush2.msra.mxu0 0.0
    %4764 = vmatprep.subr.mxu0 0.0
    %4765 = vmatpush2.msra.mxu0 0.0
    %4766 = vmatprep.subr.mxu0 0.0
    %4767 = vmatpush2.msra.mxu0 0.0
    %4768 = vmatprep.subr.mxu0 0.0
    %4769 = vmatpush2.msra.mxu0 0.0
    %4770 = vmatprep.subr.mxu0 0.0
    %4771 = vmatpush2.msra.mxu0 0.0
    %4772 = vmatprep.subr.mxu0 0.0
    %4773 = vmatpush2.msra.mxu0 0.0
    %4774 = vmatprep.subr.mxu0 0.0
    %4775 = vmatpush2.msra.mxu0 0.0
    %4776 = vmatprep.subr.mxu0 0.0
    %4777 = vmatpush2.msra.mxu0 0.0
    %4778 = vmatprep.subr.mxu0 0.0
    %4779 = vmatpush2.msra.mxu0 0.0
    %4780 = vmatprep.subr.mxu0 0.0
    %4781 = vmatpush2.msra.mxu0 0.0
    %4782 = vmatprep.subr.mxu0 0.0
    %4783 = vmatpush2.msra.mxu0 0.0
    %4784 = vmatprep.subr.mxu0 0.0
    %4785 = vmatpush2.msra.mxu0 0.0
    %4786 = vmatprep.subr.mxu0 0.0
    %4787 = vmatpush2.msra.mxu0 0.0
    %4788 = vmatprep.subr.mxu0 0.0
    %4789 = vmatpush2.msra.mxu0 0.0
    %4790 = vmatprep.mubr.f32.mxu0 0.0
    %v4791 = vand.u32 %v3958, 4294901760
    %v4792 = vsub.f32 %v3958, %v4791
    %4793 = vmatmul.mubr.f32.gmra.mxu0 %v4792
    %v4794 = vpop.f32.mrf.mxu0
    %v4795 = vadd.f32 %v4691, %v4794
    %v4796 = vpop.f32.mrf.mxu0
    %4797 = vdwg.mxu0
    %4798 = vmatprep.subr.mxu0 0.0
    %v4799 = vand.u32 %v45, 4294901760
    %4800 = vmatpush1.msra.mxu0 %v4799
    %4801 = vmatprep.subr.mxu0 0.0
    %v4802 = vand.u32 %v44, 4294901760
    %4803 = vmatpush1.msra.mxu0 %v4802
    %4804 = vmatprep.subr.mxu0 0.0
    %v4805 = vand.u32 %v43, 4294901760
    %4806 = vmatpush1.msra.mxu0 %v4805
    %4807 = vmatprep.subr.mxu0 0.0
    %v4808 = vand.u32 %v42, 4294901760
    %4809 = vmatpush1.msra.mxu0 %v4808
    %4810 = vmatprep.subr.mxu0 0.0
    %v4811 = vand.u32 %v41, 4294901760
    %4812 = vmatpush1.msra.mxu0 %v4811
    %4813 = vmatprep.subr.mxu0 0.0
    %v4814 = vand.u32 %v40, 4294901760
    %4815 = vmatpush1.msra.mxu0 %v4814
    %4816 = vmatprep.subr.mxu0 0.0
    %v4817 = vand.u32 %v39, 4294901760
    %4818 = vmatpush1.msra.mxu0 %v4817
    %4819 = vmatprep.subr.mxu0 0.0
    %v4820 = vand.u32 %v38, 4294901760
    %4821 = vmatpush1.msra.mxu0 %v4820
    %4822 = vmatprep.subr.mxu0 0.0
    %v4823 = vand.u32 %v37, 4294901760
    %4824 = vmatpush1.msra.mxu0 %v4823
    %4825 = vmatprep.subr.mxu0 0.0
    %v4826 = vand.u32 %v36, 4294901760
    %4827 = vmatpush1.msra.mxu0 %v4826
    %4828 = vmatprep.subr.mxu0 0.0
    %v4829 = vand.u32 %v35, 4294901760
    %4830 = vmatpush1.msra.mxu0 %v4829
    %4831 = vmatprep.subr.mxu0 0.0
    %v4832 = vand.u32 %v34, 4294901760
    %4833 = vmatpush1.msra.mxu0 %v4832
    %4834 = vmatprep.subr.mxu0 0.0
    %v4835 = vand.u32 %v33, 4294901760
    %4836 = vmatpush1.msra.mxu0 %v4835
    %4837 = vmatprep.subr.mxu0 0.0
    %v4838 = vand.u32 %v32, 4294901760
    %4839 = vmatpush1.msra.mxu0 %v4838
    %4840 = vmatprep.subr.mxu0 0.0
    %v4841 = vand.u32 %v31, 4294901760
    %4842 = vmatpush1.msra.mxu0 %v4841
    %4843 = vmatprep.subr.mxu0 0.0
    %v4844 = vand.u32 %v30, 4294901760
    %4845 = vmatpush1.msra.mxu0 %v4844
    %4846 = vmatprep.subr.mxu0 0.0
    %4847 = vmatpush2.msra.mxu0 0.0
    %4848 = vmatprep.subr.mxu0 0.0
    %4849 = vmatpush2.msra.mxu0 0.0
    %4850 = vmatprep.subr.mxu0 0.0
    %4851 = vmatpush2.msra.mxu0 0.0
    %4852 = vmatprep.subr.mxu0 0.0
    %4853 = vmatpush2.msra.mxu0 0.0
    %4854 = vmatprep.subr.mxu0 0.0
    %4855 = vmatpush2.msra.mxu0 0.0
    %4856 = vmatprep.subr.mxu0 0.0
    %4857 = vmatpush2.msra.mxu0 0.0
    %4858 = vmatprep.subr.mxu0 0.0
    %4859 = vmatpush2.msra.mxu0 0.0
    %4860 = vmatprep.subr.mxu0 0.0
    %4861 = vmatpush2.msra.mxu0 0.0
    %4862 = vmatprep.subr.mxu0 0.0
    %4863 = vmatpush2.msra.mxu0 0.0
    %4864 = vmatprep.subr.mxu0 0.0
    %4865 = vmatpush2.msra.mxu0 0.0
    %4866 = vmatprep.subr.mxu0 0.0
    %4867 = vmatpush2.msra.mxu0 0.0
    %4868 = vmatprep.subr.mxu0 0.0
    %4869 = vmatpush2.msra.mxu0 0.0
    %4870 = vmatprep.subr.mxu0 0.0
    %4871 = vmatpush2.msra.mxu0 0.0
    %4872 = vmatprep.subr.mxu0 0.0
    %4873 = vmatpush2.msra.mxu0 0.0
    %4874 = vmatprep.subr.mxu0 0.0
    %4875 = vmatpush2.msra.mxu0 0.0
    %4876 = vmatprep.subr.mxu0 0.0
    %4877 = vmatpush2.msra.mxu0 0.0
    %4878 = vmatprep.mubr.f32.mxu0 0.0
    %v4879 = vand.u32 %v3958, 4294901760
    %v4880 = vsub.f32 %v3958, %v4879
    %v4881 = vand.u32 %v4880, 4294901760
    %4882 = vmatmul.mubr.f32.gmra.mxu0 %v4881
    %v4883 = vpop.f32.mrf.mxu0
    %v4884 = vadd.f32 %v4795, %v4883
    %v4885 = vpop.f32.mrf.mxu0
    %4886 = vdwg.mxu0
    %4887 = vmatprep.subr.mxu0 0.0
    %v4888 = vand.u32 %v45, 4294901760
    %v4889 = vsub.f32 %v45, %v4888
    %v4890 = vand.u32 %v4889, 4294901760
    %4891 = vmatpush1.msra.mxu0 %v4890
    %4892 = vmatprep.subr.mxu0 0.0
    %v4893 = vand.u32 %v44, 4294901760
    %v4894 = vsub.f32 %v44, %v4893
    %v4895 = vand.u32 %v4894, 4294901760
    %4896 = vmatpush1.msra.mxu0 %v4895
    %4897 = vmatprep.subr.mxu0 0.0
    %v4898 = vand.u32 %v43, 4294901760
    %v4899 = vsub.f32 %v43, %v4898
    %v4900 = vand.u32 %v4899, 4294901760
    %4901 = vmatpush1.msra.mxu0 %v4900
    %4902 = vmatprep.subr.mxu0 0.0
    %v4903 = vand.u32 %v42, 4294901760
    %v4904 = vsub.f32 %v42, %v4903
    %v4905 = vand.u32 %v4904, 4294901760
    %4906 = vmatpush1.msra.mxu0 %v4905
    %4907 = vmatprep.subr.mxu0 0.0
    %v4908 = vand.u32 %v41, 4294901760
    %v4909 = vsub.f32 %v41, %v4908
    %v4910 = vand.u32 %v4909, 4294901760
    %4911 = vmatpush1.msra.mxu0 %v4910
    %4912 = vmatprep.subr.mxu0 0.0
    %v4913 = vand.u32 %v40, 4294901760
    %v4914 = vsub.f32 %v40, %v4913
    %v4915 = vand.u32 %v4914, 4294901760
    %4916 = vmatpush1.msra.mxu0 %v4915
    %4917 = vmatprep.subr.mxu0 0.0
    %v4918 = vand.u32 %v39, 4294901760
    %v4919 = vsub.f32 %v39, %v4918
    %v4920 = vand.u32 %v4919, 4294901760
    %4921 = vmatpush1.msra.mxu0 %v4920
    %4922 = vmatprep.subr.mxu0 0.0
    %v4923 = vand.u32 %v38, 4294901760
    %v4924 = vsub.f32 %v38, %v4923
    %v4925 = vand.u32 %v4924, 4294901760
    %4926 = vmatpush1.msra.mxu0 %v4925
    %4927 = vmatprep.subr.mxu0 0.0
    %v4928 = vand.u32 %v37, 4294901760
    %v4929 = vsub.f32 %v37, %v4928
    %v4930 = vand.u32 %v4929, 4294901760
    %4931 = vmatpush1.msra.mxu0 %v4930
    %4932 = vmatprep.subr.mxu0 0.0
    %v4933 = vand.u32 %v36, 4294901760
    %v4934 = vsub.f32 %v36, %v4933
    %v4935 = vand.u32 %v4934, 4294901760
    %4936 = vmatpush1.msra.mxu0 %v4935
    %4937 = vmatprep.subr.mxu0 0.0
    %v4938 = vand.u32 %v35, 4294901760
    %v4939 = vsub.f32 %v35, %v4938
    %v4940 = vand.u32 %v4939, 4294901760
    %4941 = vmatpush1.msra.mxu0 %v4940
    %4942 = vmatprep.subr.mxu0 0.0
    %v4943 = vand.u32 %v34, 4294901760
    %v4944 = vsub.f32 %v34, %v4943
    %v4945 = vand.u32 %v4944, 4294901760
    %4946 = vmatpush1.msra.mxu0 %v4945
    %4947 = vmatprep.subr.mxu0 0.0
    %v4948 = vand.u32 %v33, 4294901760
    %v4949 = vsub.f32 %v33, %v4948
    %v4950 = vand.u32 %v4949, 4294901760
    %4951 = vmatpush1.msra.mxu0 %v4950
    %4952 = vmatprep.subr.mxu0 0.0
    %v4953 = vand.u32 %v32, 4294901760
    %v4954 = vsub.f32 %v32, %v4953
    %v4955 = vand.u32 %v4954, 4294901760
    %4956 = vmatpush1.msra.mxu0 %v4955
    %4957 = vmatprep.subr.mxu0 0.0
    %v4958 = vand.u32 %v31, 4294901760
    %v4959 = vsub.f32 %v31, %v4958
    %v4960 = vand.u32 %v4959, 4294901760
    %4961 = vmatpush1.msra.mxu0 %v4960
    %4962 = vmatprep.subr.mxu0 0.0
    %v4963 = vand.u32 %v30, 4294901760
    %v4964 = vsub.f32 %v30, %v4963
    %v4965 = vand.u32 %v4964, 4294901760
    %4966 = vmatpush1.msra.mxu0 %v4965
    %4967 = vmatprep.subr.mxu0 0.0
    %4968 = vmatpush2.msra.mxu0 0.0
    %4969 = vmatprep.subr.mxu0 0.0
    %4970 = vmatpush2.msra.mxu0 0.0
    %4971 = vmatprep.subr.mxu0 0.0
    %4972 = vmatpush2.msra.mxu0 0.0
    %4973 = vmatprep.subr.mxu0 0.0
    %4974 = vmatpush2.msra.mxu0 0.0
    %4975 = vmatprep.subr.mxu0 0.0
    %4976 = vmatpush2.msra.mxu0 0.0
    %4977 = vmatprep.subr.mxu0 0.0
    %4978 = vmatpush2.msra.mxu0 0.0
    %4979 = vmatprep.subr.mxu0 0.0
    %4980 = vmatpush2.msra.mxu0 0.0
    %4981 = vmatprep.subr.mxu0 0.0
    %4982 = vmatpush2.msra.mxu0 0.0
    %4983 = vmatprep.subr.mxu0 0.0
    %4984 = vmatpush2.msra.mxu0 0.0
    %4985 = vmatprep.subr.mxu0 0.0
    %4986 = vmatpush2.msra.mxu0 0.0
    %4987 = vmatprep.subr.mxu0 0.0
    %4988 = vmatpush2.msra.mxu0 0.0
    %4989 = vmatprep.subr.mxu0 0.0
    %4990 = vmatpush2.msra.mxu0 0.0
    %4991 = vmatprep.subr.mxu0 0.0
    %4992 = vmatpush2.msra.mxu0 0.0
    %4993 = vmatprep.subr.mxu0 0.0
    %4994 = vmatpush2.msra.mxu0 0.0
    %4995 = vmatprep.subr.mxu0 0.0
    %4996 = vmatpush2.msra.mxu0 0.0
    %4997 = vmatprep.subr.mxu0 0.0
    %4998 = vmatpush2.msra.mxu0 0.0
    %4999 = vmatprep.mubr.f32.mxu0 0.0
    %v5000 = vand.u32 %v3958, 4294901760
    %5001 = vmatmul.mubr.f32.gmra.mxu0 %v5000
    %v5002 = vpop.f32.mrf.mxu0
    %v5003 = vadd.f32 %v4884, %v5002
    %v5004 = vpop.f32.mrf.mxu0
    %5005 = vdwg.mxu0
    %5006 = vmatprep.subr.mxu0 0.0
    %v5007 = vand.u32 %v45, 4294901760
    %5008 = vmatpush1.msra.mxu0 %v5007
    %5009 = vmatprep.subr.mxu0 0.0
    %v5010 = vand.u32 %v44, 4294901760
    %5011 = vmatpush1.msra.mxu0 %v5010
    %5012 = vmatprep.subr.mxu0 0.0
    %v5013 = vand.u32 %v43, 4294901760
    %5014 = vmatpush1.msra.mxu0 %v5013
    %5015 = vmatprep.subr.mxu0 0.0
    %v5016 = vand.u32 %v42, 4294901760
    %5017 = vmatpush1.msra.mxu0 %v5016
    %5018 = vmatprep.subr.mxu0 0.0
    %v5019 = vand.u32 %v41, 4294901760
    %5020 = vmatpush1.msra.mxu0 %v5019
    %5021 = vmatprep.subr.mxu0 0.0
    %v5022 = vand.u32 %v40, 4294901760
    %5023 = vmatpush1.msra.mxu0 %v5022
    %5024 = vmatprep.subr.mxu0 0.0
    %v5025 = vand.u32 %v39, 4294901760
    %5026 = vmatpush1.msra.mxu0 %v5025
    %5027 = vmatprep.subr.mxu0 0.0
    %v5028 = vand.u32 %v38, 4294901760
    %5029 = vmatpush1.msra.mxu0 %v5028
    %5030 = vmatprep.subr.mxu0 0.0
    %v5031 = vand.u32 %v37, 4294901760
    %5032 = vmatpush1.msra.mxu0 %v5031
    %5033 = vmatprep.subr.mxu0 0.0
    %v5034 = vand.u32 %v36, 4294901760
    %5035 = vmatpush1.msra.mxu0 %v5034
    %5036 = vmatprep.subr.mxu0 0.0
    %v5037 = vand.u32 %v35, 4294901760
    %5038 = vmatpush1.msra.mxu0 %v5037
    %5039 = vmatprep.subr.mxu0 0.0
    %v5040 = vand.u32 %v34, 4294901760
    %5041 = vmatpush1.msra.mxu0 %v5040
    %5042 = vmatprep.subr.mxu0 0.0
    %v5043 = vand.u32 %v33, 4294901760
    %5044 = vmatpush1.msra.mxu0 %v5043
    %5045 = vmatprep.subr.mxu0 0.0
    %v5046 = vand.u32 %v32, 4294901760
    %5047 = vmatpush1.msra.mxu0 %v5046
    %5048 = vmatprep.subr.mxu0 0.0
    %v5049 = vand.u32 %v31, 4294901760
    %5050 = vmatpush1.msra.mxu0 %v5049
    %5051 = vmatprep.subr.mxu0 0.0
    %v5052 = vand.u32 %v30, 4294901760
    %5053 = vmatpush1.msra.mxu0 %v5052
    %5054 = vmatprep.subr.mxu0 0.0
    %5055 = vmatpush2.msra.mxu0 0.0
    %5056 = vmatprep.subr.mxu0 0.0
    %5057 = vmatpush2.msra.mxu0 0.0
    %5058 = vmatprep.subr.mxu0 0.0
    %5059 = vmatpush2.msra.mxu0 0.0
    %5060 = vmatprep.subr.mxu0 0.0
    %5061 = vmatpush2.msra.mxu0 0.0
    %5062 = vmatprep.subr.mxu0 0.0
    %5063 = vmatpush2.msra.mxu0 0.0
    %5064 = vmatprep.subr.mxu0 0.0
    %5065 = vmatpush2.msra.mxu0 0.0
    %5066 = vmatprep.subr.mxu0 0.0
    %5067 = vmatpush2.msra.mxu0 0.0
    %5068 = vmatprep.subr.mxu0 0.0
    %5069 = vmatpush2.msra.mxu0 0.0
    %5070 = vmatprep.subr.mxu0 0.0
    %5071 = vmatpush2.msra.mxu0 0.0
    %5072 = vmatprep.subr.mxu0 0.0
    %5073 = vmatpush2.msra.mxu0 0.0
    %5074 = vmatprep.subr.mxu0 0.0
    %5075 = vmatpush2.msra.mxu0 0.0
    %5076 = vmatprep.subr.mxu0 0.0
    %5077 = vmatpush2.msra.mxu0 0.0
    %5078 = vmatprep.subr.mxu0 0.0
    %5079 = vmatpush2.msra.mxu0 0.0
    %5080 = vmatprep.subr.mxu0 0.0
    %5081 = vmatpush2.msra.mxu0 0.0
    %5082 = vmatprep.subr.mxu0 0.0
    %5083 = vmatpush2.msra.mxu0 0.0
    %5084 = vmatprep.subr.mxu0 0.0
    %5085 = vmatpush2.msra.mxu0 0.0
    %5086 = vmatprep.mubr.f32.mxu0 0.0
    %v5087 = vand.u32 %v3958, 4294901760
    %5088 = vmatmul.mubr.f32.gmra.mxu0 %v5087
    %v5089 = vpop.f32.mrf.mxu0
    %v5090 = vadd.f32 %v5003, %v5089
    %v5091 = vpop.f32.mrf.mxu0
    %5092 = vdwg.mxu0
    %v5093 = vadd.f32 %v4449, %v5090
    %v5094 = vtanh.pop %v5093
    %s5095 = scalar_lea.vmem [#allocation2], 32
    %5096 = vst [vmem:[%s5095] sm:$0xff] %v5094
    %v5097 = vld [vmem:[%s0 + $0x5] sm:$0x1]
    %v5098 = vld [vmem:[%s0 + $0xd] sm:$0x1]
    %v5099 = vld [vmem:[%s0 + $0x15] sm:$0x1]
    %v5100 = vld [vmem:[%s0 + $0x1d] sm:$0x1]
    %v5101 = vld [vmem:[%s0 + $0x25] sm:$0x1]
    %v5102 = vld [vmem:[%s0 + $0x2d] sm:$0x1]
    %v5103 = vld [vmem:[%s0 + $0x35] sm:$0x1]
    %v5104 = vld [vmem:[%s0 + $0x3d] sm:$0x1]
    %v5113 = vrot.slane %v5098, 7
    %v5114 = vsel %vm69, %v5113, %v5097
    %v5115 = vrot.slane %v5099, 6
    %v5116 = vsel %vm72, %v5115, %v5114
    %v5117 = vrot.slane %v5100, 5
    %v5118 = vsel %vm75, %v5117, %v5116
    %v5119 = vrot.slane %v5101, 4
    %v5120 = vsel %vm78, %v5119, %v5118
    %v5121 = vrot.slane %v5102, 3
    %v5122 = vsel %vm81, %v5121, %v5120
    %v5123 = vrot.slane %v5103, 2
    %v5124 = vsel %vm84, %v5123, %v5122
    %v5125 = vrot.slane %v5104, 1
    %v5126 = vsel %vm87, %v5125, %v5124
    %v5127 = vsel %vm89, %v5126, 0
    %5129 = vmatprep.subr.mxu0 0.0
    %5130 = vmatpush1.msra.mxu0 0.0
    %5131 = vmatprep.subr.mxu0 0.0
    %5132 = vmatpush1.msra.mxu0 0.0
    %5133 = vmatprep.subr.mxu0 0.0
    %5134 = vmatpush1.msra.mxu0 0.0
    %5135 = vmatprep.subr.mxu0 0.0
    %5136 = vmatpush1.msra.mxu0 0.0
    %5137 = vmatprep.subr.mxu0 0.0
    %5138 = vmatpush1.msra.mxu0 0.0
    %5139 = vmatprep.subr.mxu0 0.0
    %5140 = vmatpush1.msra.mxu0 0.0
    %5141 = vmatprep.subr.mxu0 0.0
    %5142 = vmatpush1.msra.mxu0 0.0
    %5143 = vmatprep.subr.mxu0 0.0
    %5144 = vmatpush1.msra.mxu0 0.0
    %5145 = vmatprep.subr.mxu0 0.0
    %5146 = vmatpush1.msra.mxu0 0.0
    %5147 = vmatprep.subr.mxu0 0.0
    %5148 = vmatpush1.msra.mxu0 0.0
    %5149 = vmatprep.subr.mxu0 0.0
    %5150 = vmatpush1.msra.mxu0 0.0
    %5151 = vmatprep.subr.mxu0 0.0
    %5152 = vmatpush1.msra.mxu0 0.0
    %5153 = vmatprep.subr.mxu0 0.0
    %5154 = vmatpush1.msra.mxu0 0.0
    %5155 = vmatprep.subr.mxu0 0.0
    %5156 = vmatpush1.msra.mxu0 0.0
    %5157 = vmatprep.subr.mxu0 0.0
    %v5158 = vand.u32 %v28, 4294901760
    %5159 = vmatpush1.msra.mxu0 %v5158
    %5160 = vmatprep.subr.mxu0 0.0
    %v5161 = vand.u32 %v27, 4294901760
    %5162 = vmatpush1.msra.mxu0 %v5161
    %5163 = vmatprep.subr.mxu0 0.0
    %5164 = vmatpush2.msra.mxu0 0.0
    %5165 = vmatprep.subr.mxu0 0.0
    %5166 = vmatpush2.msra.mxu0 0.0
    %5167 = vmatprep.subr.mxu0 0.0
    %5168 = vmatpush2.msra.mxu0 0.0
    %5169 = vmatprep.subr.mxu0 0.0
    %5170 = vmatpush2.msra.mxu0 0.0
    %5171 = vmatprep.subr.mxu0 0.0
    %5172 = vmatpush2.msra.mxu0 0.0
    %5173 = vmatprep.subr.mxu0 0.0
    %5174 = vmatpush2.msra.mxu0 0.0
    %5175 = vmatprep.subr.mxu0 0.0
    %5176 = vmatpush2.msra.mxu0 0.0
    %5177 = vmatprep.subr.mxu0 0.0
    %5178 = vmatpush2.msra.mxu0 0.0
    %5179 = vmatprep.subr.mxu0 0.0
    %5180 = vmatpush2.msra.mxu0 0.0
    %5181 = vmatprep.subr.mxu0 0.0
    %5182 = vmatpush2.msra.mxu0 0.0
    %5183 = vmatprep.subr.mxu0 0.0
    %5184 = vmatpush2.msra.mxu0 0.0
    %5185 = vmatprep.subr.mxu0 0.0
    %5186 = vmatpush2.msra.mxu0 0.0
    %5187 = vmatprep.subr.mxu0 0.0
    %5188 = vmatpush2.msra.mxu0 0.0
    %5189 = vmatprep.subr.mxu0 0.0
    %5190 = vmatpush2.msra.mxu0 0.0
    %5191 = vmatprep.subr.mxu0 0.0
    %5192 = vmatpush2.msra.mxu0 0.0
    %5193 = vmatprep.subr.mxu0 0.0
    %5194 = vmatpush2.msra.mxu0 0.0
    %5195 = vmatprep.mubr.f32.mxu0 0.0
    %v5196 = vand.u32 %v5127, 4294901760
    %v5197 = vsub.f32 %v5127, %v5196
    %v5198 = vand.u32 %v5197, 4294901760
    %v5199 = vsub.f32 %v5197, %v5198
    %v5200 = vand.u32 %v5199, 4294901760
    %5201 = vmatmul.mubr.f32.gmra.mxu0 %v5200
    %v5202 = vpop.f32.mrf.mxu0
    %v5203 = vadd.f32 %v58, %v5202
    %v5204 = vpop.f32.mrf.mxu0
    %5205 = vdwg.mxu0
    %5206 = vmatprep.subr.mxu0 0.0
    %5207 = vmatpush1.msra.mxu0 0.0
    %5208 = vmatprep.subr.mxu0 0.0
    %5209 = vmatpush1.msra.mxu0 0.0
    %5210 = vmatprep.subr.mxu0 0.0
    %5211 = vmatpush1.msra.mxu0 0.0
    %5212 = vmatprep.subr.mxu0 0.0
    %5213 = vmatpush1.msra.mxu0 0.0
    %5214 = vmatprep.subr.mxu0 0.0
    %5215 = vmatpush1.msra.mxu0 0.0
    %5216 = vmatprep.subr.mxu0 0.0
    %5217 = vmatpush1.msra.mxu0 0.0
    %5218 = vmatprep.subr.mxu0 0.0
    %5219 = vmatpush1.msra.mxu0 0.0
    %5220 = vmatprep.subr.mxu0 0.0
    %5221 = vmatpush1.msra.mxu0 0.0
    %5222 = vmatprep.subr.mxu0 0.0
    %5223 = vmatpush1.msra.mxu0 0.0
    %5224 = vmatprep.subr.mxu0 0.0
    %5225 = vmatpush1.msra.mxu0 0.0
    %5226 = vmatprep.subr.mxu0 0.0
    %5227 = vmatpush1.msra.mxu0 0.0
    %5228 = vmatprep.subr.mxu0 0.0
    %5229 = vmatpush1.msra.mxu0 0.0
    %5230 = vmatprep.subr.mxu0 0.0
    %5231 = vmatpush1.msra.mxu0 0.0
    %5232 = vmatprep.subr.mxu0 0.0
    %5233 = vmatpush1.msra.mxu0 0.0
    %5234 = vmatprep.subr.mxu0 0.0
    %v5235 = vand.u32 %v28, 4294901760
    %v5236 = vsub.f32 %v28, %v5235
    %v5237 = vand.u32 %v5236, 4294901760
    %v5238 = vsub.f32 %v5236, %v5237
    %v5239 = vand.u32 %v5238, 4294901760
    %5240 = vmatpush1.msra.mxu0 %v5239
    %5241 = vmatprep.subr.mxu0 0.0
    %v5242 = vand.u32 %v27, 4294901760
    %v5243 = vsub.f32 %v27, %v5242
    %v5244 = vand.u32 %v5243, 4294901760
    %v5245 = vsub.f32 %v5243, %v5244
    %v5246 = vand.u32 %v5245, 4294901760
    %5247 = vmatpush1.msra.mxu0 %v5246
    %5248 = vmatprep.subr.mxu0 0.0
    %5249 = vmatpush2.msra.mxu0 0.0
    %5250 = vmatprep.subr.mxu0 0.0
    %5251 = vmatpush2.msra.mxu0 0.0
    %5252 = vmatprep.subr.mxu0 0.0
    %5253 = vmatpush2.msra.mxu0 0.0
    %5254 = vmatprep.subr.mxu0 0.0
    %5255 = vmatpush2.msra.mxu0 0.0
    %5256 = vmatprep.subr.mxu0 0.0
    %5257 = vmatpush2.msra.mxu0 0.0
    %5258 = vmatprep.subr.mxu0 0.0
    %5259 = vmatpush2.msra.mxu0 0.0
    %5260 = vmatprep.subr.mxu0 0.0
    %5261 = vmatpush2.msra.mxu0 0.0
    %5262 = vmatprep.subr.mxu0 0.0
    %5263 = vmatpush2.msra.mxu0 0.0
    %5264 = vmatprep.subr.mxu0 0.0
    %5265 = vmatpush2.msra.mxu0 0.0
    %5266 = vmatprep.subr.mxu0 0.0
    %5267 = vmatpush2.msra.mxu0 0.0
    %5268 = vmatprep.subr.mxu0 0.0
    %5269 = vmatpush2.msra.mxu0 0.0
    %5270 = vmatprep.subr.mxu0 0.0
    %5271 = vmatpush2.msra.mxu0 0.0
    %5272 = vmatprep.subr.mxu0 0.0
    %5273 = vmatpush2.msra.mxu0 0.0
    %5274 = vmatprep.subr.mxu0 0.0
    %5275 = vmatpush2.msra.mxu0 0.0
    %5276 = vmatprep.subr.mxu0 0.0
    %5277 = vmatpush2.msra.mxu0 0.0
    %5278 = vmatprep.subr.mxu0 0.0
    %5279 = vmatpush2.msra.mxu0 0.0
    %5280 = vmatprep.mubr.f32.mxu0 0.0
    %v5281 = vand.u32 %v5127, 4294901760
    %5282 = vmatmul.mubr.f32.gmra.mxu0 %v5281
    %v5283 = vpop.f32.mrf.mxu0
    %v5284 = vadd.f32 %v5203, %v5283
    %v5285 = vpop.f32.mrf.mxu0
    %5286 = vdwg.mxu0
    %5287 = vmatprep.subr.mxu0 0.0
    %5288 = vmatpush1.msra.mxu0 0.0
    %5289 = vmatprep.subr.mxu0 0.0
    %5290 = vmatpush1.msra.mxu0 0.0
    %5291 = vmatprep.subr.mxu0 0.0
    %5292 = vmatpush1.msra.mxu0 0.0
    %5293 = vmatprep.subr.mxu0 0.0
    %5294 = vmatpush1.msra.mxu0 0.0
    %5295 = vmatprep.subr.mxu0 0.0
    %5296 = vmatpush1.msra.mxu0 0.0
    %5297 = vmatprep.subr.mxu0 0.0
    %5298 = vmatpush1.msra.mxu0 0.0
    %5299 = vmatprep.subr.mxu0 0.0
    %5300 = vmatpush1.msra.mxu0 0.0
    %5301 = vmatprep.subr.mxu0 0.0
    %5302 = vmatpush1.msra.mxu0 0.0
    %5303 = vmatprep.subr.mxu0 0.0
    %5304 = vmatpush1.msra.mxu0 0.0
    %5305 = vmatprep.subr.mxu0 0.0
    %5306 = vmatpush1.msra.mxu0 0.0
    %5307 = vmatprep.subr.mxu0 0.0
    %5308 = vmatpush1.msra.mxu0 0.0
    %5309 = vmatprep.subr.mxu0 0.0
    %5310 = vmatpush1.msra.mxu0 0.0
    %5311 = vmatprep.subr.mxu0 0.0
    %5312 = vmatpush1.msra.mxu0 0.0
    %5313 = vmatprep.subr.mxu0 0.0
    %5314 = vmatpush1.msra.mxu0 0.0
    %5315 = vmatprep.subr.mxu0 0.0
    %v5316 = vand.u32 %v28, 4294901760
    %v5317 = vsub.f32 %v28, %v5316
    %5318 = vmatpush1.msra.mxu0 %v5317
    %5319 = vmatprep.subr.mxu0 0.0
    %v5320 = vand.u32 %v27, 4294901760
    %v5321 = vsub.f32 %v27, %v5320
    %5322 = vmatpush1.msra.mxu0 %v5321
    %5323 = vmatprep.subr.mxu0 0.0
    %5324 = vmatpush2.msra.mxu0 0.0
    %5325 = vmatprep.subr.mxu0 0.0
    %5326 = vmatpush2.msra.mxu0 0.0
    %5327 = vmatprep.subr.mxu0 0.0
    %5328 = vmatpush2.msra.mxu0 0.0
    %5329 = vmatprep.subr.mxu0 0.0
    %5330 = vmatpush2.msra.mxu0 0.0
    %5331 = vmatprep.subr.mxu0 0.0
    %5332 = vmatpush2.msra.mxu0 0.0
    %5333 = vmatprep.subr.mxu0 0.0
    %5334 = vmatpush2.msra.mxu0 0.0
    %5335 = vmatprep.subr.mxu0 0.0
    %5336 = vmatpush2.msra.mxu0 0.0
    %5337 = vmatprep.subr.mxu0 0.0
    %5338 = vmatpush2.msra.mxu0 0.0
    %5339 = vmatprep.subr.mxu0 0.0
    %5340 = vmatpush2.msra.mxu0 0.0
    %5341 = vmatprep.subr.mxu0 0.0
    %5342 = vmatpush2.msra.mxu0 0.0
    %5343 = vmatprep.subr.mxu0 0.0
    %5344 = vmatpush2.msra.mxu0 0.0
    %5345 = vmatprep.subr.mxu0 0.0
    %5346 = vmatpush2.msra.mxu0 0.0
    %5347 = vmatprep.subr.mxu0 0.0
    %5348 = vmatpush2.msra.mxu0 0.0
    %5349 = vmatprep.subr.mxu0 0.0
    %5350 = vmatpush2.msra.mxu0 0.0
    %5351 = vmatprep.subr.mxu0 0.0
    %5352 = vmatpush2.msra.mxu0 0.0
    %5353 = vmatprep.subr.mxu0 0.0
    %5354 = vmatpush2.msra.mxu0 0.0
    %5355 = vmatprep.mubr.f32.mxu0 0.0
    %v5356 = vand.u32 %v5127, 4294901760
    %v5357 = vsub.f32 %v5127, %v5356
    %5358 = vmatmul.mubr.f32.gmra.mxu0 %v5357
    %v5359 = vpop.f32.mrf.mxu0
    %v5360 = vadd.f32 %v5284, %v5359
    %v5361 = vpop.f32.mrf.mxu0
    %5362 = vdwg.mxu0
    %5363 = vmatprep.subr.mxu0 0.0
    %5364 = vmatpush1.msra.mxu0 0.0
    %5365 = vmatprep.subr.mxu0 0.0
    %5366 = vmatpush1.msra.mxu0 0.0
    %5367 = vmatprep.subr.mxu0 0.0
    %5368 = vmatpush1.msra.mxu0 0.0
    %5369 = vmatprep.subr.mxu0 0.0
    %5370 = vmatpush1.msra.mxu0 0.0
    %5371 = vmatprep.subr.mxu0 0.0
    %5372 = vmatpush1.msra.mxu0 0.0
    %5373 = vmatprep.subr.mxu0 0.0
    %5374 = vmatpush1.msra.mxu0 0.0
    %5375 = vmatprep.subr.mxu0 0.0
    %5376 = vmatpush1.msra.mxu0 0.0
    %5377 = vmatprep.subr.mxu0 0.0
    %5378 = vmatpush1.msra.mxu0 0.0
    %5379 = vmatprep.subr.mxu0 0.0
    %5380 = vmatpush1.msra.mxu0 0.0
    %5381 = vmatprep.subr.mxu0 0.0
    %5382 = vmatpush1.msra.mxu0 0.0
    %5383 = vmatprep.subr.mxu0 0.0
    %5384 = vmatpush1.msra.mxu0 0.0
    %5385 = vmatprep.subr.mxu0 0.0
    %5386 = vmatpush1.msra.mxu0 0.0
    %5387 = vmatprep.subr.mxu0 0.0
    %5388 = vmatpush1.msra.mxu0 0.0
    %5389 = vmatprep.subr.mxu0 0.0
    %5390 = vmatpush1.msra.mxu0 0.0
    %5391 = vmatprep.subr.mxu0 0.0
    %v5392 = vand.u32 %v28, 4294901760
    %5393 = vmatpush1.msra.mxu0 %v5392
    %5394 = vmatprep.subr.mxu0 0.0
    %v5395 = vand.u32 %v27, 4294901760
    %5396 = vmatpush1.msra.mxu0 %v5395
    %5397 = vmatprep.subr.mxu0 0.0
    %5398 = vmatpush2.msra.mxu0 0.0
    %5399 = vmatprep.subr.mxu0 0.0
    %5400 = vmatpush2.msra.mxu0 0.0
    %5401 = vmatprep.subr.mxu0 0.0
    %5402 = vmatpush2.msra.mxu0 0.0
    %5403 = vmatprep.subr.mxu0 0.0
    %5404 = vmatpush2.msra.mxu0 0.0
    %5405 = vmatprep.subr.mxu0 0.0
    %5406 = vmatpush2.msra.mxu0 0.0
    %5407 = vmatprep.subr.mxu0 0.0
    %5408 = vmatpush2.msra.mxu0 0.0
    %5409 = vmatprep.subr.mxu0 0.0
    %5410 = vmatpush2.msra.mxu0 0.0
    %5411 = vmatprep.subr.mxu0 0.0
    %5412 = vmatpush2.msra.mxu0 0.0
    %5413 = vmatprep.subr.mxu0 0.0
    %5414 = vmatpush2.msra.mxu0 0.0
    %5415 = vmatprep.subr.mxu0 0.0
    %5416 = vmatpush2.msra.mxu0 0.0
    %5417 = vmatprep.subr.mxu0 0.0
    %5418 = vmatpush2.msra.mxu0 0.0
    %5419 = vmatprep.subr.mxu0 0.0
    %5420 = vmatpush2.msra.mxu0 0.0
    %5421 = vmatprep.subr.mxu0 0.0
    %5422 = vmatpush2.msra.mxu0 0.0
    %5423 = vmatprep.subr.mxu0 0.0
    %5424 = vmatpush2.msra.mxu0 0.0
    %5425 = vmatprep.subr.mxu0 0.0
    %5426 = vmatpush2.msra.mxu0 0.0
    %5427 = vmatprep.subr.mxu0 0.0
    %5428 = vmatpush2.msra.mxu0 0.0
    %5429 = vmatprep.mubr.f32.mxu0 0.0
    %v5430 = vand.u32 %v5127, 4294901760
    %v5431 = vsub.f32 %v5127, %v5430
    %v5432 = vand.u32 %v5431, 4294901760
    %5433 = vmatmul.mubr.f32.gmra.mxu0 %v5432
    %v5434 = vpop.f32.mrf.mxu0
    %v5435 = vadd.f32 %v5360, %v5434
    %v5436 = vpop.f32.mrf.mxu0
    %5437 = vdwg.mxu0
    %5438 = vmatprep.subr.mxu0 0.0
    %5439 = vmatpush1.msra.mxu0 0.0
    %5440 = vmatprep.subr.mxu0 0.0
    %5441 = vmatpush1.msra.mxu0 0.0
    %5442 = vmatprep.subr.mxu0 0.0
    %5443 = vmatpush1.msra.mxu0 0.0
    %5444 = vmatprep.subr.mxu0 0.0
    %5445 = vmatpush1.msra.mxu0 0.0
    %5446 = vmatprep.subr.mxu0 0.0
    %5447 = vmatpush1.msra.mxu0 0.0
    %5448 = vmatprep.subr.mxu0 0.0
    %5449 = vmatpush1.msra.mxu0 0.0
    %5450 = vmatprep.subr.mxu0 0.0
    %5451 = vmatpush1.msra.mxu0 0.0
    %5452 = vmatprep.subr.mxu0 0.0
    %5453 = vmatpush1.msra.mxu0 0.0
    %5454 = vmatprep.subr.mxu0 0.0
    %5455 = vmatpush1.msra.mxu0 0.0
    %5456 = vmatprep.subr.mxu0 0.0
    %5457 = vmatpush1.msra.mxu0 0.0
    %5458 = vmatprep.subr.mxu0 0.0
    %5459 = vmatpush1.msra.mxu0 0.0
    %5460 = vmatprep.subr.mxu0 0.0
    %5461 = vmatpush1.msra.mxu0 0.0
    %5462 = vmatprep.subr.mxu0 0.0
    %5463 = vmatpush1.msra.mxu0 0.0
    %5464 = vmatprep.subr.mxu0 0.0
    %5465 = vmatpush1.msra.mxu0 0.0
    %5466 = vmatprep.subr.mxu0 0.0
    %v5467 = vand.u32 %v28, 4294901760
    %v5468 = vsub.f32 %v28, %v5467
    %v5469 = vand.u32 %v5468, 4294901760
    %5470 = vmatpush1.msra.mxu0 %v5469
    %5471 = vmatprep.subr.mxu0 0.0
    %v5472 = vand.u32 %v27, 4294901760
    %v5473 = vsub.f32 %v27, %v5472
    %v5474 = vand.u32 %v5473, 4294901760
    %5475 = vmatpush1.msra.mxu0 %v5474
    %5476 = vmatprep.subr.mxu0 0.0
    %5477 = vmatpush2.msra.mxu0 0.0
    %5478 = vmatprep.subr.mxu0 0.0
    %5479 = vmatpush2.msra.mxu0 0.0
    %5480 = vmatprep.subr.mxu0 0.0
    %5481 = vmatpush2.msra.mxu0 0.0
    %5482 = vmatprep.subr.mxu0 0.0
    %5483 = vmatpush2.msra.mxu0 0.0
    %5484 = vmatprep.subr.mxu0 0.0
    %5485 = vmatpush2.msra.mxu0 0.0
    %5486 = vmatprep.subr.mxu0 0.0
    %5487 = vmatpush2.msra.mxu0 0.0
    %5488 = vmatprep.subr.mxu0 0.0
    %5489 = vmatpush2.msra.mxu0 0.0
    %5490 = vmatprep.subr.mxu0 0.0
    %5491 = vmatpush2.msra.mxu0 0.0
    %5492 = vmatprep.subr.mxu0 0.0
    %5493 = vmatpush2.msra.mxu0 0.0
    %5494 = vmatprep.subr.mxu0 0.0
    %5495 = vmatpush2.msra.mxu0 0.0
    %5496 = vmatprep.subr.mxu0 0.0
    %5497 = vmatpush2.msra.mxu0 0.0
    %5498 = vmatprep.subr.mxu0 0.0
    %5499 = vmatpush2.msra.mxu0 0.0
    %5500 = vmatprep.subr.mxu0 0.0
    %5501 = vmatpush2.msra.mxu0 0.0
    %5502 = vmatprep.subr.mxu0 0.0
    %5503 = vmatpush2.msra.mxu0 0.0
    %5504 = vmatprep.subr.mxu0 0.0
    %5505 = vmatpush2.msra.mxu0 0.0
    %5506 = vmatprep.subr.mxu0 0.0
    %5507 = vmatpush2.msra.mxu0 0.0
    %5508 = vmatprep.mubr.f32.mxu0 0.0
    %v5509 = vand.u32 %v5127, 4294901760
    %5510 = vmatmul.mubr.f32.gmra.mxu0 %v5509
    %v5511 = vpop.f32.mrf.mxu0
    %v5512 = vadd.f32 %v5435, %v5511
    %v5513 = vpop.f32.mrf.mxu0
    %5514 = vdwg.mxu0
    %5515 = vmatprep.subr.mxu0 0.0
    %5516 = vmatpush1.msra.mxu0 0.0
    %5517 = vmatprep.subr.mxu0 0.0
    %5518 = vmatpush1.msra.mxu0 0.0
    %5519 = vmatprep.subr.mxu0 0.0
    %5520 = vmatpush1.msra.mxu0 0.0
    %5521 = vmatprep.subr.mxu0 0.0
    %5522 = vmatpush1.msra.mxu0 0.0
    %5523 = vmatprep.subr.mxu0 0.0
    %5524 = vmatpush1.msra.mxu0 0.0
    %5525 = vmatprep.subr.mxu0 0.0
    %5526 = vmatpush1.msra.mxu0 0.0
    %5527 = vmatprep.subr.mxu0 0.0
    %5528 = vmatpush1.msra.mxu0 0.0
    %5529 = vmatprep.subr.mxu0 0.0
    %5530 = vmatpush1.msra.mxu0 0.0
    %5531 = vmatprep.subr.mxu0 0.0
    %5532 = vmatpush1.msra.mxu0 0.0
    %5533 = vmatprep.subr.mxu0 0.0
    %5534 = vmatpush1.msra.mxu0 0.0
    %5535 = vmatprep.subr.mxu0 0.0
    %5536 = vmatpush1.msra.mxu0 0.0
    %5537 = vmatprep.subr.mxu0 0.0
    %5538 = vmatpush1.msra.mxu0 0.0
    %5539 = vmatprep.subr.mxu0 0.0
    %5540 = vmatpush1.msra.mxu0 0.0
    %5541 = vmatprep.subr.mxu0 0.0
    %5542 = vmatpush1.msra.mxu0 0.0
    %5543 = vmatprep.subr.mxu0 0.0
    %v5544 = vand.u32 %v28, 4294901760
    %5545 = vmatpush1.msra.mxu0 %v5544
    %5546 = vmatprep.subr.mxu0 0.0
    %v5547 = vand.u32 %v27, 4294901760
    %5548 = vmatpush1.msra.mxu0 %v5547
    %5549 = vmatprep.subr.mxu0 0.0
    %5550 = vmatpush2.msra.mxu0 0.0
    %5551 = vmatprep.subr.mxu0 0.0
    %5552 = vmatpush2.msra.mxu0 0.0
    %5553 = vmatprep.subr.mxu0 0.0
    %5554 = vmatpush2.msra.mxu0 0.0
    %5555 = vmatprep.subr.mxu0 0.0
    %5556 = vmatpush2.msra.mxu0 0.0
    %5557 = vmatprep.subr.mxu0 0.0
    %5558 = vmatpush2.msra.mxu0 0.0
    %5559 = vmatprep.subr.mxu0 0.0
    %5560 = vmatpush2.msra.mxu0 0.0
    %5561 = vmatprep.subr.mxu0 0.0
    %5562 = vmatpush2.msra.mxu0 0.0
    %5563 = vmatprep.subr.mxu0 0.0
    %5564 = vmatpush2.msra.mxu0 0.0
    %5565 = vmatprep.subr.mxu0 0.0
    %5566 = vmatpush2.msra.mxu0 0.0
    %5567 = vmatprep.subr.mxu0 0.0
    %5568 = vmatpush2.msra.mxu0 0.0
    %5569 = vmatprep.subr.mxu0 0.0
    %5570 = vmatpush2.msra.mxu0 0.0
    %5571 = vmatprep.subr.mxu0 0.0
    %5572 = vmatpush2.msra.mxu0 0.0
    %5573 = vmatprep.subr.mxu0 0.0
    %5574 = vmatpush2.msra.mxu0 0.0
    %5575 = vmatprep.subr.mxu0 0.0
    %5576 = vmatpush2.msra.mxu0 0.0
    %5577 = vmatprep.subr.mxu0 0.0
    %5578 = vmatpush2.msra.mxu0 0.0
    %5579 = vmatprep.subr.mxu0 0.0
    %5580 = vmatpush2.msra.mxu0 0.0
    %5581 = vmatprep.mubr.f32.mxu0 0.0
    %v5582 = vand.u32 %v5127, 4294901760
    %5583 = vmatmul.mubr.f32.gmra.mxu0 %v5582
    %v5584 = vpop.f32.mrf.mxu0
    %v5585 = vadd.f32 %v5512, %v5584
    %v5586 = vpop.f32.mrf.mxu0
    %5587 = vdwg.mxu0
    %5588 = vmatprep.subr.mxu0 0.0
    %v5589 = vand.u32 %v45, 4294901760
    %5590 = vmatpush1.msra.mxu0 %v5589
    %5591 = vmatprep.subr.mxu0 0.0
    %v5592 = vand.u32 %v44, 4294901760
    %5593 = vmatpush1.msra.mxu0 %v5592
    %5594 = vmatprep.subr.mxu0 0.0
    %v5595 = vand.u32 %v43, 4294901760
    %5596 = vmatpush1.msra.mxu0 %v5595
    %5597 = vmatprep.subr.mxu0 0.0
    %v5598 = vand.u32 %v42, 4294901760
    %5599 = vmatpush1.msra.mxu0 %v5598
    %5600 = vmatprep.subr.mxu0 0.0
    %v5601 = vand.u32 %v41, 4294901760
    %5602 = vmatpush1.msra.mxu0 %v5601
    %5603 = vmatprep.subr.mxu0 0.0
    %v5604 = vand.u32 %v40, 4294901760
    %5605 = vmatpush1.msra.mxu0 %v5604
    %5606 = vmatprep.subr.mxu0 0.0
    %v5607 = vand.u32 %v39, 4294901760
    %5608 = vmatpush1.msra.mxu0 %v5607
    %5609 = vmatprep.subr.mxu0 0.0
    %v5610 = vand.u32 %v38, 4294901760
    %5611 = vmatpush1.msra.mxu0 %v5610
    %5612 = vmatprep.subr.mxu0 0.0
    %v5613 = vand.u32 %v37, 4294901760
    %5614 = vmatpush1.msra.mxu0 %v5613
    %5615 = vmatprep.subr.mxu0 0.0
    %v5616 = vand.u32 %v36, 4294901760
    %5617 = vmatpush1.msra.mxu0 %v5616
    %5618 = vmatprep.subr.mxu0 0.0
    %v5619 = vand.u32 %v35, 4294901760
    %5620 = vmatpush1.msra.mxu0 %v5619
    %5621 = vmatprep.subr.mxu0 0.0
    %v5622 = vand.u32 %v34, 4294901760
    %5623 = vmatpush1.msra.mxu0 %v5622
    %5624 = vmatprep.subr.mxu0 0.0
    %v5625 = vand.u32 %v33, 4294901760
    %5626 = vmatpush1.msra.mxu0 %v5625
    %5627 = vmatprep.subr.mxu0 0.0
    %v5628 = vand.u32 %v32, 4294901760
    %5629 = vmatpush1.msra.mxu0 %v5628
    %5630 = vmatprep.subr.mxu0 0.0
    %v5631 = vand.u32 %v31, 4294901760
    %5632 = vmatpush1.msra.mxu0 %v5631
    %5633 = vmatprep.subr.mxu0 0.0
    %v5634 = vand.u32 %v30, 4294901760
    %5635 = vmatpush1.msra.mxu0 %v5634
    %5636 = vmatprep.subr.mxu0 0.0
    %5637 = vmatpush2.msra.mxu0 0.0
    %5638 = vmatprep.subr.mxu0 0.0
    %5639 = vmatpush2.msra.mxu0 0.0
    %5640 = vmatprep.subr.mxu0 0.0
    %5641 = vmatpush2.msra.mxu0 0.0
    %5642 = vmatprep.subr.mxu0 0.0
    %5643 = vmatpush2.msra.mxu0 0.0
    %5644 = vmatprep.subr.mxu0 0.0
    %5645 = vmatpush2.msra.mxu0 0.0
    %5646 = vmatprep.subr.mxu0 0.0
    %5647 = vmatpush2.msra.mxu0 0.0
    %5648 = vmatprep.subr.mxu0 0.0
    %5649 = vmatpush2.msra.mxu0 0.0
    %5650 = vmatprep.subr.mxu0 0.0
    %5651 = vmatpush2.msra.mxu0 0.0
    %5652 = vmatprep.subr.mxu0 0.0
    %5653 = vmatpush2.msra.mxu0 0.0
    %5654 = vmatprep.subr.mxu0 0.0
    %5655 = vmatpush2.msra.mxu0 0.0
    %5656 = vmatprep.subr.mxu0 0.0
    %5657 = vmatpush2.msra.mxu0 0.0
    %5658 = vmatprep.subr.mxu0 0.0
    %5659 = vmatpush2.msra.mxu0 0.0
    %5660 = vmatprep.subr.mxu0 0.0
    %5661 = vmatpush2.msra.mxu0 0.0
    %5662 = vmatprep.subr.mxu0 0.0
    %5663 = vmatpush2.msra.mxu0 0.0
    %5664 = vmatprep.subr.mxu0 0.0
    %5665 = vmatpush2.msra.mxu0 0.0
    %5666 = vmatprep.subr.mxu0 0.0
    %5667 = vmatpush2.msra.mxu0 0.0
    %5668 = vmatprep.mubr.f32.mxu0 0.0
    %v5669 = vand.u32 %v5094, 4294901760
    %v5670 = vsub.f32 %v5094, %v5669
    %v5671 = vand.u32 %v5670, 4294901760
    %v5672 = vsub.f32 %v5670, %v5671
    %v5673 = vand.u32 %v5672, 4294901760
    %5674 = vmatmul.mubr.f32.gmra.mxu0 %v5673
    %v5675 = vpop.f32.mrf.mxu0
    %v5676 = vadd.f32 0.0, %v5675
    %v5677 = vpop.f32.mrf.mxu0
    %5678 = vdwg.mxu0
    %5679 = vmatprep.subr.mxu0 0.0
    %v5680 = vand.u32 %v45, 4294901760
    %v5681 = vsub.f32 %v45, %v5680
    %v5682 = vand.u32 %v5681, 4294901760
    %v5683 = vsub.f32 %v5681, %v5682
    %v5684 = vand.u32 %v5683, 4294901760
    %5685 = vmatpush1.msra.mxu0 %v5684
    %5686 = vmatprep.subr.mxu0 0.0
    %v5687 = vand.u32 %v44, 4294901760
    %v5688 = vsub.f32 %v44, %v5687
    %v5689 = vand.u32 %v5688, 4294901760
    %v5690 = vsub.f32 %v5688, %v5689
    %v5691 = vand.u32 %v5690, 4294901760
    %5692 = vmatpush1.msra.mxu0 %v5691
    %5693 = vmatprep.subr.mxu0 0.0
    %v5694 = vand.u32 %v43, 4294901760
    %v5695 = vsub.f32 %v43, %v5694
    %v5696 = vand.u32 %v5695, 4294901760
    %v5697 = vsub.f32 %v5695, %v5696
    %v5698 = vand.u32 %v5697, 4294901760
    %5699 = vmatpush1.msra.mxu0 %v5698
    %5700 = vmatprep.subr.mxu0 0.0
    %v5701 = vand.u32 %v42, 4294901760
    %v5702 = vsub.f32 %v42, %v5701
    %v5703 = vand.u32 %v5702, 4294901760
    %v5704 = vsub.f32 %v5702, %v5703
    %v5705 = vand.u32 %v5704, 4294901760
    %5706 = vmatpush1.msra.mxu0 %v5705
    %5707 = vmatprep.subr.mxu0 0.0
    %v5708 = vand.u32 %v41, 4294901760
    %v5709 = vsub.f32 %v41, %v5708
    %v5710 = vand.u32 %v5709, 4294901760
    %v5711 = vsub.f32 %v5709, %v5710
    %v5712 = vand.u32 %v5711, 4294901760
    %5713 = vmatpush1.msra.mxu0 %v5712
    %5714 = vmatprep.subr.mxu0 0.0
    %v5715 = vand.u32 %v40, 4294901760
    %v5716 = vsub.f32 %v40, %v5715
    %v5717 = vand.u32 %v5716, 4294901760
    %v5718 = vsub.f32 %v5716, %v5717
    %v5719 = vand.u32 %v5718, 4294901760
    %5720 = vmatpush1.msra.mxu0 %v5719
    %5721 = vmatprep.subr.mxu0 0.0
    %v5722 = vand.u32 %v39, 4294901760
    %v5723 = vsub.f32 %v39, %v5722
    %v5724 = vand.u32 %v5723, 4294901760
    %v5725 = vsub.f32 %v5723, %v5724
    %v5726 = vand.u32 %v5725, 4294901760
    %5727 = vmatpush1.msra.mxu0 %v5726
    %5728 = vmatprep.subr.mxu0 0.0
    %v5729 = vand.u32 %v38, 4294901760
    %v5730 = vsub.f32 %v38, %v5729
    %v5731 = vand.u32 %v5730, 4294901760
    %v5732 = vsub.f32 %v5730, %v5731
    %v5733 = vand.u32 %v5732, 4294901760
    %5734 = vmatpush1.msra.mxu0 %v5733
    %5735 = vmatprep.subr.mxu0 0.0
    %v5736 = vand.u32 %v37, 4294901760
    %v5737 = vsub.f32 %v37, %v5736
    %v5738 = vand.u32 %v5737, 4294901760
    %v5739 = vsub.f32 %v5737, %v5738
    %v5740 = vand.u32 %v5739, 4294901760
    %5741 = vmatpush1.msra.mxu0 %v5740
    %5742 = vmatprep.subr.mxu0 0.0
    %v5743 = vand.u32 %v36, 4294901760
    %v5744 = vsub.f32 %v36, %v5743
    %v5745 = vand.u32 %v5744, 4294901760
    %v5746 = vsub.f32 %v5744, %v5745
    %v5747 = vand.u32 %v5746, 4294901760
    %5748 = vmatpush1.msra.mxu0 %v5747
    %5749 = vmatprep.subr.mxu0 0.0
    %v5750 = vand.u32 %v35, 4294901760
    %v5751 = vsub.f32 %v35, %v5750
    %v5752 = vand.u32 %v5751, 4294901760
    %v5753 = vsub.f32 %v5751, %v5752
    %v5754 = vand.u32 %v5753, 4294901760
    %5755 = vmatpush1.msra.mxu0 %v5754
    %5756 = vmatprep.subr.mxu0 0.0
    %v5757 = vand.u32 %v34, 4294901760
    %v5758 = vsub.f32 %v34, %v5757
    %v5759 = vand.u32 %v5758, 4294901760
    %v5760 = vsub.f32 %v5758, %v5759
    %v5761 = vand.u32 %v5760, 4294901760
    %5762 = vmatpush1.msra.mxu0 %v5761
    %5763 = vmatprep.subr.mxu0 0.0
    %v5764 = vand.u32 %v33, 4294901760
    %v5765 = vsub.f32 %v33, %v5764
    %v5766 = vand.u32 %v5765, 4294901760
    %v5767 = vsub.f32 %v5765, %v5766
    %v5768 = vand.u32 %v5767, 4294901760
    %5769 = vmatpush1.msra.mxu0 %v5768
    %5770 = vmatprep.subr.mxu0 0.0
    %v5771 = vand.u32 %v32, 4294901760
    %v5772 = vsub.f32 %v32, %v5771
    %v5773 = vand.u32 %v5772, 4294901760
    %v5774 = vsub.f32 %v5772, %v5773
    %v5775 = vand.u32 %v5774, 4294901760
    %5776 = vmatpush1.msra.mxu0 %v5775
    %5777 = vmatprep.subr.mxu0 0.0
    %v5778 = vand.u32 %v31, 4294901760
    %v5779 = vsub.f32 %v31, %v5778
    %v5780 = vand.u32 %v5779, 4294901760
    %v5781 = vsub.f32 %v5779, %v5780
    %v5782 = vand.u32 %v5781, 4294901760
    %5783 = vmatpush1.msra.mxu0 %v5782
    %5784 = vmatprep.subr.mxu0 0.0
    %v5785 = vand.u32 %v30, 4294901760
    %v5786 = vsub.f32 %v30, %v5785
    %v5787 = vand.u32 %v5786, 4294901760
    %v5788 = vsub.f32 %v5786, %v5787
    %v5789 = vand.u32 %v5788, 4294901760
    %5790 = vmatpush1.msra.mxu0 %v5789
    %5791 = vmatprep.subr.mxu0 0.0
    %5792 = vmatpush2.msra.mxu0 0.0
    %5793 = vmatprep.subr.mxu0 0.0
    %5794 = vmatpush2.msra.mxu0 0.0
    %5795 = vmatprep.subr.mxu0 0.0
    %5796 = vmatpush2.msra.mxu0 0.0
    %5797 = vmatprep.subr.mxu0 0.0
    %5798 = vmatpush2.msra.mxu0 0.0
    %5799 = vmatprep.subr.mxu0 0.0
    %5800 = vmatpush2.msra.mxu0 0.0
    %5801 = vmatprep.subr.mxu0 0.0
    %5802 = vmatpush2.msra.mxu0 0.0
    %5803 = vmatprep.subr.mxu0 0.0
    %5804 = vmatpush2.msra.mxu0 0.0
    %5805 = vmatprep.subr.mxu0 0.0
    %5806 = vmatpush2.msra.mxu0 0.0
    %5807 = vmatprep.subr.mxu0 0.0
    %5808 = vmatpush2.msra.mxu0 0.0
    %5809 = vmatprep.subr.mxu0 0.0
    %5810 = vmatpush2.msra.mxu0 0.0
    %5811 = vmatprep.subr.mxu0 0.0
    %5812 = vmatpush2.msra.mxu0 0.0
    %5813 = vmatprep.subr.mxu0 0.0
    %5814 = vmatpush2.msra.mxu0 0.0
    %5815 = vmatprep.subr.mxu0 0.0
    %5816 = vmatpush2.msra.mxu0 0.0
    %5817 = vmatprep.subr.mxu0 0.0
    %5818 = vmatpush2.msra.mxu0 0.0
    %5819 = vmatprep.subr.mxu0 0.0
    %5820 = vmatpush2.msra.mxu0 0.0
    %5821 = vmatprep.subr.mxu0 0.0
    %5822 = vmatpush2.msra.mxu0 0.0
    %5823 = vmatprep.mubr.f32.mxu0 0.0
    %v5824 = vand.u32 %v5094, 4294901760
    %5825 = vmatmul.mubr.f32.gmra.mxu0 %v5824
    %v5826 = vpop.f32.mrf.mxu0
    %v5827 = vadd.f32 %v5676, %v5826
    %v5828 = vpop.f32.mrf.mxu0
    %5829 = vdwg.mxu0
    %5830 = vmatprep.subr.mxu0 0.0
    %v5831 = vand.u32 %v45, 4294901760
    %v5832 = vsub.f32 %v45, %v5831
    %5833 = vmatpush1.msra.mxu0 %v5832
    %5834 = vmatprep.subr.mxu0 0.0
    %v5835 = vand.u32 %v44, 4294901760
    %v5836 = vsub.f32 %v44, %v5835
    %5837 = vmatpush1.msra.mxu0 %v5836
    %5838 = vmatprep.subr.mxu0 0.0
    %v5839 = vand.u32 %v43, 4294901760
    %v5840 = vsub.f32 %v43, %v5839
    %5841 = vmatpush1.msra.mxu0 %v5840
    %5842 = vmatprep.subr.mxu0 0.0
    %v5843 = vand.u32 %v42, 4294901760
    %v5844 = vsub.f32 %v42, %v5843
    %5845 = vmatpush1.msra.mxu0 %v5844
    %5846 = vmatprep.subr.mxu0 0.0
    %v5847 = vand.u32 %v41, 4294901760
    %v5848 = vsub.f32 %v41, %v5847
    %5849 = vmatpush1.msra.mxu0 %v5848
    %5850 = vmatprep.subr.mxu0 0.0
    %v5851 = vand.u32 %v40, 4294901760
    %v5852 = vsub.f32 %v40, %v5851
    %5853 = vmatpush1.msra.mxu0 %v5852
    %5854 = vmatprep.subr.mxu0 0.0
    %v5855 = vand.u32 %v39, 4294901760
    %v5856 = vsub.f32 %v39, %v5855
    %5857 = vmatpush1.msra.mxu0 %v5856
    %5858 = vmatprep.subr.mxu0 0.0
    %v5859 = vand.u32 %v38, 4294901760
    %v5860 = vsub.f32 %v38, %v5859
    %5861 = vmatpush1.msra.mxu0 %v5860
    %5862 = vmatprep.subr.mxu0 0.0
    %v5863 = vand.u32 %v37, 4294901760
    %v5864 = vsub.f32 %v37, %v5863
    %5865 = vmatpush1.msra.mxu0 %v5864
    %5866 = vmatprep.subr.mxu0 0.0
    %v5867 = vand.u32 %v36, 4294901760
    %v5868 = vsub.f32 %v36, %v5867
    %5869 = vmatpush1.msra.mxu0 %v5868
    %5870 = vmatprep.subr.mxu0 0.0
    %v5871 = vand.u32 %v35, 4294901760
    %v5872 = vsub.f32 %v35, %v5871
    %5873 = vmatpush1.msra.mxu0 %v5872
    %5874 = vmatprep.subr.mxu0 0.0
    %v5875 = vand.u32 %v34, 4294901760
    %v5876 = vsub.f32 %v34, %v5875
    %5877 = vmatpush1.msra.mxu0 %v5876
    %5878 = vmatprep.subr.mxu0 0.0
    %v5879 = vand.u32 %v33, 4294901760
    %v5880 = vsub.f32 %v33, %v5879
    %5881 = vmatpush1.msra.mxu0 %v5880
    %5882 = vmatprep.subr.mxu0 0.0
    %v5883 = vand.u32 %v32, 4294901760
    %v5884 = vsub.f32 %v32, %v5883
    %5885 = vmatpush1.msra.mxu0 %v5884
    %5886 = vmatprep.subr.mxu0 0.0
    %v5887 = vand.u32 %v31, 4294901760
    %v5888 = vsub.f32 %v31, %v5887
    %5889 = vmatpush1.msra.mxu0 %v5888
    %5890 = vmatprep.subr.mxu0 0.0
    %v5891 = vand.u32 %v30, 4294901760
    %v5892 = vsub.f32 %v30, %v5891
    %5893 = vmatpush1.msra.mxu0 %v5892
    %5894 = vmatprep.subr.mxu0 0.0
    %5895 = vmatpush2.msra.mxu0 0.0
    %5896 = vmatprep.subr.mxu0 0.0
    %5897 = vmatpush2.msra.mxu0 0.0
    %5898 = vmatprep.subr.mxu0 0.0
    %5899 = vmatpush2.msra.mxu0 0.0
    %5900 = vmatprep.subr.mxu0 0.0
    %5901 = vmatpush2.msra.mxu0 0.0
    %5902 = vmatprep.subr.mxu0 0.0
    %5903 = vmatpush2.msra.mxu0 0.0
    %5904 = vmatprep.subr.mxu0 0.0
    %5905 = vmatpush2.msra.mxu0 0.0
    %5906 = vmatprep.subr.mxu0 0.0
    %5907 = vmatpush2.msra.mxu0 0.0
    %5908 = vmatprep.subr.mxu0 0.0
    %5909 = vmatpush2.msra.mxu0 0.0
    %5910 = vmatprep.subr.mxu0 0.0
    %5911 = vmatpush2.msra.mxu0 0.0
    %5912 = vmatprep.subr.mxu0 0.0
    %5913 = vmatpush2.msra.mxu0 0.0
    %5914 = vmatprep.subr.mxu0 0.0
    %5915 = vmatpush2.msra.mxu0 0.0
    %5916 = vmatprep.subr.mxu0 0.0
    %5917 = vmatpush2.msra.mxu0 0.0
    %5918 = vmatprep.subr.mxu0 0.0
    %5919 = vmatpush2.msra.mxu0 0.0
    %5920 = vmatprep.subr.mxu0 0.0
    %5921 = vmatpush2.msra.mxu0 0.0
    %5922 = vmatprep.subr.mxu0 0.0
    %5923 = vmatpush2.msra.mxu0 0.0
    %5924 = vmatprep.subr.mxu0 0.0
    %5925 = vmatpush2.msra.mxu0 0.0
    %5926 = vmatprep.mubr.f32.mxu0 0.0
    %v5927 = vand.u32 %v5094, 4294901760
    %v5928 = vsub.f32 %v5094, %v5927
    %5929 = vmatmul.mubr.f32.gmra.mxu0 %v5928
    %v5930 = vpop.f32.mrf.mxu0
    %v5931 = vadd.f32 %v5827, %v5930
    %v5932 = vpop.f32.mrf.mxu0
    %5933 = vdwg.mxu0
    %5934 = vmatprep.subr.mxu0 0.0
    %v5935 = vand.u32 %v45, 4294901760
    %5936 = vmatpush1.msra.mxu0 %v5935
    %5937 = vmatprep.subr.mxu0 0.0
    %v5938 = vand.u32 %v44, 4294901760
    %5939 = vmatpush1.msra.mxu0 %v5938
    %5940 = vmatprep.subr.mxu0 0.0
    %v5941 = vand.u32 %v43, 4294901760
    %5942 = vmatpush1.msra.mxu0 %v5941
    %5943 = vmatprep.subr.mxu0 0.0
    %v5944 = vand.u32 %v42, 4294901760
    %5945 = vmatpush1.msra.mxu0 %v5944
    %5946 = vmatprep.subr.mxu0 0.0
    %v5947 = vand.u32 %v41, 4294901760
    %5948 = vmatpush1.msra.mxu0 %v5947
    %5949 = vmatprep.subr.mxu0 0.0
    %v5950 = vand.u32 %v40, 4294901760
    %5951 = vmatpush1.msra.mxu0 %v5950
    %5952 = vmatprep.subr.mxu0 0.0
    %v5953 = vand.u32 %v39, 4294901760
    %5954 = vmatpush1.msra.mxu0 %v5953
    %5955 = vmatprep.subr.mxu0 0.0
    %v5956 = vand.u32 %v38, 4294901760
    %5957 = vmatpush1.msra.mxu0 %v5956
    %5958 = vmatprep.subr.mxu0 0.0
    %v5959 = vand.u32 %v37, 4294901760
    %5960 = vmatpush1.msra.mxu0 %v5959
    %5961 = vmatprep.subr.mxu0 0.0
    %v5962 = vand.u32 %v36, 4294901760
    %5963 = vmatpush1.msra.mxu0 %v5962
    %5964 = vmatprep.subr.mxu0 0.0
    %v5965 = vand.u32 %v35, 4294901760
    %5966 = vmatpush1.msra.mxu0 %v5965
    %5967 = vmatprep.subr.mxu0 0.0
    %v5968 = vand.u32 %v34, 4294901760
    %5969 = vmatpush1.msra.mxu0 %v5968
    %5970 = vmatprep.subr.mxu0 0.0
    %v5971 = vand.u32 %v33, 4294901760
    %5972 = vmatpush1.msra.mxu0 %v5971
    %5973 = vmatprep.subr.mxu0 0.0
    %v5974 = vand.u32 %v32, 4294901760
    %5975 = vmatpush1.msra.mxu0 %v5974
    %5976 = vmatprep.subr.mxu0 0.0
    %v5977 = vand.u32 %v31, 4294901760
    %5978 = vmatpush1.msra.mxu0 %v5977
    %5979 = vmatprep.subr.mxu0 0.0
    %v5980 = vand.u32 %v30, 4294901760
    %5981 = vmatpush1.msra.mxu0 %v5980
    %5982 = vmatprep.subr.mxu0 0.0
    %5983 = vmatpush2.msra.mxu0 0.0
    %5984 = vmatprep.subr.mxu0 0.0
    %5985 = vmatpush2.msra.mxu0 0.0
    %5986 = vmatprep.subr.mxu0 0.0
    %5987 = vmatpush2.msra.mxu0 0.0
    %5988 = vmatprep.subr.mxu0 0.0
    %5989 = vmatpush2.msra.mxu0 0.0
    %5990 = vmatprep.subr.mxu0 0.0
    %5991 = vmatpush2.msra.mxu0 0.0
    %5992 = vmatprep.subr.mxu0 0.0
    %5993 = vmatpush2.msra.mxu0 0.0
    %5994 = vmatprep.subr.mxu0 0.0
    %5995 = vmatpush2.msra.mxu0 0.0
    %5996 = vmatprep.subr.mxu0 0.0
    %5997 = vmatpush2.msra.mxu0 0.0
    %5998 = vmatprep.subr.mxu0 0.0
    %5999 = vmatpush2.msra.mxu0 0.0
    %6000 = vmatprep.subr.mxu0 0.0
    %6001 = vmatpush2.msra.mxu0 0.0
    %6002 = vmatprep.subr.mxu0 0.0
    %6003 = vmatpush2.msra.mxu0 0.0
    %6004 = vmatprep.subr.mxu0 0.0
    %6005 = vmatpush2.msra.mxu0 0.0
    %6006 = vmatprep.subr.mxu0 0.0
    %6007 = vmatpush2.msra.mxu0 0.0
    %6008 = vmatprep.subr.mxu0 0.0
    %6009 = vmatpush2.msra.mxu0 0.0
    %6010 = vmatprep.subr.mxu0 0.0
    %6011 = vmatpush2.msra.mxu0 0.0
    %6012 = vmatprep.subr.mxu0 0.0
    %6013 = vmatpush2.msra.mxu0 0.0
    %6014 = vmatprep.mubr.f32.mxu0 0.0
    %v6015 = vand.u32 %v5094, 4294901760
    %v6016 = vsub.f32 %v5094, %v6015
    %v6017 = vand.u32 %v6016, 4294901760
    %6018 = vmatmul.mubr.f32.gmra.mxu0 %v6017
    %v6019 = vpop.f32.mrf.mxu0
    %v6020 = vadd.f32 %v5931, %v6019
    %v6021 = vpop.f32.mrf.mxu0
    %6022 = vdwg.mxu0
    %6023 = vmatprep.subr.mxu0 0.0
    %v6024 = vand.u32 %v45, 4294901760
    %v6025 = vsub.f32 %v45, %v6024
    %v6026 = vand.u32 %v6025, 4294901760
    %6027 = vmatpush1.msra.mxu0 %v6026
    %6028 = vmatprep.subr.mxu0 0.0
    %v6029 = vand.u32 %v44, 4294901760
    %v6030 = vsub.f32 %v44, %v6029
    %v6031 = vand.u32 %v6030, 4294901760
    %6032 = vmatpush1.msra.mxu0 %v6031
    %6033 = vmatprep.subr.mxu0 0.0
    %v6034 = vand.u32 %v43, 4294901760
    %v6035 = vsub.f32 %v43, %v6034
    %v6036 = vand.u32 %v6035, 4294901760
    %6037 = vmatpush1.msra.mxu0 %v6036
    %6038 = vmatprep.subr.mxu0 0.0
    %v6039 = vand.u32 %v42, 4294901760
    %v6040 = vsub.f32 %v42, %v6039
    %v6041 = vand.u32 %v6040, 4294901760
    %6042 = vmatpush1.msra.mxu0 %v6041
    %6043 = vmatprep.subr.mxu0 0.0
    %v6044 = vand.u32 %v41, 4294901760
    %v6045 = vsub.f32 %v41, %v6044
    %v6046 = vand.u32 %v6045, 4294901760
    %6047 = vmatpush1.msra.mxu0 %v6046
    %6048 = vmatprep.subr.mxu0 0.0
    %v6049 = vand.u32 %v40, 4294901760
    %v6050 = vsub.f32 %v40, %v6049
    %v6051 = vand.u32 %v6050, 4294901760
    %6052 = vmatpush1.msra.mxu0 %v6051
    %6053 = vmatprep.subr.mxu0 0.0
    %v6054 = vand.u32 %v39, 4294901760
    %v6055 = vsub.f32 %v39, %v6054
    %v6056 = vand.u32 %v6055, 4294901760
    %6057 = vmatpush1.msra.mxu0 %v6056
    %6058 = vmatprep.subr.mxu0 0.0
    %v6059 = vand.u32 %v38, 4294901760
    %v6060 = vsub.f32 %v38, %v6059
    %v6061 = vand.u32 %v6060, 4294901760
    %6062 = vmatpush1.msra.mxu0 %v6061
    %6063 = vmatprep.subr.mxu0 0.0
    %v6064 = vand.u32 %v37, 4294901760
    %v6065 = vsub.f32 %v37, %v6064
    %v6066 = vand.u32 %v6065, 4294901760
    %6067 = vmatpush1.msra.mxu0 %v6066
    %6068 = vmatprep.subr.mxu0 0.0
    %v6069 = vand.u32 %v36, 4294901760
    %v6070 = vsub.f32 %v36, %v6069
    %v6071 = vand.u32 %v6070, 4294901760
    %6072 = vmatpush1.msra.mxu0 %v6071
    %6073 = vmatprep.subr.mxu0 0.0
    %v6074 = vand.u32 %v35, 4294901760
    %v6075 = vsub.f32 %v35, %v6074
    %v6076 = vand.u32 %v6075, 4294901760
    %6077 = vmatpush1.msra.mxu0 %v6076
    %6078 = vmatprep.subr.mxu0 0.0
    %v6079 = vand.u32 %v34, 4294901760
    %v6080 = vsub.f32 %v34, %v6079
    %v6081 = vand.u32 %v6080, 4294901760
    %6082 = vmatpush1.msra.mxu0 %v6081
    %6083 = vmatprep.subr.mxu0 0.0
    %v6084 = vand.u32 %v33, 4294901760
    %v6085 = vsub.f32 %v33, %v6084
    %v6086 = vand.u32 %v6085, 4294901760
    %6087 = vmatpush1.msra.mxu0 %v6086
    %6088 = vmatprep.subr.mxu0 0.0
    %v6089 = vand.u32 %v32, 4294901760
    %v6090 = vsub.f32 %v32, %v6089
    %v6091 = vand.u32 %v6090, 4294901760
    %6092 = vmatpush1.msra.mxu0 %v6091
    %6093 = vmatprep.subr.mxu0 0.0
    %v6094 = vand.u32 %v31, 4294901760
    %v6095 = vsub.f32 %v31, %v6094
    %v6096 = vand.u32 %v6095, 4294901760
    %6097 = vmatpush1.msra.mxu0 %v6096
    %6098 = vmatprep.subr.mxu0 0.0
    %v6099 = vand.u32 %v30, 4294901760
    %v6100 = vsub.f32 %v30, %v6099
    %v6101 = vand.u32 %v6100, 4294901760
    %6102 = vmatpush1.msra.mxu0 %v6101
    %6103 = vmatprep.subr.mxu0 0.0
    %6104 = vmatpush2.msra.mxu0 0.0
    %6105 = vmatprep.subr.mxu0 0.0
    %6106 = vmatpush2.msra.mxu0 0.0
    %6107 = vmatprep.subr.mxu0 0.0
    %6108 = vmatpush2.msra.mxu0 0.0
    %6109 = vmatprep.subr.mxu0 0.0
    %6110 = vmatpush2.msra.mxu0 0.0
    %6111 = vmatprep.subr.mxu0 0.0
    %6112 = vmatpush2.msra.mxu0 0.0
    %6113 = vmatprep.subr.mxu0 0.0
    %6114 = vmatpush2.msra.mxu0 0.0
    %6115 = vmatprep.subr.mxu0 0.0
    %6116 = vmatpush2.msra.mxu0 0.0
    %6117 = vmatprep.subr.mxu0 0.0
    %6118 = vmatpush2.msra.mxu0 0.0
    %6119 = vmatprep.subr.mxu0 0.0
    %6120 = vmatpush2.msra.mxu0 0.0
    %6121 = vmatprep.subr.mxu0 0.0
    %6122 = vmatpush2.msra.mxu0 0.0
    %6123 = vmatprep.subr.mxu0 0.0
    %6124 = vmatpush2.msra.mxu0 0.0
    %6125 = vmatprep.subr.mxu0 0.0
    %6126 = vmatpush2.msra.mxu0 0.0
    %6127 = vmatprep.subr.mxu0 0.0
    %6128 = vmatpush2.msra.mxu0 0.0
    %6129 = vmatprep.subr.mxu0 0.0
    %6130 = vmatpush2.msra.mxu0 0.0
    %6131 = vmatprep.subr.mxu0 0.0
    %6132 = vmatpush2.msra.mxu0 0.0
    %6133 = vmatprep.subr.mxu0 0.0
    %6134 = vmatpush2.msra.mxu0 0.0
    %6135 = vmatprep.mubr.f32.mxu0 0.0
    %v6136 = vand.u32 %v5094, 4294901760
    %6137 = vmatmul.mubr.f32.gmra.mxu0 %v6136
    %v6138 = vpop.f32.mrf.mxu0
    %v6139 = vadd.f32 %v6020, %v6138
    %v6140 = vpop.f32.mrf.mxu0
    %6141 = vdwg.mxu0
    %6142 = vmatprep.subr.mxu0 0.0
    %v6143 = vand.u32 %v45, 4294901760
    %6144 = vmatpush1.msra.mxu0 %v6143
    %6145 = vmatprep.subr.mxu0 0.0
    %v6146 = vand.u32 %v44, 4294901760
    %6147 = vmatpush1.msra.mxu0 %v6146
    %6148 = vmatprep.subr.mxu0 0.0
    %v6149 = vand.u32 %v43, 4294901760
    %6150 = vmatpush1.msra.mxu0 %v6149
    %6151 = vmatprep.subr.mxu0 0.0
    %v6152 = vand.u32 %v42, 4294901760
    %6153 = vmatpush1.msra.mxu0 %v6152
    %6154 = vmatprep.subr.mxu0 0.0
    %v6155 = vand.u32 %v41, 4294901760
    %6156 = vmatpush1.msra.mxu0 %v6155
    %6157 = vmatprep.subr.mxu0 0.0
    %v6158 = vand.u32 %v40, 4294901760
    %6159 = vmatpush1.msra.mxu0 %v6158
    %6160 = vmatprep.subr.mxu0 0.0
    %v6161 = vand.u32 %v39, 4294901760
    %6162 = vmatpush1.msra.mxu0 %v6161
    %6163 = vmatprep.subr.mxu0 0.0
    %v6164 = vand.u32 %v38, 4294901760
    %6165 = vmatpush1.msra.mxu0 %v6164
    %6166 = vmatprep.subr.mxu0 0.0
    %v6167 = vand.u32 %v37, 4294901760
    %6168 = vmatpush1.msra.mxu0 %v6167
    %6169 = vmatprep.subr.mxu0 0.0
    %v6170 = vand.u32 %v36, 4294901760
    %6171 = vmatpush1.msra.mxu0 %v6170
    %6172 = vmatprep.subr.mxu0 0.0
    %v6173 = vand.u32 %v35, 4294901760
    %6174 = vmatpush1.msra.mxu0 %v6173
    %6175 = vmatprep.subr.mxu0 0.0
    %v6176 = vand.u32 %v34, 4294901760
    %6177 = vmatpush1.msra.mxu0 %v6176
    %6178 = vmatprep.subr.mxu0 0.0
    %v6179 = vand.u32 %v33, 4294901760
    %6180 = vmatpush1.msra.mxu0 %v6179
    %6181 = vmatprep.subr.mxu0 0.0
    %v6182 = vand.u32 %v32, 4294901760
    %6183 = vmatpush1.msra.mxu0 %v6182
    %6184 = vmatprep.subr.mxu0 0.0
    %v6185 = vand.u32 %v31, 4294901760
    %6186 = vmatpush1.msra.mxu0 %v6185
    %6187 = vmatprep.subr.mxu0 0.0
    %v6188 = vand.u32 %v30, 4294901760
    %6189 = vmatpush1.msra.mxu0 %v6188
    %6190 = vmatprep.subr.mxu0 0.0
    %6191 = vmatpush2.msra.mxu0 0.0
    %6192 = vmatprep.subr.mxu0 0.0
    %6193 = vmatpush2.msra.mxu0 0.0
    %6194 = vmatprep.subr.mxu0 0.0
    %6195 = vmatpush2.msra.mxu0 0.0
    %6196 = vmatprep.subr.mxu0 0.0
    %6197 = vmatpush2.msra.mxu0 0.0
    %6198 = vmatprep.subr.mxu0 0.0
    %6199 = vmatpush2.msra.mxu0 0.0
    %6200 = vmatprep.subr.mxu0 0.0
    %6201 = vmatpush2.msra.mxu0 0.0
    %6202 = vmatprep.subr.mxu0 0.0
    %6203 = vmatpush2.msra.mxu0 0.0
    %6204 = vmatprep.subr.mxu0 0.0
    %6205 = vmatpush2.msra.mxu0 0.0
    %6206 = vmatprep.subr.mxu0 0.0
    %6207 = vmatpush2.msra.mxu0 0.0
    %6208 = vmatprep.subr.mxu0 0.0
    %6209 = vmatpush2.msra.mxu0 0.0
    %6210 = vmatprep.subr.mxu0 0.0
    %6211 = vmatpush2.msra.mxu0 0.0
    %6212 = vmatprep.subr.mxu0 0.0
    %6213 = vmatpush2.msra.mxu0 0.0
    %6214 = vmatprep.subr.mxu0 0.0
    %6215 = vmatpush2.msra.mxu0 0.0
    %6216 = vmatprep.subr.mxu0 0.0
    %6217 = vmatpush2.msra.mxu0 0.0
    %6218 = vmatprep.subr.mxu0 0.0
    %6219 = vmatpush2.msra.mxu0 0.0
    %6220 = vmatprep.subr.mxu0 0.0
    %6221 = vmatpush2.msra.mxu0 0.0
    %6222 = vmatprep.mubr.f32.mxu0 0.0
    %v6223 = vand.u32 %v5094, 4294901760
    %6224 = vmatmul.mubr.f32.gmra.mxu0 %v6223
    %v6225 = vpop.f32.mrf.mxu0
    %v6226 = vadd.f32 %v6139, %v6225
    %v6227 = vpop.f32.mrf.mxu0
    %6228 = vdwg.mxu0
    %v6229 = vadd.f32 %v5585, %v6226
    %v6230 = vtanh.pop %v6229
    %s6231 = scalar_lea.vmem [#allocation2], 40
    %6232 = vst [vmem:[%s6231] sm:$0xff] %v6230
    %v6233 = vld [vmem:[%s0 + $0x6] sm:$0x1]
    %v6234 = vld [vmem:[%s0 + $0xe] sm:$0x1]
    %v6235 = vld [vmem:[%s0 + $0x16] sm:$0x1]
    %v6236 = vld [vmem:[%s0 + $0x1e] sm:$0x1]
    %v6237 = vld [vmem:[%s0 + $0x26] sm:$0x1]
    %v6238 = vld [vmem:[%s0 + $0x2e] sm:$0x1]
    %v6239 = vld [vmem:[%s0 + $0x36] sm:$0x1]
    %v6240 = vld [vmem:[%s0 + $0x3e] sm:$0x1]
    %v6249 = vrot.slane %v6234, 7
    %v6250 = vsel %vm69, %v6249, %v6233
    %v6251 = vrot.slane %v6235, 6
    %v6252 = vsel %vm72, %v6251, %v6250
    %v6253 = vrot.slane %v6236, 5
    %v6254 = vsel %vm75, %v6253, %v6252
    %v6255 = vrot.slane %v6237, 4
    %v6256 = vsel %vm78, %v6255, %v6254
    %v6257 = vrot.slane %v6238, 3
    %v6258 = vsel %vm81, %v6257, %v6256
    %v6259 = vrot.slane %v6239, 2
    %v6260 = vsel %vm84, %v6259, %v6258
    %v6261 = vrot.slane %v6240, 1
    %v6262 = vsel %vm87, %v6261, %v6260
    %v6263 = vsel %vm89, %v6262, 0
    %6265 = vmatprep.subr.mxu0 0.0
    %6266 = vmatpush1.msra.mxu0 0.0
    %6267 = vmatprep.subr.mxu0 0.0
    %6268 = vmatpush1.msra.mxu0 0.0
    %6269 = vmatprep.subr.mxu0 0.0
    %6270 = vmatpush1.msra.mxu0 0.0
    %6271 = vmatprep.subr.mxu0 0.0
    %6272 = vmatpush1.msra.mxu0 0.0
    %6273 = vmatprep.subr.mxu0 0.0
    %6274 = vmatpush1.msra.mxu0 0.0
    %6275 = vmatprep.subr.mxu0 0.0
    %6276 = vmatpush1.msra.mxu0 0.0
    %6277 = vmatprep.subr.mxu0 0.0
    %6278 = vmatpush1.msra.mxu0 0.0
    %6279 = vmatprep.subr.mxu0 0.0
    %6280 = vmatpush1.msra.mxu0 0.0
    %6281 = vmatprep.subr.mxu0 0.0
    %6282 = vmatpush1.msra.mxu0 0.0
    %6283 = vmatprep.subr.mxu0 0.0
    %6284 = vmatpush1.msra.mxu0 0.0
    %6285 = vmatprep.subr.mxu0 0.0
    %6286 = vmatpush1.msra.mxu0 0.0
    %6287 = vmatprep.subr.mxu0 0.0
    %6288 = vmatpush1.msra.mxu0 0.0
    %6289 = vmatprep.subr.mxu0 0.0
    %6290 = vmatpush1.msra.mxu0 0.0
    %6291 = vmatprep.subr.mxu0 0.0
    %6292 = vmatpush1.msra.mxu0 0.0
    %6293 = vmatprep.subr.mxu0 0.0
    %v6294 = vand.u32 %v28, 4294901760
    %6295 = vmatpush1.msra.mxu0 %v6294
    %6296 = vmatprep.subr.mxu0 0.0
    %v6297 = vand.u32 %v27, 4294901760
    %6298 = vmatpush1.msra.mxu0 %v6297
    %6299 = vmatprep.subr.mxu0 0.0
    %6300 = vmatpush2.msra.mxu0 0.0
    %6301 = vmatprep.subr.mxu0 0.0
    %6302 = vmatpush2.msra.mxu0 0.0
    %6303 = vmatprep.subr.mxu0 0.0
    %6304 = vmatpush2.msra.mxu0 0.0
    %6305 = vmatprep.subr.mxu0 0.0
    %6306 = vmatpush2.msra.mxu0 0.0
    %6307 = vmatprep.subr.mxu0 0.0
    %6308 = vmatpush2.msra.mxu0 0.0
    %6309 = vmatprep.subr.mxu0 0.0
    %6310 = vmatpush2.msra.mxu0 0.0
    %6311 = vmatprep.subr.mxu0 0.0
    %6312 = vmatpush2.msra.mxu0 0.0
    %6313 = vmatprep.subr.mxu0 0.0
    %6314 = vmatpush2.msra.mxu0 0.0
    %6315 = vmatprep.subr.mxu0 0.0
    %6316 = vmatpush2.msra.mxu0 0.0
    %6317 = vmatprep.subr.mxu0 0.0
    %6318 = vmatpush2.msra.mxu0 0.0
    %6319 = vmatprep.subr.mxu0 0.0
    %6320 = vmatpush2.msra.mxu0 0.0
    %6321 = vmatprep.subr.mxu0 0.0
    %6322 = vmatpush2.msra.mxu0 0.0
    %6323 = vmatprep.subr.mxu0 0.0
    %6324 = vmatpush2.msra.mxu0 0.0
    %6325 = vmatprep.subr.mxu0 0.0
    %6326 = vmatpush2.msra.mxu0 0.0
    %6327 = vmatprep.subr.mxu0 0.0
    %6328 = vmatpush2.msra.mxu0 0.0
    %6329 = vmatprep.subr.mxu0 0.0
    %6330 = vmatpush2.msra.mxu0 0.0
    %6331 = vmatprep.mubr.f32.mxu0 0.0
    %v6332 = vand.u32 %v6263, 4294901760
    %v6333 = vsub.f32 %v6263, %v6332
    %v6334 = vand.u32 %v6333, 4294901760
    %v6335 = vsub.f32 %v6333, %v6334
    %v6336 = vand.u32 %v6335, 4294901760
    %6337 = vmatmul.mubr.f32.gmra.mxu0 %v6336
    %v6338 = vpop.f32.mrf.mxu0
    %v6339 = vadd.f32 %v58, %v6338
    %v6340 = vpop.f32.mrf.mxu0
    %6341 = vdwg.mxu0
    %6342 = vmatprep.subr.mxu0 0.0
    %6343 = vmatpush1.msra.mxu0 0.0
    %6344 = vmatprep.subr.mxu0 0.0
    %6345 = vmatpush1.msra.mxu0 0.0
    %6346 = vmatprep.subr.mxu0 0.0
    %6347 = vmatpush1.msra.mxu0 0.0
    %6348 = vmatprep.subr.mxu0 0.0
    %6349 = vmatpush1.msra.mxu0 0.0
    %6350 = vmatprep.subr.mxu0 0.0
    %6351 = vmatpush1.msra.mxu0 0.0
    %6352 = vmatprep.subr.mxu0 0.0
    %6353 = vmatpush1.msra.mxu0 0.0
    %6354 = vmatprep.subr.mxu0 0.0
    %6355 = vmatpush1.msra.mxu0 0.0
    %6356 = vmatprep.subr.mxu0 0.0
    %6357 = vmatpush1.msra.mxu0 0.0
    %6358 = vmatprep.subr.mxu0 0.0
    %6359 = vmatpush1.msra.mxu0 0.0
    %6360 = vmatprep.subr.mxu0 0.0
    %6361 = vmatpush1.msra.mxu0 0.0
    %6362 = vmatprep.subr.mxu0 0.0
    %6363 = vmatpush1.msra.mxu0 0.0
    %6364 = vmatprep.subr.mxu0 0.0
    %6365 = vmatpush1.msra.mxu0 0.0
    %6366 = vmatprep.subr.mxu0 0.0
    %6367 = vmatpush1.msra.mxu0 0.0
    %6368 = vmatprep.subr.mxu0 0.0
    %6369 = vmatpush1.msra.mxu0 0.0
    %6370 = vmatprep.subr.mxu0 0.0
    %v6371 = vand.u32 %v28, 4294901760
    %v6372 = vsub.f32 %v28, %v6371
    %v6373 = vand.u32 %v6372, 4294901760
    %v6374 = vsub.f32 %v6372, %v6373
    %v6375 = vand.u32 %v6374, 4294901760
    %6376 = vmatpush1.msra.mxu0 %v6375
    %6377 = vmatprep.subr.mxu0 0.0
    %v6378 = vand.u32 %v27, 4294901760
    %v6379 = vsub.f32 %v27, %v6378
    %v6380 = vand.u32 %v6379, 4294901760
    %v6381 = vsub.f32 %v6379, %v6380
    %v6382 = vand.u32 %v6381, 4294901760
    %6383 = vmatpush1.msra.mxu0 %v6382
    %6384 = vmatprep.subr.mxu0 0.0
    %6385 = vmatpush2.msra.mxu0 0.0
    %6386 = vmatprep.subr.mxu0 0.0
    %6387 = vmatpush2.msra.mxu0 0.0
    %6388 = vmatprep.subr.mxu0 0.0
    %6389 = vmatpush2.msra.mxu0 0.0
    %6390 = vmatprep.subr.mxu0 0.0
    %6391 = vmatpush2.msra.mxu0 0.0
    %6392 = vmatprep.subr.mxu0 0.0
    %6393 = vmatpush2.msra.mxu0 0.0
    %6394 = vmatprep.subr.mxu0 0.0
    %6395 = vmatpush2.msra.mxu0 0.0
    %6396 = vmatprep.subr.mxu0 0.0
    %6397 = vmatpush2.msra.mxu0 0.0
    %6398 = vmatprep.subr.mxu0 0.0
    %6399 = vmatpush2.msra.mxu0 0.0
    %6400 = vmatprep.subr.mxu0 0.0
    %6401 = vmatpush2.msra.mxu0 0.0
    %6402 = vmatprep.subr.mxu0 0.0
    %6403 = vmatpush2.msra.mxu0 0.0
    %6404 = vmatprep.subr.mxu0 0.0
    %6405 = vmatpush2.msra.mxu0 0.0
    %6406 = vmatprep.subr.mxu0 0.0
    %6407 = vmatpush2.msra.mxu0 0.0
    %6408 = vmatprep.subr.mxu0 0.0
    %6409 = vmatpush2.msra.mxu0 0.0
    %6410 = vmatprep.subr.mxu0 0.0
    %6411 = vmatpush2.msra.mxu0 0.0
    %6412 = vmatprep.subr.mxu0 0.0
    %6413 = vmatpush2.msra.mxu0 0.0
    %6414 = vmatprep.subr.mxu0 0.0
    %6415 = vmatpush2.msra.mxu0 0.0
    %6416 = vmatprep.mubr.f32.mxu0 0.0
    %v6417 = vand.u32 %v6263, 4294901760
    %6418 = vmatmul.mubr.f32.gmra.mxu0 %v6417
    %v6419 = vpop.f32.mrf.mxu0
    %v6420 = vadd.f32 %v6339, %v6419
    %v6421 = vpop.f32.mrf.mxu0
    %6422 = vdwg.mxu0
    %6423 = vmatprep.subr.mxu0 0.0
    %6424 = vmatpush1.msra.mxu0 0.0
    %6425 = vmatprep.subr.mxu0 0.0
    %6426 = vmatpush1.msra.mxu0 0.0
    %6427 = vmatprep.subr.mxu0 0.0
    %6428 = vmatpush1.msra.mxu0 0.0
    %6429 = vmatprep.subr.mxu0 0.0
    %6430 = vmatpush1.msra.mxu0 0.0
    %6431 = vmatprep.subr.mxu0 0.0
    %6432 = vmatpush1.msra.mxu0 0.0
    %6433 = vmatprep.subr.mxu0 0.0
    %6434 = vmatpush1.msra.mxu0 0.0
    %6435 = vmatprep.subr.mxu0 0.0
    %6436 = vmatpush1.msra.mxu0 0.0
    %6437 = vmatprep.subr.mxu0 0.0
    %6438 = vmatpush1.msra.mxu0 0.0
    %6439 = vmatprep.subr.mxu0 0.0
    %6440 = vmatpush1.msra.mxu0 0.0
    %6441 = vmatprep.subr.mxu0 0.0
    %6442 = vmatpush1.msra.mxu0 0.0
    %6443 = vmatprep.subr.mxu0 0.0
    %6444 = vmatpush1.msra.mxu0 0.0
    %6445 = vmatprep.subr.mxu0 0.0
    %6446 = vmatpush1.msra.mxu0 0.0
    %6447 = vmatprep.subr.mxu0 0.0
    %6448 = vmatpush1.msra.mxu0 0.0
    %6449 = vmatprep.subr.mxu0 0.0
    %6450 = vmatpush1.msra.mxu0 0.0
    %6451 = vmatprep.subr.mxu0 0.0
    %v6452 = vand.u32 %v28, 4294901760
    %v6453 = vsub.f32 %v28, %v6452
    %6454 = vmatpush1.msra.mxu0 %v6453
    %6455 = vmatprep.subr.mxu0 0.0
    %v6456 = vand.u32 %v27, 4294901760
    %v6457 = vsub.f32 %v27, %v6456
    %6458 = vmatpush1.msra.mxu0 %v6457
    %6459 = vmatprep.subr.mxu0 0.0
    %6460 = vmatpush2.msra.mxu0 0.0
    %6461 = vmatprep.subr.mxu0 0.0
    %6462 = vmatpush2.msra.mxu0 0.0
    %6463 = vmatprep.subr.mxu0 0.0
    %6464 = vmatpush2.msra.mxu0 0.0
    %6465 = vmatprep.subr.mxu0 0.0
    %6466 = vmatpush2.msra.mxu0 0.0
    %6467 = vmatprep.subr.mxu0 0.0
    %6468 = vmatpush2.msra.mxu0 0.0
    %6469 = vmatprep.subr.mxu0 0.0
    %6470 = vmatpush2.msra.mxu0 0.0
    %6471 = vmatprep.subr.mxu0 0.0
    %6472 = vmatpush2.msra.mxu0 0.0
    %6473 = vmatprep.subr.mxu0 0.0
    %6474 = vmatpush2.msra.mxu0 0.0
    %6475 = vmatprep.subr.mxu0 0.0
    %6476 = vmatpush2.msra.mxu0 0.0
    %6477 = vmatprep.subr.mxu0 0.0
    %6478 = vmatpush2.msra.mxu0 0.0
    %6479 = vmatprep.subr.mxu0 0.0
    %6480 = vmatpush2.msra.mxu0 0.0
    %6481 = vmatprep.subr.mxu0 0.0
    %6482 = vmatpush2.msra.mxu0 0.0
    %6483 = vmatprep.subr.mxu0 0.0
    %6484 = vmatpush2.msra.mxu0 0.0
    %6485 = vmatprep.subr.mxu0 0.0
    %6486 = vmatpush2.msra.mxu0 0.0
    %6487 = vmatprep.subr.mxu0 0.0
    %6488 = vmatpush2.msra.mxu0 0.0
    %6489 = vmatprep.subr.mxu0 0.0
    %6490 = vmatpush2.msra.mxu0 0.0
    %6491 = vmatprep.mubr.f32.mxu0 0.0
    %v6492 = vand.u32 %v6263, 4294901760
    %v6493 = vsub.f32 %v6263, %v6492
    %6494 = vmatmul.mubr.f32.gmra.mxu0 %v6493
    %v6495 = vpop.f32.mrf.mxu0
    %v6496 = vadd.f32 %v6420, %v6495
    %v6497 = vpop.f32.mrf.mxu0
    %6498 = vdwg.mxu0
    %6499 = vmatprep.subr.mxu0 0.0
    %6500 = vmatpush1.msra.mxu0 0.0
    %6501 = vmatprep.subr.mxu0 0.0
    %6502 = vmatpush1.msra.mxu0 0.0
    %6503 = vmatprep.subr.mxu0 0.0
    %6504 = vmatpush1.msra.mxu0 0.0
    %6505 = vmatprep.subr.mxu0 0.0
    %6506 = vmatpush1.msra.mxu0 0.0
    %6507 = vmatprep.subr.mxu0 0.0
    %6508 = vmatpush1.msra.mxu0 0.0
    %6509 = vmatprep.subr.mxu0 0.0
    %6510 = vmatpush1.msra.mxu0 0.0
    %6511 = vmatprep.subr.mxu0 0.0
    %6512 = vmatpush1.msra.mxu0 0.0
    %6513 = vmatprep.subr.mxu0 0.0
    %6514 = vmatpush1.msra.mxu0 0.0
    %6515 = vmatprep.subr.mxu0 0.0
    %6516 = vmatpush1.msra.mxu0 0.0
    %6517 = vmatprep.subr.mxu0 0.0
    %6518 = vmatpush1.msra.mxu0 0.0
    %6519 = vmatprep.subr.mxu0 0.0
    %6520 = vmatpush1.msra.mxu0 0.0
    %6521 = vmatprep.subr.mxu0 0.0
    %6522 = vmatpush1.msra.mxu0 0.0
    %6523 = vmatprep.subr.mxu0 0.0
    %6524 = vmatpush1.msra.mxu0 0.0
    %6525 = vmatprep.subr.mxu0 0.0
    %6526 = vmatpush1.msra.mxu0 0.0
    %6527 = vmatprep.subr.mxu0 0.0
    %v6528 = vand.u32 %v28, 4294901760
    %6529 = vmatpush1.msra.mxu0 %v6528
    %6530 = vmatprep.subr.mxu0 0.0
    %v6531 = vand.u32 %v27, 4294901760
    %6532 = vmatpush1.msra.mxu0 %v6531
    %6533 = vmatprep.subr.mxu0 0.0
    %6534 = vmatpush2.msra.mxu0 0.0
    %6535 = vmatprep.subr.mxu0 0.0
    %6536 = vmatpush2.msra.mxu0 0.0
    %6537 = vmatprep.subr.mxu0 0.0
    %6538 = vmatpush2.msra.mxu0 0.0
    %6539 = vmatprep.subr.mxu0 0.0
    %6540 = vmatpush2.msra.mxu0 0.0
    %6541 = vmatprep.subr.mxu0 0.0
    %6542 = vmatpush2.msra.mxu0 0.0
    %6543 = vmatprep.subr.mxu0 0.0
    %6544 = vmatpush2.msra.mxu0 0.0
    %6545 = vmatprep.subr.mxu0 0.0
    %6546 = vmatpush2.msra.mxu0 0.0
    %6547 = vmatprep.subr.mxu0 0.0
    %6548 = vmatpush2.msra.mxu0 0.0
    %6549 = vmatprep.subr.mxu0 0.0
    %6550 = vmatpush2.msra.mxu0 0.0
    %6551 = vmatprep.subr.mxu0 0.0
    %6552 = vmatpush2.msra.mxu0 0.0
    %6553 = vmatprep.subr.mxu0 0.0
    %6554 = vmatpush2.msra.mxu0 0.0
    %6555 = vmatprep.subr.mxu0 0.0
    %6556 = vmatpush2.msra.mxu0 0.0
    %6557 = vmatprep.subr.mxu0 0.0
    %6558 = vmatpush2.msra.mxu0 0.0
    %6559 = vmatprep.subr.mxu0 0.0
    %6560 = vmatpush2.msra.mxu0 0.0
    %6561 = vmatprep.subr.mxu0 0.0
    %6562 = vmatpush2.msra.mxu0 0.0
    %6563 = vmatprep.subr.mxu0 0.0
    %6564 = vmatpush2.msra.mxu0 0.0
    %6565 = vmatprep.mubr.f32.mxu0 0.0
    %v6566 = vand.u32 %v6263, 4294901760
    %v6567 = vsub.f32 %v6263, %v6566
    %v6568 = vand.u32 %v6567, 4294901760
    %6569 = vmatmul.mubr.f32.gmra.mxu0 %v6568
    %v6570 = vpop.f32.mrf.mxu0
    %v6571 = vadd.f32 %v6496, %v6570
    %v6572 = vpop.f32.mrf.mxu0
    %6573 = vdwg.mxu0
    %6574 = vmatprep.subr.mxu0 0.0
    %6575 = vmatpush1.msra.mxu0 0.0
    %6576 = vmatprep.subr.mxu0 0.0
    %6577 = vmatpush1.msra.mxu0 0.0
    %6578 = vmatprep.subr.mxu0 0.0
    %6579 = vmatpush1.msra.mxu0 0.0
    %6580 = vmatprep.subr.mxu0 0.0
    %6581 = vmatpush1.msra.mxu0 0.0
    %6582 = vmatprep.subr.mxu0 0.0
    %6583 = vmatpush1.msra.mxu0 0.0
    %6584 = vmatprep.subr.mxu0 0.0
    %6585 = vmatpush1.msra.mxu0 0.0
    %6586 = vmatprep.subr.mxu0 0.0
    %6587 = vmatpush1.msra.mxu0 0.0
    %6588 = vmatprep.subr.mxu0 0.0
    %6589 = vmatpush1.msra.mxu0 0.0
    %6590 = vmatprep.subr.mxu0 0.0
    %6591 = vmatpush1.msra.mxu0 0.0
    %6592 = vmatprep.subr.mxu0 0.0
    %6593 = vmatpush1.msra.mxu0 0.0
    %6594 = vmatprep.subr.mxu0 0.0
    %6595 = vmatpush1.msra.mxu0 0.0
    %6596 = vmatprep.subr.mxu0 0.0
    %6597 = vmatpush1.msra.mxu0 0.0
    %6598 = vmatprep.subr.mxu0 0.0
    %6599 = vmatpush1.msra.mxu0 0.0
    %6600 = vmatprep.subr.mxu0 0.0
    %6601 = vmatpush1.msra.mxu0 0.0
    %6602 = vmatprep.subr.mxu0 0.0
    %v6603 = vand.u32 %v28, 4294901760
    %v6604 = vsub.f32 %v28, %v6603
    %v6605 = vand.u32 %v6604, 4294901760
    %6606 = vmatpush1.msra.mxu0 %v6605
    %6607 = vmatprep.subr.mxu0 0.0
    %v6608 = vand.u32 %v27, 4294901760
    %v6609 = vsub.f32 %v27, %v6608
    %v6610 = vand.u32 %v6609, 4294901760
    %6611 = vmatpush1.msra.mxu0 %v6610
    %6612 = vmatprep.subr.mxu0 0.0
    %6613 = vmatpush2.msra.mxu0 0.0
    %6614 = vmatprep.subr.mxu0 0.0
    %6615 = vmatpush2.msra.mxu0 0.0
    %6616 = vmatprep.subr.mxu0 0.0
    %6617 = vmatpush2.msra.mxu0 0.0
    %6618 = vmatprep.subr.mxu0 0.0
    %6619 = vmatpush2.msra.mxu0 0.0
    %6620 = vmatprep.subr.mxu0 0.0
    %6621 = vmatpush2.msra.mxu0 0.0
    %6622 = vmatprep.subr.mxu0 0.0
    %6623 = vmatpush2.msra.mxu0 0.0
    %6624 = vmatprep.subr.mxu0 0.0
    %6625 = vmatpush2.msra.mxu0 0.0
    %6626 = vmatprep.subr.mxu0 0.0
    %6627 = vmatpush2.msra.mxu0 0.0
    %6628 = vmatprep.subr.mxu0 0.0
    %6629 = vmatpush2.msra.mxu0 0.0
    %6630 = vmatprep.subr.mxu0 0.0
    %6631 = vmatpush2.msra.mxu0 0.0
    %6632 = vmatprep.subr.mxu0 0.0
    %6633 = vmatpush2.msra.mxu0 0.0
    %6634 = vmatprep.subr.mxu0 0.0
    %6635 = vmatpush2.msra.mxu0 0.0
    %6636 = vmatprep.subr.mxu0 0.0
    %6637 = vmatpush2.msra.mxu0 0.0
    %6638 = vmatprep.subr.mxu0 0.0
    %6639 = vmatpush2.msra.mxu0 0.0
    %6640 = vmatprep.subr.mxu0 0.0
    %6641 = vmatpush2.msra.mxu0 0.0
    %6642 = vmatprep.subr.mxu0 0.0
    %6643 = vmatpush2.msra.mxu0 0.0
    %6644 = vmatprep.mubr.f32.mxu0 0.0
    %v6645 = vand.u32 %v6263, 4294901760
    %6646 = vmatmul.mubr.f32.gmra.mxu0 %v6645
    %v6647 = vpop.f32.mrf.mxu0
    %v6648 = vadd.f32 %v6571, %v6647
    %v6649 = vpop.f32.mrf.mxu0
    %6650 = vdwg.mxu0
    %6651 = vmatprep.subr.mxu0 0.0
    %6652 = vmatpush1.msra.mxu0 0.0
    %6653 = vmatprep.subr.mxu0 0.0
    %6654 = vmatpush1.msra.mxu0 0.0
    %6655 = vmatprep.subr.mxu0 0.0
    %6656 = vmatpush1.msra.mxu0 0.0
    %6657 = vmatprep.subr.mxu0 0.0
    %6658 = vmatpush1.msra.mxu0 0.0
    %6659 = vmatprep.subr.mxu0 0.0
    %6660 = vmatpush1.msra.mxu0 0.0
    %6661 = vmatprep.subr.mxu0 0.0
    %6662 = vmatpush1.msra.mxu0 0.0
    %6663 = vmatprep.subr.mxu0 0.0
    %6664 = vmatpush1.msra.mxu0 0.0
    %6665 = vmatprep.subr.mxu0 0.0
    %6666 = vmatpush1.msra.mxu0 0.0
    %6667 = vmatprep.subr.mxu0 0.0
    %6668 = vmatpush1.msra.mxu0 0.0
    %6669 = vmatprep.subr.mxu0 0.0
    %6670 = vmatpush1.msra.mxu0 0.0
    %6671 = vmatprep.subr.mxu0 0.0
    %6672 = vmatpush1.msra.mxu0 0.0
    %6673 = vmatprep.subr.mxu0 0.0
    %6674 = vmatpush1.msra.mxu0 0.0
    %6675 = vmatprep.subr.mxu0 0.0
    %6676 = vmatpush1.msra.mxu0 0.0
    %6677 = vmatprep.subr.mxu0 0.0
    %6678 = vmatpush1.msra.mxu0 0.0
    %6679 = vmatprep.subr.mxu0 0.0
    %v6680 = vand.u32 %v28, 4294901760
    %6681 = vmatpush1.msra.mxu0 %v6680
    %6682 = vmatprep.subr.mxu0 0.0
    %v6683 = vand.u32 %v27, 4294901760
    %6684 = vmatpush1.msra.mxu0 %v6683
    %6685 = vmatprep.subr.mxu0 0.0
    %6686 = vmatpush2.msra.mxu0 0.0
    %6687 = vmatprep.subr.mxu0 0.0
    %6688 = vmatpush2.msra.mxu0 0.0
    %6689 = vmatprep.subr.mxu0 0.0
    %6690 = vmatpush2.msra.mxu0 0.0
    %6691 = vmatprep.subr.mxu0 0.0
    %6692 = vmatpush2.msra.mxu0 0.0
    %6693 = vmatprep.subr.mxu0 0.0
    %6694 = vmatpush2.msra.mxu0 0.0
    %6695 = vmatprep.subr.mxu0 0.0
    %6696 = vmatpush2.msra.mxu0 0.0
    %6697 = vmatprep.subr.mxu0 0.0
    %6698 = vmatpush2.msra.mxu0 0.0
    %6699 = vmatprep.subr.mxu0 0.0
    %6700 = vmatpush2.msra.mxu0 0.0
    %6701 = vmatprep.subr.mxu0 0.0
    %6702 = vmatpush2.msra.mxu0 0.0
    %6703 = vmatprep.subr.mxu0 0.0
    %6704 = vmatpush2.msra.mxu0 0.0
    %6705 = vmatprep.subr.mxu0 0.0
    %6706 = vmatpush2.msra.mxu0 0.0
    %6707 = vmatprep.subr.mxu0 0.0
    %6708 = vmatpush2.msra.mxu0 0.0
    %6709 = vmatprep.subr.mxu0 0.0
    %6710 = vmatpush2.msra.mxu0 0.0
    %6711 = vmatprep.subr.mxu0 0.0
    %6712 = vmatpush2.msra.mxu0 0.0
    %6713 = vmatprep.subr.mxu0 0.0
    %6714 = vmatpush2.msra.mxu0 0.0
    %6715 = vmatprep.subr.mxu0 0.0
    %6716 = vmatpush2.msra.mxu0 0.0
    %6717 = vmatprep.mubr.f32.mxu0 0.0
    %v6718 = vand.u32 %v6263, 4294901760
    %6719 = vmatmul.mubr.f32.gmra.mxu0 %v6718
    %v6720 = vpop.f32.mrf.mxu0
    %v6721 = vadd.f32 %v6648, %v6720
    %v6722 = vpop.f32.mrf.mxu0
    %6723 = vdwg.mxu0
    %6724 = vmatprep.subr.mxu0 0.0
    %v6725 = vand.u32 %v45, 4294901760
    %6726 = vmatpush1.msra.mxu0 %v6725
    %6727 = vmatprep.subr.mxu0 0.0
    %v6728 = vand.u32 %v44, 4294901760
    %6729 = vmatpush1.msra.mxu0 %v6728
    %6730 = vmatprep.subr.mxu0 0.0
    %v6731 = vand.u32 %v43, 4294901760
    %6732 = vmatpush1.msra.mxu0 %v6731
    %6733 = vmatprep.subr.mxu0 0.0
    %v6734 = vand.u32 %v42, 4294901760
    %6735 = vmatpush1.msra.mxu0 %v6734
    %6736 = vmatprep.subr.mxu0 0.0
    %v6737 = vand.u32 %v41, 4294901760
    %6738 = vmatpush1.msra.mxu0 %v6737
    %6739 = vmatprep.subr.mxu0 0.0
    %v6740 = vand.u32 %v40, 4294901760
    %6741 = vmatpush1.msra.mxu0 %v6740
    %6742 = vmatprep.subr.mxu0 0.0
    %v6743 = vand.u32 %v39, 4294901760
    %6744 = vmatpush1.msra.mxu0 %v6743
    %6745 = vmatprep.subr.mxu0 0.0
    %v6746 = vand.u32 %v38, 4294901760
    %6747 = vmatpush1.msra.mxu0 %v6746
    %6748 = vmatprep.subr.mxu0 0.0
    %v6749 = vand.u32 %v37, 4294901760
    %6750 = vmatpush1.msra.mxu0 %v6749
    %6751 = vmatprep.subr.mxu0 0.0
    %v6752 = vand.u32 %v36, 4294901760
    %6753 = vmatpush1.msra.mxu0 %v6752
    %6754 = vmatprep.subr.mxu0 0.0
    %v6755 = vand.u32 %v35, 4294901760
    %6756 = vmatpush1.msra.mxu0 %v6755
    %6757 = vmatprep.subr.mxu0 0.0
    %v6758 = vand.u32 %v34, 4294901760
    %6759 = vmatpush1.msra.mxu0 %v6758
    %6760 = vmatprep.subr.mxu0 0.0
    %v6761 = vand.u32 %v33, 4294901760
    %6762 = vmatpush1.msra.mxu0 %v6761
    %6763 = vmatprep.subr.mxu0 0.0
    %v6764 = vand.u32 %v32, 4294901760
    %6765 = vmatpush1.msra.mxu0 %v6764
    %6766 = vmatprep.subr.mxu0 0.0
    %v6767 = vand.u32 %v31, 4294901760
    %6768 = vmatpush1.msra.mxu0 %v6767
    %6769 = vmatprep.subr.mxu0 0.0
    %v6770 = vand.u32 %v30, 4294901760
    %6771 = vmatpush1.msra.mxu0 %v6770
    %6772 = vmatprep.subr.mxu0 0.0
    %6773 = vmatpush2.msra.mxu0 0.0
    %6774 = vmatprep.subr.mxu0 0.0
    %6775 = vmatpush2.msra.mxu0 0.0
    %6776 = vmatprep.subr.mxu0 0.0
    %6777 = vmatpush2.msra.mxu0 0.0
    %6778 = vmatprep.subr.mxu0 0.0
    %6779 = vmatpush2.msra.mxu0 0.0
    %6780 = vmatprep.subr.mxu0 0.0
    %6781 = vmatpush2.msra.mxu0 0.0
    %6782 = vmatprep.subr.mxu0 0.0
    %6783 = vmatpush2.msra.mxu0 0.0
    %6784 = vmatprep.subr.mxu0 0.0
    %6785 = vmatpush2.msra.mxu0 0.0
    %6786 = vmatprep.subr.mxu0 0.0
    %6787 = vmatpush2.msra.mxu0 0.0
    %6788 = vmatprep.subr.mxu0 0.0
    %6789 = vmatpush2.msra.mxu0 0.0
    %6790 = vmatprep.subr.mxu0 0.0
    %6791 = vmatpush2.msra.mxu0 0.0
    %6792 = vmatprep.subr.mxu0 0.0
    %6793 = vmatpush2.msra.mxu0 0.0
    %6794 = vmatprep.subr.mxu0 0.0
    %6795 = vmatpush2.msra.mxu0 0.0
    %6796 = vmatprep.subr.mxu0 0.0
    %6797 = vmatpush2.msra.mxu0 0.0
    %6798 = vmatprep.subr.mxu0 0.0
    %6799 = vmatpush2.msra.mxu0 0.0
    %6800 = vmatprep.subr.mxu0 0.0
    %6801 = vmatpush2.msra.mxu0 0.0
    %6802 = vmatprep.subr.mxu0 0.0
    %6803 = vmatpush2.msra.mxu0 0.0
    %6804 = vmatprep.mubr.f32.mxu0 0.0
    %v6805 = vand.u32 %v6230, 4294901760
    %v6806 = vsub.f32 %v6230, %v6805
    %v6807 = vand.u32 %v6806, 4294901760
    %v6808 = vsub.f32 %v6806, %v6807
    %v6809 = vand.u32 %v6808, 4294901760
    %6810 = vmatmul.mubr.f32.gmra.mxu0 %v6809
    %v6811 = vpop.f32.mrf.mxu0
    %v6812 = vadd.f32 0.0, %v6811
    %v6813 = vpop.f32.mrf.mxu0
    %6814 = vdwg.mxu0
    %6815 = vmatprep.subr.mxu0 0.0
    %v6816 = vand.u32 %v45, 4294901760
    %v6817 = vsub.f32 %v45, %v6816
    %v6818 = vand.u32 %v6817, 4294901760
    %v6819 = vsub.f32 %v6817, %v6818
    %v6820 = vand.u32 %v6819, 4294901760
    %6821 = vmatpush1.msra.mxu0 %v6820
    %6822 = vmatprep.subr.mxu0 0.0
    %v6823 = vand.u32 %v44, 4294901760
    %v6824 = vsub.f32 %v44, %v6823
    %v6825 = vand.u32 %v6824, 4294901760
    %v6826 = vsub.f32 %v6824, %v6825
    %v6827 = vand.u32 %v6826, 4294901760
    %6828 = vmatpush1.msra.mxu0 %v6827
    %6829 = vmatprep.subr.mxu0 0.0
    %v6830 = vand.u32 %v43, 4294901760
    %v6831 = vsub.f32 %v43, %v6830
    %v6832 = vand.u32 %v6831, 4294901760
    %v6833 = vsub.f32 %v6831, %v6832
    %v6834 = vand.u32 %v6833, 4294901760
    %6835 = vmatpush1.msra.mxu0 %v6834
    %6836 = vmatprep.subr.mxu0 0.0
    %v6837 = vand.u32 %v42, 4294901760
    %v6838 = vsub.f32 %v42, %v6837
    %v6839 = vand.u32 %v6838, 4294901760
    %v6840 = vsub.f32 %v6838, %v6839
    %v6841 = vand.u32 %v6840, 4294901760
    %6842 = vmatpush1.msra.mxu0 %v6841
    %6843 = vmatprep.subr.mxu0 0.0
    %v6844 = vand.u32 %v41, 4294901760
    %v6845 = vsub.f32 %v41, %v6844
    %v6846 = vand.u32 %v6845, 4294901760
    %v6847 = vsub.f32 %v6845, %v6846
    %v6848 = vand.u32 %v6847, 4294901760
    %6849 = vmatpush1.msra.mxu0 %v6848
    %6850 = vmatprep.subr.mxu0 0.0
    %v6851 = vand.u32 %v40, 4294901760
    %v6852 = vsub.f32 %v40, %v6851
    %v6853 = vand.u32 %v6852, 4294901760
    %v6854 = vsub.f32 %v6852, %v6853
    %v6855 = vand.u32 %v6854, 4294901760
    %6856 = vmatpush1.msra.mxu0 %v6855
    %6857 = vmatprep.subr.mxu0 0.0
    %v6858 = vand.u32 %v39, 4294901760
    %v6859 = vsub.f32 %v39, %v6858
    %v6860 = vand.u32 %v6859, 4294901760
    %v6861 = vsub.f32 %v6859, %v6860
    %v6862 = vand.u32 %v6861, 4294901760
    %6863 = vmatpush1.msra.mxu0 %v6862
    %6864 = vmatprep.subr.mxu0 0.0
    %v6865 = vand.u32 %v38, 4294901760
    %v6866 = vsub.f32 %v38, %v6865
    %v6867 = vand.u32 %v6866, 4294901760
    %v6868 = vsub.f32 %v6866, %v6867
    %v6869 = vand.u32 %v6868, 4294901760
    %6870 = vmatpush1.msra.mxu0 %v6869
    %6871 = vmatprep.subr.mxu0 0.0
    %v6872 = vand.u32 %v37, 4294901760
    %v6873 = vsub.f32 %v37, %v6872
    %v6874 = vand.u32 %v6873, 4294901760
    %v6875 = vsub.f32 %v6873, %v6874
    %v6876 = vand.u32 %v6875, 4294901760
    %6877 = vmatpush1.msra.mxu0 %v6876
    %6878 = vmatprep.subr.mxu0 0.0
    %v6879 = vand.u32 %v36, 4294901760
    %v6880 = vsub.f32 %v36, %v6879
    %v6881 = vand.u32 %v6880, 4294901760
    %v6882 = vsub.f32 %v6880, %v6881
    %v6883 = vand.u32 %v6882, 4294901760
    %6884 = vmatpush1.msra.mxu0 %v6883
    %6885 = vmatprep.subr.mxu0 0.0
    %v6886 = vand.u32 %v35, 4294901760
    %v6887 = vsub.f32 %v35, %v6886
    %v6888 = vand.u32 %v6887, 4294901760
    %v6889 = vsub.f32 %v6887, %v6888
    %v6890 = vand.u32 %v6889, 4294901760
    %6891 = vmatpush1.msra.mxu0 %v6890
    %6892 = vmatprep.subr.mxu0 0.0
    %v6893 = vand.u32 %v34, 4294901760
    %v6894 = vsub.f32 %v34, %v6893
    %v6895 = vand.u32 %v6894, 4294901760
    %v6896 = vsub.f32 %v6894, %v6895
    %v6897 = vand.u32 %v6896, 4294901760
    %6898 = vmatpush1.msra.mxu0 %v6897
    %6899 = vmatprep.subr.mxu0 0.0
    %v6900 = vand.u32 %v33, 4294901760
    %v6901 = vsub.f32 %v33, %v6900
    %v6902 = vand.u32 %v6901, 4294901760
    %v6903 = vsub.f32 %v6901, %v6902
    %v6904 = vand.u32 %v6903, 4294901760
    %6905 = vmatpush1.msra.mxu0 %v6904
    %6906 = vmatprep.subr.mxu0 0.0
    %v6907 = vand.u32 %v32, 4294901760
    %v6908 = vsub.f32 %v32, %v6907
    %v6909 = vand.u32 %v6908, 4294901760
    %v6910 = vsub.f32 %v6908, %v6909
    %v6911 = vand.u32 %v6910, 4294901760
    %6912 = vmatpush1.msra.mxu0 %v6911
    %6913 = vmatprep.subr.mxu0 0.0
    %v6914 = vand.u32 %v31, 4294901760
    %v6915 = vsub.f32 %v31, %v6914
    %v6916 = vand.u32 %v6915, 4294901760
    %v6917 = vsub.f32 %v6915, %v6916
    %v6918 = vand.u32 %v6917, 4294901760
    %6919 = vmatpush1.msra.mxu0 %v6918
    %6920 = vmatprep.subr.mxu0 0.0
    %v6921 = vand.u32 %v30, 4294901760
    %v6922 = vsub.f32 %v30, %v6921
    %v6923 = vand.u32 %v6922, 4294901760
    %v6924 = vsub.f32 %v6922, %v6923
    %v6925 = vand.u32 %v6924, 4294901760
    %6926 = vmatpush1.msra.mxu0 %v6925
    %6927 = vmatprep.subr.mxu0 0.0
    %6928 = vmatpush2.msra.mxu0 0.0
    %6929 = vmatprep.subr.mxu0 0.0
    %6930 = vmatpush2.msra.mxu0 0.0
    %6931 = vmatprep.subr.mxu0 0.0
    %6932 = vmatpush2.msra.mxu0 0.0
    %6933 = vmatprep.subr.mxu0 0.0
    %6934 = vmatpush2.msra.mxu0 0.0
    %6935 = vmatprep.subr.mxu0 0.0
    %6936 = vmatpush2.msra.mxu0 0.0
    %6937 = vmatprep.subr.mxu0 0.0
    %6938 = vmatpush2.msra.mxu0 0.0
    %6939 = vmatprep.subr.mxu0 0.0
    %6940 = vmatpush2.msra.mxu0 0.0
    %6941 = vmatprep.subr.mxu0 0.0
    %6942 = vmatpush2.msra.mxu0 0.0
    %6943 = vmatprep.subr.mxu0 0.0
    %6944 = vmatpush2.msra.mxu0 0.0
    %6945 = vmatprep.subr.mxu0 0.0
    %6946 = vmatpush2.msra.mxu0 0.0
    %6947 = vmatprep.subr.mxu0 0.0
    %6948 = vmatpush2.msra.mxu0 0.0
    %6949 = vmatprep.subr.mxu0 0.0
    %6950 = vmatpush2.msra.mxu0 0.0
    %6951 = vmatprep.subr.mxu0 0.0
    %6952 = vmatpush2.msra.mxu0 0.0
    %6953 = vmatprep.subr.mxu0 0.0
    %6954 = vmatpush2.msra.mxu0 0.0
    %6955 = vmatprep.subr.mxu0 0.0
    %6956 = vmatpush2.msra.mxu0 0.0
    %6957 = vmatprep.subr.mxu0 0.0
    %6958 = vmatpush2.msra.mxu0 0.0
    %6959 = vmatprep.mubr.f32.mxu0 0.0
    %v6960 = vand.u32 %v6230, 4294901760
    %6961 = vmatmul.mubr.f32.gmra.mxu0 %v6960
    %v6962 = vpop.f32.mrf.mxu0
    %v6963 = vadd.f32 %v6812, %v6962
    %v6964 = vpop.f32.mrf.mxu0
    %6965 = vdwg.mxu0
    %6966 = vmatprep.subr.mxu0 0.0
    %v6967 = vand.u32 %v45, 4294901760
    %v6968 = vsub.f32 %v45, %v6967
    %6969 = vmatpush1.msra.mxu0 %v6968
    %6970 = vmatprep.subr.mxu0 0.0
    %v6971 = vand.u32 %v44, 4294901760
    %v6972 = vsub.f32 %v44, %v6971
    %6973 = vmatpush1.msra.mxu0 %v6972
    %6974 = vmatprep.subr.mxu0 0.0
    %v6975 = vand.u32 %v43, 4294901760
    %v6976 = vsub.f32 %v43, %v6975
    %6977 = vmatpush1.msra.mxu0 %v6976
    %6978 = vmatprep.subr.mxu0 0.0
    %v6979 = vand.u32 %v42, 4294901760
    %v6980 = vsub.f32 %v42, %v6979
    %6981 = vmatpush1.msra.mxu0 %v6980
    %6982 = vmatprep.subr.mxu0 0.0
    %v6983 = vand.u32 %v41, 4294901760
    %v6984 = vsub.f32 %v41, %v6983
    %6985 = vmatpush1.msra.mxu0 %v6984
    %6986 = vmatprep.subr.mxu0 0.0
    %v6987 = vand.u32 %v40, 4294901760
    %v6988 = vsub.f32 %v40, %v6987
    %6989 = vmatpush1.msra.mxu0 %v6988
    %6990 = vmatprep.subr.mxu0 0.0
    %v6991 = vand.u32 %v39, 4294901760
    %v6992 = vsub.f32 %v39, %v6991
    %6993 = vmatpush1.msra.mxu0 %v6992
    %6994 = vmatprep.subr.mxu0 0.0
    %v6995 = vand.u32 %v38, 4294901760
    %v6996 = vsub.f32 %v38, %v6995
    %6997 = vmatpush1.msra.mxu0 %v6996
    %6998 = vmatprep.subr.mxu0 0.0
    %v6999 = vand.u32 %v37, 4294901760
    %v7000 = vsub.f32 %v37, %v6999
    %7001 = vmatpush1.msra.mxu0 %v7000
    %7002 = vmatprep.subr.mxu0 0.0
    %v7003 = vand.u32 %v36, 4294901760
    %v7004 = vsub.f32 %v36, %v7003
    %7005 = vmatpush1.msra.mxu0 %v7004
    %7006 = vmatprep.subr.mxu0 0.0
    %v7007 = vand.u32 %v35, 4294901760
    %v7008 = vsub.f32 %v35, %v7007
    %7009 = vmatpush1.msra.mxu0 %v7008
    %7010 = vmatprep.subr.mxu0 0.0
    %v7011 = vand.u32 %v34, 4294901760
    %v7012 = vsub.f32 %v34, %v7011
    %7013 = vmatpush1.msra.mxu0 %v7012
    %7014 = vmatprep.subr.mxu0 0.0
    %v7015 = vand.u32 %v33, 4294901760
    %v7016 = vsub.f32 %v33, %v7015
    %7017 = vmatpush1.msra.mxu0 %v7016
    %7018 = vmatprep.subr.mxu0 0.0
    %v7019 = vand.u32 %v32, 4294901760
    %v7020 = vsub.f32 %v32, %v7019
    %7021 = vmatpush1.msra.mxu0 %v7020
    %7022 = vmatprep.subr.mxu0 0.0
    %v7023 = vand.u32 %v31, 4294901760
    %v7024 = vsub.f32 %v31, %v7023
    %7025 = vmatpush1.msra.mxu0 %v7024
    %7026 = vmatprep.subr.mxu0 0.0
    %v7027 = vand.u32 %v30, 4294901760
    %v7028 = vsub.f32 %v30, %v7027
    %7029 = vmatpush1.msra.mxu0 %v7028
    %7030 = vmatprep.subr.mxu0 0.0
    %7031 = vmatpush2.msra.mxu0 0.0
    %7032 = vmatprep.subr.mxu0 0.0
    %7033 = vmatpush2.msra.mxu0 0.0
    %7034 = vmatprep.subr.mxu0 0.0
    %7035 = vmatpush2.msra.mxu0 0.0
    %7036 = vmatprep.subr.mxu0 0.0
    %7037 = vmatpush2.msra.mxu0 0.0
    %7038 = vmatprep.subr.mxu0 0.0
    %7039 = vmatpush2.msra.mxu0 0.0
    %7040 = vmatprep.subr.mxu0 0.0
    %7041 = vmatpush2.msra.mxu0 0.0
    %7042 = vmatprep.subr.mxu0 0.0
    %7043 = vmatpush2.msra.mxu0 0.0
    %7044 = vmatprep.subr.mxu0 0.0
    %7045 = vmatpush2.msra.mxu0 0.0
    %7046 = vmatprep.subr.mxu0 0.0
    %7047 = vmatpush2.msra.mxu0 0.0
    %7048 = vmatprep.subr.mxu0 0.0
    %7049 = vmatpush2.msra.mxu0 0.0
    %7050 = vmatprep.subr.mxu0 0.0
    %7051 = vmatpush2.msra.mxu0 0.0
    %7052 = vmatprep.subr.mxu0 0.0
    %7053 = vmatpush2.msra.mxu0 0.0
    %7054 = vmatprep.subr.mxu0 0.0
    %7055 = vmatpush2.msra.mxu0 0.0
    %7056 = vmatprep.subr.mxu0 0.0
    %7057 = vmatpush2.msra.mxu0 0.0
    %7058 = vmatprep.subr.mxu0 0.0
    %7059 = vmatpush2.msra.mxu0 0.0
    %7060 = vmatprep.subr.mxu0 0.0
    %7061 = vmatpush2.msra.mxu0 0.0
    %7062 = vmatprep.mubr.f32.mxu0 0.0
    %v7063 = vand.u32 %v6230, 4294901760
    %v7064 = vsub.f32 %v6230, %v7063
    %7065 = vmatmul.mubr.f32.gmra.mxu0 %v7064
    %v7066 = vpop.f32.mrf.mxu0
    %v7067 = vadd.f32 %v6963, %v7066
    %v7068 = vpop.f32.mrf.mxu0
    %7069 = vdwg.mxu0
    %7070 = vmatprep.subr.mxu0 0.0
    %v7071 = vand.u32 %v45, 4294901760
    %7072 = vmatpush1.msra.mxu0 %v7071
    %7073 = vmatprep.subr.mxu0 0.0
    %v7074 = vand.u32 %v44, 4294901760
    %7075 = vmatpush1.msra.mxu0 %v7074
    %7076 = vmatprep.subr.mxu0 0.0
    %v7077 = vand.u32 %v43, 4294901760
    %7078 = vmatpush1.msra.mxu0 %v7077
    %7079 = vmatprep.subr.mxu0 0.0
    %v7080 = vand.u32 %v42, 4294901760
    %7081 = vmatpush1.msra.mxu0 %v7080
    %7082 = vmatprep.subr.mxu0 0.0
    %v7083 = vand.u32 %v41, 4294901760
    %7084 = vmatpush1.msra.mxu0 %v7083
    %7085 = vmatprep.subr.mxu0 0.0
    %v7086 = vand.u32 %v40, 4294901760
    %7087 = vmatpush1.msra.mxu0 %v7086
    %7088 = vmatprep.subr.mxu0 0.0
    %v7089 = vand.u32 %v39, 4294901760
    %7090 = vmatpush1.msra.mxu0 %v7089
    %7091 = vmatprep.subr.mxu0 0.0
    %v7092 = vand.u32 %v38, 4294901760
    %7093 = vmatpush1.msra.mxu0 %v7092
    %7094 = vmatprep.subr.mxu0 0.0
    %v7095 = vand.u32 %v37, 4294901760
    %7096 = vmatpush1.msra.mxu0 %v7095
    %7097 = vmatprep.subr.mxu0 0.0
    %v7098 = vand.u32 %v36, 4294901760
    %7099 = vmatpush1.msra.mxu0 %v7098
    %7100 = vmatprep.subr.mxu0 0.0
    %v7101 = vand.u32 %v35, 4294901760
    %7102 = vmatpush1.msra.mxu0 %v7101
    %7103 = vmatprep.subr.mxu0 0.0
    %v7104 = vand.u32 %v34, 4294901760
    %7105 = vmatpush1.msra.mxu0 %v7104
    %7106 = vmatprep.subr.mxu0 0.0
    %v7107 = vand.u32 %v33, 4294901760
    %7108 = vmatpush1.msra.mxu0 %v7107
    %7109 = vmatprep.subr.mxu0 0.0
    %v7110 = vand.u32 %v32, 4294901760
    %7111 = vmatpush1.msra.mxu0 %v7110
    %7112 = vmatprep.subr.mxu0 0.0
    %v7113 = vand.u32 %v31, 4294901760
    %7114 = vmatpush1.msra.mxu0 %v7113
    %7115 = vmatprep.subr.mxu0 0.0
    %v7116 = vand.u32 %v30, 4294901760
    %7117 = vmatpush1.msra.mxu0 %v7116
    %7118 = vmatprep.subr.mxu0 0.0
    %7119 = vmatpush2.msra.mxu0 0.0
    %7120 = vmatprep.subr.mxu0 0.0
    %7121 = vmatpush2.msra.mxu0 0.0
    %7122 = vmatprep.subr.mxu0 0.0
    %7123 = vmatpush2.msra.mxu0 0.0
    %7124 = vmatprep.subr.mxu0 0.0
    %7125 = vmatpush2.msra.mxu0 0.0
    %7126 = vmatprep.subr.mxu0 0.0
    %7127 = vmatpush2.msra.mxu0 0.0
    %7128 = vmatprep.subr.mxu0 0.0
    %7129 = vmatpush2.msra.mxu0 0.0
    %7130 = vmatprep.subr.mxu0 0.0
    %7131 = vmatpush2.msra.mxu0 0.0
    %7132 = vmatprep.subr.mxu0 0.0
    %7133 = vmatpush2.msra.mxu0 0.0
    %7134 = vmatprep.subr.mxu0 0.0
    %7135 = vmatpush2.msra.mxu0 0.0
    %7136 = vmatprep.subr.mxu0 0.0
    %7137 = vmatpush2.msra.mxu0 0.0
    %7138 = vmatprep.subr.mxu0 0.0
    %7139 = vmatpush2.msra.mxu0 0.0
    %7140 = vmatprep.subr.mxu0 0.0
    %7141 = vmatpush2.msra.mxu0 0.0
    %7142 = vmatprep.subr.mxu0 0.0
    %7143 = vmatpush2.msra.mxu0 0.0
    %7144 = vmatprep.subr.mxu0 0.0
    %7145 = vmatpush2.msra.mxu0 0.0
    %7146 = vmatprep.subr.mxu0 0.0
    %7147 = vmatpush2.msra.mxu0 0.0
    %7148 = vmatprep.subr.mxu0 0.0
    %7149 = vmatpush2.msra.mxu0 0.0
    %7150 = vmatprep.mubr.f32.mxu0 0.0
    %v7151 = vand.u32 %v6230, 4294901760
    %v7152 = vsub.f32 %v6230, %v7151
    %v7153 = vand.u32 %v7152, 4294901760
    %7154 = vmatmul.mubr.f32.gmra.mxu0 %v7153
    %v7155 = vpop.f32.mrf.mxu0
    %v7156 = vadd.f32 %v7067, %v7155
    %v7157 = vpop.f32.mrf.mxu0
    %7158 = vdwg.mxu0
    %7159 = vmatprep.subr.mxu0 0.0
    %v7160 = vand.u32 %v45, 4294901760
    %v7161 = vsub.f32 %v45, %v7160
    %v7162 = vand.u32 %v7161, 4294901760
    %7163 = vmatpush1.msra.mxu0 %v7162
    %7164 = vmatprep.subr.mxu0 0.0
    %v7165 = vand.u32 %v44, 4294901760
    %v7166 = vsub.f32 %v44, %v7165
    %v7167 = vand.u32 %v7166, 4294901760
    %7168 = vmatpush1.msra.mxu0 %v7167
    %7169 = vmatprep.subr.mxu0 0.0
    %v7170 = vand.u32 %v43, 4294901760
    %v7171 = vsub.f32 %v43, %v7170
    %v7172 = vand.u32 %v7171, 4294901760
    %7173 = vmatpush1.msra.mxu0 %v7172
    %7174 = vmatprep.subr.mxu0 0.0
    %v7175 = vand.u32 %v42, 4294901760
    %v7176 = vsub.f32 %v42, %v7175
    %v7177 = vand.u32 %v7176, 4294901760
    %7178 = vmatpush1.msra.mxu0 %v7177
    %7179 = vmatprep.subr.mxu0 0.0
    %v7180 = vand.u32 %v41, 4294901760
    %v7181 = vsub.f32 %v41, %v7180
    %v7182 = vand.u32 %v7181, 4294901760
    %7183 = vmatpush1.msra.mxu0 %v7182
    %7184 = vmatprep.subr.mxu0 0.0
    %v7185 = vand.u32 %v40, 4294901760
    %v7186 = vsub.f32 %v40, %v7185
    %v7187 = vand.u32 %v7186, 4294901760
    %7188 = vmatpush1.msra.mxu0 %v7187
    %7189 = vmatprep.subr.mxu0 0.0
    %v7190 = vand.u32 %v39, 4294901760
    %v7191 = vsub.f32 %v39, %v7190
    %v7192 = vand.u32 %v7191, 4294901760
    %7193 = vmatpush1.msra.mxu0 %v7192
    %7194 = vmatprep.subr.mxu0 0.0
    %v7195 = vand.u32 %v38, 4294901760
    %v7196 = vsub.f32 %v38, %v7195
    %v7197 = vand.u32 %v7196, 4294901760
    %7198 = vmatpush1.msra.mxu0 %v7197
    %7199 = vmatprep.subr.mxu0 0.0
    %v7200 = vand.u32 %v37, 4294901760
    %v7201 = vsub.f32 %v37, %v7200
    %v7202 = vand.u32 %v7201, 4294901760
    %7203 = vmatpush1.msra.mxu0 %v7202
    %7204 = vmatprep.subr.mxu0 0.0
    %v7205 = vand.u32 %v36, 4294901760
    %v7206 = vsub.f32 %v36, %v7205
    %v7207 = vand.u32 %v7206, 4294901760
    %7208 = vmatpush1.msra.mxu0 %v7207
    %7209 = vmatprep.subr.mxu0 0.0
    %v7210 = vand.u32 %v35, 4294901760
    %v7211 = vsub.f32 %v35, %v7210
    %v7212 = vand.u32 %v7211, 4294901760
    %7213 = vmatpush1.msra.mxu0 %v7212
    %7214 = vmatprep.subr.mxu0 0.0
    %v7215 = vand.u32 %v34, 4294901760
    %v7216 = vsub.f32 %v34, %v7215
    %v7217 = vand.u32 %v7216, 4294901760
    %7218 = vmatpush1.msra.mxu0 %v7217
    %7219 = vmatprep.subr.mxu0 0.0
    %v7220 = vand.u32 %v33, 4294901760
    %v7221 = vsub.f32 %v33, %v7220
    %v7222 = vand.u32 %v7221, 4294901760
    %7223 = vmatpush1.msra.mxu0 %v7222
    %7224 = vmatprep.subr.mxu0 0.0
    %v7225 = vand.u32 %v32, 4294901760
    %v7226 = vsub.f32 %v32, %v7225
    %v7227 = vand.u32 %v7226, 4294901760
    %7228 = vmatpush1.msra.mxu0 %v7227
    %7229 = vmatprep.subr.mxu0 0.0
    %v7230 = vand.u32 %v31, 4294901760
    %v7231 = vsub.f32 %v31, %v7230
    %v7232 = vand.u32 %v7231, 4294901760
    %7233 = vmatpush1.msra.mxu0 %v7232
    %7234 = vmatprep.subr.mxu0 0.0
    %v7235 = vand.u32 %v30, 4294901760
    %v7236 = vsub.f32 %v30, %v7235
    %v7237 = vand.u32 %v7236, 4294901760
    %7238 = vmatpush1.msra.mxu0 %v7237
    %7239 = vmatprep.subr.mxu0 0.0
    %7240 = vmatpush2.msra.mxu0 0.0
    %7241 = vmatprep.subr.mxu0 0.0
    %7242 = vmatpush2.msra.mxu0 0.0
    %7243 = vmatprep.subr.mxu0 0.0
    %7244 = vmatpush2.msra.mxu0 0.0
    %7245 = vmatprep.subr.mxu0 0.0
    %7246 = vmatpush2.msra.mxu0 0.0
    %7247 = vmatprep.subr.mxu0 0.0
    %7248 = vmatpush2.msra.mxu0 0.0
    %7249 = vmatprep.subr.mxu0 0.0
    %7250 = vmatpush2.msra.mxu0 0.0
    %7251 = vmatprep.subr.mxu0 0.0
    %7252 = vmatpush2.msra.mxu0 0.0
    %7253 = vmatprep.subr.mxu0 0.0
    %7254 = vmatpush2.msra.mxu0 0.0
    %7255 = vmatprep.subr.mxu0 0.0
    %7256 = vmatpush2.msra.mxu0 0.0
    %7257 = vmatprep.subr.mxu0 0.0
    %7258 = vmatpush2.msra.mxu0 0.0
    %7259 = vmatprep.subr.mxu0 0.0
    %7260 = vmatpush2.msra.mxu0 0.0
    %7261 = vmatprep.subr.mxu0 0.0
    %7262 = vmatpush2.msra.mxu0 0.0
    %7263 = vmatprep.subr.mxu0 0.0
    %7264 = vmatpush2.msra.mxu0 0.0
    %7265 = vmatprep.subr.mxu0 0.0
    %7266 = vmatpush2.msra.mxu0 0.0
    %7267 = vmatprep.subr.mxu0 0.0
    %7268 = vmatpush2.msra.mxu0 0.0
    %7269 = vmatprep.subr.mxu0 0.0
    %7270 = vmatpush2.msra.mxu0 0.0
    %7271 = vmatprep.mubr.f32.mxu0 0.0
    %v7272 = vand.u32 %v6230, 4294901760
    %7273 = vmatmul.mubr.f32.gmra.mxu0 %v7272
    %v7274 = vpop.f32.mrf.mxu0
    %v7275 = vadd.f32 %v7156, %v7274
    %v7276 = vpop.f32.mrf.mxu0
    %7277 = vdwg.mxu0
    %7278 = vmatprep.subr.mxu0 0.0
    %v7279 = vand.u32 %v45, 4294901760
    %7280 = vmatpush1.msra.mxu0 %v7279
    %7281 = vmatprep.subr.mxu0 0.0
    %v7282 = vand.u32 %v44, 4294901760
    %7283 = vmatpush1.msra.mxu0 %v7282
    %7284 = vmatprep.subr.mxu0 0.0
    %v7285 = vand.u32 %v43, 4294901760
    %7286 = vmatpush1.msra.mxu0 %v7285
    %7287 = vmatprep.subr.mxu0 0.0
    %v7288 = vand.u32 %v42, 4294901760
    %7289 = vmatpush1.msra.mxu0 %v7288
    %7290 = vmatprep.subr.mxu0 0.0
    %v7291 = vand.u32 %v41, 4294901760
    %7292 = vmatpush1.msra.mxu0 %v7291
    %7293 = vmatprep.subr.mxu0 0.0
    %v7294 = vand.u32 %v40, 4294901760
    %7295 = vmatpush1.msra.mxu0 %v7294
    %7296 = vmatprep.subr.mxu0 0.0
    %v7297 = vand.u32 %v39, 4294901760
    %7298 = vmatpush1.msra.mxu0 %v7297
    %7299 = vmatprep.subr.mxu0 0.0
    %v7300 = vand.u32 %v38, 4294901760
    %7301 = vmatpush1.msra.mxu0 %v7300
    %7302 = vmatprep.subr.mxu0 0.0
    %v7303 = vand.u32 %v37, 4294901760
    %7304 = vmatpush1.msra.mxu0 %v7303
    %7305 = vmatprep.subr.mxu0 0.0
    %v7306 = vand.u32 %v36, 4294901760
    %7307 = vmatpush1.msra.mxu0 %v7306
    %7308 = vmatprep.subr.mxu0 0.0
    %v7309 = vand.u32 %v35, 4294901760
    %7310 = vmatpush1.msra.mxu0 %v7309
    %7311 = vmatprep.subr.mxu0 0.0
    %v7312 = vand.u32 %v34, 4294901760
    %7313 = vmatpush1.msra.mxu0 %v7312
    %7314 = vmatprep.subr.mxu0 0.0
    %v7315 = vand.u32 %v33, 4294901760
    %7316 = vmatpush1.msra.mxu0 %v7315
    %7317 = vmatprep.subr.mxu0 0.0
    %v7318 = vand.u32 %v32, 4294901760
    %7319 = vmatpush1.msra.mxu0 %v7318
    %7320 = vmatprep.subr.mxu0 0.0
    %v7321 = vand.u32 %v31, 4294901760
    %7322 = vmatpush1.msra.mxu0 %v7321
    %7323 = vmatprep.subr.mxu0 0.0
    %v7324 = vand.u32 %v30, 4294901760
    %7325 = vmatpush1.msra.mxu0 %v7324
    %7326 = vmatprep.subr.mxu0 0.0
    %7327 = vmatpush2.msra.mxu0 0.0
    %7328 = vmatprep.subr.mxu0 0.0
    %7329 = vmatpush2.msra.mxu0 0.0
    %7330 = vmatprep.subr.mxu0 0.0
    %7331 = vmatpush2.msra.mxu0 0.0
    %7332 = vmatprep.subr.mxu0 0.0
    %7333 = vmatpush2.msra.mxu0 0.0
    %7334 = vmatprep.subr.mxu0 0.0
    %7335 = vmatpush2.msra.mxu0 0.0
    %7336 = vmatprep.subr.mxu0 0.0
    %7337 = vmatpush2.msra.mxu0 0.0
    %7338 = vmatprep.subr.mxu0 0.0
    %7339 = vmatpush2.msra.mxu0 0.0
    %7340 = vmatprep.subr.mxu0 0.0
    %7341 = vmatpush2.msra.mxu0 0.0
    %7342 = vmatprep.subr.mxu0 0.0
    %7343 = vmatpush2.msra.mxu0 0.0
    %7344 = vmatprep.subr.mxu0 0.0
    %7345 = vmatpush2.msra.mxu0 0.0
    %7346 = vmatprep.subr.mxu0 0.0
    %7347 = vmatpush2.msra.mxu0 0.0
    %7348 = vmatprep.subr.mxu0 0.0
    %7349 = vmatpush2.msra.mxu0 0.0
    %7350 = vmatprep.subr.mxu0 0.0
    %7351 = vmatpush2.msra.mxu0 0.0
    %7352 = vmatprep.subr.mxu0 0.0
    %7353 = vmatpush2.msra.mxu0 0.0
    %7354 = vmatprep.subr.mxu0 0.0
    %7355 = vmatpush2.msra.mxu0 0.0
    %7356 = vmatprep.subr.mxu0 0.0
    %7357 = vmatpush2.msra.mxu0 0.0
    %7358 = vmatprep.mubr.f32.mxu0 0.0
    %v7359 = vand.u32 %v6230, 4294901760
    %7360 = vmatmul.mubr.f32.gmra.mxu0 %v7359
    %v7361 = vpop.f32.mrf.mxu0
    %v7362 = vadd.f32 %v7275, %v7361
    %v7363 = vpop.f32.mrf.mxu0
    %7364 = vdwg.mxu0
    %v7365 = vadd.f32 %v6721, %v7362
    %v7366 = vtanh.pop %v7365
    %s7367 = scalar_lea.vmem [#allocation2], 48
    %7368 = vst [vmem:[%s7367] sm:$0xff] %v7366
    %v7369 = vld [vmem:[%s0 + $0x7] sm:$0x1]
    %v7370 = vld [vmem:[%s0 + $0xf] sm:$0x1]
    %v7371 = vld [vmem:[%s0 + $0x17] sm:$0x1]
    %v7372 = vld [vmem:[%s0 + $0x1f] sm:$0x1]
    %v7373 = vld [vmem:[%s0 + $0x27] sm:$0x1]
    %v7374 = vld [vmem:[%s0 + $0x2f] sm:$0x1]
    %v7375 = vld [vmem:[%s0 + $0x37] sm:$0x1]
    %v7376 = vld [vmem:[%s0 + $0x3f] sm:$0x1]
    %v7385 = vrot.slane %v7370, 7
    %v7386 = vsel %vm69, %v7385, %v7369
    %v7387 = vrot.slane %v7371, 6
    %v7388 = vsel %vm72, %v7387, %v7386
    %v7389 = vrot.slane %v7372, 5
    %v7390 = vsel %vm75, %v7389, %v7388
    %v7391 = vrot.slane %v7373, 4
    %v7392 = vsel %vm78, %v7391, %v7390
    %v7393 = vrot.slane %v7374, 3
    %v7394 = vsel %vm81, %v7393, %v7392
    %v7395 = vrot.slane %v7375, 2
    %v7396 = vsel %vm84, %v7395, %v7394
    %v7397 = vrot.slane %v7376, 1
    %v7398 = vsel %vm87, %v7397, %v7396
    %v7399 = vsel %vm89, %v7398, 0
    %7401 = vmatprep.subr.mxu0 0.0
    %7402 = vmatpush1.msra.mxu0 0.0
    %7403 = vmatprep.subr.mxu0 0.0
    %7404 = vmatpush1.msra.mxu0 0.0
    %7405 = vmatprep.subr.mxu0 0.0
    %7406 = vmatpush1.msra.mxu0 0.0
    %7407 = vmatprep.subr.mxu0 0.0
    %7408 = vmatpush1.msra.mxu0 0.0
    %7409 = vmatprep.subr.mxu0 0.0
    %7410 = vmatpush1.msra.mxu0 0.0
    %7411 = vmatprep.subr.mxu0 0.0
    %7412 = vmatpush1.msra.mxu0 0.0
    %7413 = vmatprep.subr.mxu0 0.0
    %7414 = vmatpush1.msra.mxu0 0.0
    %7415 = vmatprep.subr.mxu0 0.0
    %7416 = vmatpush1.msra.mxu0 0.0
    %7417 = vmatprep.subr.mxu0 0.0
    %7418 = vmatpush1.msra.mxu0 0.0
    %7419 = vmatprep.subr.mxu0 0.0
    %7420 = vmatpush1.msra.mxu0 0.0
    %7421 = vmatprep.subr.mxu0 0.0
    %7422 = vmatpush1.msra.mxu0 0.0
    %7423 = vmatprep.subr.mxu0 0.0
    %7424 = vmatpush1.msra.mxu0 0.0
    %7425 = vmatprep.subr.mxu0 0.0
    %7426 = vmatpush1.msra.mxu0 0.0
    %7427 = vmatprep.subr.mxu0 0.0
    %7428 = vmatpush1.msra.mxu0 0.0
    %7429 = vmatprep.subr.mxu0 0.0
    %v7430 = vand.u32 %v28, 4294901760
    %7431 = vmatpush1.msra.mxu0 %v7430
    %7432 = vmatprep.subr.mxu0 0.0
    %v7433 = vand.u32 %v27, 4294901760
    %7434 = vmatpush1.msra.mxu0 %v7433
    %7435 = vmatprep.subr.mxu0 0.0
    %7436 = vmatpush2.msra.mxu0 0.0
    %7437 = vmatprep.subr.mxu0 0.0
    %7438 = vmatpush2.msra.mxu0 0.0
    %7439 = vmatprep.subr.mxu0 0.0
    %7440 = vmatpush2.msra.mxu0 0.0
    %7441 = vmatprep.subr.mxu0 0.0
    %7442 = vmatpush2.msra.mxu0 0.0
    %7443 = vmatprep.subr.mxu0 0.0
    %7444 = vmatpush2.msra.mxu0 0.0
    %7445 = vmatprep.subr.mxu0 0.0
    %7446 = vmatpush2.msra.mxu0 0.0
    %7447 = vmatprep.subr.mxu0 0.0
    %7448 = vmatpush2.msra.mxu0 0.0
    %7449 = vmatprep.subr.mxu0 0.0
    %7450 = vmatpush2.msra.mxu0 0.0
    %7451 = vmatprep.subr.mxu0 0.0
    %7452 = vmatpush2.msra.mxu0 0.0
    %7453 = vmatprep.subr.mxu0 0.0
    %7454 = vmatpush2.msra.mxu0 0.0
    %7455 = vmatprep.subr.mxu0 0.0
    %7456 = vmatpush2.msra.mxu0 0.0
    %7457 = vmatprep.subr.mxu0 0.0
    %7458 = vmatpush2.msra.mxu0 0.0
    %7459 = vmatprep.subr.mxu0 0.0
    %7460 = vmatpush2.msra.mxu0 0.0
    %7461 = vmatprep.subr.mxu0 0.0
    %7462 = vmatpush2.msra.mxu0 0.0
    %7463 = vmatprep.subr.mxu0 0.0
    %7464 = vmatpush2.msra.mxu0 0.0
    %7465 = vmatprep.subr.mxu0 0.0
    %7466 = vmatpush2.msra.mxu0 0.0
    %7467 = vmatprep.mubr.f32.mxu0 0.0
    %v7468 = vand.u32 %v7399, 4294901760
    %v7469 = vsub.f32 %v7399, %v7468
    %v7470 = vand.u32 %v7469, 4294901760
    %v7471 = vsub.f32 %v7469, %v7470
    %v7472 = vand.u32 %v7471, 4294901760
    %7473 = vmatmul.mubr.f32.gmra.mxu0 %v7472
    %v7474 = vpop.f32.mrf.mxu0
    %v7475 = vadd.f32 %v58, %v7474
    %v7476 = vpop.f32.mrf.mxu0
    %7477 = vdwg.mxu0
    %7478 = vmatprep.subr.mxu0 0.0
    %7479 = vmatpush1.msra.mxu0 0.0
    %7480 = vmatprep.subr.mxu0 0.0
    %7481 = vmatpush1.msra.mxu0 0.0
    %7482 = vmatprep.subr.mxu0 0.0
    %7483 = vmatpush1.msra.mxu0 0.0
    %7484 = vmatprep.subr.mxu0 0.0
    %7485 = vmatpush1.msra.mxu0 0.0
    %7486 = vmatprep.subr.mxu0 0.0
    %7487 = vmatpush1.msra.mxu0 0.0
    %7488 = vmatprep.subr.mxu0 0.0
    %7489 = vmatpush1.msra.mxu0 0.0
    %7490 = vmatprep.subr.mxu0 0.0
    %7491 = vmatpush1.msra.mxu0 0.0
    %7492 = vmatprep.subr.mxu0 0.0
    %7493 = vmatpush1.msra.mxu0 0.0
    %7494 = vmatprep.subr.mxu0 0.0
    %7495 = vmatpush1.msra.mxu0 0.0
    %7496 = vmatprep.subr.mxu0 0.0
    %7497 = vmatpush1.msra.mxu0 0.0
    %7498 = vmatprep.subr.mxu0 0.0
    %7499 = vmatpush1.msra.mxu0 0.0
    %7500 = vmatprep.subr.mxu0 0.0
    %7501 = vmatpush1.msra.mxu0 0.0
    %7502 = vmatprep.subr.mxu0 0.0
    %7503 = vmatpush1.msra.mxu0 0.0
    %7504 = vmatprep.subr.mxu0 0.0
    %7505 = vmatpush1.msra.mxu0 0.0
    %7506 = vmatprep.subr.mxu0 0.0
    %v7507 = vand.u32 %v28, 4294901760
    %v7508 = vsub.f32 %v28, %v7507
    %v7509 = vand.u32 %v7508, 4294901760
    %v7510 = vsub.f32 %v7508, %v7509
    %v7511 = vand.u32 %v7510, 4294901760
    %7512 = vmatpush1.msra.mxu0 %v7511
    %7513 = vmatprep.subr.mxu0 0.0
    %v7514 = vand.u32 %v27, 4294901760
    %v7515 = vsub.f32 %v27, %v7514
    %v7516 = vand.u32 %v7515, 4294901760
    %v7517 = vsub.f32 %v7515, %v7516
    %v7518 = vand.u32 %v7517, 4294901760
    %7519 = vmatpush1.msra.mxu0 %v7518
    %7520 = vmatprep.subr.mxu0 0.0
    %7521 = vmatpush2.msra.mxu0 0.0
    %7522 = vmatprep.subr.mxu0 0.0
    %7523 = vmatpush2.msra.mxu0 0.0
    %7524 = vmatprep.subr.mxu0 0.0
    %7525 = vmatpush2.msra.mxu0 0.0
    %7526 = vmatprep.subr.mxu0 0.0
    %7527 = vmatpush2.msra.mxu0 0.0
    %7528 = vmatprep.subr.mxu0 0.0
    %7529 = vmatpush2.msra.mxu0 0.0
    %7530 = vmatprep.subr.mxu0 0.0
    %7531 = vmatpush2.msra.mxu0 0.0
    %7532 = vmatprep.subr.mxu0 0.0
    %7533 = vmatpush2.msra.mxu0 0.0
    %7534 = vmatprep.subr.mxu0 0.0
    %7535 = vmatpush2.msra.mxu0 0.0
    %7536 = vmatprep.subr.mxu0 0.0
    %7537 = vmatpush2.msra.mxu0 0.0
    %7538 = vmatprep.subr.mxu0 0.0
    %7539 = vmatpush2.msra.mxu0 0.0
    %7540 = vmatprep.subr.mxu0 0.0
    %7541 = vmatpush2.msra.mxu0 0.0
    %7542 = vmatprep.subr.mxu0 0.0
    %7543 = vmatpush2.msra.mxu0 0.0
    %7544 = vmatprep.subr.mxu0 0.0
    %7545 = vmatpush2.msra.mxu0 0.0
    %7546 = vmatprep.subr.mxu0 0.0
    %7547 = vmatpush2.msra.mxu0 0.0
    %7548 = vmatprep.subr.mxu0 0.0
    %7549 = vmatpush2.msra.mxu0 0.0
    %7550 = vmatprep.subr.mxu0 0.0
    %7551 = vmatpush2.msra.mxu0 0.0
    %7552 = vmatprep.mubr.f32.mxu0 0.0
    %v7553 = vand.u32 %v7399, 4294901760
    %7554 = vmatmul.mubr.f32.gmra.mxu0 %v7553
    %v7555 = vpop.f32.mrf.mxu0
    %v7556 = vadd.f32 %v7475, %v7555
    %v7557 = vpop.f32.mrf.mxu0
    %7558 = vdwg.mxu0
    %7559 = vmatprep.subr.mxu0 0.0
    %7560 = vmatpush1.msra.mxu0 0.0
    %7561 = vmatprep.subr.mxu0 0.0
    %7562 = vmatpush1.msra.mxu0 0.0
    %7563 = vmatprep.subr.mxu0 0.0
    %7564 = vmatpush1.msra.mxu0 0.0
    %7565 = vmatprep.subr.mxu0 0.0
    %7566 = vmatpush1.msra.mxu0 0.0
    %7567 = vmatprep.subr.mxu0 0.0
    %7568 = vmatpush1.msra.mxu0 0.0
    %7569 = vmatprep.subr.mxu0 0.0
    %7570 = vmatpush1.msra.mxu0 0.0
    %7571 = vmatprep.subr.mxu0 0.0
    %7572 = vmatpush1.msra.mxu0 0.0
    %7573 = vmatprep.subr.mxu0 0.0
    %7574 = vmatpush1.msra.mxu0 0.0
    %7575 = vmatprep.subr.mxu0 0.0
    %7576 = vmatpush1.msra.mxu0 0.0
    %7577 = vmatprep.subr.mxu0 0.0
    %7578 = vmatpush1.msra.mxu0 0.0
    %7579 = vmatprep.subr.mxu0 0.0
    %7580 = vmatpush1.msra.mxu0 0.0
    %7581 = vmatprep.subr.mxu0 0.0
    %7582 = vmatpush1.msra.mxu0 0.0
    %7583 = vmatprep.subr.mxu0 0.0
    %7584 = vmatpush1.msra.mxu0 0.0
    %7585 = vmatprep.subr.mxu0 0.0
    %7586 = vmatpush1.msra.mxu0 0.0
    %7587 = vmatprep.subr.mxu0 0.0
    %v7588 = vand.u32 %v28, 4294901760
    %v7589 = vsub.f32 %v28, %v7588
    %7590 = vmatpush1.msra.mxu0 %v7589
    %7591 = vmatprep.subr.mxu0 0.0
    %v7592 = vand.u32 %v27, 4294901760
    %v7593 = vsub.f32 %v27, %v7592
    %7594 = vmatpush1.msra.mxu0 %v7593
    %7595 = vmatprep.subr.mxu0 0.0
    %7596 = vmatpush2.msra.mxu0 0.0
    %7597 = vmatprep.subr.mxu0 0.0
    %7598 = vmatpush2.msra.mxu0 0.0
    %7599 = vmatprep.subr.mxu0 0.0
    %7600 = vmatpush2.msra.mxu0 0.0
    %7601 = vmatprep.subr.mxu0 0.0
    %7602 = vmatpush2.msra.mxu0 0.0
    %7603 = vmatprep.subr.mxu0 0.0
    %7604 = vmatpush2.msra.mxu0 0.0
    %7605 = vmatprep.subr.mxu0 0.0
    %7606 = vmatpush2.msra.mxu0 0.0
    %7607 = vmatprep.subr.mxu0 0.0
    %7608 = vmatpush2.msra.mxu0 0.0
    %7609 = vmatprep.subr.mxu0 0.0
    %7610 = vmatpush2.msra.mxu0 0.0
    %7611 = vmatprep.subr.mxu0 0.0
    %7612 = vmatpush2.msra.mxu0 0.0
    %7613 = vmatprep.subr.mxu0 0.0
    %7614 = vmatpush2.msra.mxu0 0.0
    %7615 = vmatprep.subr.mxu0 0.0
    %7616 = vmatpush2.msra.mxu0 0.0
    %7617 = vmatprep.subr.mxu0 0.0
    %7618 = vmatpush2.msra.mxu0 0.0
    %7619 = vmatprep.subr.mxu0 0.0
    %7620 = vmatpush2.msra.mxu0 0.0
    %7621 = vmatprep.subr.mxu0 0.0
    %7622 = vmatpush2.msra.mxu0 0.0
    %7623 = vmatprep.subr.mxu0 0.0
    %7624 = vmatpush2.msra.mxu0 0.0
    %7625 = vmatprep.subr.mxu0 0.0
    %7626 = vmatpush2.msra.mxu0 0.0
    %7627 = vmatprep.mubr.f32.mxu0 0.0
    %v7628 = vand.u32 %v7399, 4294901760
    %v7629 = vsub.f32 %v7399, %v7628
    %7630 = vmatmul.mubr.f32.gmra.mxu0 %v7629
    %v7631 = vpop.f32.mrf.mxu0
    %v7632 = vadd.f32 %v7556, %v7631
    %v7633 = vpop.f32.mrf.mxu0
    %7634 = vdwg.mxu0
    %7635 = vmatprep.subr.mxu0 0.0
    %7636 = vmatpush1.msra.mxu0 0.0
    %7637 = vmatprep.subr.mxu0 0.0
    %7638 = vmatpush1.msra.mxu0 0.0
    %7639 = vmatprep.subr.mxu0 0.0
    %7640 = vmatpush1.msra.mxu0 0.0
    %7641 = vmatprep.subr.mxu0 0.0
    %7642 = vmatpush1.msra.mxu0 0.0
    %7643 = vmatprep.subr.mxu0 0.0
    %7644 = vmatpush1.msra.mxu0 0.0
    %7645 = vmatprep.subr.mxu0 0.0
    %7646 = vmatpush1.msra.mxu0 0.0
    %7647 = vmatprep.subr.mxu0 0.0
    %7648 = vmatpush1.msra.mxu0 0.0
    %7649 = vmatprep.subr.mxu0 0.0
    %7650 = vmatpush1.msra.mxu0 0.0
    %7651 = vmatprep.subr.mxu0 0.0
    %7652 = vmatpush1.msra.mxu0 0.0
    %7653 = vmatprep.subr.mxu0 0.0
    %7654 = vmatpush1.msra.mxu0 0.0
    %7655 = vmatprep.subr.mxu0 0.0
    %7656 = vmatpush1.msra.mxu0 0.0
    %7657 = vmatprep.subr.mxu0 0.0
    %7658 = vmatpush1.msra.mxu0 0.0
    %7659 = vmatprep.subr.mxu0 0.0
    %7660 = vmatpush1.msra.mxu0 0.0
    %7661 = vmatprep.subr.mxu0 0.0
    %7662 = vmatpush1.msra.mxu0 0.0
    %7663 = vmatprep.subr.mxu0 0.0
    %v7664 = vand.u32 %v28, 4294901760
    %7665 = vmatpush1.msra.mxu0 %v7664
    %7666 = vmatprep.subr.mxu0 0.0
    %v7667 = vand.u32 %v27, 4294901760
    %7668 = vmatpush1.msra.mxu0 %v7667
    %7669 = vmatprep.subr.mxu0 0.0
    %7670 = vmatpush2.msra.mxu0 0.0
    %7671 = vmatprep.subr.mxu0 0.0
    %7672 = vmatpush2.msra.mxu0 0.0
    %7673 = vmatprep.subr.mxu0 0.0
    %7674 = vmatpush2.msra.mxu0 0.0
    %7675 = vmatprep.subr.mxu0 0.0
    %7676 = vmatpush2.msra.mxu0 0.0
    %7677 = vmatprep.subr.mxu0 0.0
    %7678 = vmatpush2.msra.mxu0 0.0
    %7679 = vmatprep.subr.mxu0 0.0
    %7680 = vmatpush2.msra.mxu0 0.0
    %7681 = vmatprep.subr.mxu0 0.0
    %7682 = vmatpush2.msra.mxu0 0.0
    %7683 = vmatprep.subr.mxu0 0.0
    %7684 = vmatpush2.msra.mxu0 0.0
    %7685 = vmatprep.subr.mxu0 0.0
    %7686 = vmatpush2.msra.mxu0 0.0
    %7687 = vmatprep.subr.mxu0 0.0
    %7688 = vmatpush2.msra.mxu0 0.0
    %7689 = vmatprep.subr.mxu0 0.0
    %7690 = vmatpush2.msra.mxu0 0.0
    %7691 = vmatprep.subr.mxu0 0.0
    %7692 = vmatpush2.msra.mxu0 0.0
    %7693 = vmatprep.subr.mxu0 0.0
    %7694 = vmatpush2.msra.mxu0 0.0
    %7695 = vmatprep.subr.mxu0 0.0
    %7696 = vmatpush2.msra.mxu0 0.0
    %7697 = vmatprep.subr.mxu0 0.0
    %7698 = vmatpush2.msra.mxu0 0.0
    %7699 = vmatprep.subr.mxu0 0.0
    %7700 = vmatpush2.msra.mxu0 0.0
    %7701 = vmatprep.mubr.f32.mxu0 0.0
    %v7702 = vand.u32 %v7399, 4294901760
    %v7703 = vsub.f32 %v7399, %v7702
    %v7704 = vand.u32 %v7703, 4294901760
    %7705 = vmatmul.mubr.f32.gmra.mxu0 %v7704
    %v7706 = vpop.f32.mrf.mxu0
    %v7707 = vadd.f32 %v7632, %v7706
    %v7708 = vpop.f32.mrf.mxu0
    %7709 = vdwg.mxu0
    %7710 = vmatprep.subr.mxu0 0.0
    %7711 = vmatpush1.msra.mxu0 0.0
    %7712 = vmatprep.subr.mxu0 0.0
    %7713 = vmatpush1.msra.mxu0 0.0
    %7714 = vmatprep.subr.mxu0 0.0
    %7715 = vmatpush1.msra.mxu0 0.0
    %7716 = vmatprep.subr.mxu0 0.0
    %7717 = vmatpush1.msra.mxu0 0.0
    %7718 = vmatprep.subr.mxu0 0.0
    %7719 = vmatpush1.msra.mxu0 0.0
    %7720 = vmatprep.subr.mxu0 0.0
    %7721 = vmatpush1.msra.mxu0 0.0
    %7722 = vmatprep.subr.mxu0 0.0
    %7723 = vmatpush1.msra.mxu0 0.0
    %7724 = vmatprep.subr.mxu0 0.0
    %7725 = vmatpush1.msra.mxu0 0.0
    %7726 = vmatprep.subr.mxu0 0.0
    %7727 = vmatpush1.msra.mxu0 0.0
    %7728 = vmatprep.subr.mxu0 0.0
    %7729 = vmatpush1.msra.mxu0 0.0
    %7730 = vmatprep.subr.mxu0 0.0
    %7731 = vmatpush1.msra.mxu0 0.0
    %7732 = vmatprep.subr.mxu0 0.0
    %7733 = vmatpush1.msra.mxu0 0.0
    %7734 = vmatprep.subr.mxu0 0.0
    %7735 = vmatpush1.msra.mxu0 0.0
    %7736 = vmatprep.subr.mxu0 0.0
    %7737 = vmatpush1.msra.mxu0 0.0
    %7738 = vmatprep.subr.mxu0 0.0
    %v7739 = vand.u32 %v28, 4294901760
    %v7740 = vsub.f32 %v28, %v7739
    %v7741 = vand.u32 %v7740, 4294901760
    %7742 = vmatpush1.msra.mxu0 %v7741
    %7743 = vmatprep.subr.mxu0 0.0
    %v7744 = vand.u32 %v27, 4294901760
    %v7745 = vsub.f32 %v27, %v7744
    %v7746 = vand.u32 %v7745, 4294901760
    %7747 = vmatpush1.msra.mxu0 %v7746
    %7748 = vmatprep.subr.mxu0 0.0
    %7749 = vmatpush2.msra.mxu0 0.0
    %7750 = vmatprep.subr.mxu0 0.0
    %7751 = vmatpush2.msra.mxu0 0.0
    %7752 = vmatprep.subr.mxu0 0.0
    %7753 = vmatpush2.msra.mxu0 0.0
    %7754 = vmatprep.subr.mxu0 0.0
    %7755 = vmatpush2.msra.mxu0 0.0
    %7756 = vmatprep.subr.mxu0 0.0
    %7757 = vmatpush2.msra.mxu0 0.0
    %7758 = vmatprep.subr.mxu0 0.0
    %7759 = vmatpush2.msra.mxu0 0.0
    %7760 = vmatprep.subr.mxu0 0.0
    %7761 = vmatpush2.msra.mxu0 0.0
    %7762 = vmatprep.subr.mxu0 0.0
    %7763 = vmatpush2.msra.mxu0 0.0
    %7764 = vmatprep.subr.mxu0 0.0
    %7765 = vmatpush2.msra.mxu0 0.0
    %7766 = vmatprep.subr.mxu0 0.0
    %7767 = vmatpush2.msra.mxu0 0.0
    %7768 = vmatprep.subr.mxu0 0.0
    %7769 = vmatpush2.msra.mxu0 0.0
    %7770 = vmatprep.subr.mxu0 0.0
    %7771 = vmatpush2.msra.mxu0 0.0
    %7772 = vmatprep.subr.mxu0 0.0
    %7773 = vmatpush2.msra.mxu0 0.0
    %7774 = vmatprep.subr.mxu0 0.0
    %7775 = vmatpush2.msra.mxu0 0.0
    %7776 = vmatprep.subr.mxu0 0.0
    %7777 = vmatpush2.msra.mxu0 0.0
    %7778 = vmatprep.subr.mxu0 0.0
    %7779 = vmatpush2.msra.mxu0 0.0
    %7780 = vmatprep.mubr.f32.mxu0 0.0
    %v7781 = vand.u32 %v7399, 4294901760
    %7782 = vmatmul.mubr.f32.gmra.mxu0 %v7781
    %v7783 = vpop.f32.mrf.mxu0
    %v7784 = vadd.f32 %v7707, %v7783
    %v7785 = vpop.f32.mrf.mxu0
    %7786 = vdwg.mxu0
    %7787 = vmatprep.subr.mxu0 0.0
    %7788 = vmatpush1.msra.mxu0 0.0
    %7789 = vmatprep.subr.mxu0 0.0
    %7790 = vmatpush1.msra.mxu0 0.0
    %7791 = vmatprep.subr.mxu0 0.0
    %7792 = vmatpush1.msra.mxu0 0.0
    %7793 = vmatprep.subr.mxu0 0.0
    %7794 = vmatpush1.msra.mxu0 0.0
    %7795 = vmatprep.subr.mxu0 0.0
    %7796 = vmatpush1.msra.mxu0 0.0
    %7797 = vmatprep.subr.mxu0 0.0
    %7798 = vmatpush1.msra.mxu0 0.0
    %7799 = vmatprep.subr.mxu0 0.0
    %7800 = vmatpush1.msra.mxu0 0.0
    %7801 = vmatprep.subr.mxu0 0.0
    %7802 = vmatpush1.msra.mxu0 0.0
    %7803 = vmatprep.subr.mxu0 0.0
    %7804 = vmatpush1.msra.mxu0 0.0
    %7805 = vmatprep.subr.mxu0 0.0
    %7806 = vmatpush1.msra.mxu0 0.0
    %7807 = vmatprep.subr.mxu0 0.0
    %7808 = vmatpush1.msra.mxu0 0.0
    %7809 = vmatprep.subr.mxu0 0.0
    %7810 = vmatpush1.msra.mxu0 0.0
    %7811 = vmatprep.subr.mxu0 0.0
    %7812 = vmatpush1.msra.mxu0 0.0
    %7813 = vmatprep.subr.mxu0 0.0
    %7814 = vmatpush1.msra.mxu0 0.0
    %7815 = vmatprep.subr.mxu0 0.0
    %v7816 = vand.u32 %v28, 4294901760
    %7817 = vmatpush1.msra.mxu0 %v7816
    %7818 = vmatprep.subr.mxu0 0.0
    %v7819 = vand.u32 %v27, 4294901760
    %7820 = vmatpush1.msra.mxu0 %v7819
    %7821 = vmatprep.subr.mxu0 0.0
    %7822 = vmatpush2.msra.mxu0 0.0
    %7823 = vmatprep.subr.mxu0 0.0
    %7824 = vmatpush2.msra.mxu0 0.0
    %7825 = vmatprep.subr.mxu0 0.0
    %7826 = vmatpush2.msra.mxu0 0.0
    %7827 = vmatprep.subr.mxu0 0.0
    %7828 = vmatpush2.msra.mxu0 0.0
    %7829 = vmatprep.subr.mxu0 0.0
    %7830 = vmatpush2.msra.mxu0 0.0
    %7831 = vmatprep.subr.mxu0 0.0
    %7832 = vmatpush2.msra.mxu0 0.0
    %7833 = vmatprep.subr.mxu0 0.0
    %7834 = vmatpush2.msra.mxu0 0.0
    %7835 = vmatprep.subr.mxu0 0.0
    %7836 = vmatpush2.msra.mxu0 0.0
    %7837 = vmatprep.subr.mxu0 0.0
    %7838 = vmatpush2.msra.mxu0 0.0
    %7839 = vmatprep.subr.mxu0 0.0
    %7840 = vmatpush2.msra.mxu0 0.0
    %7841 = vmatprep.subr.mxu0 0.0
    %7842 = vmatpush2.msra.mxu0 0.0
    %7843 = vmatprep.subr.mxu0 0.0
    %7844 = vmatpush2.msra.mxu0 0.0
    %7845 = vmatprep.subr.mxu0 0.0
    %7846 = vmatpush2.msra.mxu0 0.0
    %7847 = vmatprep.subr.mxu0 0.0
    %7848 = vmatpush2.msra.mxu0 0.0
    %7849 = vmatprep.subr.mxu0 0.0
    %7850 = vmatpush2.msra.mxu0 0.0
    %7851 = vmatprep.subr.mxu0 0.0
    %7852 = vmatpush2.msra.mxu0 0.0
    %7853 = vmatprep.mubr.f32.mxu0 0.0
    %v7854 = vand.u32 %v7399, 4294901760
    %7855 = vmatmul.mubr.f32.gmra.mxu0 %v7854
    %v7856 = vpop.f32.mrf.mxu0
    %v7857 = vadd.f32 %v7784, %v7856
    %v7858 = vpop.f32.mrf.mxu0
    %7859 = vdwg.mxu0
    %7860 = vmatprep.subr.mxu0 0.0
    %v7861 = vand.u32 %v45, 4294901760
    %7862 = vmatpush1.msra.mxu0 %v7861
    %7863 = vmatprep.subr.mxu0 0.0
    %v7864 = vand.u32 %v44, 4294901760
    %7865 = vmatpush1.msra.mxu0 %v7864
    %7866 = vmatprep.subr.mxu0 0.0
    %v7867 = vand.u32 %v43, 4294901760
    %7868 = vmatpush1.msra.mxu0 %v7867
    %7869 = vmatprep.subr.mxu0 0.0
    %v7870 = vand.u32 %v42, 4294901760
    %7871 = vmatpush1.msra.mxu0 %v7870
    %7872 = vmatprep.subr.mxu0 0.0
    %v7873 = vand.u32 %v41, 4294901760
    %7874 = vmatpush1.msra.mxu0 %v7873
    %7875 = vmatprep.subr.mxu0 0.0
    %v7876 = vand.u32 %v40, 4294901760
    %7877 = vmatpush1.msra.mxu0 %v7876
    %7878 = vmatprep.subr.mxu0 0.0
    %v7879 = vand.u32 %v39, 4294901760
    %7880 = vmatpush1.msra.mxu0 %v7879
    %7881 = vmatprep.subr.mxu0 0.0
    %v7882 = vand.u32 %v38, 4294901760
    %7883 = vmatpush1.msra.mxu0 %v7882
    %7884 = vmatprep.subr.mxu0 0.0
    %v7885 = vand.u32 %v37, 4294901760
    %7886 = vmatpush1.msra.mxu0 %v7885
    %7887 = vmatprep.subr.mxu0 0.0
    %v7888 = vand.u32 %v36, 4294901760
    %7889 = vmatpush1.msra.mxu0 %v7888
    %7890 = vmatprep.subr.mxu0 0.0
    %v7891 = vand.u32 %v35, 4294901760
    %7892 = vmatpush1.msra.mxu0 %v7891
    %7893 = vmatprep.subr.mxu0 0.0
    %v7894 = vand.u32 %v34, 4294901760
    %7895 = vmatpush1.msra.mxu0 %v7894
    %7896 = vmatprep.subr.mxu0 0.0
    %v7897 = vand.u32 %v33, 4294901760
    %7898 = vmatpush1.msra.mxu0 %v7897
    %7899 = vmatprep.subr.mxu0 0.0
    %v7900 = vand.u32 %v32, 4294901760
    %7901 = vmatpush1.msra.mxu0 %v7900
    %7902 = vmatprep.subr.mxu0 0.0
    %v7903 = vand.u32 %v31, 4294901760
    %7904 = vmatpush1.msra.mxu0 %v7903
    %7905 = vmatprep.subr.mxu0 0.0
    %v7906 = vand.u32 %v30, 4294901760
    %7907 = vmatpush1.msra.mxu0 %v7906
    %7908 = vmatprep.subr.mxu0 0.0
    %7909 = vmatpush2.msra.mxu0 0.0
    %7910 = vmatprep.subr.mxu0 0.0
    %7911 = vmatpush2.msra.mxu0 0.0
    %7912 = vmatprep.subr.mxu0 0.0
    %7913 = vmatpush2.msra.mxu0 0.0
    %7914 = vmatprep.subr.mxu0 0.0
    %7915 = vmatpush2.msra.mxu0 0.0
    %7916 = vmatprep.subr.mxu0 0.0
    %7917 = vmatpush2.msra.mxu0 0.0
    %7918 = vmatprep.subr.mxu0 0.0
    %7919 = vmatpush2.msra.mxu0 0.0
    %7920 = vmatprep.subr.mxu0 0.0
    %7921 = vmatpush2.msra.mxu0 0.0
    %7922 = vmatprep.subr.mxu0 0.0
    %7923 = vmatpush2.msra.mxu0 0.0
    %7924 = vmatprep.subr.mxu0 0.0
    %7925 = vmatpush2.msra.mxu0 0.0
    %7926 = vmatprep.subr.mxu0 0.0
    %7927 = vmatpush2.msra.mxu0 0.0
    %7928 = vmatprep.subr.mxu0 0.0
    %7929 = vmatpush2.msra.mxu0 0.0
    %7930 = vmatprep.subr.mxu0 0.0
    %7931 = vmatpush2.msra.mxu0 0.0
    %7932 = vmatprep.subr.mxu0 0.0
    %7933 = vmatpush2.msra.mxu0 0.0
    %7934 = vmatprep.subr.mxu0 0.0
    %7935 = vmatpush2.msra.mxu0 0.0
    %7936 = vmatprep.subr.mxu0 0.0
    %7937 = vmatpush2.msra.mxu0 0.0
    %7938 = vmatprep.subr.mxu0 0.0
    %7939 = vmatpush2.msra.mxu0 0.0
    %7940 = vmatprep.mubr.f32.mxu0 0.0
    %v7941 = vand.u32 %v7366, 4294901760
    %v7942 = vsub.f32 %v7366, %v7941
    %v7943 = vand.u32 %v7942, 4294901760
    %v7944 = vsub.f32 %v7942, %v7943
    %v7945 = vand.u32 %v7944, 4294901760
    %7946 = vmatmul.mubr.f32.gmra.mxu0 %v7945
    %v7947 = vpop.f32.mrf.mxu0
    %v7948 = vadd.f32 0.0, %v7947
    %v7949 = vpop.f32.mrf.mxu0
    %7950 = vdwg.mxu0
    %7951 = vmatprep.subr.mxu0 0.0
    %v7952 = vand.u32 %v45, 4294901760
    %v7953 = vsub.f32 %v45, %v7952
    %v7954 = vand.u32 %v7953, 4294901760
    %v7955 = vsub.f32 %v7953, %v7954
    %v7956 = vand.u32 %v7955, 4294901760
    %7957 = vmatpush1.msra.mxu0 %v7956
    %7958 = vmatprep.subr.mxu0 0.0
    %v7959 = vand.u32 %v44, 4294901760
    %v7960 = vsub.f32 %v44, %v7959
    %v7961 = vand.u32 %v7960, 4294901760
    %v7962 = vsub.f32 %v7960, %v7961
    %v7963 = vand.u32 %v7962, 4294901760
    %7964 = vmatpush1.msra.mxu0 %v7963
    %7965 = vmatprep.subr.mxu0 0.0
    %v7966 = vand.u32 %v43, 4294901760
    %v7967 = vsub.f32 %v43, %v7966
    %v7968 = vand.u32 %v7967, 4294901760
    %v7969 = vsub.f32 %v7967, %v7968
    %v7970 = vand.u32 %v7969, 4294901760
    %7971 = vmatpush1.msra.mxu0 %v7970
    %7972 = vmatprep.subr.mxu0 0.0
    %v7973 = vand.u32 %v42, 4294901760
    %v7974 = vsub.f32 %v42, %v7973
    %v7975 = vand.u32 %v7974, 4294901760
    %v7976 = vsub.f32 %v7974, %v7975
    %v7977 = vand.u32 %v7976, 4294901760
    %7978 = vmatpush1.msra.mxu0 %v7977
    %7979 = vmatprep.subr.mxu0 0.0
    %v7980 = vand.u32 %v41, 4294901760
    %v7981 = vsub.f32 %v41, %v7980
    %v7982 = vand.u32 %v7981, 4294901760
    %v7983 = vsub.f32 %v7981, %v7982
    %v7984 = vand.u32 %v7983, 4294901760
    %7985 = vmatpush1.msra.mxu0 %v7984
    %7986 = vmatprep.subr.mxu0 0.0
    %v7987 = vand.u32 %v40, 4294901760
    %v7988 = vsub.f32 %v40, %v7987
    %v7989 = vand.u32 %v7988, 4294901760
    %v7990 = vsub.f32 %v7988, %v7989
    %v7991 = vand.u32 %v7990, 4294901760
    %7992 = vmatpush1.msra.mxu0 %v7991
    %7993 = vmatprep.subr.mxu0 0.0
    %v7994 = vand.u32 %v39, 4294901760
    %v7995 = vsub.f32 %v39, %v7994
    %v7996 = vand.u32 %v7995, 4294901760
    %v7997 = vsub.f32 %v7995, %v7996
    %v7998 = vand.u32 %v7997, 4294901760
    %7999 = vmatpush1.msra.mxu0 %v7998
    %8000 = vmatprep.subr.mxu0 0.0
    %v8001 = vand.u32 %v38, 4294901760
    %v8002 = vsub.f32 %v38, %v8001
    %v8003 = vand.u32 %v8002, 4294901760
    %v8004 = vsub.f32 %v8002, %v8003
    %v8005 = vand.u32 %v8004, 4294901760
    %8006 = vmatpush1.msra.mxu0 %v8005
    %8007 = vmatprep.subr.mxu0 0.0
    %v8008 = vand.u32 %v37, 4294901760
    %v8009 = vsub.f32 %v37, %v8008
    %v8010 = vand.u32 %v8009, 4294901760
    %v8011 = vsub.f32 %v8009, %v8010
    %v8012 = vand.u32 %v8011, 4294901760
    %8013 = vmatpush1.msra.mxu0 %v8012
    %8014 = vmatprep.subr.mxu0 0.0
    %v8015 = vand.u32 %v36, 4294901760
    %v8016 = vsub.f32 %v36, %v8015
    %v8017 = vand.u32 %v8016, 4294901760
    %v8018 = vsub.f32 %v8016, %v8017
    %v8019 = vand.u32 %v8018, 4294901760
    %8020 = vmatpush1.msra.mxu0 %v8019
    %8021 = vmatprep.subr.mxu0 0.0
    %v8022 = vand.u32 %v35, 4294901760
    %v8023 = vsub.f32 %v35, %v8022
    %v8024 = vand.u32 %v8023, 4294901760
    %v8025 = vsub.f32 %v8023, %v8024
    %v8026 = vand.u32 %v8025, 4294901760
    %8027 = vmatpush1.msra.mxu0 %v8026
    %8028 = vmatprep.subr.mxu0 0.0
    %v8029 = vand.u32 %v34, 4294901760
    %v8030 = vsub.f32 %v34, %v8029
    %v8031 = vand.u32 %v8030, 4294901760
    %v8032 = vsub.f32 %v8030, %v8031
    %v8033 = vand.u32 %v8032, 4294901760
    %8034 = vmatpush1.msra.mxu0 %v8033
    %8035 = vmatprep.subr.mxu0 0.0
    %v8036 = vand.u32 %v33, 4294901760
    %v8037 = vsub.f32 %v33, %v8036
    %v8038 = vand.u32 %v8037, 4294901760
    %v8039 = vsub.f32 %v8037, %v8038
    %v8040 = vand.u32 %v8039, 4294901760
    %8041 = vmatpush1.msra.mxu0 %v8040
    %8042 = vmatprep.subr.mxu0 0.0
    %v8043 = vand.u32 %v32, 4294901760
    %v8044 = vsub.f32 %v32, %v8043
    %v8045 = vand.u32 %v8044, 4294901760
    %v8046 = vsub.f32 %v8044, %v8045
    %v8047 = vand.u32 %v8046, 4294901760
    %8048 = vmatpush1.msra.mxu0 %v8047
    %8049 = vmatprep.subr.mxu0 0.0
    %v8050 = vand.u32 %v31, 4294901760
    %v8051 = vsub.f32 %v31, %v8050
    %v8052 = vand.u32 %v8051, 4294901760
    %v8053 = vsub.f32 %v8051, %v8052
    %v8054 = vand.u32 %v8053, 4294901760
    %8055 = vmatpush1.msra.mxu0 %v8054
    %8056 = vmatprep.subr.mxu0 0.0
    %v8057 = vand.u32 %v30, 4294901760
    %v8058 = vsub.f32 %v30, %v8057
    %v8059 = vand.u32 %v8058, 4294901760
    %v8060 = vsub.f32 %v8058, %v8059
    %v8061 = vand.u32 %v8060, 4294901760
    %8062 = vmatpush1.msra.mxu0 %v8061
    %8063 = vmatprep.subr.mxu0 0.0
    %8064 = vmatpush2.msra.mxu0 0.0
    %8065 = vmatprep.subr.mxu0 0.0
    %8066 = vmatpush2.msra.mxu0 0.0
    %8067 = vmatprep.subr.mxu0 0.0
    %8068 = vmatpush2.msra.mxu0 0.0
    %8069 = vmatprep.subr.mxu0 0.0
    %8070 = vmatpush2.msra.mxu0 0.0
    %8071 = vmatprep.subr.mxu0 0.0
    %8072 = vmatpush2.msra.mxu0 0.0
    %8073 = vmatprep.subr.mxu0 0.0
    %8074 = vmatpush2.msra.mxu0 0.0
    %8075 = vmatprep.subr.mxu0 0.0
    %8076 = vmatpush2.msra.mxu0 0.0
    %8077 = vmatprep.subr.mxu0 0.0
    %8078 = vmatpush2.msra.mxu0 0.0
    %8079 = vmatprep.subr.mxu0 0.0
    %8080 = vmatpush2.msra.mxu0 0.0
    %8081 = vmatprep.subr.mxu0 0.0
    %8082 = vmatpush2.msra.mxu0 0.0
    %8083 = vmatprep.subr.mxu0 0.0
    %8084 = vmatpush2.msra.mxu0 0.0
    %8085 = vmatprep.subr.mxu0 0.0
    %8086 = vmatpush2.msra.mxu0 0.0
    %8087 = vmatprep.subr.mxu0 0.0
    %8088 = vmatpush2.msra.mxu0 0.0
    %8089 = vmatprep.subr.mxu0 0.0
    %8090 = vmatpush2.msra.mxu0 0.0
    %8091 = vmatprep.subr.mxu0 0.0
    %8092 = vmatpush2.msra.mxu0 0.0
    %8093 = vmatprep.subr.mxu0 0.0
    %8094 = vmatpush2.msra.mxu0 0.0
    %8095 = vmatprep.mubr.f32.mxu0 0.0
    %v8096 = vand.u32 %v7366, 4294901760
    %8097 = vmatmul.mubr.f32.gmra.mxu0 %v8096
    %v8098 = vpop.f32.mrf.mxu0
    %v8099 = vadd.f32 %v7948, %v8098
    %v8100 = vpop.f32.mrf.mxu0
    %8101 = vdwg.mxu0
    %8102 = vmatprep.subr.mxu0 0.0
    %v8103 = vand.u32 %v45, 4294901760
    %v8104 = vsub.f32 %v45, %v8103
    %8105 = vmatpush1.msra.mxu0 %v8104
    %8106 = vmatprep.subr.mxu0 0.0
    %v8107 = vand.u32 %v44, 4294901760
    %v8108 = vsub.f32 %v44, %v8107
    %8109 = vmatpush1.msra.mxu0 %v8108
    %8110 = vmatprep.subr.mxu0 0.0
    %v8111 = vand.u32 %v43, 4294901760
    %v8112 = vsub.f32 %v43, %v8111
    %8113 = vmatpush1.msra.mxu0 %v8112
    %8114 = vmatprep.subr.mxu0 0.0
    %v8115 = vand.u32 %v42, 4294901760
    %v8116 = vsub.f32 %v42, %v8115
    %8117 = vmatpush1.msra.mxu0 %v8116
    %8118 = vmatprep.subr.mxu0 0.0
    %v8119 = vand.u32 %v41, 4294901760
    %v8120 = vsub.f32 %v41, %v8119
    %8121 = vmatpush1.msra.mxu0 %v8120
    %8122 = vmatprep.subr.mxu0 0.0
    %v8123 = vand.u32 %v40, 4294901760
    %v8124 = vsub.f32 %v40, %v8123
    %8125 = vmatpush1.msra.mxu0 %v8124
    %8126 = vmatprep.subr.mxu0 0.0
    %v8127 = vand.u32 %v39, 4294901760
    %v8128 = vsub.f32 %v39, %v8127
    %8129 = vmatpush1.msra.mxu0 %v8128
    %8130 = vmatprep.subr.mxu0 0.0
    %v8131 = vand.u32 %v38, 4294901760
    %v8132 = vsub.f32 %v38, %v8131
    %8133 = vmatpush1.msra.mxu0 %v8132
    %8134 = vmatprep.subr.mxu0 0.0
    %v8135 = vand.u32 %v37, 4294901760
    %v8136 = vsub.f32 %v37, %v8135
    %8137 = vmatpush1.msra.mxu0 %v8136
    %8138 = vmatprep.subr.mxu0 0.0
    %v8139 = vand.u32 %v36, 4294901760
    %v8140 = vsub.f32 %v36, %v8139
    %8141 = vmatpush1.msra.mxu0 %v8140
    %8142 = vmatprep.subr.mxu0 0.0
    %v8143 = vand.u32 %v35, 4294901760
    %v8144 = vsub.f32 %v35, %v8143
    %8145 = vmatpush1.msra.mxu0 %v8144
    %8146 = vmatprep.subr.mxu0 0.0
    %v8147 = vand.u32 %v34, 4294901760
    %v8148 = vsub.f32 %v34, %v8147
    %8149 = vmatpush1.msra.mxu0 %v8148
    %8150 = vmatprep.subr.mxu0 0.0
    %v8151 = vand.u32 %v33, 4294901760
    %v8152 = vsub.f32 %v33, %v8151
    %8153 = vmatpush1.msra.mxu0 %v8152
    %8154 = vmatprep.subr.mxu0 0.0
    %v8155 = vand.u32 %v32, 4294901760
    %v8156 = vsub.f32 %v32, %v8155
    %8157 = vmatpush1.msra.mxu0 %v8156
    %8158 = vmatprep.subr.mxu0 0.0
    %v8159 = vand.u32 %v31, 4294901760
    %v8160 = vsub.f32 %v31, %v8159
    %8161 = vmatpush1.msra.mxu0 %v8160
    %8162 = vmatprep.subr.mxu0 0.0
    %v8163 = vand.u32 %v30, 4294901760
    %v8164 = vsub.f32 %v30, %v8163
    %8165 = vmatpush1.msra.mxu0 %v8164
    %8166 = vmatprep.subr.mxu0 0.0
    %8167 = vmatpush2.msra.mxu0 0.0
    %8168 = vmatprep.subr.mxu0 0.0
    %8169 = vmatpush2.msra.mxu0 0.0
    %8170 = vmatprep.subr.mxu0 0.0
    %8171 = vmatpush2.msra.mxu0 0.0
    %8172 = vmatprep.subr.mxu0 0.0
    %8173 = vmatpush2.msra.mxu0 0.0
    %8174 = vmatprep.subr.mxu0 0.0
    %8175 = vmatpush2.msra.mxu0 0.0
    %8176 = vmatprep.subr.mxu0 0.0
    %8177 = vmatpush2.msra.mxu0 0.0
    %8178 = vmatprep.subr.mxu0 0.0
    %8179 = vmatpush2.msra.mxu0 0.0
    %8180 = vmatprep.subr.mxu0 0.0
    %8181 = vmatpush2.msra.mxu0 0.0
    %8182 = vmatprep.subr.mxu0 0.0
    %8183 = vmatpush2.msra.mxu0 0.0
    %8184 = vmatprep.subr.mxu0 0.0
    %8185 = vmatpush2.msra.mxu0 0.0
    %8186 = vmatprep.subr.mxu0 0.0
    %8187 = vmatpush2.msra.mxu0 0.0
    %8188 = vmatprep.subr.mxu0 0.0
    %8189 = vmatpush2.msra.mxu0 0.0
    %8190 = vmatprep.subr.mxu0 0.0
    %8191 = vmatpush2.msra.mxu0 0.0
    %8192 = vmatprep.subr.mxu0 0.0
    %8193 = vmatpush2.msra.mxu0 0.0
    %8194 = vmatprep.subr.mxu0 0.0
    %8195 = vmatpush2.msra.mxu0 0.0
    %8196 = vmatprep.subr.mxu0 0.0
    %8197 = vmatpush2.msra.mxu0 0.0
    %8198 = vmatprep.mubr.f32.mxu0 0.0
    %v8199 = vand.u32 %v7366, 4294901760
    %v8200 = vsub.f32 %v7366, %v8199
    %8201 = vmatmul.mubr.f32.gmra.mxu0 %v8200
    %v8202 = vpop.f32.mrf.mxu0
    %v8203 = vadd.f32 %v8099, %v8202
    %v8204 = vpop.f32.mrf.mxu0
    %8205 = vdwg.mxu0
    %8206 = vmatprep.subr.mxu0 0.0
    %v8207 = vand.u32 %v45, 4294901760
    %8208 = vmatpush1.msra.mxu0 %v8207
    %8209 = vmatprep.subr.mxu0 0.0
    %v8210 = vand.u32 %v44, 4294901760
    %8211 = vmatpush1.msra.mxu0 %v8210
    %8212 = vmatprep.subr.mxu0 0.0
    %v8213 = vand.u32 %v43, 4294901760
    %8214 = vmatpush1.msra.mxu0 %v8213
    %8215 = vmatprep.subr.mxu0 0.0
    %v8216 = vand.u32 %v42, 4294901760
    %8217 = vmatpush1.msra.mxu0 %v8216
    %8218 = vmatprep.subr.mxu0 0.0
    %v8219 = vand.u32 %v41, 4294901760
    %8220 = vmatpush1.msra.mxu0 %v8219
    %8221 = vmatprep.subr.mxu0 0.0
    %v8222 = vand.u32 %v40, 4294901760
    %8223 = vmatpush1.msra.mxu0 %v8222
    %8224 = vmatprep.subr.mxu0 0.0
    %v8225 = vand.u32 %v39, 4294901760
    %8226 = vmatpush1.msra.mxu0 %v8225
    %8227 = vmatprep.subr.mxu0 0.0
    %v8228 = vand.u32 %v38, 4294901760
    %8229 = vmatpush1.msra.mxu0 %v8228
    %8230 = vmatprep.subr.mxu0 0.0
    %v8231 = vand.u32 %v37, 4294901760
    %8232 = vmatpush1.msra.mxu0 %v8231
    %8233 = vmatprep.subr.mxu0 0.0
    %v8234 = vand.u32 %v36, 4294901760
    %8235 = vmatpush1.msra.mxu0 %v8234
    %8236 = vmatprep.subr.mxu0 0.0
    %v8237 = vand.u32 %v35, 4294901760
    %8238 = vmatpush1.msra.mxu0 %v8237
    %8239 = vmatprep.subr.mxu0 0.0
    %v8240 = vand.u32 %v34, 4294901760
    %8241 = vmatpush1.msra.mxu0 %v8240
    %8242 = vmatprep.subr.mxu0 0.0
    %v8243 = vand.u32 %v33, 4294901760
    %8244 = vmatpush1.msra.mxu0 %v8243
    %8245 = vmatprep.subr.mxu0 0.0
    %v8246 = vand.u32 %v32, 4294901760
    %8247 = vmatpush1.msra.mxu0 %v8246
    %8248 = vmatprep.subr.mxu0 0.0
    %v8249 = vand.u32 %v31, 4294901760
    %8250 = vmatpush1.msra.mxu0 %v8249
    %8251 = vmatprep.subr.mxu0 0.0
    %v8252 = vand.u32 %v30, 4294901760
    %8253 = vmatpush1.msra.mxu0 %v8252
    %8254 = vmatprep.subr.mxu0 0.0
    %8255 = vmatpush2.msra.mxu0 0.0
    %8256 = vmatprep.subr.mxu0 0.0
    %8257 = vmatpush2.msra.mxu0 0.0
    %8258 = vmatprep.subr.mxu0 0.0
    %8259 = vmatpush2.msra.mxu0 0.0
    %8260 = vmatprep.subr.mxu0 0.0
    %8261 = vmatpush2.msra.mxu0 0.0
    %8262 = vmatprep.subr.mxu0 0.0
    %8263 = vmatpush2.msra.mxu0 0.0
    %8264 = vmatprep.subr.mxu0 0.0
    %8265 = vmatpush2.msra.mxu0 0.0
    %8266 = vmatprep.subr.mxu0 0.0
    %8267 = vmatpush2.msra.mxu0 0.0
    %8268 = vmatprep.subr.mxu0 0.0
    %8269 = vmatpush2.msra.mxu0 0.0
    %8270 = vmatprep.subr.mxu0 0.0
    %8271 = vmatpush2.msra.mxu0 0.0
    %8272 = vmatprep.subr.mxu0 0.0
    %8273 = vmatpush2.msra.mxu0 0.0
    %8274 = vmatprep.subr.mxu0 0.0
    %8275 = vmatpush2.msra.mxu0 0.0
    %8276 = vmatprep.subr.mxu0 0.0
    %8277 = vmatpush2.msra.mxu0 0.0
    %8278 = vmatprep.subr.mxu0 0.0
    %8279 = vmatpush2.msra.mxu0 0.0
    %8280 = vmatprep.subr.mxu0 0.0
    %8281 = vmatpush2.msra.mxu0 0.0
    %8282 = vmatprep.subr.mxu0 0.0
    %8283 = vmatpush2.msra.mxu0 0.0
    %8284 = vmatprep.subr.mxu0 0.0
    %8285 = vmatpush2.msra.mxu0 0.0
    %8286 = vmatprep.mubr.f32.mxu0 0.0
    %v8287 = vand.u32 %v7366, 4294901760
    %v8288 = vsub.f32 %v7366, %v8287
    %v8289 = vand.u32 %v8288, 4294901760
    %8290 = vmatmul.mubr.f32.gmra.mxu0 %v8289
    %v8291 = vpop.f32.mrf.mxu0
    %v8292 = vadd.f32 %v8203, %v8291
    %v8293 = vpop.f32.mrf.mxu0
    %8294 = vdwg.mxu0
    %8295 = vmatprep.subr.mxu0 0.0
    %v8296 = vand.u32 %v45, 4294901760
    %v8297 = vsub.f32 %v45, %v8296
    %v8298 = vand.u32 %v8297, 4294901760
    %8299 = vmatpush1.msra.mxu0 %v8298
    %8300 = vmatprep.subr.mxu0 0.0
    %v8301 = vand.u32 %v44, 4294901760
    %v8302 = vsub.f32 %v44, %v8301
    %v8303 = vand.u32 %v8302, 4294901760
    %8304 = vmatpush1.msra.mxu0 %v8303
    %8305 = vmatprep.subr.mxu0 0.0
    %v8306 = vand.u32 %v43, 4294901760
    %v8307 = vsub.f32 %v43, %v8306
    %v8308 = vand.u32 %v8307, 4294901760
    %8309 = vmatpush1.msra.mxu0 %v8308
    %8310 = vmatprep.subr.mxu0 0.0
    %v8311 = vand.u32 %v42, 4294901760
    %v8312 = vsub.f32 %v42, %v8311
    %v8313 = vand.u32 %v8312, 4294901760
    %8314 = vmatpush1.msra.mxu0 %v8313
    %8315 = vmatprep.subr.mxu0 0.0
    %v8316 = vand.u32 %v41, 4294901760
    %v8317 = vsub.f32 %v41, %v8316
    %v8318 = vand.u32 %v8317, 4294901760
    %8319 = vmatpush1.msra.mxu0 %v8318
    %8320 = vmatprep.subr.mxu0 0.0
    %v8321 = vand.u32 %v40, 4294901760
    %v8322 = vsub.f32 %v40, %v8321
    %v8323 = vand.u32 %v8322, 4294901760
    %8324 = vmatpush1.msra.mxu0 %v8323
    %8325 = vmatprep.subr.mxu0 0.0
    %v8326 = vand.u32 %v39, 4294901760
    %v8327 = vsub.f32 %v39, %v8326
    %v8328 = vand.u32 %v8327, 4294901760
    %8329 = vmatpush1.msra.mxu0 %v8328
    %8330 = vmatprep.subr.mxu0 0.0
    %v8331 = vand.u32 %v38, 4294901760
    %v8332 = vsub.f32 %v38, %v8331
    %v8333 = vand.u32 %v8332, 4294901760
    %8334 = vmatpush1.msra.mxu0 %v8333
    %8335 = vmatprep.subr.mxu0 0.0
    %v8336 = vand.u32 %v37, 4294901760
    %v8337 = vsub.f32 %v37, %v8336
    %v8338 = vand.u32 %v8337, 4294901760
    %8339 = vmatpush1.msra.mxu0 %v8338
    %8340 = vmatprep.subr.mxu0 0.0
    %v8341 = vand.u32 %v36, 4294901760
    %v8342 = vsub.f32 %v36, %v8341
    %v8343 = vand.u32 %v8342, 4294901760
    %8344 = vmatpush1.msra.mxu0 %v8343
    %8345 = vmatprep.subr.mxu0 0.0
    %v8346 = vand.u32 %v35, 4294901760
    %v8347 = vsub.f32 %v35, %v8346
    %v8348 = vand.u32 %v8347, 4294901760
    %8349 = vmatpush1.msra.mxu0 %v8348
    %8350 = vmatprep.subr.mxu0 0.0
    %v8351 = vand.u32 %v34, 4294901760
    %v8352 = vsub.f32 %v34, %v8351
    %v8353 = vand.u32 %v8352, 4294901760
    %8354 = vmatpush1.msra.mxu0 %v8353
    %8355 = vmatprep.subr.mxu0 0.0
    %v8356 = vand.u32 %v33, 4294901760
    %v8357 = vsub.f32 %v33, %v8356
    %v8358 = vand.u32 %v8357, 4294901760
    %8359 = vmatpush1.msra.mxu0 %v8358
    %8360 = vmatprep.subr.mxu0 0.0
    %v8361 = vand.u32 %v32, 4294901760
    %v8362 = vsub.f32 %v32, %v8361
    %v8363 = vand.u32 %v8362, 4294901760
    %8364 = vmatpush1.msra.mxu0 %v8363
    %8365 = vmatprep.subr.mxu0 0.0
    %v8366 = vand.u32 %v31, 4294901760
    %v8367 = vsub.f32 %v31, %v8366
    %v8368 = vand.u32 %v8367, 4294901760
    %8369 = vmatpush1.msra.mxu0 %v8368
    %8370 = vmatprep.subr.mxu0 0.0
    %v8371 = vand.u32 %v30, 4294901760
    %v8372 = vsub.f32 %v30, %v8371
    %v8373 = vand.u32 %v8372, 4294901760
    %8374 = vmatpush1.msra.mxu0 %v8373
    %8375 = vmatprep.subr.mxu0 0.0
    %8376 = vmatpush2.msra.mxu0 0.0
    %8377 = vmatprep.subr.mxu0 0.0
    %8378 = vmatpush2.msra.mxu0 0.0
    %8379 = vmatprep.subr.mxu0 0.0
    %8380 = vmatpush2.msra.mxu0 0.0
    %8381 = vmatprep.subr.mxu0 0.0
    %8382 = vmatpush2.msra.mxu0 0.0
    %8383 = vmatprep.subr.mxu0 0.0
    %8384 = vmatpush2.msra.mxu0 0.0
    %8385 = vmatprep.subr.mxu0 0.0
    %8386 = vmatpush2.msra.mxu0 0.0
    %8387 = vmatprep.subr.mxu0 0.0
    %8388 = vmatpush2.msra.mxu0 0.0
    %8389 = vmatprep.subr.mxu0 0.0
    %8390 = vmatpush2.msra.mxu0 0.0
    %8391 = vmatprep.subr.mxu0 0.0
    %8392 = vmatpush2.msra.mxu0 0.0
    %8393 = vmatprep.subr.mxu0 0.0
    %8394 = vmatpush2.msra.mxu0 0.0
    %8395 = vmatprep.subr.mxu0 0.0
    %8396 = vmatpush2.msra.mxu0 0.0
    %8397 = vmatprep.subr.mxu0 0.0
    %8398 = vmatpush2.msra.mxu0 0.0
    %8399 = vmatprep.subr.mxu0 0.0
    %8400 = vmatpush2.msra.mxu0 0.0
    %8401 = vmatprep.subr.mxu0 0.0
    %8402 = vmatpush2.msra.mxu0 0.0
    %8403 = vmatprep.subr.mxu0 0.0
    %8404 = vmatpush2.msra.mxu0 0.0
    %8405 = vmatprep.subr.mxu0 0.0
    %8406 = vmatpush2.msra.mxu0 0.0
    %8407 = vmatprep.mubr.f32.mxu0 0.0
    %v8408 = vand.u32 %v7366, 4294901760
    %8409 = vmatmul.mubr.f32.gmra.mxu0 %v8408
    %v8410 = vpop.f32.mrf.mxu0
    %v8411 = vadd.f32 %v8292, %v8410
    %v8412 = vpop.f32.mrf.mxu0
    %8413 = vdwg.mxu0
    %8414 = vmatprep.subr.mxu0 0.0
    %v8415 = vand.u32 %v45, 4294901760
    %8416 = vmatpush1.msra.mxu0 %v8415
    %8417 = vmatprep.subr.mxu0 0.0
    %v8418 = vand.u32 %v44, 4294901760
    %8419 = vmatpush1.msra.mxu0 %v8418
    %8420 = vmatprep.subr.mxu0 0.0
    %v8421 = vand.u32 %v43, 4294901760
    %8422 = vmatpush1.msra.mxu0 %v8421
    %8423 = vmatprep.subr.mxu0 0.0
    %v8424 = vand.u32 %v42, 4294901760
    %8425 = vmatpush1.msra.mxu0 %v8424
    %8426 = vmatprep.subr.mxu0 0.0
    %v8427 = vand.u32 %v41, 4294901760
    %8428 = vmatpush1.msra.mxu0 %v8427
    %8429 = vmatprep.subr.mxu0 0.0
    %v8430 = vand.u32 %v40, 4294901760
    %8431 = vmatpush1.msra.mxu0 %v8430
    %8432 = vmatprep.subr.mxu0 0.0
    %v8433 = vand.u32 %v39, 4294901760
    %8434 = vmatpush1.msra.mxu0 %v8433
    %8435 = vmatprep.subr.mxu0 0.0
    %v8436 = vand.u32 %v38, 4294901760
    %8437 = vmatpush1.msra.mxu0 %v8436
    %8438 = vmatprep.subr.mxu0 0.0
    %v8439 = vand.u32 %v37, 4294901760
    %8440 = vmatpush1.msra.mxu0 %v8439
    %8441 = vmatprep.subr.mxu0 0.0
    %v8442 = vand.u32 %v36, 4294901760
    %8443 = vmatpush1.msra.mxu0 %v8442
    %8444 = vmatprep.subr.mxu0 0.0
    %v8445 = vand.u32 %v35, 4294901760
    %8446 = vmatpush1.msra.mxu0 %v8445
    %8447 = vmatprep.subr.mxu0 0.0
    %v8448 = vand.u32 %v34, 4294901760
    %8449 = vmatpush1.msra.mxu0 %v8448
    %8450 = vmatprep.subr.mxu0 0.0
    %v8451 = vand.u32 %v33, 4294901760
    %8452 = vmatpush1.msra.mxu0 %v8451
    %8453 = vmatprep.subr.mxu0 0.0
    %v8454 = vand.u32 %v32, 4294901760
    %8455 = vmatpush1.msra.mxu0 %v8454
    %8456 = vmatprep.subr.mxu0 0.0
    %v8457 = vand.u32 %v31, 4294901760
    %8458 = vmatpush1.msra.mxu0 %v8457
    %8459 = vmatprep.subr.mxu0 0.0
    %v8460 = vand.u32 %v30, 4294901760
    %8461 = vmatpush1.msra.mxu0 %v8460
    %8462 = vmatprep.subr.mxu0 0.0
    %8463 = vmatpush2.msra.mxu0 0.0
    %8464 = vmatprep.subr.mxu0 0.0
    %8465 = vmatpush2.msra.mxu0 0.0
    %8466 = vmatprep.subr.mxu0 0.0
    %8467 = vmatpush2.msra.mxu0 0.0
    %8468 = vmatprep.subr.mxu0 0.0
    %8469 = vmatpush2.msra.mxu0 0.0
    %8470 = vmatprep.subr.mxu0 0.0
    %8471 = vmatpush2.msra.mxu0 0.0
    %8472 = vmatprep.subr.mxu0 0.0
    %8473 = vmatpush2.msra.mxu0 0.0
    %8474 = vmatprep.subr.mxu0 0.0
    %8475 = vmatpush2.msra.mxu0 0.0
    %8476 = vmatprep.subr.mxu0 0.0
    %8477 = vmatpush2.msra.mxu0 0.0
    %8478 = vmatprep.subr.mxu0 0.0
    %8479 = vmatpush2.msra.mxu0 0.0
    %8480 = vmatprep.subr.mxu0 0.0
    %8481 = vmatpush2.msra.mxu0 0.0
    %8482 = vmatprep.subr.mxu0 0.0
    %8483 = vmatpush2.msra.mxu0 0.0
    %8484 = vmatprep.subr.mxu0 0.0
    %8485 = vmatpush2.msra.mxu0 0.0
    %8486 = vmatprep.subr.mxu0 0.0
    %8487 = vmatpush2.msra.mxu0 0.0
    %8488 = vmatprep.subr.mxu0 0.0
    %8489 = vmatpush2.msra.mxu0 0.0
    %8490 = vmatprep.subr.mxu0 0.0
    %8491 = vmatpush2.msra.mxu0 0.0
    %8492 = vmatprep.subr.mxu0 0.0
    %8493 = vmatpush2.msra.mxu0 0.0
    %8494 = vmatprep.mubr.f32.mxu0 0.0
    %v8495 = vand.u32 %v7366, 4294901760
    %8496 = vmatmul.mubr.f32.gmra.mxu0 %v8495
    %v8497 = vpop.f32.mrf.mxu0
    %v8498 = vadd.f32 %v8411, %v8497
    %v8499 = vpop.f32.mrf.mxu0
    %8500 = vdwg.mxu0
    %v8501 = vadd.f32 %v7857, %v8498
    %v8502 = vtanh.pop %v8501
    %s8503 = scalar_lea.vmem [#allocation2], 56
    %8504 = vst [vmem:[%s8503] sm:$0xff] %v8502
    %v8505 = vld [vmem:[%s4] sm:$0xff]
    %v8506 = vld [vmem:[%s4 + $0x8] sm:$0xff]
    %v8507 = vld [vmem:[%s4 + $0x10] sm:$0xff]
    %v8508 = vld [vmem:[%s4 + $0x18] sm:$0xff]
    %v8509 = vld [vmem:[%s4 + $0x20] sm:$0xff]
    %v8510 = vld [vmem:[%s4 + $0x28] sm:$0xff]
    %v8511 = vld [vmem:[%s4 + $0x30] sm:$0xff]
    %v8512 = vld [vmem:[%s4 + $0x38] sm:$0xff]
    %v8513 = vld [vmem:[%s4 + $0x40] sm:$0xff]
    %v8514 = vld [vmem:[%s4 + $0x48] sm:$0xff]
    %v8515 = vld [vmem:[%s4 + $0x50] sm:$0xff]
    %v8516 = vld [vmem:[%s4 + $0x58] sm:$0xff]
    %v8517 = vld [vmem:[%s4 + $0x60] sm:$0xff]
    %v8518 = vld [vmem:[%s4 + $0x68] sm:$0xff]
    %v8519 = vld [vmem:[%s4 + $0x70] sm:$0xff]
    %v8520 = vld [vmem:[%s4 + $0x78] sm:$0xff]
    %v8521 = vld [vmem:[%s5] sm:$0x1]
    %v8523 = vlaneseq
    %v8524 = vshrl.u32 %v8523, 7
    %v8525 = vsub.s32 0, %v8524
    %v8526 = vrot.slane %v8521, %v8525
    %8528 = vmatprep.subr.mxu0 0.0
    %v8529 = vand.u32 %v8520, 4294901760
    %8530 = vmatpush1.msra.mxu0 %v8529
    %8531 = vmatprep.subr.mxu0 0.0
    %v8532 = vand.u32 %v8519, 4294901760
    %8533 = vmatpush1.msra.mxu0 %v8532
    %8534 = vmatprep.subr.mxu0 0.0
    %v8535 = vand.u32 %v8518, 4294901760
    %8536 = vmatpush1.msra.mxu0 %v8535
    %8537 = vmatprep.subr.mxu0 0.0
    %v8538 = vand.u32 %v8517, 4294901760
    %8539 = vmatpush1.msra.mxu0 %v8538
    %8540 = vmatprep.subr.mxu0 0.0
    %v8541 = vand.u32 %v8516, 4294901760
    %8542 = vmatpush1.msra.mxu0 %v8541
    %8543 = vmatprep.subr.mxu0 0.0
    %v8544 = vand.u32 %v8515, 4294901760
    %8545 = vmatpush1.msra.mxu0 %v8544
    %8546 = vmatprep.subr.mxu0 0.0
    %v8547 = vand.u32 %v8514, 4294901760
    %8548 = vmatpush1.msra.mxu0 %v8547
    %8549 = vmatprep.subr.mxu0 0.0
    %v8550 = vand.u32 %v8513, 4294901760
    %8551 = vmatpush1.msra.mxu0 %v8550
    %8552 = vmatprep.subr.mxu0 0.0
    %v8553 = vand.u32 %v8512, 4294901760
    %8554 = vmatpush1.msra.mxu0 %v8553
    %8555 = vmatprep.subr.mxu0 0.0
    %v8556 = vand.u32 %v8511, 4294901760
    %8557 = vmatpush1.msra.mxu0 %v8556
    %8558 = vmatprep.subr.mxu0 0.0
    %v8559 = vand.u32 %v8510, 4294901760
    %8560 = vmatpush1.msra.mxu0 %v8559
    %8561 = vmatprep.subr.mxu0 0.0
    %v8562 = vand.u32 %v8509, 4294901760
    %8563 = vmatpush1.msra.mxu0 %v8562
    %8564 = vmatprep.subr.mxu0 0.0
    %v8565 = vand.u32 %v8508, 4294901760
    %8566 = vmatpush1.msra.mxu0 %v8565
    %8567 = vmatprep.subr.mxu0 0.0
    %v8568 = vand.u32 %v8507, 4294901760
    %8569 = vmatpush1.msra.mxu0 %v8568
    %8570 = vmatprep.subr.mxu0 0.0
    %v8571 = vand.u32 %v8506, 4294901760
    %8572 = vmatpush1.msra.mxu0 %v8571
    %8573 = vmatprep.subr.mxu0 0.0
    %v8574 = vand.u32 %v8505, 4294901760
    %8575 = vmatpush1.msra.mxu0 %v8574
    %8576 = vmatprep.subr.mxu0 0.0
    %8577 = vmatpush2.msra.mxu0 0.0
    %8578 = vmatprep.subr.mxu0 0.0
    %8579 = vmatpush2.msra.mxu0 0.0
    %8580 = vmatprep.subr.mxu0 0.0
    %8581 = vmatpush2.msra.mxu0 0.0
    %8582 = vmatprep.subr.mxu0 0.0
    %8583 = vmatpush2.msra.mxu0 0.0
    %8584 = vmatprep.subr.mxu0 0.0
    %8585 = vmatpush2.msra.mxu0 0.0
    %8586 = vmatprep.subr.mxu0 0.0
    %8587 = vmatpush2.msra.mxu0 0.0
    %8588 = vmatprep.subr.mxu0 0.0
    %8589 = vmatpush2.msra.mxu0 0.0
    %8590 = vmatprep.subr.mxu0 0.0
    %8591 = vmatpush2.msra.mxu0 0.0
    %8592 = vmatprep.subr.mxu0 0.0
    %8593 = vmatpush2.msra.mxu0 0.0
    %8594 = vmatprep.subr.mxu0 0.0
    %8595 = vmatpush2.msra.mxu0 0.0
    %8596 = vmatprep.subr.mxu0 0.0
    %8597 = vmatpush2.msra.mxu0 0.0
    %8598 = vmatprep.subr.mxu0 0.0
    %8599 = vmatpush2.msra.mxu0 0.0
    %8600 = vmatprep.subr.mxu0 0.0
    %8601 = vmatpush2.msra.mxu0 0.0
    %8602 = vmatprep.subr.mxu0 0.0
    %8603 = vmatpush2.msra.mxu0 0.0
    %8604 = vmatprep.subr.mxu0 0.0
    %8605 = vmatpush2.msra.mxu0 0.0
    %8606 = vmatprep.subr.mxu0 0.0
    %8607 = vmatpush2.msra.mxu0 0.0
    %8608 = vmatprep.mubr.f32.mxu0 0.0
    %v8609 = vand.u32 %v8502, 4294901760
    %v8610 = vsub.f32 %v8502, %v8609
    %v8611 = vand.u32 %v8610, 4294901760
    %v8612 = vsub.f32 %v8610, %v8611
    %v8613 = vand.u32 %v8612, 4294901760
    %8614 = vmatmul.mubr.f32.gmra.mxu0 %v8613
    %v8615 = vpop.f32.mrf.mxu0
    %v8616 = vadd.f32 %v8526, %v8615
    %v8617 = vpop.f32.mrf.mxu0
    %8618 = vdwg.mxu0
    %8619 = vmatprep.subr.mxu0 0.0
    %v8620 = vand.u32 %v8520, 4294901760
    %v8621 = vsub.f32 %v8520, %v8620
    %v8622 = vand.u32 %v8621, 4294901760
    %v8623 = vsub.f32 %v8621, %v8622
    %v8624 = vand.u32 %v8623, 4294901760
    %8625 = vmatpush1.msra.mxu0 %v8624
    %8626 = vmatprep.subr.mxu0 0.0
    %v8627 = vand.u32 %v8519, 4294901760
    %v8628 = vsub.f32 %v8519, %v8627
    %v8629 = vand.u32 %v8628, 4294901760
    %v8630 = vsub.f32 %v8628, %v8629
    %v8631 = vand.u32 %v8630, 4294901760
    %8632 = vmatpush1.msra.mxu0 %v8631
    %8633 = vmatprep.subr.mxu0 0.0
    %v8634 = vand.u32 %v8518, 4294901760
    %v8635 = vsub.f32 %v8518, %v8634
    %v8636 = vand.u32 %v8635, 4294901760
    %v8637 = vsub.f32 %v8635, %v8636
    %v8638 = vand.u32 %v8637, 4294901760
    %8639 = vmatpush1.msra.mxu0 %v8638
    %8640 = vmatprep.subr.mxu0 0.0
    %v8641 = vand.u32 %v8517, 4294901760
    %v8642 = vsub.f32 %v8517, %v8641
    %v8643 = vand.u32 %v8642, 4294901760
    %v8644 = vsub.f32 %v8642, %v8643
    %v8645 = vand.u32 %v8644, 4294901760
    %8646 = vmatpush1.msra.mxu0 %v8645
    %8647 = vmatprep.subr.mxu0 0.0
    %v8648 = vand.u32 %v8516, 4294901760
    %v8649 = vsub.f32 %v8516, %v8648
    %v8650 = vand.u32 %v8649, 4294901760
    %v8651 = vsub.f32 %v8649, %v8650
    %v8652 = vand.u32 %v8651, 4294901760
    %8653 = vmatpush1.msra.mxu0 %v8652
    %8654 = vmatprep.subr.mxu0 0.0
    %v8655 = vand.u32 %v8515, 4294901760
    %v8656 = vsub.f32 %v8515, %v8655
    %v8657 = vand.u32 %v8656, 4294901760
    %v8658 = vsub.f32 %v8656, %v8657
    %v8659 = vand.u32 %v8658, 4294901760
    %8660 = vmatpush1.msra.mxu0 %v8659
    %8661 = vmatprep.subr.mxu0 0.0
    %v8662 = vand.u32 %v8514, 4294901760
    %v8663 = vsub.f32 %v8514, %v8662
    %v8664 = vand.u32 %v8663, 4294901760
    %v8665 = vsub.f32 %v8663, %v8664
    %v8666 = vand.u32 %v8665, 4294901760
    %8667 = vmatpush1.msra.mxu0 %v8666
    %8668 = vmatprep.subr.mxu0 0.0
    %v8669 = vand.u32 %v8513, 4294901760
    %v8670 = vsub.f32 %v8513, %v8669
    %v8671 = vand.u32 %v8670, 4294901760
    %v8672 = vsub.f32 %v8670, %v8671
    %v8673 = vand.u32 %v8672, 4294901760
    %8674 = vmatpush1.msra.mxu0 %v8673
    %8675 = vmatprep.subr.mxu0 0.0
    %v8676 = vand.u32 %v8512, 4294901760
    %v8677 = vsub.f32 %v8512, %v8676
    %v8678 = vand.u32 %v8677, 4294901760
    %v8679 = vsub.f32 %v8677, %v8678
    %v8680 = vand.u32 %v8679, 4294901760
    %8681 = vmatpush1.msra.mxu0 %v8680
    %8682 = vmatprep.subr.mxu0 0.0
    %v8683 = vand.u32 %v8511, 4294901760
    %v8684 = vsub.f32 %v8511, %v8683
    %v8685 = vand.u32 %v8684, 4294901760
    %v8686 = vsub.f32 %v8684, %v8685
    %v8687 = vand.u32 %v8686, 4294901760
    %8688 = vmatpush1.msra.mxu0 %v8687
    %8689 = vmatprep.subr.mxu0 0.0
    %v8690 = vand.u32 %v8510, 4294901760
    %v8691 = vsub.f32 %v8510, %v8690
    %v8692 = vand.u32 %v8691, 4294901760
    %v8693 = vsub.f32 %v8691, %v8692
    %v8694 = vand.u32 %v8693, 4294901760
    %8695 = vmatpush1.msra.mxu0 %v8694
    %8696 = vmatprep.subr.mxu0 0.0
    %v8697 = vand.u32 %v8509, 4294901760
    %v8698 = vsub.f32 %v8509, %v8697
    %v8699 = vand.u32 %v8698, 4294901760
    %v8700 = vsub.f32 %v8698, %v8699
    %v8701 = vand.u32 %v8700, 4294901760
    %8702 = vmatpush1.msra.mxu0 %v8701
    %8703 = vmatprep.subr.mxu0 0.0
    %v8704 = vand.u32 %v8508, 4294901760
    %v8705 = vsub.f32 %v8508, %v8704
    %v8706 = vand.u32 %v8705, 4294901760
    %v8707 = vsub.f32 %v8705, %v8706
    %v8708 = vand.u32 %v8707, 4294901760
    %8709 = vmatpush1.msra.mxu0 %v8708
    %8710 = vmatprep.subr.mxu0 0.0
    %v8711 = vand.u32 %v8507, 4294901760
    %v8712 = vsub.f32 %v8507, %v8711
    %v8713 = vand.u32 %v8712, 4294901760
    %v8714 = vsub.f32 %v8712, %v8713
    %v8715 = vand.u32 %v8714, 4294901760
    %8716 = vmatpush1.msra.mxu0 %v8715
    %8717 = vmatprep.subr.mxu0 0.0
    %v8718 = vand.u32 %v8506, 4294901760
    %v8719 = vsub.f32 %v8506, %v8718
    %v8720 = vand.u32 %v8719, 4294901760
    %v8721 = vsub.f32 %v8719, %v8720
    %v8722 = vand.u32 %v8721, 4294901760
    %8723 = vmatpush1.msra.mxu0 %v8722
    %8724 = vmatprep.subr.mxu0 0.0
    %v8725 = vand.u32 %v8505, 4294901760
    %v8726 = vsub.f32 %v8505, %v8725
    %v8727 = vand.u32 %v8726, 4294901760
    %v8728 = vsub.f32 %v8726, %v8727
    %v8729 = vand.u32 %v8728, 4294901760
    %8730 = vmatpush1.msra.mxu0 %v8729
    %8731 = vmatprep.subr.mxu0 0.0
    %8732 = vmatpush2.msra.mxu0 0.0
    %8733 = vmatprep.subr.mxu0 0.0
    %8734 = vmatpush2.msra.mxu0 0.0
    %8735 = vmatprep.subr.mxu0 0.0
    %8736 = vmatpush2.msra.mxu0 0.0
    %8737 = vmatprep.subr.mxu0 0.0
    %8738 = vmatpush2.msra.mxu0 0.0
    %8739 = vmatprep.subr.mxu0 0.0
    %8740 = vmatpush2.msra.mxu0 0.0
    %8741 = vmatprep.subr.mxu0 0.0
    %8742 = vmatpush2.msra.mxu0 0.0
    %8743 = vmatprep.subr.mxu0 0.0
    %8744 = vmatpush2.msra.mxu0 0.0
    %8745 = vmatprep.subr.mxu0 0.0
    %8746 = vmatpush2.msra.mxu0 0.0
    %8747 = vmatprep.subr.mxu0 0.0
    %8748 = vmatpush2.msra.mxu0 0.0
    %8749 = vmatprep.subr.mxu0 0.0
    %8750 = vmatpush2.msra.mxu0 0.0
    %8751 = vmatprep.subr.mxu0 0.0
    %8752 = vmatpush2.msra.mxu0 0.0
    %8753 = vmatprep.subr.mxu0 0.0
    %8754 = vmatpush2.msra.mxu0 0.0
    %8755 = vmatprep.subr.mxu0 0.0
    %8756 = vmatpush2.msra.mxu0 0.0
    %8757 = vmatprep.subr.mxu0 0.0
    %8758 = vmatpush2.msra.mxu0 0.0
    %8759 = vmatprep.subr.mxu0 0.0
    %8760 = vmatpush2.msra.mxu0 0.0
    %8761 = vmatprep.subr.mxu0 0.0
    %8762 = vmatpush2.msra.mxu0 0.0
    %8763 = vmatprep.mubr.f32.mxu0 0.0
    %v8764 = vand.u32 %v8502, 4294901760
    %8765 = vmatmul.mubr.f32.gmra.mxu0 %v8764
    %v8766 = vpop.f32.mrf.mxu0
    %v8767 = vadd.f32 %v8616, %v8766
    %v8768 = vpop.f32.mrf.mxu0
    %8769 = vdwg.mxu0
    %8770 = vmatprep.subr.mxu0 0.0
    %v8771 = vand.u32 %v8520, 4294901760
    %v8772 = vsub.f32 %v8520, %v8771
    %8773 = vmatpush1.msra.mxu0 %v8772
    %8774 = vmatprep.subr.mxu0 0.0
    %v8775 = vand.u32 %v8519, 4294901760
    %v8776 = vsub.f32 %v8519, %v8775
    %8777 = vmatpush1.msra.mxu0 %v8776
    %8778 = vmatprep.subr.mxu0 0.0
    %v8779 = vand.u32 %v8518, 4294901760
    %v8780 = vsub.f32 %v8518, %v8779
    %8781 = vmatpush1.msra.mxu0 %v8780
    %8782 = vmatprep.subr.mxu0 0.0
    %v8783 = vand.u32 %v8517, 4294901760
    %v8784 = vsub.f32 %v8517, %v8783
    %8785 = vmatpush1.msra.mxu0 %v8784
    %8786 = vmatprep.subr.mxu0 0.0
    %v8787 = vand.u32 %v8516, 4294901760
    %v8788 = vsub.f32 %v8516, %v8787
    %8789 = vmatpush1.msra.mxu0 %v8788
    %8790 = vmatprep.subr.mxu0 0.0
    %v8791 = vand.u32 %v8515, 4294901760
    %v8792 = vsub.f32 %v8515, %v8791
    %8793 = vmatpush1.msra.mxu0 %v8792
    %8794 = vmatprep.subr.mxu0 0.0
    %v8795 = vand.u32 %v8514, 4294901760
    %v8796 = vsub.f32 %v8514, %v8795
    %8797 = vmatpush1.msra.mxu0 %v8796
    %8798 = vmatprep.subr.mxu0 0.0
    %v8799 = vand.u32 %v8513, 4294901760
    %v8800 = vsub.f32 %v8513, %v8799
    %8801 = vmatpush1.msra.mxu0 %v8800
    %8802 = vmatprep.subr.mxu0 0.0
    %v8803 = vand.u32 %v8512, 4294901760
    %v8804 = vsub.f32 %v8512, %v8803
    %8805 = vmatpush1.msra.mxu0 %v8804
    %8806 = vmatprep.subr.mxu0 0.0
    %v8807 = vand.u32 %v8511, 4294901760
    %v8808 = vsub.f32 %v8511, %v8807
    %8809 = vmatpush1.msra.mxu0 %v8808
    %8810 = vmatprep.subr.mxu0 0.0
    %v8811 = vand.u32 %v8510, 4294901760
    %v8812 = vsub.f32 %v8510, %v8811
    %8813 = vmatpush1.msra.mxu0 %v8812
    %8814 = vmatprep.subr.mxu0 0.0
    %v8815 = vand.u32 %v8509, 4294901760
    %v8816 = vsub.f32 %v8509, %v8815
    %8817 = vmatpush1.msra.mxu0 %v8816
    %8818 = vmatprep.subr.mxu0 0.0
    %v8819 = vand.u32 %v8508, 4294901760
    %v8820 = vsub.f32 %v8508, %v8819
    %8821 = vmatpush1.msra.mxu0 %v8820
    %8822 = vmatprep.subr.mxu0 0.0
    %v8823 = vand.u32 %v8507, 4294901760
    %v8824 = vsub.f32 %v8507, %v8823
    %8825 = vmatpush1.msra.mxu0 %v8824
    %8826 = vmatprep.subr.mxu0 0.0
    %v8827 = vand.u32 %v8506, 4294901760
    %v8828 = vsub.f32 %v8506, %v8827
    %8829 = vmatpush1.msra.mxu0 %v8828
    %8830 = vmatprep.subr.mxu0 0.0
    %v8831 = vand.u32 %v8505, 4294901760
    %v8832 = vsub.f32 %v8505, %v8831
    %8833 = vmatpush1.msra.mxu0 %v8832
    %8834 = vmatprep.subr.mxu0 0.0
    %8835 = vmatpush2.msra.mxu0 0.0
    %8836 = vmatprep.subr.mxu0 0.0
    %8837 = vmatpush2.msra.mxu0 0.0
    %8838 = vmatprep.subr.mxu0 0.0
    %8839 = vmatpush2.msra.mxu0 0.0
    %8840 = vmatprep.subr.mxu0 0.0
    %8841 = vmatpush2.msra.mxu0 0.0
    %8842 = vmatprep.subr.mxu0 0.0
    %8843 = vmatpush2.msra.mxu0 0.0
    %8844 = vmatprep.subr.mxu0 0.0
    %8845 = vmatpush2.msra.mxu0 0.0
    %8846 = vmatprep.subr.mxu0 0.0
    %8847 = vmatpush2.msra.mxu0 0.0
    %8848 = vmatprep.subr.mxu0 0.0
    %8849 = vmatpush2.msra.mxu0 0.0
    %8850 = vmatprep.subr.mxu0 0.0
    %8851 = vmatpush2.msra.mxu0 0.0
    %8852 = vmatprep.subr.mxu0 0.0
    %8853 = vmatpush2.msra.mxu0 0.0
    %8854 = vmatprep.subr.mxu0 0.0
    %8855 = vmatpush2.msra.mxu0 0.0
    %8856 = vmatprep.subr.mxu0 0.0
    %8857 = vmatpush2.msra.mxu0 0.0
    %8858 = vmatprep.subr.mxu0 0.0
    %8859 = vmatpush2.msra.mxu0 0.0
    %8860 = vmatprep.subr.mxu0 0.0
    %8861 = vmatpush2.msra.mxu0 0.0
    %8862 = vmatprep.subr.mxu0 0.0
    %8863 = vmatpush2.msra.mxu0 0.0
    %8864 = vmatprep.subr.mxu0 0.0
    %8865 = vmatpush2.msra.mxu0 0.0
    %8866 = vmatprep.mubr.f32.mxu0 0.0
    %v8867 = vand.u32 %v8502, 4294901760
    %v8868 = vsub.f32 %v8502, %v8867
    %8869 = vmatmul.mubr.f32.gmra.mxu0 %v8868
    %v8870 = vpop.f32.mrf.mxu0
    %v8871 = vadd.f32 %v8767, %v8870
    %v8872 = vpop.f32.mrf.mxu0
    %8873 = vdwg.mxu0
    %8874 = vmatprep.subr.mxu0 0.0
    %v8875 = vand.u32 %v8520, 4294901760
    %8876 = vmatpush1.msra.mxu0 %v8875
    %8877 = vmatprep.subr.mxu0 0.0
    %v8878 = vand.u32 %v8519, 4294901760
    %8879 = vmatpush1.msra.mxu0 %v8878
    %8880 = vmatprep.subr.mxu0 0.0
    %v8881 = vand.u32 %v8518, 4294901760
    %8882 = vmatpush1.msra.mxu0 %v8881
    %8883 = vmatprep.subr.mxu0 0.0
    %v8884 = vand.u32 %v8517, 4294901760
    %8885 = vmatpush1.msra.mxu0 %v8884
    %8886 = vmatprep.subr.mxu0 0.0
    %v8887 = vand.u32 %v8516, 4294901760
    %8888 = vmatpush1.msra.mxu0 %v8887
    %8889 = vmatprep.subr.mxu0 0.0
    %v8890 = vand.u32 %v8515, 4294901760
    %8891 = vmatpush1.msra.mxu0 %v8890
    %8892 = vmatprep.subr.mxu0 0.0
    %v8893 = vand.u32 %v8514, 4294901760
    %8894 = vmatpush1.msra.mxu0 %v8893
    %8895 = vmatprep.subr.mxu0 0.0
    %v8896 = vand.u32 %v8513, 4294901760
    %8897 = vmatpush1.msra.mxu0 %v8896
    %8898 = vmatprep.subr.mxu0 0.0
    %v8899 = vand.u32 %v8512, 4294901760
    %8900 = vmatpush1.msra.mxu0 %v8899
    %8901 = vmatprep.subr.mxu0 0.0
    %v8902 = vand.u32 %v8511, 4294901760
    %8903 = vmatpush1.msra.mxu0 %v8902
    %8904 = vmatprep.subr.mxu0 0.0
    %v8905 = vand.u32 %v8510, 4294901760
    %8906 = vmatpush1.msra.mxu0 %v8905
    %8907 = vmatprep.subr.mxu0 0.0
    %v8908 = vand.u32 %v8509, 4294901760
    %8909 = vmatpush1.msra.mxu0 %v8908
    %8910 = vmatprep.subr.mxu0 0.0
    %v8911 = vand.u32 %v8508, 4294901760
    %8912 = vmatpush1.msra.mxu0 %v8911
    %8913 = vmatprep.subr.mxu0 0.0
    %v8914 = vand.u32 %v8507, 4294901760
    %8915 = vmatpush1.msra.mxu0 %v8914
    %8916 = vmatprep.subr.mxu0 0.0
    %v8917 = vand.u32 %v8506, 4294901760
    %8918 = vmatpush1.msra.mxu0 %v8917
    %8919 = vmatprep.subr.mxu0 0.0
    %v8920 = vand.u32 %v8505, 4294901760
    %8921 = vmatpush1.msra.mxu0 %v8920
    %8922 = vmatprep.subr.mxu0 0.0
    %8923 = vmatpush2.msra.mxu0 0.0
    %8924 = vmatprep.subr.mxu0 0.0
    %8925 = vmatpush2.msra.mxu0 0.0
    %8926 = vmatprep.subr.mxu0 0.0
    %8927 = vmatpush2.msra.mxu0 0.0
    %8928 = vmatprep.subr.mxu0 0.0
    %8929 = vmatpush2.msra.mxu0 0.0
    %8930 = vmatprep.subr.mxu0 0.0
    %8931 = vmatpush2.msra.mxu0 0.0
    %8932 = vmatprep.subr.mxu0 0.0
    %8933 = vmatpush2.msra.mxu0 0.0
    %8934 = vmatprep.subr.mxu0 0.0
    %8935 = vmatpush2.msra.mxu0 0.0
    %8936 = vmatprep.subr.mxu0 0.0
    %8937 = vmatpush2.msra.mxu0 0.0
    %8938 = vmatprep.subr.mxu0 0.0
    %8939 = vmatpush2.msra.mxu0 0.0
    %8940 = vmatprep.subr.mxu0 0.0
    %8941 = vmatpush2.msra.mxu0 0.0
    %8942 = vmatprep.subr.mxu0 0.0
    %8943 = vmatpush2.msra.mxu0 0.0
    %8944 = vmatprep.subr.mxu0 0.0
    %8945 = vmatpush2.msra.mxu0 0.0
    %8946 = vmatprep.subr.mxu0 0.0
    %8947 = vmatpush2.msra.mxu0 0.0
    %8948 = vmatprep.subr.mxu0 0.0
    %8949 = vmatpush2.msra.mxu0 0.0
    %8950 = vmatprep.subr.mxu0 0.0
    %8951 = vmatpush2.msra.mxu0 0.0
    %8952 = vmatprep.subr.mxu0 0.0
    %8953 = vmatpush2.msra.mxu0 0.0
    %8954 = vmatprep.mubr.f32.mxu0 0.0
    %v8955 = vand.u32 %v8502, 4294901760
    %v8956 = vsub.f32 %v8502, %v8955
    %v8957 = vand.u32 %v8956, 4294901760
    %8958 = vmatmul.mubr.f32.gmra.mxu0 %v8957
    %v8959 = vpop.f32.mrf.mxu0
    %v8960 = vadd.f32 %v8871, %v8959
    %v8961 = vpop.f32.mrf.mxu0
    %8962 = vdwg.mxu0
    %8963 = vmatprep.subr.mxu0 0.0
    %v8964 = vand.u32 %v8520, 4294901760
    %v8965 = vsub.f32 %v8520, %v8964
    %v8966 = vand.u32 %v8965, 4294901760
    %8967 = vmatpush1.msra.mxu0 %v8966
    %8968 = vmatprep.subr.mxu0 0.0
    %v8969 = vand.u32 %v8519, 4294901760
    %v8970 = vsub.f32 %v8519, %v8969
    %v8971 = vand.u32 %v8970, 4294901760
    %8972 = vmatpush1.msra.mxu0 %v8971
    %8973 = vmatprep.subr.mxu0 0.0
    %v8974 = vand.u32 %v8518, 4294901760
    %v8975 = vsub.f32 %v8518, %v8974
    %v8976 = vand.u32 %v8975, 4294901760
    %8977 = vmatpush1.msra.mxu0 %v8976
    %8978 = vmatprep.subr.mxu0 0.0
    %v8979 = vand.u32 %v8517, 4294901760
    %v8980 = vsub.f32 %v8517, %v8979
    %v8981 = vand.u32 %v8980, 4294901760
    %8982 = vmatpush1.msra.mxu0 %v8981
    %8983 = vmatprep.subr.mxu0 0.0
    %v8984 = vand.u32 %v8516, 4294901760
    %v8985 = vsub.f32 %v8516, %v8984
    %v8986 = vand.u32 %v8985, 4294901760
    %8987 = vmatpush1.msra.mxu0 %v8986
    %8988 = vmatprep.subr.mxu0 0.0
    %v8989 = vand.u32 %v8515, 4294901760
    %v8990 = vsub.f32 %v8515, %v8989
    %v8991 = vand.u32 %v8990, 4294901760
    %8992 = vmatpush1.msra.mxu0 %v8991
    %8993 = vmatprep.subr.mxu0 0.0
    %v8994 = vand.u32 %v8514, 4294901760
    %v8995 = vsub.f32 %v8514, %v8994
    %v8996 = vand.u32 %v8995, 4294901760
    %8997 = vmatpush1.msra.mxu0 %v8996
    %8998 = vmatprep.subr.mxu0 0.0
    %v8999 = vand.u32 %v8513, 4294901760
    %v9000 = vsub.f32 %v8513, %v8999
    %v9001 = vand.u32 %v9000, 4294901760
    %9002 = vmatpush1.msra.mxu0 %v9001
    %9003 = vmatprep.subr.mxu0 0.0
    %v9004 = vand.u32 %v8512, 4294901760
    %v9005 = vsub.f32 %v8512, %v9004
    %v9006 = vand.u32 %v9005, 4294901760
    %9007 = vmatpush1.msra.mxu0 %v9006
    %9008 = vmatprep.subr.mxu0 0.0
    %v9009 = vand.u32 %v8511, 4294901760
    %v9010 = vsub.f32 %v8511, %v9009
    %v9011 = vand.u32 %v9010, 4294901760
    %9012 = vmatpush1.msra.mxu0 %v9011
    %9013 = vmatprep.subr.mxu0 0.0
    %v9014 = vand.u32 %v8510, 4294901760
    %v9015 = vsub.f32 %v8510, %v9014
    %v9016 = vand.u32 %v9015, 4294901760
    %9017 = vmatpush1.msra.mxu0 %v9016
    %9018 = vmatprep.subr.mxu0 0.0
    %v9019 = vand.u32 %v8509, 4294901760
    %v9020 = vsub.f32 %v8509, %v9019
    %v9021 = vand.u32 %v9020, 4294901760
    %9022 = vmatpush1.msra.mxu0 %v9021
    %9023 = vmatprep.subr.mxu0 0.0
    %v9024 = vand.u32 %v8508, 4294901760
    %v9025 = vsub.f32 %v8508, %v9024
    %v9026 = vand.u32 %v9025, 4294901760
    %9027 = vmatpush1.msra.mxu0 %v9026
    %9028 = vmatprep.subr.mxu0 0.0
    %v9029 = vand.u32 %v8507, 4294901760
    %v9030 = vsub.f32 %v8507, %v9029
    %v9031 = vand.u32 %v9030, 4294901760
    %9032 = vmatpush1.msra.mxu0 %v9031
    %9033 = vmatprep.subr.mxu0 0.0
    %v9034 = vand.u32 %v8506, 4294901760
    %v9035 = vsub.f32 %v8506, %v9034
    %v9036 = vand.u32 %v9035, 4294901760
    %9037 = vmatpush1.msra.mxu0 %v9036
    %9038 = vmatprep.subr.mxu0 0.0
    %v9039 = vand.u32 %v8505, 4294901760
    %v9040 = vsub.f32 %v8505, %v9039
    %v9041 = vand.u32 %v9040, 4294901760
    %9042 = vmatpush1.msra.mxu0 %v9041
    %9043 = vmatprep.subr.mxu0 0.0
    %9044 = vmatpush2.msra.mxu0 0.0
    %9045 = vmatprep.subr.mxu0 0.0
    %9046 = vmatpush2.msra.mxu0 0.0
    %9047 = vmatprep.subr.mxu0 0.0
    %9048 = vmatpush2.msra.mxu0 0.0
    %9049 = vmatprep.subr.mxu0 0.0
    %9050 = vmatpush2.msra.mxu0 0.0
    %9051 = vmatprep.subr.mxu0 0.0
    %9052 = vmatpush2.msra.mxu0 0.0
    %9053 = vmatprep.subr.mxu0 0.0
    %9054 = vmatpush2.msra.mxu0 0.0
    %9055 = vmatprep.subr.mxu0 0.0
    %9056 = vmatpush2.msra.mxu0 0.0
    %9057 = vmatprep.subr.mxu0 0.0
    %9058 = vmatpush2.msra.mxu0 0.0
    %9059 = vmatprep.subr.mxu0 0.0
    %9060 = vmatpush2.msra.mxu0 0.0
    %9061 = vmatprep.subr.mxu0 0.0
    %9062 = vmatpush2.msra.mxu0 0.0
    %9063 = vmatprep.subr.mxu0 0.0
    %9064 = vmatpush2.msra.mxu0 0.0
    %9065 = vmatprep.subr.mxu0 0.0
    %9066 = vmatpush2.msra.mxu0 0.0
    %9067 = vmatprep.subr.mxu0 0.0
    %9068 = vmatpush2.msra.mxu0 0.0
    %9069 = vmatprep.subr.mxu0 0.0
    %9070 = vmatpush2.msra.mxu0 0.0
    %9071 = vmatprep.subr.mxu0 0.0
    %9072 = vmatpush2.msra.mxu0 0.0
    %9073 = vmatprep.subr.mxu0 0.0
    %9074 = vmatpush2.msra.mxu0 0.0
    %9075 = vmatprep.mubr.f32.mxu0 0.0
    %v9076 = vand.u32 %v8502, 4294901760
    %9077 = vmatmul.mubr.f32.gmra.mxu0 %v9076
    %v9078 = vpop.f32.mrf.mxu0
    %v9079 = vadd.f32 %v8960, %v9078
    %v9080 = vpop.f32.mrf.mxu0
    %9081 = vdwg.mxu0
    %9082 = vmatprep.subr.mxu0 0.0
    %v9083 = vand.u32 %v8520, 4294901760
    %9084 = vmatpush1.msra.mxu0 %v9083
    %9085 = vmatprep.subr.mxu0 0.0
    %v9086 = vand.u32 %v8519, 4294901760
    %9087 = vmatpush1.msra.mxu0 %v9086
    %9088 = vmatprep.subr.mxu0 0.0
    %v9089 = vand.u32 %v8518, 4294901760
    %9090 = vmatpush1.msra.mxu0 %v9089
    %9091 = vmatprep.subr.mxu0 0.0
    %v9092 = vand.u32 %v8517, 4294901760
    %9093 = vmatpush1.msra.mxu0 %v9092
    %9094 = vmatprep.subr.mxu0 0.0
    %v9095 = vand.u32 %v8516, 4294901760
    %9096 = vmatpush1.msra.mxu0 %v9095
    %9097 = vmatprep.subr.mxu0 0.0
    %v9098 = vand.u32 %v8515, 4294901760
    %9099 = vmatpush1.msra.mxu0 %v9098
    %9100 = vmatprep.subr.mxu0 0.0
    %v9101 = vand.u32 %v8514, 4294901760
    %9102 = vmatpush1.msra.mxu0 %v9101
    %9103 = vmatprep.subr.mxu0 0.0
    %v9104 = vand.u32 %v8513, 4294901760
    %9105 = vmatpush1.msra.mxu0 %v9104
    %9106 = vmatprep.subr.mxu0 0.0
    %v9107 = vand.u32 %v8512, 4294901760
    %9108 = vmatpush1.msra.mxu0 %v9107
    %9109 = vmatprep.subr.mxu0 0.0
    %v9110 = vand.u32 %v8511, 4294901760
    %9111 = vmatpush1.msra.mxu0 %v9110
    %9112 = vmatprep.subr.mxu0 0.0
    %v9113 = vand.u32 %v8510, 4294901760
    %9114 = vmatpush1.msra.mxu0 %v9113
    %9115 = vmatprep.subr.mxu0 0.0
    %v9116 = vand.u32 %v8509, 4294901760
    %9117 = vmatpush1.msra.mxu0 %v9116
    %9118 = vmatprep.subr.mxu0 0.0
    %v9119 = vand.u32 %v8508, 4294901760
    %9120 = vmatpush1.msra.mxu0 %v9119
    %9121 = vmatprep.subr.mxu0 0.0
    %v9122 = vand.u32 %v8507, 4294901760
    %9123 = vmatpush1.msra.mxu0 %v9122
    %9124 = vmatprep.subr.mxu0 0.0
    %v9125 = vand.u32 %v8506, 4294901760
    %9126 = vmatpush1.msra.mxu0 %v9125
    %9127 = vmatprep.subr.mxu0 0.0
    %v9128 = vand.u32 %v8505, 4294901760
    %9129 = vmatpush1.msra.mxu0 %v9128
    %9130 = vmatprep.subr.mxu0 0.0
    %9131 = vmatpush2.msra.mxu0 0.0
    %9132 = vmatprep.subr.mxu0 0.0
    %9133 = vmatpush2.msra.mxu0 0.0
    %9134 = vmatprep.subr.mxu0 0.0
    %9135 = vmatpush2.msra.mxu0 0.0
    %9136 = vmatprep.subr.mxu0 0.0
    %9137 = vmatpush2.msra.mxu0 0.0
    %9138 = vmatprep.subr.mxu0 0.0
    %9139 = vmatpush2.msra.mxu0 0.0
    %9140 = vmatprep.subr.mxu0 0.0
    %9141 = vmatpush2.msra.mxu0 0.0
    %9142 = vmatprep.subr.mxu0 0.0
    %9143 = vmatpush2.msra.mxu0 0.0
    %9144 = vmatprep.subr.mxu0 0.0
    %9145 = vmatpush2.msra.mxu0 0.0
    %9146 = vmatprep.subr.mxu0 0.0
    %9147 = vmatpush2.msra.mxu0 0.0
    %9148 = vmatprep.subr.mxu0 0.0
    %9149 = vmatpush2.msra.mxu0 0.0
    %9150 = vmatprep.subr.mxu0 0.0
    %9151 = vmatpush2.msra.mxu0 0.0
    %9152 = vmatprep.subr.mxu0 0.0
    %9153 = vmatpush2.msra.mxu0 0.0
    %9154 = vmatprep.subr.mxu0 0.0
    %9155 = vmatpush2.msra.mxu0 0.0
    %9156 = vmatprep.subr.mxu0 0.0
    %9157 = vmatpush2.msra.mxu0 0.0
    %9158 = vmatprep.subr.mxu0 0.0
    %9159 = vmatpush2.msra.mxu0 0.0
    %9160 = vmatprep.subr.mxu0 0.0
    %9161 = vmatpush2.msra.mxu0 0.0
    %9162 = vmatprep.mubr.f32.mxu0 0.0
    %v9163 = vand.u32 %v8502, 4294901760
    %9164 = vmatmul.mubr.f32.gmra.mxu0 %v9163
    %v9165 = vpop.f32.mrf.mxu0
    %v9166 = vadd.f32 %v9079, %v9165
    %v9167 = vpop.f32.mrf.mxu0
    %9168 = vdwg.mxu0
    %9169 = vst [vmem:[#allocation4] sm:$0xff] %v9166
    // Predicated region
    $region26: #{rnn_forward_decode.1} parent=1 // pred_check
      _
    $region27: #{rnn_forward_decode.1} parent=1 // pred_check_branch
      %9171 = sbr.rel (0) target = $region29
    $region28: #{rnn_forward_decode.1} parent=1 // pred_region
      %s9173 = ssub.s32 1024, 1024
      %9174 = vsyncadd [#allocation3], %s9173
      %s9175 = sshll.u32 [#allocation2], 4
      %s9176 = int_to_ptr.vmem [resolvable:$true] %s9175
      %9181 = dma.vmem_to_hbm [thread:$0]  %s9176, 1024, %s6, [#allocation3], 128, 128, 8
    $region29: #{rnn_forward_decode.1} parent=1 // pred_fallthru
      _
    // Predicated region
    $region30: #{rnn_forward_decode.1} parent=1 // pred_check
      _
    $region31: #{rnn_forward_decode.1} parent=1 // pred_check_branch
      %9183 = sbr.rel (0) target = $region33
    $region32: #{rnn_forward_decode.1} parent=1 // pred_region
      %s9185 = ssub.s32 128, 128
      %9186 = vsyncadd [#allocation5], %s9185
      %s9188 = sshll.u32 [#allocation4], 4
      %s9189 = int_to_ptr.vmem [resolvable:$true] %s9188
      %9191 = dma.vmem_to_hbm [thread:$0]  %s9189, 128, %s7, [#allocation5]
    $region33: #{rnn_forward_decode.1} parent=1 // pred_fallthru
      _
    // Predicated region
    $region34: #{rnn_forward_decode.1} parent=1 // pred_check
      _
    $region35: #{rnn_forward_decode.1} parent=1 // pred_check_branch
      %9193 = sbr.rel (0) target = $region37
    $region36: #{rnn_forward_decode.1} parent=1 // pred_region
      %9194 = dma.done [#allocation3], 1024
    $region37: #{rnn_forward_decode.1} parent=1 // pred_fallthru
      _
    // Predicated region
    $region38: #{rnn_forward_decode.1} parent=1 // pred_check
      _
    $region39: #{rnn_forward_decode.1} parent=1 // pred_check_branch
      %9196 = sbr.rel (0) target = $region41
    $region40: #{rnn_forward_decode.1} parent=1 // pred_region
      %9197 = dma.done [#allocation5], 128
    $region41: #{rnn_forward_decode.1} parent=1 // pred_fallthru
      _
    %9198 = vsyncpa [#allocation3], 1
    %9199 = vsyncpa [#allocation5], 1

</llo_original>
